<compile_context>
chip_gen: v7x
topology: tpu7x:2x2x1
jax: 0.10.0
libtpu: 0.0.40
codegen_flags: <defaults>
</compile_context>

<pallas_src>
import functools

import jax
import jax.numpy as jnp
from jax import lax
from jax.experimental import pallas as pl
from jax.experimental.pallas import tpu as pltpu


_BN_EPS = 1e-5


def _round_up(x, m):
    return ((x + m - 1) // m) * m


def _vmem_budget():
    """Generation-aware scoped-VMEM limit + per-step tile budget (bytes)."""
    try:
        cap = int(pltpu.get_tpu_info().vmem_capacity_bytes)
    except Exception:                      # conservative (v7x-safe) fallback
        cap = 64 * 1024 * 1024
    limit = min(cap * 3 // 4, 96 * 1024 * 1024)   # 96 MiB v5e/v6e, ~48 MiB v7x
    return limit, limit // 2


_VMEM_LIMIT_BYTES, _TILE_BUDGET_BYTES = _vmem_budget()


def _pick_tile_bn(m_real, k, co_pad, budget=_TILE_BUDGET_BYTES):
    """Largest lane tile tm (multiple of 128) for the fused BN block whose
    per-step footprint (double-buffered patches/output tiles + weight copy +
    full-layer f32 y scratch) fits the VMEM budget."""
    m_up = _round_up(max(m_real, 1), 128)
    fixed = (2 * k * co_pad * 2           # double-buffered (CO_pad, K) weight
             + co_pad * m_up * 4          # full-layer f32 y scratch
             + 8 * co_pad * 128 * 4)      # small per-channel scratches (padded)
    per_col = 2 * (k * 2) + 2 * (co_pad * 2)    # patches + output, 2 buffers
    tm = (budget - fixed) // per_col if budget > fixed else 128
    tm = max(128, (tm // 128) * 128)
    return min(tm, m_up)


def _pick_tile_tanh(m_real, k, co_pad, budget=_TILE_BUDGET_BYTES):
    m_up = _round_up(max(m_real, 1), 128)
    fixed = 2 * k * co_pad * 2 + co_pad * 128 * 4
    per_col = 2 * (k * 2) + 2 * (co_pad * 4)
    tm = (budget - fixed) // per_col if budget > fixed else 128
    tm = max(128, (tm // 128) * 128)
    return min(tm, m_up)


# ------------------------------------------------------------------ kernels --

def _convt_bn_relu_kernel(p_ref, wt_ref, g_ref, b_ref, o_ref,
                          y_sc, sum_sc, sq_sc, scale_sc, shift_sc, *, m_total):
    """Fused ConvTranspose-as-matmul + training-mode BatchNorm + ReLU.

    grid = (sweep, row_tile):
      sweep 0: y_tile = w_t @ patches_tile^T (bf16 in, f32 out) -> VMEM
               scratch; accumulate per-channel sum / sum-of-squares.
      sweep 1: finalize scale/shift once (first step), then normalize +
               affine + ReLU each tile, stored lane-dense (CO_pad, tm).
    """
    s = pl.program_id(0)
    i = pl.program_id(1)

    @pl.when(jnp.logical_and(s == 0, i == 0))
    def _init():
        sum_sc[...] = jnp.zeros_like(sum_sc)
        sq_sc[...] = jnp.zeros_like(sq_sc)

    @pl.when(s == 0)
    def _matmul_and_stats():
        y = lax.dot_general(wt_ref[...], p_ref[...],
                            dimension_numbers=(((1,), (1,)), ((), ())),
                            preferred_element_type=jnp.float32)  # (CO_pad, tm)
        y_sc[i] = y
        # single-sweep stats: var = E[x^2] - E[x]^2 later (divide by real M;
        # zero-padded rows contribute nothing).
        sum_sc[...] += jnp.sum(y, axis=1, keepdims=True)
        sq_sc[...] += jnp.sum(y * y, axis=1, keepdims=True)

    @pl.when(jnp.logical_and(s == 1, i == 0))
    def _finalize_stats():
        inv_m = jnp.float32(1.0 / m_total)
        mean = sum_sc[...] * inv_m
        # TODO(synk): shifted-mean / Welford accumulation if E[x^2]-E[x]^2
        # cancellation becomes visible at real batch/spatial sizes.
        var = jnp.maximum(sq_sc[...] * inv_m - mean * mean, 0.0)
        scale = g_ref[...] * lax.rsqrt(var + _BN_EPS)
        scale_sc[...] = scale
        shift_sc[...] = b_ref[...] - mean * scale

    @pl.when(s == 1)
    def _normalize_relu():
        y = y_sc[i]
        o_ref[...] = jnp.maximum(
            y * scale_sc[...] + shift_sc[...], 0.0).astype(o_ref.dtype)


def _convt_tanh_t_kernel(p_ref, wt_ref, b_ref, o_ref):
    """Final layer: out = tanh(w_t @ patches^T + bias), channel-major output."""
    y = lax.dot_general(wt_ref[...], p_ref[...],
                        dimension_numbers=(((1,), (1,)), ((), ())),
                        preferred_element_type=jnp.float32)      # (CO_pad, tm)
    o_ref[...] = jnp.tanh(y + b_ref[...])


# ---------------------------------------------------------------- wrappers --

def convt_bn_relu(patches, w_t, gamma_col, beta_col):
    """patches (M, K) bf16, w_t (CO_pad, K) bf16, gamma/beta (CO_pad, 1) f32
    -> channel-major activations (CO_pad, m_pad) bf16."""
    m_real, K = patches.shape
    co_pad = w_t.shape[0]
    tm = _pick_tile_bn(m_real, K, co_pad)
    n_tiles = pl.cdiv(m_real, tm)
    m_pad = n_tiles * tm
    if m_pad != m_real:
        # zero rows add 0 to sum/sumsq; stats divide by the real M below.
        patches = jnp.pad(patches, ((0, m_pad - m_real), (0, 0)))

    return pl.pallas_call(
        functools.partial(_convt_bn_relu_kernel, m_total=float(m_real)),
        out_shape=jax.ShapeDtypeStruct((co_pad, m_pad), jnp.bfloat16),
        grid=(2, n_tiles),
        in_specs=[
            # patches are only consumed during sweep 0; pin block 0 during
            # sweep 1 so the revisit skips the re-DMA.
            pl.BlockSpec((tm, K), lambda s, i: ((1 - s) * i, 0)),
            pl.BlockSpec((co_pad, K), lambda s, i: (0, 0)),
            pl.BlockSpec((co_pad, 1), lambda s, i: (0, 0)),
            pl.BlockSpec((co_pad, 1), lambda s, i: (0, 0)),
        ],
        # output tiles are only written during sweep 1; pin block 0 during
        # sweep 0 so no stale buffer is ever flushed over real data.
        out_specs=pl.BlockSpec((co_pad, tm), lambda s, i: (0, i * s)),
        scratch_shapes=[
            pltpu.VMEM((n_tiles, co_pad, tm), jnp.float32),  # full-layer y
            pltpu.VMEM((co_pad, 1), jnp.float32),            # sum
            pltpu.VMEM((co_pad, 1), jnp.float32),            # sum of squares
            pltpu.VMEM((co_pad, 1), jnp.float32),            # scale
            pltpu.VMEM((co_pad, 1), jnp.float32),            # shift
        ],
        compiler_params=pltpu.CompilerParams(
            dimension_semantics=("arbitrary", "arbitrary"),
            vmem_limit_bytes=_VMEM_LIMIT_BYTES),
    )(patches, w_t, gamma_col, beta_col)


def convt_tanh(patches, w_t, bias_col):
    """Final ConvTranspose (as matmul) + bias + Tanh, lane-dense (CO_pad, M)."""
    m_real, K = patches.shape
    co_pad = w_t.shape[0]
    tm = _pick_tile_tanh(m_real, K, co_pad)
    n_tiles = pl.cdiv(m_real, tm)
    m_pad = n_tiles * tm
    if m_pad != m_real:
        patches = jnp.pad(patches, ((0, m_pad - m_real), (0, 0)))
    return pl.pallas_call(
        _convt_tanh_t_kernel,
        out_shape=jax.ShapeDtypeStruct((co_pad, m_pad), jnp.float32),
        grid=(n_tiles,),
        in_specs=[pl.BlockSpec((tm, K), lambda i: (i, 0)),
                  pl.BlockSpec((co_pad, K), lambda i: (0, 0)),
                  pl.BlockSpec((co_pad, 1), lambda i: (0, 0))],
        out_specs=pl.BlockSpec((co_pad, tm), lambda i: (0, i)),
        compiler_params=pltpu.CompilerParams(
            dimension_semantics=("parallel",),
            vmem_limit_bytes=_VMEM_LIMIT_BYTES),
    )(patches, w_t, bias_col)


# ------------------------------------------------------------- im2col glue --

def _convt_patches_nhwc(x, k, s, p):
    """Express ConvTranspose2d as a valid conv on the zero-dilated, zero-padded
    NHWC input; return im2col patches (M, CI*k*k) and output dims.
    TODO(synk): replace with implicit in-kernel im2col (see header)."""
    n, h, w, c = x.shape
    hd, wd = (h - 1) * s + 1, (w - 1) * s + 1
    xd = jnp.zeros((n, hd, wd, c), x.dtype).at[:, ::s, ::s, :].set(x)
    pad = k - 1 - p
    xp = jnp.pad(xd, ((0, 0), (pad, pad), (pad, pad), (0, 0)))
    oh = (h - 1) * s - 2 * p + k
    ow = (w - 1) * s - 2 * p + k
    taps = [xp[:, kh:kh + oh, kw:kw + ow, :]           # each (N, OH, OW, C)
            for kh in range(k) for kw in range(k)]
    pt = jnp.stack(taps, axis=-1)                      # (N, OH, OW, C, k*k)
    return pt.reshape(n * oh * ow, c * k * k), (n, oh, ow)


def _convt_weight_mat_t(w, co_pad):
    """PyTorch ConvTranspose2d weight (CI, CO, k, k) -> (CO_pad, CI*k*k):
    spatial flip, then (ci, kh, kw) column order matching the patches."""
    ci, co, k, _ = w.shape
    wf = w[:, :, ::-1, ::-1]
    wt = wf.transpose(1, 0, 2, 3).reshape(co, ci * k * k)
    return jnp.pad(wt, ((0, co_pad - co), (0, 0)))


def _cm_to_nhwc(y_cm, co, n, oh, ow):
    """Channel-major (CO_pad, m_pad) kernel output -> NHWC for next im2col."""
    return y_cm[:co, :n * oh * ow].reshape(co, n, oh, ow).transpose(1, 2, 3, 0)


# --------------------------------------------------------------- generator --

def init_generator_params(key, z_dim, channels_img, dim):
    chans = [z_dim, dim * 16, dim * 8, dim * 4, dim * 2, channels_img]
    params = []
    for li in range(5):
        key, kw, kg, kb = jax.random.split(key, 4)
        w = 0.02 * jax.random.normal(kw, (chans[li], chans[li + 1], 4, 4),
                                     jnp.float32)
        if li < 4:  # ConvTranspose (bias=False) + BatchNorm + ReLU block
            gamma = 1.0 + 0.1 * jax.random.normal(kg, (chans[li + 1],),
                                                  jnp.float32)
            beta = 0.1 * jax.random.normal(kb, (chans[li + 1],), jnp.float32)
            params.append((w, gamma, beta))
        else:       # final ConvTranspose2d (bias=True) + Tanh
            bias = 0.02 * jax.random.normal(kb, (chans[li + 1],), jnp.float32)
            params.append((w, bias))
    return params


def generator_forward(params, x):
    """x: (N, z_dim, 1, 1) NCHW -> (N, channels_img, 64, 64) NCHW, f32."""
    strides = (1, 2, 2, 2, 2)
    pads = (0, 1, 1, 1, 1)
    # NHWC internally; bf16 activations drive the MXU at native rate.
    h = jnp.transpose(x, (0, 2, 3, 1)).astype(jnp.bfloat16)

    # TODO(synk): BatchNorm is training-mode (batch stats) only; no
    # running-mean/var buffers, so it does not match an eval() PyTorch model.
    for li in range(4):
        w, gamma, beta = params[li]
        co = w.shape[1]
        co_pad = max(8, _round_up(co, 8))
        patches, (n, oh, ow) = _convt_patches_nhwc(h, 4, strides[li], pads[li])
        wt = _convt_weight_mat_t(w, co_pad).astype(jnp.bfloat16)  # (CO_pad, K)
        g_col = jnp.pad(gamma, (0, co_pad - co)).reshape(co_pad, 1)
        b_col = jnp.pad(beta, (0, co_pad - co)).reshape(co_pad, 1)
        y_cm = convt_bn_relu(patches, wt, g_col, b_col)    # (CO_pad, m_pad)
        h = _cm_to_nhwc(y_cm, co, n, oh, ow)               # NHWC, bf16

    w, bias = params[4]
    co = w.shape[1]
    co_pad = max(8, _round_up(co, 8))
    patches, (n, oh, ow) = _convt_patches_nhwc(h, 4, strides[4], pads[4])
    wt = _convt_weight_mat_t(w, co_pad).astype(jnp.bfloat16)
    bias_col = jnp.pad(bias, (0, co_pad - co)).reshape(co_pad, 1)
    out_t = convt_tanh(patches, wt, bias_col)              # (CO_pad, m_pad) f32
    out_t = out_t[:co, :n * oh * ow]                       # (CO, N*OH*OW)
    return out_t.reshape(co, n, oh, ow).transpose(1, 0, 2, 3)  # NCHW, f32


# --------------------------------------------------------------------- main --

if __name__ == "__main__":
    key = jax.random.PRNGKey(0)
    batch, z_dim, channels_img, dim = 2, 8, 3, 4

    kp, kx = jax.random.split(key)
    params = init_generator_params(kp, z_dim, channels_img, dim)
    x = jax.random.normal(kx, (batch, z_dim, 1, 1), jnp.float32)

    fwd = jax.jit(generator_forward)
    out = jax.block_until_ready(fwd(params, x))

    assert out.shape == (batch, channels_img, 64, 64), out.shape
    assert bool(jnp.all(jnp.isfinite(out)))
    assert bool(jnp.all(jnp.abs(out) <= 1.0 + 1e-6))  # tanh range
    print("KERNEL_OK")
</pallas_src>

<mosaic_0001>
module attributes {stable_mosaic.version = 11 : i64} {
  func.func @_convt_bn_relu_kernel(%arg0: i32, %arg1: i32, %arg2: memref<128x128xbf16, #tpu.memory_space<vmem>>, %arg3: memref<64x128xbf16, #tpu.memory_space<vmem>>, %arg4: memref<64x1xf32, #tpu.memory_space<vmem>>, %arg5: memref<64x1xf32, #tpu.memory_space<vmem>>, %arg6: memref<64x128xbf16, #tpu.memory_space<vmem>>, %arg7: memref<1x64x128xf32, #tpu.memory_space<vmem>>, %arg8: memref<64x1xf32, #tpu.memory_space<vmem>>, %arg9: memref<64x1xf32, #tpu.memory_space<vmem>>, %arg10: memref<64x1xf32, #tpu.memory_space<vmem>>, %arg11: memref<64x1xf32, #tpu.memory_space<vmem>>) attributes {dimension_semantics = [#tpu.dimension_semantics<arbitrary>, #tpu.dimension_semantics<arbitrary>], iteration_bounds = array<i64: 2, 1>, scalar_prefetch = 0 : i64, scratch_operands = 5 : i64, tpu.core_type = #tpu.core_type<tc>, window_params = [{transform_indices = @transform_0, window_bounds = array<i64: 128, 128>}, {pipeline_mode = #tpu.pipeline_mode<synchronous>, transform_indices = @transform_1, window_bounds = array<i64: 64, 128>}, {pipeline_mode = #tpu.pipeline_mode<synchronous>, transform_indices = @transform_2, window_bounds = array<i64: 64, 1>}, {pipeline_mode = #tpu.pipeline_mode<synchronous>, transform_indices = @transform_3, window_bounds = array<i64: 64, 1>}, {transform_indices = @transform_4, window_bounds = array<i64: 64, 128>}]} {
    %c0_i32 = arith.constant 0 : i32
    %0 = arith.cmpi eq, %arg0, %c0_i32 : i32
    %c0_i32_0 = arith.constant 0 : i32
    %1 = arith.cmpi eq, %arg1, %c0_i32_0 : i32
    %2 = arith.andi %0, %1 : i1
    %3 = arith.extui %2 : i1 to i32
    %c0_i32_1 = arith.constant 0 : i32
    %4 = arith.cmpi ne, %3, %c0_i32_1 : i32
    scf.if %4 {
      %cst = arith.constant 0.000000e+00 : f32
      %16 = vector.broadcast %cst : f32 to vector<64x1xf32>
      %c0 = arith.constant 0 : index
      %c0_8 = arith.constant 0 : index
      %17 = vector.load %arg8[%c0, %c0_8] : memref<64x1xf32, #tpu.memory_space<vmem>>, vector<64x1xf32>
      tpu.vector_store %arg8[%c0, %c0_8], %16 {strides = array<i32>} : memref<64x1xf32, #tpu.memory_space<vmem>>, vector<64x1xf32>,
      %cst_9 = arith.constant 0.000000e+00 : f32
      %18 = vector.broadcast %cst_9 : f32 to vector<64x1xf32>
      %c0_10 = arith.constant 0 : index
      %c0_11 = arith.constant 0 : index
      %19 = vector.load %arg9[%c0_10, %c0_11] : memref<64x1xf32, #tpu.memory_space<vmem>>, vector<64x1xf32>
      tpu.vector_store %arg9[%c0_10, %c0_11], %18 {strides = array<i32>} : memref<64x1xf32, #tpu.memory_space<vmem>>, vector<64x1xf32>,
    } else {
    }
    %c0_i32_2 = arith.constant 0 : i32
    %5 = arith.cmpi eq, %arg0, %c0_i32_2 : i32
    %6 = arith.extui %5 : i1 to i32
    %c0_i32_3 = arith.constant 0 : i32
    %7 = arith.cmpi ne, %6, %c0_i32_3 : i32
    scf.if %7 {
      %c0 = arith.constant 0 : index
      %c0_8 = arith.constant 0 : index
      %16 = vector.load %arg3[%c0, %c0_8] : memref<64x128xbf16, #tpu.memory_space<vmem>>, vector<64x128xbf16>
      %c0_9 = arith.constant 0 : index
      %c0_10 = arith.constant 0 : index
      %17 = vector.load %arg2[%c0_9, %c0_10] : memref<128x128xbf16, #tpu.memory_space<vmem>>, vector<128x128xbf16>
      %cst = arith.constant dense<0.000000e+00> : vector<64x128xf32>
      %18 = tpu.matmul %16, %17, %cst {dimension_numbers = #tpu.dot_dimension_numbers<[1], [1], [0], [0], [0, 0, 1, 0], [], []>} : vector<64x128xbf16>, vector<128x128xbf16>, vector<64x128xf32> -> vector<64x128xf32>
      %19 = arith.index_cast %arg1 : i32 to index
      %c0_11 = arith.constant 0 : index
      %c0_12 = arith.constant 0 : index
      %20 = vector.load %arg7[%19, %c0_11, %c0_12] : memref<1x64x128xf32, #tpu.memory_space<vmem>>, vector<1x64x128xf32>
      %21 = vector.shape_cast %20 : vector<1x64x128xf32> to vector<64x128xf32>
      %22 = vector.shape_cast %18 : vector<64x128xf32> to vector<1x64x128xf32>
      tpu.vector_store %arg7[%19, %c0_11, %c0_12], %22 {strides = array<i32>} : memref<1x64x128xf32, #tpu.memory_space<vmem>>, vector<1x64x128xf32>,
      %c0_13 = arith.constant 0 : index
      %c0_14 = arith.constant 0 : index
      %23 = vector.load %arg8[%c0_13, %c0_14] : memref<64x1xf32, #tpu.memory_space<vmem>>, vector<64x1xf32>
      %cst_15 = arith.constant dense<0.000000e+00> : vector<64xf32>
      %24 = vector.multi_reduction <add>, %18, %cst_15 [1] : vector<64x128xf32> to vector<64xf32>
      %25 = vector.shape_cast %24 : vector<64xf32> to vector<64x1xf32>
      %26 = arith.addf %23, %25 : vector<64x1xf32>
      %c0_16 = arith.constant 0 : index
      %c0_17 = arith.constant 0 : index
      %27 = vector.load %arg8[%c0_16, %c0_17] : memref<64x1xf32, #tpu.memory_space<vmem>>, vector<64x1xf32>
      tpu.vector_store %arg8[%c0_16, %c0_17], %26 {strides = array<i32>} : memref<64x1xf32, #tpu.memory_space<vmem>>, vector<64x1xf32>,
      %c0_18 = arith.constant 0 : index
      %c0_19 = arith.constant 0 : index
      %28 = vector.load %arg9[%c0_18, %c0_19] : memref<64x1xf32, #tpu.memory_space<vmem>>, vector<64x1xf32>
      %29 = arith.mulf %18, %18 : vector<64x128xf32>
      %cst_20 = arith.constant dense<0.000000e+00> : vector<64xf32>
      %30 = vector.multi_reduction <add>, %29, %cst_20 [1] : vector<64x128xf32> to vector<64xf32>
      %31 = vector.shape_cast %30 : vector<64xf32> to vector<64x1xf32>
      %32 = arith.addf %28, %31 : vector<64x1xf32>
      %c0_21 = arith.constant 0 : index
      %c0_22 = arith.constant 0 : index
      %33 = vector.load %arg9[%c0_21, %c0_22] : memref<64x1xf32, #tpu.memory_space<vmem>>, vector<64x1xf32>
      tpu.vector_store %arg9[%c0_21, %c0_22], %32 {strides = array<i32>} : memref<64x1xf32, #tpu.memory_space<vmem>>, vector<64x1xf32>,
    } else {
    }
    %c1_i32 = arith.constant 1 : i32
    %8 = arith.cmpi eq, %arg0, %c1_i32 : i32
    %c0_i32_4 = arith.constant 0 : i32
    %9 = arith.cmpi eq, %arg1, %c0_i32_4 : i32
    %10 = arith.andi %8, %9 : i1
    %11 = arith.extui %10 : i1 to i32
    %c0_i32_5 = arith.constant 0 : i32
    %12 = arith.cmpi ne, %11, %c0_i32_5 : i32
    scf.if %12 {
      %c0 = arith.constant 0 : index
      %c0_8 = arith.constant 0 : index
      %16 = vector.load %arg8[%c0, %c0_8] : memref<64x1xf32, #tpu.memory_space<vmem>>, vector<64x1xf32>
      %cst = arith.constant 3.125000e-02 : f32
      %17 = vector.broadcast %cst : f32 to vector<64x1xf32>
      %18 = arith.mulf %16, %17 : vector<64x1xf32>
      %c0_9 = arith.constant 0 : index
      %c0_10 = arith.constant 0 : index
      %19 = vector.load %arg9[%c0_9, %c0_10] : memref<64x1xf32, #tpu.memory_space<vmem>>, vector<64x1xf32>
      %cst_11 = arith.constant 3.125000e-02 : f32
      %20 = vector.broadcast %cst_11 : f32 to vector<64x1xf32>
      %21 = arith.mulf %19, %20 : vector<64x1xf32>
      %22 = arith.mulf %18, %18 : vector<64x1xf32>
      %23 = arith.subf %21, %22 : vector<64x1xf32>
      %cst_12 = arith.constant 0.000000e+00 : f32
      %24 = vector.broadcast %cst_12 : f32 to vector<64x1xf32>
      %25 = arith.maximumf %23, %24 : vector<64x1xf32>
      %c0_13 = arith.constant 0 : index
      %c0_14 = arith.constant 0 : index
      %26 = vector.load %arg4[%c0_13, %c0_14] : memref<64x1xf32, #tpu.memory_space<vmem>>, vector<64x1xf32>
      %cst_15 = arith.constant 9.99999974E-6 : f32
      %27 = vector.broadcast %cst_15 : f32 to vector<64x1xf32>
      %28 = arith.addf %25, %27 : vector<64x1xf32>
      %29 = math.rsqrt %28 : vector<64x1xf32>
      %30 = arith.mulf %26, %29 : vector<64x1xf32>
      %c0_16 = arith.constant 0 : index
      %c0_17 = arith.constant 0 : index
      %31 = vector.load %arg10[%c0_16, %c0_17] : memref<64x1xf32, #tpu.memory_space<vmem>>, vector<64x1xf32>
      tpu.vector_store %arg10[%c0_16, %c0_17], %30 {strides = array<i32>} : memref<64x1xf32, #tpu.memory_space<vmem>>, vector<64x1xf32>,
      %c0_18 = arith.constant 0 : index
      %c0_19 = arith.constant 0 : index
      %32 = vector.load %arg5[%c0_18, %c0_19] : memref<64x1xf32, #tpu.memory_space<vmem>>, vector<64x1xf32>
      %33 = arith.mulf %18, %30 : vector<64x1xf32>
      %34 = arith.subf %32, %33 : vector<64x1xf32>
      %c0_20 = arith.constant 0 : index
      %c0_21 = arith.constant 0 : index
      %35 = vector.load %arg11[%c0_20, %c0_21] : memref<64x1xf32, #tpu.memory_space<vmem>>, vector<64x1xf32>
      tpu.vector_store %arg11[%c0_20, %c0_21], %34 {strides = array<i32>} : memref<64x1xf32, #tpu.memory_space<vmem>>, vector<64x1xf32>,
    } else {
    }
    %c1_i32_6 = arith.constant 1 : i32
    %13 = arith.cmpi eq, %arg0, %c1_i32_6 : i32
    %14 = arith.extui %13 : i1 to i32
    %c0_i32_7 = arith.constant 0 : i32
    %15 = arith.cmpi ne, %14, %c0_i32_7 : i32
    scf.if %15 {
      %16 = arith.index_cast %arg1 : i32 to index
      %c0 = arith.constant 0 : index
      %c0_8 = arith.constant 0 : index
      %17 = vector.load %arg7[%16, %c0, %c0_8] : memref<1x64x128xf32, #tpu.memory_space<vmem>>, vector<1x64x128xf32>
      %18 = vector.shape_cast %17 : vector<1x64x128xf32> to vector<64x128xf32>
      %c0_9 = arith.constant 0 : index
      %c0_10 = arith.constant 0 : index
      %19 = vector.load %arg10[%c0_9, %c0_10] : memref<64x1xf32, #tpu.memory_space<vmem>>, vector<64x1xf32>
      %20 = vector.broadcast %19 : vector<64x1xf32> to vector<64x128xf32>
      %21 = arith.mulf %18, %20 : vector<64x128xf32>
      %c0_11 = arith.constant 0 : index
      %c0_12 = arith.constant 0 : index
      %22 = vector.load %arg11[%c0_11, %c0_12] : memref<64x1xf32, #tpu.memory_space<vmem>>, vector<64x1xf32>
      %23 = vector.broadcast %22 : vector<64x1xf32> to vector<64x128xf32>
      %24 = arith.addf %21, %23 : vector<64x128xf32>
      %cst = arith.constant 0.000000e+00 : f32
      %25 = vector.broadcast %cst : f32 to vector<64x128xf32>
      %26 = arith.maximumf %24, %25 : vector<64x128xf32>
      %27 = arith.truncf %26 : vector<64x128xf32> to vector<64x128xbf16>
      %c0_13 = arith.constant 0 : index
      %c0_14 = arith.constant 0 : index
      %28 = vector.load %arg6[%c0_13, %c0_14] : memref<64x128xbf16, #tpu.memory_space<vmem>>, vector<64x128xbf16>
      tpu.vector_store %arg6[%c0_13, %c0_14], %27 {strides = array<i32>} : memref<64x128xbf16, #tpu.memory_space<vmem>>, vector<64x128xbf16>,
    } else {
    }
    return
  }
  func.func @transform_0(%arg0: i32, %arg1: i32) -> (i32, i32) {
    %c1_i32 = arith.constant 1 : i32
    %0 = arith.subi %c1_i32, %arg0 : i32
    %1 = arith.muli %0, %arg1 : i32
    %c0_i32 = arith.constant 0 : i32
    %c0_i32_0 = arith.constant 0 : i32
    return %1, %c0_i32 : i32, i32
  }
  func.func @transform_1(%arg0: i32, %arg1: i32) -> (i32, i32) {
    %c0_i32 = arith.constant 0 : i32
    %c0_i32_0 = arith.constant 0 : i32
    %c0_i32_1 = arith.constant 0 : i32
    return %c0_i32, %c0_i32_0 : i32, i32
  }
  func.func @transform_2(%arg0: i32, %arg1: i32) -> (i32, i32) {
    %c0_i32 = arith.constant 0 : i32
    %c0_i32_0 = arith.constant 0 : i32
    %c0_i32_1 = arith.constant 0 : i32
    return %c0_i32, %c0_i32_0 : i32, i32
  }
  func.func @transform_3(%arg0: i32, %arg1: i32) -> (i32, i32) {
    %c0_i32 = arith.constant 0 : i32
    %c0_i32_0 = arith.constant 0 : i32
    %c0_i32_1 = arith.constant 0 : i32
    return %c0_i32, %c0_i32_0 : i32, i32
  }
  func.func @transform_4(%arg0: i32, %arg1: i32) -> (i32, i32) {
    %0 = arith.muli %arg1, %arg0 : i32
    %c0_i32 = arith.constant 0 : i32
    %c0_i32_0 = arith.constant 0 : i32
    return %c0_i32, %0 : i32, i32
  }
}

module attributes {stable_mosaic.version = 11 : i64} {
  func.func @_convt_bn_relu_kernel(%arg0: i32, %arg1: i32, %arg2: memref<128x1024xbf16, #tpu.memory_space<vmem>>, %arg3: memref<32x1024xbf16, #tpu.memory_space<vmem>>, %arg4: memref<32x1xf32, #tpu.memory_space<vmem>>, %arg5: memref<32x1xf32, #tpu.memory_space<vmem>>, %arg6: memref<32x128xbf16, #tpu.memory_space<vmem>>, %arg7: memref<1x32x128xf32, #tpu.memory_space<vmem>>, %arg8: memref<32x1xf32, #tpu.memory_space<vmem>>, %arg9: memref<32x1xf32, #tpu.memory_space<vmem>>, %arg10: memref<32x1xf32, #tpu.memory_space<vmem>>, %arg11: memref<32x1xf32, #tpu.memory_space<vmem>>) attributes {dimension_semantics = [#tpu.dimension_semantics<arbitrary>, #tpu.dimension_semantics<arbitrary>], iteration_bounds = array<i64: 2, 1>, scalar_prefetch = 0 : i64, scratch_operands = 5 : i64, tpu.core_type = #tpu.core_type<tc>, window_params = [{transform_indices = @transform_0, window_bounds = array<i64: 128, 1024>}, {pipeline_mode = #tpu.pipeline_mode<synchronous>, transform_indices = @transform_1, window_bounds = array<i64: 32, 1024>}, {pipeline_mode = #tpu.pipeline_mode<synchronous>, transform_indices = @transform_2, window_bounds = array<i64: 32, 1>}, {pipeline_mode = #tpu.pipeline_mode<synchronous>, transform_indices = @transform_3, window_bounds = array<i64: 32, 1>}, {transform_indices = @transform_4, window_bounds = array<i64: 32, 128>}]} {
    %c0_i32 = arith.constant 0 : i32
    %0 = arith.cmpi eq, %arg0, %c0_i32 : i32
    %c0_i32_0 = arith.constant 0 : i32
    %1 = arith.cmpi eq, %arg1, %c0_i32_0 : i32
    %2 = arith.andi %0, %1 : i1
    %3 = arith.extui %2 : i1 to i32
    %c0_i32_1 = arith.constant 0 : i32
    %4 = arith.cmpi ne, %3, %c0_i32_1 : i32
    scf.if %4 {
      %cst = arith.constant 0.000000e+00 : f32
      %16 = vector.broadcast %cst : f32 to vector<32x1xf32>
      %c0 = arith.constant 0 : index
      %c0_8 = arith.constant 0 : index
      %17 = vector.load %arg8[%c0, %c0_8] : memref<32x1xf32, #tpu.memory_space<vmem>>, vector<32x1xf32>
      tpu.vector_store %arg8[%c0, %c0_8], %16 {strides = array<i32>} : memref<32x1xf32, #tpu.memory_space<vmem>>, vector<32x1xf32>,
      %cst_9 = arith.constant 0.000000e+00 : f32
      %18 = vector.broadcast %cst_9 : f32 to vector<32x1xf32>
      %c0_10 = arith.constant 0 : index
      %c0_11 = arith.constant 0 : index
      %19 = vector.load %arg9[%c0_10, %c0_11] : memref<32x1xf32, #tpu.memory_space<vmem>>, vector<32x1xf32>
      tpu.vector_store %arg9[%c0_10, %c0_11], %18 {strides = array<i32>} : memref<32x1xf32, #tpu.memory_space<vmem>>, vector<32x1xf32>,
    } else {
    }
    %c0_i32_2 = arith.constant 0 : i32
    %5 = arith.cmpi eq, %arg0, %c0_i32_2 : i32
    %6 = arith.extui %5 : i1 to i32
    %c0_i32_3 = arith.constant 0 : i32
    %7 = arith.cmpi ne, %6, %c0_i32_3 : i32
    scf.if %7 {
      %c0 = arith.constant 0 : index
      %c0_8 = arith.constant 0 : index
      %16 = vector.load %arg3[%c0, %c0_8] : memref<32x1024xbf16, #tpu.memory_space<vmem>>, vector<32x1024xbf16>
      %c0_9 = arith.constant 0 : index
      %c0_10 = arith.constant 0 : index
      %17 = vector.load %arg2[%c0_9, %c0_10] : memref<128x1024xbf16, #tpu.memory_space<vmem>>, vector<128x1024xbf16>
      %cst = arith.constant dense<0.000000e+00> : vector<32x128xf32>
      %18 = tpu.matmul %16, %17, %cst {dimension_numbers = #tpu.dot_dimension_numbers<[1], [1], [0], [0], [0, 0, 1, 0], [], []>} : vector<32x1024xbf16>, vector<128x1024xbf16>, vector<32x128xf32> -> vector<32x128xf32>
      %19 = arith.index_cast %arg1 : i32 to index
      %c0_11 = arith.constant 0 : index
      %c0_12 = arith.constant 0 : index
      %20 = vector.load %arg7[%19, %c0_11, %c0_12] : memref<1x32x128xf32, #tpu.memory_space<vmem>>, vector<1x32x128xf32>
      %21 = vector.shape_cast %20 : vector<1x32x128xf32> to vector<32x128xf32>
      %22 = vector.shape_cast %18 : vector<32x128xf32> to vector<1x32x128xf32>
      tpu.vector_store %arg7[%19, %c0_11, %c0_12], %22 {strides = array<i32>} : memref<1x32x128xf32, #tpu.memory_space<vmem>>, vector<1x32x128xf32>,
      %c0_13 = arith.constant 0 : index
      %c0_14 = arith.constant 0 : index
      %23 = vector.load %arg8[%c0_13, %c0_14] : memref<32x1xf32, #tpu.memory_space<vmem>>, vector<32x1xf32>
      %cst_15 = arith.constant dense<0.000000e+00> : vector<32xf32>
      %24 = vector.multi_reduction <add>, %18, %cst_15 [1] : vector<32x128xf32> to vector<32xf32>
      %25 = vector.shape_cast %24 : vector<32xf32> to vector<32x1xf32>
      %26 = arith.addf %23, %25 : vector<32x1xf32>
      %c0_16 = arith.constant 0 : index
      %c0_17 = arith.constant 0 : index
      %27 = vector.load %arg8[%c0_16, %c0_17] : memref<32x1xf32, #tpu.memory_space<vmem>>, vector<32x1xf32>
      tpu.vector_store %arg8[%c0_16, %c0_17], %26 {strides = array<i32>} : memref<32x1xf32, #tpu.memory_space<vmem>>, vector<32x1xf32>,
      %c0_18 = arith.constant 0 : index
      %c0_19 = arith.constant 0 : index
      %28 = vector.load %arg9[%c0_18, %c0_19] : memref<32x1xf32, #tpu.memory_space<vmem>>, vector<32x1xf32>
      %29 = arith.mulf %18, %18 : vector<32x128xf32>
      %cst_20 = arith.constant dense<0.000000e+00> : vector<32xf32>
      %30 = vector.multi_reduction <add>, %29, %cst_20 [1] : vector<32x128xf32> to vector<32xf32>
      %31 = vector.shape_cast %30 : vector<32xf32> to vector<32x1xf32>
      %32 = arith.addf %28, %31 : vector<32x1xf32>
      %c0_21 = arith.constant 0 : index
      %c0_22 = arith.constant 0 : index
      %33 = vector.load %arg9[%c0_21, %c0_22] : memref<32x1xf32, #tpu.memory_space<vmem>>, vector<32x1xf32>
      tpu.vector_store %arg9[%c0_21, %c0_22], %32 {strides = array<i32>} : memref<32x1xf32, #tpu.memory_space<vmem>>, vector<32x1xf32>,
    } else {
    }
    %c1_i32 = arith.constant 1 : i32
    %8 = arith.cmpi eq, %arg0, %c1_i32 : i32
    %c0_i32_4 = arith.constant 0 : i32
    %9 = arith.cmpi eq, %arg1, %c0_i32_4 : i32
    %10 = arith.andi %8, %9 : i1
    %11 = arith.extui %10 : i1 to i32
    %c0_i32_5 = arith.constant 0 : i32
    %12 = arith.cmpi ne, %11, %c0_i32_5 : i32
    scf.if %12 {
      %c0 = arith.constant 0 : index
      %c0_8 = arith.constant 0 : index
      %16 = vector.load %arg8[%c0, %c0_8] : memref<32x1xf32, #tpu.memory_space<vmem>>, vector<32x1xf32>
      %cst = arith.constant 7.812500e-03 : f32
      %17 = vector.broadcast %cst : f32 to vector<32x1xf32>
      %18 = arith.mulf %16, %17 : vector<32x1xf32>
      %c0_9 = arith.constant 0 : index
      %c0_10 = arith.constant 0 : index
      %19 = vector.load %arg9[%c0_9, %c0_10] : memref<32x1xf32, #tpu.memory_space<vmem>>, vector<32x1xf32>
      %cst_11 = arith.constant 7.812500e-03 : f32
      %20 = vector.broadcast %cst_11 : f32 to vector<32x1xf32>
      %21 = arith.mulf %19, %20 : vector<32x1xf32>
      %22 = arith.mulf %18, %18 : vector<32x1xf32>
      %23 = arith.subf %21, %22 : vector<32x1xf32>
      %cst_12 = arith.constant 0.000000e+00 : f32
      %24 = vector.broadcast %cst_12 : f32 to vector<32x1xf32>
      %25 = arith.maximumf %23, %24 : vector<32x1xf32>
      %c0_13 = arith.constant 0 : index
      %c0_14 = arith.constant 0 : index
      %26 = vector.load %arg4[%c0_13, %c0_14] : memref<32x1xf32, #tpu.memory_space<vmem>>, vector<32x1xf32>
      %cst_15 = arith.constant 9.99999974E-6 : f32
      %27 = vector.broadcast %cst_15 : f32 to vector<32x1xf32>
      %28 = arith.addf %25, %27 : vector<32x1xf32>
      %29 = math.rsqrt %28 : vector<32x1xf32>
      %30 = arith.mulf %26, %29 : vector<32x1xf32>
      %c0_16 = arith.constant 0 : index
      %c0_17 = arith.constant 0 : index
      %31 = vector.load %arg10[%c0_16, %c0_17] : memref<32x1xf32, #tpu.memory_space<vmem>>, vector<32x1xf32>
      tpu.vector_store %arg10[%c0_16, %c0_17], %30 {strides = array<i32>} : memref<32x1xf32, #tpu.memory_space<vmem>>, vector<32x1xf32>,
      %c0_18 = arith.constant 0 : index
      %c0_19 = arith.constant 0 : index
      %32 = vector.load %arg5[%c0_18, %c0_19] : memref<32x1xf32, #tpu.memory_space<vmem>>, vector<32x1xf32>
      %33 = arith.mulf %18, %30 : vector<32x1xf32>
      %34 = arith.subf %32, %33 : vector<32x1xf32>
      %c0_20 = arith.constant 0 : index
      %c0_21 = arith.constant 0 : index
      %35 = vector.load %arg11[%c0_20, %c0_21] : memref<32x1xf32, #tpu.memory_space<vmem>>, vector<32x1xf32>
      tpu.vector_store %arg11[%c0_20, %c0_21], %34 {strides = array<i32>} : memref<32x1xf32, #tpu.memory_space<vmem>>, vector<32x1xf32>,
    } else {
    }
    %c1_i32_6 = arith.constant 1 : i32
    %13 = arith.cmpi eq, %arg0, %c1_i32_6 : i32
    %14 = arith.extui %13 : i1 to i32
    %c0_i32_7 = arith.constant 0 : i32
    %15 = arith.cmpi ne, %14, %c0_i32_7 : i32
    scf.if %15 {
      %16 = arith.index_cast %arg1 : i32 to index
      %c0 = arith.constant 0 : index
      %c0_8 = arith.constant 0 : index
      %17 = vector.load %arg7[%16, %c0, %c0_8] : memref<1x32x128xf32, #tpu.memory_space<vmem>>, vector<1x32x128xf32>
      %18 = vector.shape_cast %17 : vector<1x32x128xf32> to vector<32x128xf32>
      %c0_9 = arith.constant 0 : index
      %c0_10 = arith.constant 0 : index
      %19 = vector.load %arg10[%c0_9, %c0_10] : memref<32x1xf32, #tpu.memory_space<vmem>>, vector<32x1xf32>
      %20 = vector.broadcast %19 : vector<32x1xf32> to vector<32x128xf32>
      %21 = arith.mulf %18, %20 : vector<32x128xf32>
      %c0_11 = arith.constant 0 : index
      %c0_12 = arith.constant 0 : index
      %22 = vector.load %arg11[%c0_11, %c0_12] : memref<32x1xf32, #tpu.memory_space<vmem>>, vector<32x1xf32>
      %23 = vector.broadcast %22 : vector<32x1xf32> to vector<32x128xf32>
      %24 = arith.addf %21, %23 : vector<32x128xf32>
      %cst = arith.constant 0.000000e+00 : f32
      %25 = vector.broadcast %cst : f32 to vector<32x128xf32>
      %26 = arith.maximumf %24, %25 : vector<32x128xf32>
      %27 = arith.truncf %26 : vector<32x128xf32> to vector<32x128xbf16>
      %c0_13 = arith.constant 0 : index
      %c0_14 = arith.constant 0 : index
      %28 = vector.load %arg6[%c0_13, %c0_14] : memref<32x128xbf16, #tpu.memory_space<vmem>>, vector<32x128xbf16>
      tpu.vector_store %arg6[%c0_13, %c0_14], %27 {strides = array<i32>} : memref<32x128xbf16, #tpu.memory_space<vmem>>, vector<32x128xbf16>,
    } else {
    }
    return
  }
  func.func @transform_0(%arg0: i32, %arg1: i32) -> (i32, i32) {
    %c1_i32 = arith.constant 1 : i32
    %0 = arith.subi %c1_i32, %arg0 : i32
    %1 = arith.muli %0, %arg1 : i32
    %c0_i32 = arith.constant 0 : i32
    %c0_i32_0 = arith.constant 0 : i32
    return %1, %c0_i32 : i32, i32
  }
  func.func @transform_1(%arg0: i32, %arg1: i32) -> (i32, i32) {
    %c0_i32 = arith.constant 0 : i32
    %c0_i32_0 = arith.constant 0 : i32
    %c0_i32_1 = arith.constant 0 : i32
    return %c0_i32, %c0_i32_0 : i32, i32
  }
  func.func @transform_2(%arg0: i32, %arg1: i32) -> (i32, i32) {
    %c0_i32 = arith.constant 0 : i32
    %c0_i32_0 = arith.constant 0 : i32
    %c0_i32_1 = arith.constant 0 : i32
    return %c0_i32, %c0_i32_0 : i32, i32
  }
  func.func @transform_3(%arg0: i32, %arg1: i32) -> (i32, i32) {
    %c0_i32 = arith.constant 0 : i32
    %c0_i32_0 = arith.constant 0 : i32
    %c0_i32_1 = arith.constant 0 : i32
    return %c0_i32, %c0_i32_0 : i32, i32
  }
  func.func @transform_4(%arg0: i32, %arg1: i32) -> (i32, i32) {
    %0 = arith.muli %arg1, %arg0 : i32
    %c0_i32 = arith.constant 0 : i32
    %c0_i32_0 = arith.constant 0 : i32
    return %c0_i32, %0 : i32, i32
  }
}

module attributes {stable_mosaic.version = 11 : i64} {
  func.func @_convt_bn_relu_kernel(%arg0: i32, %arg1: i32, %arg2: memref<512x512xbf16, #tpu.memory_space<vmem>>, %arg3: memref<16x512xbf16, #tpu.memory_space<vmem>>, %arg4: memref<16x1xf32, #tpu.memory_space<vmem>>, %arg5: memref<16x1xf32, #tpu.memory_space<vmem>>, %arg6: memref<16x512xbf16, #tpu.memory_space<vmem>>, %arg7: memref<1x16x512xf32, #tpu.memory_space<vmem>>, %arg8: memref<16x1xf32, #tpu.memory_space<vmem>>, %arg9: memref<16x1xf32, #tpu.memory_space<vmem>>, %arg10: memref<16x1xf32, #tpu.memory_space<vmem>>, %arg11: memref<16x1xf32, #tpu.memory_space<vmem>>) attributes {dimension_semantics = [#tpu.dimension_semantics<arbitrary>, #tpu.dimension_semantics<arbitrary>], iteration_bounds = array<i64: 2, 1>, scalar_prefetch = 0 : i64, scratch_operands = 5 : i64, tpu.core_type = #tpu.core_type<tc>, window_params = [{transform_indices = @transform_0, window_bounds = array<i64: 512, 512>}, {pipeline_mode = #tpu.pipeline_mode<synchronous>, transform_indices = @transform_1, window_bounds = array<i64: 16, 512>}, {pipeline_mode = #tpu.pipeline_mode<synchronous>, transform_indices = @transform_2, window_bounds = array<i64: 16, 1>}, {pipeline_mode = #tpu.pipeline_mode<synchronous>, transform_indices = @transform_3, window_bounds = array<i64: 16, 1>}, {transform_indices = @transform_4, window_bounds = array<i64: 16, 512>}]} {
    %c0_i32 = arith.constant 0 : i32
    %0 = arith.cmpi eq, %arg0, %c0_i32 : i32
    %c0_i32_0 = arith.constant 0 : i32
    %1 = arith.cmpi eq, %arg1, %c0_i32_0 : i32
    %2 = arith.andi %0, %1 : i1
    %3 = arith.extui %2 : i1 to i32
    %c0_i32_1 = arith.constant 0 : i32
    %4 = arith.cmpi ne, %3, %c0_i32_1 : i32
    scf.if %4 {
      %cst = arith.constant 0.000000e+00 : f32
      %16 = vector.broadcast %cst : f32 to vector<16x1xf32>
      %c0 = arith.constant 0 : index
      %c0_8 = arith.constant 0 : index
      %17 = vector.load %arg8[%c0, %c0_8] : memref<16x1xf32, #tpu.memory_space<vmem>>, vector<16x1xf32>
      tpu.vector_store %arg8[%c0, %c0_8], %16 {strides = array<i32>} : memref<16x1xf32, #tpu.memory_space<vmem>>, vector<16x1xf32>,
      %cst_9 = arith.constant 0.000000e+00 : f32
      %18 = vector.broadcast %cst_9 : f32 to vector<16x1xf32>
      %c0_10 = arith.constant 0 : index
      %c0_11 = arith.constant 0 : index
      %19 = vector.load %arg9[%c0_10, %c0_11] : memref<16x1xf32, #tpu.memory_space<vmem>>, vector<16x1xf32>
      tpu.vector_store %arg9[%c0_10, %c0_11], %18 {strides = array<i32>} : memref<16x1xf32, #tpu.memory_space<vmem>>, vector<16x1xf32>,
    } else {
    }
    %c0_i32_2 = arith.constant 0 : i32
    %5 = arith.cmpi eq, %arg0, %c0_i32_2 : i32
    %6 = arith.extui %5 : i1 to i32
    %c0_i32_3 = arith.constant 0 : i32
    %7 = arith.cmpi ne, %6, %c0_i32_3 : i32
    scf.if %7 {
      %c0 = arith.constant 0 : index
      %c0_8 = arith.constant 0 : index
      %16 = vector.load %arg3[%c0, %c0_8] : memref<16x512xbf16, #tpu.memory_space<vmem>>, vector<16x512xbf16>
      %c0_9 = arith.constant 0 : index
      %c0_10 = arith.constant 0 : index
      %17 = vector.load %arg2[%c0_9, %c0_10] : memref<512x512xbf16, #tpu.memory_space<vmem>>, vector<512x512xbf16>
      %cst = arith.constant dense<0.000000e+00> : vector<16x512xf32>
      %18 = tpu.matmul %16, %17, %cst {dimension_numbers = #tpu.dot_dimension_numbers<[1], [1], [0], [0], [0, 0, 1, 0], [], []>} : vector<16x512xbf16>, vector<512x512xbf16>, vector<16x512xf32> -> vector<16x512xf32>
      %19 = arith.index_cast %arg1 : i32 to index
      %c0_11 = arith.constant 0 : index
      %c0_12 = arith.constant 0 : index
      %20 = vector.load %arg7[%19, %c0_11, %c0_12] : memref<1x16x512xf32, #tpu.memory_space<vmem>>, vector<1x16x512xf32>
      %21 = vector.shape_cast %20 : vector<1x16x512xf32> to vector<16x512xf32>
      %22 = vector.shape_cast %18 : vector<16x512xf32> to vector<1x16x512xf32>
      tpu.vector_store %arg7[%19, %c0_11, %c0_12], %22 {strides = array<i32>} : memref<1x16x512xf32, #tpu.memory_space<vmem>>, vector<1x16x512xf32>,
      %c0_13 = arith.constant 0 : index
      %c0_14 = arith.constant 0 : index
      %23 = vector.load %arg8[%c0_13, %c0_14] : memref<16x1xf32, #tpu.memory_space<vmem>>, vector<16x1xf32>
      %cst_15 = arith.constant dense<0.000000e+00> : vector<16xf32>
      %24 = vector.multi_reduction <add>, %18, %cst_15 [1] : vector<16x512xf32> to vector<16xf32>
      %25 = vector.shape_cast %24 : vector<16xf32> to vector<16x1xf32>
      %26 = arith.addf %23, %25 : vector<16x1xf32>
      %c0_16 = arith.constant 0 : index
      %c0_17 = arith.constant 0 : index
      %27 = vector.load %arg8[%c0_16, %c0_17] : memref<16x1xf32, #tpu.memory_space<vmem>>, vector<16x1xf32>
      tpu.vector_store %arg8[%c0_16, %c0_17], %26 {strides = array<i32>} : memref<16x1xf32, #tpu.memory_space<vmem>>, vector<16x1xf32>,
      %c0_18 = arith.constant 0 : index
      %c0_19 = arith.constant 0 : index
      %28 = vector.load %arg9[%c0_18, %c0_19] : memref<16x1xf32, #tpu.memory_space<vmem>>, vector<16x1xf32>
      %29 = arith.mulf %18, %18 : vector<16x512xf32>
      %cst_20 = arith.constant dense<0.000000e+00> : vector<16xf32>
      %30 = vector.multi_reduction <add>, %29, %cst_20 [1] : vector<16x512xf32> to vector<16xf32>
      %31 = vector.shape_cast %30 : vector<16xf32> to vector<16x1xf32>
      %32 = arith.addf %28, %31 : vector<16x1xf32>
      %c0_21 = arith.constant 0 : index
      %c0_22 = arith.constant 0 : index
      %33 = vector.load %arg9[%c0_21, %c0_22] : memref<16x1xf32, #tpu.memory_space<vmem>>, vector<16x1xf32>
      tpu.vector_store %arg9[%c0_21, %c0_22], %32 {strides = array<i32>} : memref<16x1xf32, #tpu.memory_space<vmem>>, vector<16x1xf32>,
    } else {
    }
    %c1_i32 = arith.constant 1 : i32
    %8 = arith.cmpi eq, %arg0, %c1_i32 : i32
    %c0_i32_4 = arith.constant 0 : i32
    %9 = arith.cmpi eq, %arg1, %c0_i32_4 : i32
    %10 = arith.andi %8, %9 : i1
    %11 = arith.extui %10 : i1 to i32
    %c0_i32_5 = arith.constant 0 : i32
    %12 = arith.cmpi ne, %11, %c0_i32_5 : i32
    scf.if %12 {
      %c0 = arith.constant 0 : index
      %c0_8 = arith.constant 0 : index
      %16 = vector.load %arg8[%c0, %c0_8] : memref<16x1xf32, #tpu.memory_space<vmem>>, vector<16x1xf32>
      %cst = arith.constant 0.001953125 : f32
      %17 = vector.broadcast %cst : f32 to vector<16x1xf32>
      %18 = arith.mulf %16, %17 : vector<16x1xf32>
      %c0_9 = arith.constant 0 : index
      %c0_10 = arith.constant 0 : index
      %19 = vector.load %arg9[%c0_9, %c0_10] : memref<16x1xf32, #tpu.memory_space<vmem>>, vector<16x1xf32>
      %cst_11 = arith.constant 0.001953125 : f32
      %20 = vector.broadcast %cst_11 : f32 to vector<16x1xf32>
      %21 = arith.mulf %19, %20 : vector<16x1xf32>
      %22 = arith.mulf %18, %18 : vector<16x1xf32>
      %23 = arith.subf %21, %22 : vector<16x1xf32>
      %cst_12 = arith.constant 0.000000e+00 : f32
      %24 = vector.broadcast %cst_12 : f32 to vector<16x1xf32>
      %25 = arith.maximumf %23, %24 : vector<16x1xf32>
      %c0_13 = arith.constant 0 : index
      %c0_14 = arith.constant 0 : index
      %26 = vector.load %arg4[%c0_13, %c0_14] : memref<16x1xf32, #tpu.memory_space<vmem>>, vector<16x1xf32>
      %cst_15 = arith.constant 9.99999974E-6 : f32
      %27 = vector.broadcast %cst_15 : f32 to vector<16x1xf32>
      %28 = arith.addf %25, %27 : vector<16x1xf32>
      %29 = math.rsqrt %28 : vector<16x1xf32>
      %30 = arith.mulf %26, %29 : vector<16x1xf32>
      %c0_16 = arith.constant 0 : index
      %c0_17 = arith.constant 0 : index
      %31 = vector.load %arg10[%c0_16, %c0_17] : memref<16x1xf32, #tpu.memory_space<vmem>>, vector<16x1xf32>
      tpu.vector_store %arg10[%c0_16, %c0_17], %30 {strides = array<i32>} : memref<16x1xf32, #tpu.memory_space<vmem>>, vector<16x1xf32>,
      %c0_18 = arith.constant 0 : index
      %c0_19 = arith.constant 0 : index
      %32 = vector.load %arg5[%c0_18, %c0_19] : memref<16x1xf32, #tpu.memory_space<vmem>>, vector<16x1xf32>
      %33 = arith.mulf %18, %30 : vector<16x1xf32>
      %34 = arith.subf %32, %33 : vector<16x1xf32>
      %c0_20 = arith.constant 0 : index
      %c0_21 = arith.constant 0 : index
      %35 = vector.load %arg11[%c0_20, %c0_21] : memref<16x1xf32, #tpu.memory_space<vmem>>, vector<16x1xf32>
      tpu.vector_store %arg11[%c0_20, %c0_21], %34 {strides = array<i32>} : memref<16x1xf32, #tpu.memory_space<vmem>>, vector<16x1xf32>,
    } else {
    }
    %c1_i32_6 = arith.constant 1 : i32
    %13 = arith.cmpi eq, %arg0, %c1_i32_6 : i32
    %14 = arith.extui %13 : i1 to i32
    %c0_i32_7 = arith.constant 0 : i32
    %15 = arith.cmpi ne, %14, %c0_i32_7 : i32
    scf.if %15 {
      %16 = arith.index_cast %arg1 : i32 to index
      %c0 = arith.constant 0 : index
      %c0_8 = arith.constant 0 : index
      %17 = vector.load %arg7[%16, %c0, %c0_8] : memref<1x16x512xf32, #tpu.memory_space<vmem>>, vector<1x16x512xf32>
      %18 = vector.shape_cast %17 : vector<1x16x512xf32> to vector<16x512xf32>
      %c0_9 = arith.constant 0 : index
      %c0_10 = arith.constant 0 : index
      %19 = vector.load %arg10[%c0_9, %c0_10] : memref<16x1xf32, #tpu.memory_space<vmem>>, vector<16x1xf32>
      %20 = vector.broadcast %19 : vector<16x1xf32> to vector<16x512xf32>
      %21 = arith.mulf %18, %20 : vector<16x512xf32>
      %c0_11 = arith.constant 0 : index
      %c0_12 = arith.constant 0 : index
      %22 = vector.load %arg11[%c0_11, %c0_12] : memref<16x1xf32, #tpu.memory_space<vmem>>, vector<16x1xf32>
      %23 = vector.broadcast %22 : vector<16x1xf32> to vector<16x512xf32>
      %24 = arith.addf %21, %23 : vector<16x512xf32>
      %cst = arith.constant 0.000000e+00 : f32
      %25 = vector.broadcast %cst : f32 to vector<16x512xf32>
      %26 = arith.maximumf %24, %25 : vector<16x512xf32>
      %27 = arith.truncf %26 : vector<16x512xf32> to vector<16x512xbf16>
      %c0_13 = arith.constant 0 : index
      %c0_14 = arith.constant 0 : index
      %28 = vector.load %arg6[%c0_13, %c0_14] : memref<16x512xbf16, #tpu.memory_space<vmem>>, vector<16x512xbf16>
      tpu.vector_store %arg6[%c0_13, %c0_14], %27 {strides = array<i32>} : memref<16x512xbf16, #tpu.memory_space<vmem>>, vector<16x512xbf16>,
    } else {
    }
    return
  }
  func.func @transform_0(%arg0: i32, %arg1: i32) -> (i32, i32) {
    %c1_i32 = arith.constant 1 : i32
    %0 = arith.subi %c1_i32, %arg0 : i32
    %1 = arith.muli %0, %arg1 : i32
    %c0_i32 = arith.constant 0 : i32
    %c0_i32_0 = arith.constant 0 : i32
    return %1, %c0_i32 : i32, i32
  }
  func.func @transform_1(%arg0: i32, %arg1: i32) -> (i32, i32) {
    %c0_i32 = arith.constant 0 : i32
    %c0_i32_0 = arith.constant 0 : i32
    %c0_i32_1 = arith.constant 0 : i32
    return %c0_i32, %c0_i32_0 : i32, i32
  }
  func.func @transform_2(%arg0: i32, %arg1: i32) -> (i32, i32) {
    %c0_i32 = arith.constant 0 : i32
    %c0_i32_0 = arith.constant 0 : i32
    %c0_i32_1 = arith.constant 0 : i32
    return %c0_i32, %c0_i32_0 : i32, i32
  }
  func.func @transform_3(%arg0: i32, %arg1: i32) -> (i32, i32) {
    %c0_i32 = arith.constant 0 : i32
    %c0_i32_0 = arith.constant 0 : i32
    %c0_i32_1 = arith.constant 0 : i32
    return %c0_i32, %c0_i32_0 : i32, i32
  }
  func.func @transform_4(%arg0: i32, %arg1: i32) -> (i32, i32) {
    %0 = arith.muli %arg1, %arg0 : i32
    %c0_i32 = arith.constant 0 : i32
    %c0_i32_0 = arith.constant 0 : i32
    return %c0_i32, %0 : i32, i32
  }
}

module attributes {stable_mosaic.version = 11 : i64} {
  func.func @_convt_bn_relu_kernel(%arg0: i32, %arg1: i32, %arg2: memref<2048x256xbf16, #tpu.memory_space<vmem>>, %arg3: memref<8x256xbf16, #tpu.memory_space<vmem>>, %arg4: memref<8x1xf32, #tpu.memory_space<vmem>>, %arg5: memref<8x1xf32, #tpu.memory_space<vmem>>, %arg6: memref<8x2048xbf16, #tpu.memory_space<vmem>>, %arg7: memref<1x8x2048xf32, #tpu.memory_space<vmem>>, %arg8: memref<8x1xf32, #tpu.memory_space<vmem>>, %arg9: memref<8x1xf32, #tpu.memory_space<vmem>>, %arg10: memref<8x1xf32, #tpu.memory_space<vmem>>, %arg11: memref<8x1xf32, #tpu.memory_space<vmem>>) attributes {dimension_semantics = [#tpu.dimension_semantics<arbitrary>, #tpu.dimension_semantics<arbitrary>], iteration_bounds = array<i64: 2, 1>, scalar_prefetch = 0 : i64, scratch_operands = 5 : i64, tpu.core_type = #tpu.core_type<tc>, window_params = [{transform_indices = @transform_0, window_bounds = array<i64: 2048, 256>}, {pipeline_mode = #tpu.pipeline_mode<synchronous>, transform_indices = @transform_1, window_bounds = array<i64: 8, 256>}, {pipeline_mode = #tpu.pipeline_mode<synchronous>, transform_indices = @transform_2, window_bounds = array<i64: 8, 1>}, {pipeline_mode = #tpu.pipeline_mode<synchronous>, transform_indices = @transform_3, window_bounds = array<i64: 8, 1>}, {transform_indices = @transform_4, window_bounds = array<i64: 8, 2048>}]} {
    %c0_i32 = arith.constant 0 : i32
    %0 = arith.cmpi eq, %arg0, %c0_i32 : i32
    %c0_i32_0 = arith.constant 0 : i32
    %1 = arith.cmpi eq, %arg1, %c0_i32_0 : i32
    %2 = arith.andi %0, %1 : i1
    %3 = arith.extui %2 : i1 to i32
    %c0_i32_1 = arith.constant 0 : i32
    %4 = arith.cmpi ne, %3, %c0_i32_1 : i32
    scf.if %4 {
      %cst = arith.constant 0.000000e+00 : f32
      %16 = vector.broadcast %cst : f32 to vector<8x1xf32>
      %c0 = arith.constant 0 : index
      %c0_8 = arith.constant 0 : index
      %17 = vector.load %arg8[%c0, %c0_8] : memref<8x1xf32, #tpu.memory_space<vmem>>, vector<8x1xf32>
      tpu.vector_store %arg8[%c0, %c0_8], %16 {strides = array<i32>} : memref<8x1xf32, #tpu.memory_space<vmem>>, vector<8x1xf32>,
      %cst_9 = arith.constant 0.000000e+00 : f32
      %18 = vector.broadcast %cst_9 : f32 to vector<8x1xf32>
      %c0_10 = arith.constant 0 : index
      %c0_11 = arith.constant 0 : index
      %19 = vector.load %arg9[%c0_10, %c0_11] : memref<8x1xf32, #tpu.memory_space<vmem>>, vector<8x1xf32>
      tpu.vector_store %arg9[%c0_10, %c0_11], %18 {strides = array<i32>} : memref<8x1xf32, #tpu.memory_space<vmem>>, vector<8x1xf32>,
    } else {
    }
    %c0_i32_2 = arith.constant 0 : i32
    %5 = arith.cmpi eq, %arg0, %c0_i32_2 : i32
    %6 = arith.extui %5 : i1 to i32
    %c0_i32_3 = arith.constant 0 : i32
    %7 = arith.cmpi ne, %6, %c0_i32_3 : i32
    scf.if %7 {
      %c0 = arith.constant 0 : index
      %c0_8 = arith.constant 0 : index
      %16 = vector.load %arg3[%c0, %c0_8] : memref<8x256xbf16, #tpu.memory_space<vmem>>, vector<8x256xbf16>
      %c0_9 = arith.constant 0 : index
      %c0_10 = arith.constant 0 : index
      %17 = vector.load %arg2[%c0_9, %c0_10] : memref<2048x256xbf16, #tpu.memory_space<vmem>>, vector<2048x256xbf16>
      %cst = arith.constant dense<0.000000e+00> : vector<8x2048xf32>
      %18 = tpu.matmul %16, %17, %cst {dimension_numbers = #tpu.dot_dimension_numbers<[1], [1], [0], [0], [0, 0, 1, 0], [], []>} : vector<8x256xbf16>, vector<2048x256xbf16>, vector<8x2048xf32> -> vector<8x2048xf32>
      %19 = arith.index_cast %arg1 : i32 to index
      %c0_11 = arith.constant 0 : index
      %c0_12 = arith.constant 0 : index
      %20 = vector.load %arg7[%19, %c0_11, %c0_12] : memref<1x8x2048xf32, #tpu.memory_space<vmem>>, vector<1x8x2048xf32>
      %21 = vector.shape_cast %20 : vector<1x8x2048xf32> to vector<8x2048xf32>
      %22 = vector.shape_cast %18 : vector<8x2048xf32> to vector<1x8x2048xf32>
      tpu.vector_store %arg7[%19, %c0_11, %c0_12], %22 {strides = array<i32>} : memref<1x8x2048xf32, #tpu.memory_space<vmem>>, vector<1x8x2048xf32>,
      %c0_13 = arith.constant 0 : index
      %c0_14 = arith.constant 0 : index
      %23 = vector.load %arg8[%c0_13, %c0_14] : memref<8x1xf32, #tpu.memory_space<vmem>>, vector<8x1xf32>
      %cst_15 = arith.constant dense<0.000000e+00> : vector<8xf32>
      %24 = vector.multi_reduction <add>, %18, %cst_15 [1] : vector<8x2048xf32> to vector<8xf32>
      %25 = vector.shape_cast %24 : vector<8xf32> to vector<8x1xf32>
      %26 = arith.addf %23, %25 : vector<8x1xf32>
      %c0_16 = arith.constant 0 : index
      %c0_17 = arith.constant 0 : index
      %27 = vector.load %arg8[%c0_16, %c0_17] : memref<8x1xf32, #tpu.memory_space<vmem>>, vector<8x1xf32>
      tpu.vector_store %arg8[%c0_16, %c0_17], %26 {strides = array<i32>} : memref<8x1xf32, #tpu.memory_space<vmem>>, vector<8x1xf32>,
      %c0_18 = arith.constant 0 : index
      %c0_19 = arith.constant 0 : index
      %28 = vector.load %arg9[%c0_18, %c0_19] : memref<8x1xf32, #tpu.memory_space<vmem>>, vector<8x1xf32>
      %29 = arith.mulf %18, %18 : vector<8x2048xf32>
      %cst_20 = arith.constant dense<0.000000e+00> : vector<8xf32>
      %30 = vector.multi_reduction <add>, %29, %cst_20 [1] : vector<8x2048xf32> to vector<8xf32>
      %31 = vector.shape_cast %30 : vector<8xf32> to vector<8x1xf32>
      %32 = arith.addf %28, %31 : vector<8x1xf32>
      %c0_21 = arith.constant 0 : index
      %c0_22 = arith.constant 0 : index
      %33 = vector.load %arg9[%c0_21, %c0_22] : memref<8x1xf32, #tpu.memory_space<vmem>>, vector<8x1xf32>
      tpu.vector_store %arg9[%c0_21, %c0_22], %32 {strides = array<i32>} : memref<8x1xf32, #tpu.memory_space<vmem>>, vector<8x1xf32>,
    } else {
    }
    %c1_i32 = arith.constant 1 : i32
    %8 = arith.cmpi eq, %arg0, %c1_i32 : i32
    %c0_i32_4 = arith.constant 0 : i32
    %9 = arith.cmpi eq, %arg1, %c0_i32_4 : i32
    %10 = arith.andi %8, %9 : i1
    %11 = arith.extui %10 : i1 to i32
    %c0_i32_5 = arith.constant 0 : i32
    %12 = arith.cmpi ne, %11, %c0_i32_5 : i32
    scf.if %12 {
      %c0 = arith.constant 0 : index
      %c0_8 = arith.constant 0 : index
      %16 = vector.load %arg8[%c0, %c0_8] : memref<8x1xf32, #tpu.memory_space<vmem>>, vector<8x1xf32>
      %cst = arith.constant 4.8828125E-4 : f32
      %17 = vector.broadcast %cst : f32 to vector<8x1xf32>
      %18 = arith.mulf %16, %17 : vector<8x1xf32>
      %c0_9 = arith.constant 0 : index
      %c0_10 = arith.constant 0 : index
      %19 = vector.load %arg9[%c0_9, %c0_10] : memref<8x1xf32, #tpu.memory_space<vmem>>, vector<8x1xf32>
      %cst_11 = arith.constant 4.8828125E-4 : f32
      %20 = vector.broadcast %cst_11 : f32 to vector<8x1xf32>
      %21 = arith.mulf %19, %20 : vector<8x1xf32>
      %22 = arith.mulf %18, %18 : vector<8x1xf32>
      %23 = arith.subf %21, %22 : vector<8x1xf32>
      %cst_12 = arith.constant 0.000000e+00 : f32
      %24 = vector.broadcast %cst_12 : f32 to vector<8x1xf32>
      %25 = arith.maximumf %23, %24 : vector<8x1xf32>
      %c0_13 = arith.constant 0 : index
      %c0_14 = arith.constant 0 : index
      %26 = vector.load %arg4[%c0_13, %c0_14] : memref<8x1xf32, #tpu.memory_space<vmem>>, vector<8x1xf32>
      %cst_15 = arith.constant 9.99999974E-6 : f32
      %27 = vector.broadcast %cst_15 : f32 to vector<8x1xf32>
      %28 = arith.addf %25, %27 : vector<8x1xf32>
      %29 = math.rsqrt %28 : vector<8x1xf32>
      %30 = arith.mulf %26, %29 : vector<8x1xf32>
      %c0_16 = arith.constant 0 : index
      %c0_17 = arith.constant 0 : index
      %31 = vector.load %arg10[%c0_16, %c0_17] : memref<8x1xf32, #tpu.memory_space<vmem>>, vector<8x1xf32>
      tpu.vector_store %arg10[%c0_16, %c0_17], %30 {strides = array<i32>} : memref<8x1xf32, #tpu.memory_space<vmem>>, vector<8x1xf32>,
      %c0_18 = arith.constant 0 : index
      %c0_19 = arith.constant 0 : index
      %32 = vector.load %arg5[%c0_18, %c0_19] : memref<8x1xf32, #tpu.memory_space<vmem>>, vector<8x1xf32>
      %33 = arith.mulf %18, %30 : vector<8x1xf32>
      %34 = arith.subf %32, %33 : vector<8x1xf32>
      %c0_20 = arith.constant 0 : index
      %c0_21 = arith.constant 0 : index
      %35 = vector.load %arg11[%c0_20, %c0_21] : memref<8x1xf32, #tpu.memory_space<vmem>>, vector<8x1xf32>
      tpu.vector_store %arg11[%c0_20, %c0_21], %34 {strides = array<i32>} : memref<8x1xf32, #tpu.memory_space<vmem>>, vector<8x1xf32>,
    } else {
    }
    %c1_i32_6 = arith.constant 1 : i32
    %13 = arith.cmpi eq, %arg0, %c1_i32_6 : i32
    %14 = arith.extui %13 : i1 to i32
    %c0_i32_7 = arith.constant 0 : i32
    %15 = arith.cmpi ne, %14, %c0_i32_7 : i32
    scf.if %15 {
      %16 = arith.index_cast %arg1 : i32 to index
      %c0 = arith.constant 0 : index
      %c0_8 = arith.constant 0 : index
      %17 = vector.load %arg7[%16, %c0, %c0_8] : memref<1x8x2048xf32, #tpu.memory_space<vmem>>, vector<1x8x2048xf32>
      %18 = vector.shape_cast %17 : vector<1x8x2048xf32> to vector<8x2048xf32>
      %c0_9 = arith.constant 0 : index
      %c0_10 = arith.constant 0 : index
      %19 = vector.load %arg10[%c0_9, %c0_10] : memref<8x1xf32, #tpu.memory_space<vmem>>, vector<8x1xf32>
      %20 = vector.broadcast %19 : vector<8x1xf32> to vector<8x2048xf32>
      %21 = arith.mulf %18, %20 : vector<8x2048xf32>
      %c0_11 = arith.constant 0 : index
      %c0_12 = arith.constant 0 : index
      %22 = vector.load %arg11[%c0_11, %c0_12] : memref<8x1xf32, #tpu.memory_space<vmem>>, vector<8x1xf32>
      %23 = vector.broadcast %22 : vector<8x1xf32> to vector<8x2048xf32>
      %24 = arith.addf %21, %23 : vector<8x2048xf32>
      %cst = arith.constant 0.000000e+00 : f32
      %25 = vector.broadcast %cst : f32 to vector<8x2048xf32>
      %26 = arith.maximumf %24, %25 : vector<8x2048xf32>
      %27 = arith.truncf %26 : vector<8x2048xf32> to vector<8x2048xbf16>
      %c0_13 = arith.constant 0 : index
      %c0_14 = arith.constant 0 : index
      %28 = vector.load %arg6[%c0_13, %c0_14] : memref<8x2048xbf16, #tpu.memory_space<vmem>>, vector<8x2048xbf16>
      tpu.vector_store %arg6[%c0_13, %c0_14], %27 {strides = array<i32>} : memref<8x2048xbf16, #tpu.memory_space<vmem>>, vector<8x2048xbf16>,
    } else {
    }
    return
  }
  func.func @transform_0(%arg0: i32, %arg1: i32) -> (i32, i32) {
    %c1_i32 = arith.constant 1 : i32
    %0 = arith.subi %c1_i32, %arg0 : i32
    %1 = arith.muli %0, %arg1 : i32
    %c0_i32 = arith.constant 0 : i32
    %c0_i32_0 = arith.constant 0 : i32
    return %1, %c0_i32 : i32, i32
  }
  func.func @transform_1(%arg0: i32, %arg1: i32) -> (i32, i32) {
    %c0_i32 = arith.constant 0 : i32
    %c0_i32_0 = arith.constant 0 : i32
    %c0_i32_1 = arith.constant 0 : i32
    return %c0_i32, %c0_i32_0 : i32, i32
  }
  func.func @transform_2(%arg0: i32, %arg1: i32) -> (i32, i32) {
    %c0_i32 = arith.constant 0 : i32
    %c0_i32_0 = arith.constant 0 : i32
    %c0_i32_1 = arith.constant 0 : i32
    return %c0_i32, %c0_i32_0 : i32, i32
  }
  func.func @transform_3(%arg0: i32, %arg1: i32) -> (i32, i32) {
    %c0_i32 = arith.constant 0 : i32
    %c0_i32_0 = arith.constant 0 : i32
    %c0_i32_1 = arith.constant 0 : i32
    return %c0_i32, %c0_i32_0 : i32, i32
  }
  func.func @transform_4(%arg0: i32, %arg1: i32) -> (i32, i32) {
    %0 = arith.muli %arg1, %arg0 : i32
    %c0_i32 = arith.constant 0 : i32
    %c0_i32_0 = arith.constant 0 : i32
    return %c0_i32, %0 : i32, i32
  }
}

module attributes {stable_mosaic.version = 11 : i64} {
  func.func @_convt_tanh_t_kernel(%arg0: i32, %arg1: memref<8192x128xbf16, #tpu.memory_space<vmem>>, %arg2: memref<8x128xbf16, #tpu.memory_space<vmem>>, %arg3: memref<8x1xf32, #tpu.memory_space<vmem>>, %arg4: memref<8x8192xf32, #tpu.memory_space<vmem>>) attributes {dimension_semantics = [#tpu.dimension_semantics<parallel>], iteration_bounds = array<i64: 1>, scalar_prefetch = 0 : i64, scratch_operands = 0 : i64, tpu.core_type = #tpu.core_type<tc>, window_params = [{transform_indices = @transform_0, window_bounds = array<i64: 8192, 128>}, {pipeline_mode = #tpu.pipeline_mode<synchronous>, transform_indices = @transform_1, window_bounds = array<i64: 8, 128>}, {pipeline_mode = #tpu.pipeline_mode<synchronous>, transform_indices = @transform_2, window_bounds = array<i64: 8, 1>}, {transform_indices = @transform_3, window_bounds = array<i64: 8, 8192>}]} {
    %c0 = arith.constant 0 : index
    %c0_0 = arith.constant 0 : index
    %0 = vector.load %arg2[%c0, %c0_0] : memref<8x128xbf16, #tpu.memory_space<vmem>>, vector<8x128xbf16>
    %c0_1 = arith.constant 0 : index
    %c0_2 = arith.constant 0 : index
    %1 = vector.load %arg1[%c0_1, %c0_2] : memref<8192x128xbf16, #tpu.memory_space<vmem>>, vector<8192x128xbf16>
    %cst = arith.constant dense<0.000000e+00> : vector<8x8192xf32>
    %2 = tpu.matmul %0, %1, %cst {dimension_numbers = #tpu.dot_dimension_numbers<[1], [1], [0], [0], [0, 0, 1, 0], [], []>} : vector<8x128xbf16>, vector<8192x128xbf16>, vector<8x8192xf32> -> vector<8x8192xf32>
    %c0_3 = arith.constant 0 : index
    %c0_4 = arith.constant 0 : index
    %3 = vector.load %arg3[%c0_3, %c0_4] : memref<8x1xf32, #tpu.memory_space<vmem>>, vector<8x1xf32>
    %4 = vector.broadcast %3 : vector<8x1xf32> to vector<8x8192xf32>
    %5 = arith.addf %2, %4 : vector<8x8192xf32>
    %6 = math.tanh %5 : vector<8x8192xf32>
    %c0_5 = arith.constant 0 : index
    %c0_6 = arith.constant 0 : index
    %7 = vector.load %arg4[%c0_5, %c0_6] : memref<8x8192xf32, #tpu.memory_space<vmem>>, vector<8x8192xf32>
    tpu.vector_store %arg4[%c0_5, %c0_6], %6 {strides = array<i32>} : memref<8x8192xf32, #tpu.memory_space<vmem>>, vector<8x8192xf32>,
    return
  }
  func.func @transform_0(%arg0: i32) -> (i32, i32) {
    %c0_i32 = arith.constant 0 : i32
    %c0_i32_0 = arith.constant 0 : i32
    return %arg0, %c0_i32 : i32, i32
  }
  func.func @transform_1(%arg0: i32) -> (i32, i32) {
    %c0_i32 = arith.constant 0 : i32
    %c0_i32_0 = arith.constant 0 : i32
    %c0_i32_1 = arith.constant 0 : i32
    return %c0_i32, %c0_i32_0 : i32, i32
  }
  func.func @transform_2(%arg0: i32) -> (i32, i32) {
    %c0_i32 = arith.constant 0 : i32
    %c0_i32_0 = arith.constant 0 : i32
    %c0_i32_1 = arith.constant 0 : i32
    return %c0_i32, %c0_i32_0 : i32, i32
  }
  func.func @transform_3(%arg0: i32) -> (i32, i32) {
    %c0_i32 = arith.constant 0 : i32
    %c0_i32_0 = arith.constant 0 : i32
    return %c0_i32, %arg0 : i32, i32
  }
}

</mosaic_0001>

<llo_original>
// kernel: generator_forward.5
$region0: #{generator_forward.5}
  #allocation0 [shape = 'u32[]', space=smem, size = 0x4, offset = 0x4, fixed_abs, tag = 'smem constant byte address 0x4 - core index']
  #allocation1 [shape = 'u32[144,128]{1,0:T(1,128)}', space=vmem, size = 0x12000, scoped, tag = 'internal scratch']
  #allocation2 [shape = 'f32[1,64,128]{2,1,0:T(8,128)}', space=vmem, size = 0x8000, scoped, tag = 'scratch operand']
  #allocation3 [shape = 'f32[64,1]{1,0:T(8,128)}', space=vmem, size = 0x8000, scoped, tag = 'scratch operand']
  #allocation4 [shape = 'f32[64,1]{1,0:T(8,128)}', space=vmem, size = 0x8000, scoped, tag = 'scratch operand']
  #allocation5 [shape = 'f32[64,1]{1,0:T(8,128)}', space=vmem, size = 0x8000, scoped, tag = 'scratch operand']
  #allocation6 [shape = 'f32[64,1]{1,0:T(8,128)}', space=vmem, size = 0x8000, scoped, tag = 'scratch operand']
  %s0 = inlined_call_operand.vmem [shape: bf16[128,128], index: 0, kind: input, shape index: {}]
  %s1 = inlined_call_operand.vmem [shape: bf16[64,128], index: 1, kind: input, shape index: {}]
  %s2 = inlined_call_operand.vmem [shape: f32[64,1], index: 2, kind: input, shape index: {}]
  %s3 = inlined_call_operand.vmem [shape: f32[64,1], index: 3, kind: input, shape index: {}]
  %s4 = inlined_call_operand.vmem [shape: bf16[64,128], index: 4, kind: output, shape index: {}]
  %s5 = sld [smem:[#allocation0]]
  $region65: #{generator_forward.5} parent=0
    _
  %s7 = ssub.s32 1, %s5
  %s8 = scalar_select 0, %s7, %s5
  loop: start=0, step=1, limit=4
  $region2: #{generator_forward.5} parent=0 // loop_pre_header
    _
  $region3: #{generator_forward.5} parent=0 // loop_header
    %s10 = sphi 0, %s14
    %p11 = scmp.ge.s32.totalorder %s10, 4
    %s17 = sphi 0, %s29
    %s18 = sphi 0, %s25
    %s19 = sphi 0, %s17
    %s20 = sphi 0, %s18
    %s21 = sphi 0, %s19
    %s22 = sphi 0, %s20
    %s36 = sphi 0, %s38
    %s39 = sphi 0, %s36
    %s40 = sphi 0, %s39
    %s56 = sphi 0, %s40
    %s60 = sphi 0, %s60
    %s62 = sphi 0, %s60
    %s63 = sphi 0, %s62
    %s77 = sphi 0, %s63
    %s81 = sphi 0, %s81
    %s83 = sphi 0, %s81
    %s84 = sphi 0, %s83
    %s98 = sphi 0, %s84
    %s102 = sphi 0, %s102
    %s104 = sphi 0, %s102
    %s105 = sphi 0, %s104
    %s119 = sphi 0, %s105
    %s127 = sphi 0, %s129
    %s130 = sphi 0, %s127
    %s131 = sphi 0, %s130
    %s147 = sphi 0, %s131
  $region4: #{generator_forward.5} parent=0 // loop_header_branch
    %13 = sbr.rel (%p11) target = $region8
  $region5: #{generator_forward.5} parent=0 // loop_body
    %s15 = ssub.s32 %s10, 1
    %s16 = ssub.s32 %s10, 2
    %s23 = sadd.s32 1, %s18
    %p24 = scmp.ge.s32.totalorder %s23, 1
    %s25 = scalar_select %p24, 0, %s23
    %s26 = sadd.s32 1, %s17
    %s27 = scalar_select %p24, %s26, %s17
    %p28 = scmp.ge.s32.totalorder %s27, 2
    %s29 = scalar_select %p28, 0, %s27
    %s30 = ssub.s32 1, %s17
    %s31 = smul.u32 %s30, %s18
    %s32 = ssub.s32 1, %s29
    %s33 = smul.u32 %s32, %s25
    %s34 = ssub.s32 %s31, %s33
    %p35 = scmp.eq.s32.totalorder %s34, 0
    %s37 = sadd.s32 %s36, 1
    %s38 = scalar_select %p35, %s36, %s37
    %p41 = pneg %p35
    %p42 = scmp.eq.s32.totalorder %s10, 1
    %p43 = por %p41, %p42
    %p44 = scmp.ne.s32.totalorder %s36, %s39
    %p45 = scmp.eq.s32.totalorder %s10, 0
    %p46 = por %p44, %p45
    %p47 = scmp.ne.s32.totalorder %s36, %s39
    %p48 = scmp.eq.s32.totalorder %s15, 1
    %p49 = por %p47, %p48
    %p50 = scmp.ne.s32.totalorder %s39, %s40
    %p51 = scmp.eq.s32.totalorder %s15, 0
    %p52 = por %p50, %p51
    %p53 = scmp.ne.s32.totalorder %s39, %s40
    %p54 = scmp.eq.s32.totalorder %s16, 1
    %p55 = por %p53, %p54
    %p57 = scmp.ne.s32.totalorder %s40, %s56
    %p58 = scmp.eq.s32.totalorder %s16, 0
    %p59 = por %p57, %p58
    %s61 = sadd.s32 %s60, 1
    %p64 = scmp.eq.s32.totalorder %s10, 1
    %p65 = scmp.ne.s32.totalorder %s60, %s62
    %p66 = scmp.eq.s32.totalorder %s10, 0
    %p67 = por %p65, %p66
    %p68 = scmp.ne.s32.totalorder %s60, %s62
    %p69 = scmp.eq.s32.totalorder %s15, 1
    %p70 = por %p68, %p69
    %p71 = scmp.ne.s32.totalorder %s62, %s63
    %p72 = scmp.eq.s32.totalorder %s15, 0
    %p73 = por %p71, %p72
    %p74 = scmp.ne.s32.totalorder %s62, %s63
    %p75 = scmp.eq.s32.totalorder %s16, 1
    %p76 = por %p74, %p75
    %p78 = scmp.ne.s32.totalorder %s63, %s77
    %p79 = scmp.eq.s32.totalorder %s16, 0
    %p80 = por %p78, %p79
    %s82 = sadd.s32 %s81, 1
    %p85 = scmp.eq.s32.totalorder %s10, 1
    %p86 = scmp.ne.s32.totalorder %s81, %s83
    %p87 = scmp.eq.s32.totalorder %s10, 0
    %p88 = por %p86, %p87
    %p89 = scmp.ne.s32.totalorder %s81, %s83
    %p90 = scmp.eq.s32.totalorder %s15, 1
    %p91 = por %p89, %p90
    %p92 = scmp.ne.s32.totalorder %s83, %s84
    %p93 = scmp.eq.s32.totalorder %s15, 0
    %p94 = por %p92, %p93
    %p95 = scmp.ne.s32.totalorder %s83, %s84
    %p96 = scmp.eq.s32.totalorder %s16, 1
    %p97 = por %p95, %p96
    %p99 = scmp.ne.s32.totalorder %s84, %s98
    %p100 = scmp.eq.s32.totalorder %s16, 0
    %p101 = por %p99, %p100
    %s103 = sadd.s32 %s102, 1
    %p106 = scmp.eq.s32.totalorder %s10, 1
    %p107 = scmp.ne.s32.totalorder %s102, %s104
    %p108 = scmp.eq.s32.totalorder %s10, 0
    %p109 = por %p107, %p108
    %p110 = scmp.ne.s32.totalorder %s102, %s104
    %p111 = scmp.eq.s32.totalorder %s15, 1
    %p112 = por %p110, %p111
    %p113 = scmp.ne.s32.totalorder %s104, %s105
    %p114 = scmp.eq.s32.totalorder %s15, 0
    %p115 = por %p113, %p114
    %p116 = scmp.ne.s32.totalorder %s104, %s105
    %p117 = scmp.eq.s32.totalorder %s16, 1
    %p118 = por %p116, %p117
    %p120 = scmp.ne.s32.totalorder %s105, %s119
    %p121 = scmp.eq.s32.totalorder %s16, 0
    %p122 = por %p120, %p121
    %s123 = smul.u32 %s18, %s17
    %s124 = smul.u32 %s25, %s29
    %s125 = ssub.s32 %s123, %s124
    %p126 = scmp.eq.s32.totalorder %s125, 0
    %s128 = sadd.s32 %s127, 1
    %s129 = scalar_select %p126, %s127, %s128
    %p132 = pneg %p126
    %p133 = scmp.eq.s32.totalorder %s10, 1
    %p134 = por %p132, %p133
    %p135 = scmp.ne.s32.totalorder %s127, %s130
    %p136 = scmp.eq.s32.totalorder %s10, 0
    %p137 = por %p135, %p136
    %p138 = scmp.ne.s32.totalorder %s127, %s130
    %p139 = scmp.eq.s32.totalorder %s15, 1
    %p140 = por %p138, %p139
    %p141 = scmp.ne.s32.totalorder %s130, %s131
    %p142 = scmp.eq.s32.totalorder %s15, 0
    %p143 = por %p141, %p142
    %p144 = scmp.ne.s32.totalorder %s130, %s131
    %p145 = scmp.eq.s32.totalorder %s16, 1
    %p146 = por %p144, %p145
    %p148 = scmp.ne.s32.totalorder %s131, %s147
    %p149 = scmp.eq.s32.totalorder %s16, 0
    %p150 = por %p148, %p149
    %p151 = scmp.le.s32.totalorder 1, %s10
    %p152 = scmp.lt.s32.totalorder %s10, 3
    %p153 = pnand %p151, %p152
    %p154 = pneg %p153
    // Predicated region
    $region9: #{generator_forward.5} parent=5 // pred_check
      _
    $region10: #{generator_forward.5} parent=5 // pred_check_branch
      %156 = sbr.rel (%p153) target = $region12
    $region11: #{generator_forward.5} parent=5 // pred_region
      %s157 = ssub.s32 %s10, 1
      // Predicated region
      $region13: #{generator_forward.5} parent=11 // pred_check
        %p158 = pneg %p73
      $region14: #{generator_forward.5} parent=11 // pred_check_branch
        %160 = sbr.rel (%p158) target = $region16
      $region15: #{generator_forward.5} parent=11 // pred_region
        _
      $region16: #{generator_forward.5} parent=11 // pred_fallthru
        _
      // Predicated region
      $region17: #{generator_forward.5} parent=11 // pred_check
        %p161 = pneg %p94
      $region18: #{generator_forward.5} parent=11 // pred_check_branch
        %163 = sbr.rel (%p161) target = $region20
      $region19: #{generator_forward.5} parent=11 // pred_region
        _
      $region20: #{generator_forward.5} parent=11 // pred_fallthru
        _
      // Predicated region
      $region21: #{generator_forward.5} parent=11 // pred_check
        %p164 = pneg %p115
      $region22: #{generator_forward.5} parent=11 // pred_check_branch
        %166 = sbr.rel (%p164) target = $region24
      $region23: #{generator_forward.5} parent=11 // pred_region
        _
      $region24: #{generator_forward.5} parent=11 // pred_fallthru
        _
    $region12: #{generator_forward.5} parent=5 // pred_fallthru
      _
    %p167 = scmp.lt.s32.totalorder %s10, 2
    // Predicated region
    $region25: #{generator_forward.5} parent=5 // pred_check
      %p168 = pneg %p167
    $region26: #{generator_forward.5} parent=5 // pred_check_branch
      %170 = sbr.rel (%p168) target = $region28
    $region27: #{generator_forward.5} parent=5 // pred_region
      // Predicated region
      $region29: #{generator_forward.5} parent=27 // pred_check
        %p171 = pneg %p46
      $region30: #{generator_forward.5} parent=27 // pred_check_branch
        %173 = sbr.rel (%p171) target = $region32
      $region31: #{generator_forward.5} parent=27 // pred_region
        %s174 = ssub.s32 1, %s17
        %s175 = smul.u32 %s174, %s18
        %s176 = smul.u32 16, %s175
        %p177 = scmp.lt.s32.totalorder %s176, 15
        %s178 = scalar_select %p177, %s176, 15
        %s179 = smul.addr %s178, 4
        %s180 = scalar_lea.vmem %s0, %s179
        %s181 = ssub.s32 1, %s17
        %s182 = smul.u32 %s181, %s18
        %s183 = smul.u32 16, %s182
      $region32: #{generator_forward.5} parent=27 // pred_fallthru
        _
    $region28: #{generator_forward.5} parent=5 // pred_fallthru
      _
    %p184 = scmp.le.s32.totalorder 1, %s10
    %p185 = scmp.lt.s32.totalorder %s10, 3
    %p186 = pnand %p184, %p185
    %p187 = pneg %p186
    // Predicated region
    $region33: #{generator_forward.5} parent=5 // pred_check
      _
    $region34: #{generator_forward.5} parent=5 // pred_check_branch
      %189 = sbr.rel (%p186) target = $region36
    $region35: #{generator_forward.5} parent=5 // pred_region
      %s190 = ssub.s32 %s10, 1
      %s191 = ssub.s32 1, %s19
      %s192 = smul.u32 %s191, %s20
      %s193 = smul.u32 16, %s192
      %p194 = scmp.lt.s32.totalorder %s193, 15
      %s195 = scalar_select %p194, %s193, 15
      %s196 = smul.addr %s195, 4
      %s197 = scalar_lea.vmem %s0, %s196
      %p198 = pneg %p52
      %p199 = pneg %p49
      %p200 = pneg %p73
      %p201 = pneg %p70
      %p202 = pneg %p94
      %p203 = pneg %p91
      %p204 = pneg %p115
      %p205 = pneg %p112
      %p206 = pneg %p143
      %p207 = pneg %p140
      %s208 = smul.u32 %s20, %s19
      %p209 = scmp.lt.s32.totalorder %s208, 0
      %s210 = scalar_select %p209, %s208, 0
      %s211 = smul.addr %s210, 4
      %s212 = scalar_lea.vmem %s4, %s211
      %s213 = ssub.s32 1, %s19
      %s214 = smul.u32 %s213, %s20
      %s215 = smul.u32 16, %s214
      %p216 = scmp.lt.s32.totalorder %s215, 15
      %s217 = scalar_select %p216, %s215, 15
      %s218 = smul.addr %s217, 4
      %s219 = scalar_lea.vmem %s0, %s218
      %s220 = ssub.s32 1, %s19
      %s221 = smul.u32 %s220, %s20
      %s222 = smul.u32 16, %s221
      %s223 = smul.u32 %s20, %s19
      %p224 = scmp.lt.s32.totalorder %s223, 0
      %s225 = scalar_select %p224, %s223, 0
      %s226 = smul.addr %s225, 4
      %s227 = scalar_lea.vmem %s4, %s226
      %s228 = smul.u32 %s20, %s19
      %p230 = scmp.eq.s32.totalorder %s19, 0
      %p231 = scmp.eq.s32.totalorder %s20, 0
      %p232 = pnand %p230, %p231
      %p233 = pneg %p232
      // Predicated region
      $region37: #{generator_forward.5} parent=35 // pred_check
        _
      $region38: #{generator_forward.5} parent=35 // pred_check_branch
        %235 = sbr.rel (%p232) target = $region40
      $region39: #{generator_forward.5} parent=35 // pred_region
        %vm236 = vcmask 7168
        %237 = vst.msk [vmem:[#allocation3] sm:$0xff] %vm236, 0.0
        %238 = vst.msk [vmem:[#allocation3 + $0x8] sm:$0xff] %vm236, 0.0
        %239 = vst.msk [vmem:[#allocation3 + $0x10] sm:$0xff] %vm236, 0.0
        %240 = vst.msk [vmem:[#allocation3 + $0x18] sm:$0xff] %vm236, 0.0
        %241 = vst.msk [vmem:[#allocation3 + $0x20] sm:$0xff] %vm236, 0.0
        %242 = vst.msk [vmem:[#allocation3 + $0x28] sm:$0xff] %vm236, 0.0
        %243 = vst.msk [vmem:[#allocation3 + $0x30] sm:$0xff] %vm236, 0.0
        %244 = vst.msk [vmem:[#allocation3 + $0x38] sm:$0xff] %vm236, 0.0
        %245 = vst.msk [vmem:[#allocation4] sm:$0xff] %vm236, 0.0
        %246 = vst.msk [vmem:[#allocation4 + $0x8] sm:$0xff] %vm236, 0.0
        %247 = vst.msk [vmem:[#allocation4 + $0x10] sm:$0xff] %vm236, 0.0
        %248 = vst.msk [vmem:[#allocation4 + $0x18] sm:$0xff] %vm236, 0.0
        %249 = vst.msk [vmem:[#allocation4 + $0x20] sm:$0xff] %vm236, 0.0
        %250 = vst.msk [vmem:[#allocation4 + $0x28] sm:$0xff] %vm236, 0.0
        %251 = vst.msk [vmem:[#allocation4 + $0x30] sm:$0xff] %vm236, 0.0
        %252 = vst.msk [vmem:[#allocation4 + $0x38] sm:$0xff] %vm236, 0.0
      $region40: #{generator_forward.5} parent=35 // pred_fallthru
        _
      // Predicated region
      $region41: #{generator_forward.5} parent=35 // pred_check
        %p253 = pneg %p230
      $region42: #{generator_forward.5} parent=35 // pred_check_branch
        %255 = sbr.rel (%p253) target = $region44
      $region43: #{generator_forward.5} parent=35 // pred_region
        %v256 = vld [vmem:[%s1] sm:$0xf]
        %v257 = vld [vmem:[%s1 + $0x4] sm:$0xf]
        %v258 = vld [vmem:[%s1 + $0x8] sm:$0xf]
        %v259 = vld [vmem:[%s1 + $0xc] sm:$0xf]
        %v260 = vld [vmem:[%s1 + $0x10] sm:$0xf]
        %v261 = vld [vmem:[%s1 + $0x14] sm:$0xf]
        %v262 = vld [vmem:[%s1 + $0x18] sm:$0xf]
        %v263 = vld [vmem:[%s1 + $0x1c] sm:$0xf]
        %v264 = vld [vmem:[%s219] sm:$0xf]
        %v265 = vld [vmem:[%s219 + $0x4] sm:$0xf]
        %v266 = vld [vmem:[%s219 + $0x8] sm:$0xf]
        %v267 = vld [vmem:[%s219 + $0xc] sm:$0xf]
        %v268 = vld [vmem:[%s219 + $0x10] sm:$0xf]
        %v269 = vld [vmem:[%s219 + $0x14] sm:$0xf]
        %v270 = vld [vmem:[%s219 + $0x18] sm:$0xf]
        %v271 = vld [vmem:[%s219 + $0x1c] sm:$0xf]
        %v272 = vld [vmem:[%s219 + $0x20] sm:$0xf]
        %v273 = vld [vmem:[%s219 + $0x24] sm:$0xf]
        %v274 = vld [vmem:[%s219 + $0x28] sm:$0xf]
        %v275 = vld [vmem:[%s219 + $0x2c] sm:$0xf]
        %v276 = vld [vmem:[%s219 + $0x30] sm:$0xf]
        %v277 = vld [vmem:[%s219 + $0x34] sm:$0xf]
        %v278 = vld [vmem:[%s219 + $0x38] sm:$0xf]
        %v279 = vld [vmem:[%s219 + $0x3c] sm:$0xf]
        %v288 = vunpack.c.l.b16 %v256
        %v289 = vunpack.c.l.b16 %v257
        %v290 = vunpack.c.l.b16 %v258
        %v291 = vunpack.c.l.b16 %v259
        %v292 = vunpack.c.l.b16 %v260
        %v293 = vunpack.c.l.b16 %v261
        %v294 = vunpack.c.l.b16 %v262
        %v295 = vunpack.c.l.b16 %v263
        %v296 = vpack.c.b16 %v289, %v288
        %v297 = vpack.c.b16 %v291, %v290
        %v298 = vpack.c.b16 %v293, %v292
        %v299 = vpack.c.b16 %v295, %v294
        %v320 = vunpack.c.l.b16 %v264
        %v321 = vunpack.c.l.b16 %v265
        %v322 = vunpack.c.l.b16 %v266
        %v323 = vunpack.c.l.b16 %v267
        %v324 = vunpack.c.l.b16 %v268
        %v325 = vunpack.c.l.b16 %v269
        %v326 = vunpack.c.l.b16 %v270
        %v327 = vunpack.c.l.b16 %v271
        %v328 = vunpack.c.l.b16 %v272
        %v329 = vunpack.c.l.b16 %v273
        %v330 = vunpack.c.l.b16 %v274
        %v331 = vunpack.c.l.b16 %v275
        %v332 = vunpack.c.l.b16 %v276
        %v333 = vunpack.c.l.b16 %v277
        %v334 = vunpack.c.l.b16 %v278
        %v335 = vunpack.c.l.b16 %v279
        %v336 = vpack.c.b16 %v321, %v320
        %v337 = vpack.c.b16 %v323, %v322
        %v338 = vpack.c.b16 %v325, %v324
        %v339 = vpack.c.b16 %v327, %v326
        %v340 = vpack.c.b16 %v329, %v328
        %v341 = vpack.c.b16 %v331, %v330
        %v342 = vpack.c.b16 %v333, %v332
        %v343 = vpack.c.b16 %v335, %v334
        %352 = vmatprep.subr.bf16.mxu0 0
        %353 = vmatpush1.bf16.xpose.msra.mxu0 %v336
        %354 = vmatprep.subr.bf16.mxu0 0
        %355 = vmatpush1.bf16.xpose.msra.mxu0 %v337
        %356 = vmatprep.subr.bf16.mxu0 0
        %357 = vmatpush1.bf16.xpose.msra.mxu0 %v338
        %358 = vmatprep.subr.bf16.mxu0 0
        %359 = vmatpush1.bf16.xpose.msra.mxu0 %v339
        %360 = vmatprep.subr.bf16.mxu0 0
        %361 = vmatpush1.bf16.xpose.msra.mxu0 %v340
        %362 = vmatprep.subr.bf16.mxu0 0
        %363 = vmatpush1.bf16.xpose.msra.mxu0 %v341
        %364 = vmatprep.subr.bf16.mxu0 0
        %365 = vmatpush1.bf16.xpose.msra.mxu0 %v342
        %366 = vmatprep.subr.bf16.mxu0 0
        %367 = vmatpush1.bf16.xpose.msra.mxu0 %v343
        %368 = vmatprep.subr.bf16.mxu0 0
        %369 = vmatpush1.bf16.xpose.msra.mxu0 0
        %370 = vmatprep.subr.bf16.mxu0 0
        %371 = vmatpush1.bf16.xpose.msra.mxu0 0
        %372 = vmatprep.subr.bf16.mxu0 0
        %373 = vmatpush1.bf16.xpose.msra.mxu0 0
        %374 = vmatprep.subr.bf16.mxu0 0
        %375 = vmatpush1.bf16.xpose.msra.mxu0 0
        %376 = vmatprep.subr.bf16.mxu0 0
        %377 = vmatpush1.bf16.xpose.msra.mxu0 0
        %378 = vmatprep.subr.bf16.mxu0 0
        %379 = vmatpush1.bf16.xpose.msra.mxu0 0
        %380 = vmatprep.subr.bf16.mxu0 0
        %381 = vmatpush1.bf16.xpose.msra.mxu0 0
        %382 = vmatprep.subr.bf16.mxu0 0
        %383 = vmatpush1.bf16.xpose.msra.mxu0 0
        %384 = vmatprep.mubr.bf16.mxu0 0
        %385 = vmatmul.mubr.bf16.gmra.mrb[0].mxu0 %v296
        %v386 = vpop.f32.mrb[0].mxu0
        %v387 = vadd.f32 0.0, %v386
        %v388 = vpop.f32.mrb[0].mxu0
        %v389 = vpop.f32.mrb[0].mxu0
        %v390 = vadd.f32 0.0, %v389
        %v391 = vpop.f32.mrb[0].mxu0
        %392 = vmatprep.mubr.bf16.mxu0 0
        %393 = vmatmul.mubr.bf16.gmra.mrb[0].mxu0 %v297
        %v394 = vpop.f32.mrb[0].mxu0
        %v395 = vadd.f32 0.0, %v394
        %v396 = vpop.f32.mrb[0].mxu0
        %v397 = vpop.f32.mrb[0].mxu0
        %v398 = vadd.f32 0.0, %v397
        %v399 = vpop.f32.mrb[0].mxu0
        %400 = vmatprep.mubr.bf16.mxu0 0
        %401 = vmatmul.mubr.bf16.gmra.mrb[0].mxu0 %v298
        %v402 = vpop.f32.mrb[0].mxu0
        %v403 = vadd.f32 0.0, %v402
        %v404 = vpop.f32.mrb[0].mxu0
        %v405 = vpop.f32.mrb[0].mxu0
        %v406 = vadd.f32 0.0, %v405
        %v407 = vpop.f32.mrb[0].mxu0
        %408 = vmatprep.mubr.bf16.mxu0 0
        %409 = vmatmul.mubr.bf16.gmra.mrb[0].mxu0 %v299
        %v410 = vpop.f32.mrb[0].mxu0
        %v411 = vadd.f32 0.0, %v410
        %v412 = vpop.f32.mrb[0].mxu0
        %v413 = vpop.f32.mrb[0].mxu0
        %v414 = vadd.f32 0.0, %v413
        %v415 = vpop.f32.mrb[0].mxu0
        %416 = vdwg.mxu0
        %s417 = smul.u32 %s20, 64
        %s418 = scalar_lea.vmem [#allocation2], %s417
        %419 = vst [vmem:[%s418] sm:$0xff] %v387
        %420 = vst [vmem:[%s418 + $0x8] sm:$0xff] %v390
        %421 = vst [vmem:[%s418 + $0x10] sm:$0xff] %v395
        %422 = vst [vmem:[%s418 + $0x18] sm:$0xff] %v398
        %423 = vst [vmem:[%s418 + $0x20] sm:$0xff] %v403
        %424 = vst [vmem:[%s418 + $0x28] sm:$0xff] %v406
        %425 = vst [vmem:[%s418 + $0x30] sm:$0xff] %v411
        %426 = vst [vmem:[%s418 + $0x38] sm:$0xff] %v414
        %v427 = vld [vmem:[#allocation3] sm:$0xff]
        %v428 = vld [vmem:[#allocation3 + $0x8] sm:$0xff]
        %v429 = vld [vmem:[#allocation3 + $0x10] sm:$0xff]
        %v430 = vld [vmem:[#allocation3 + $0x18] sm:$0xff]
        %v431 = vld [vmem:[#allocation3 + $0x20] sm:$0xff]
        %v432 = vld [vmem:[#allocation3 + $0x28] sm:$0xff]
        %v433 = vld [vmem:[#allocation3 + $0x30] sm:$0xff]
        %v434 = vld [vmem:[#allocation3 + $0x38] sm:$0xff]
        %435 = vadd.xlane.f32.xlu0 %v387
        %v436 = vpop.xlane.xlu0 %435
        %437 = vadd.xlane.f32.xlu0 %v390
        %v438 = vpop.xlane.xlu0 %437
        %439 = vadd.xlane.f32.xlu0 %v395
        %v440 = vpop.xlane.xlu0 %439
        %441 = vadd.xlane.f32.xlu0 %v398
        %v442 = vpop.xlane.xlu0 %441
        %443 = vadd.xlane.f32.xlu0 %v403
        %v444 = vpop.xlane.xlu0 %443
        %445 = vadd.xlane.f32.xlu0 %v406
        %v446 = vpop.xlane.xlu0 %445
        %447 = vadd.xlane.f32.xlu0 %v411
        %v448 = vpop.xlane.xlu0 %447
        %449 = vadd.xlane.f32.xlu0 %v414
        %v450 = vpop.xlane.xlu0 %449
        %v451 = vadd.f32 %v427, %v436
        %v452 = vadd.f32 %v428, %v438
        %v453 = vadd.f32 %v429, %v440
        %v454 = vadd.f32 %v430, %v442
        %v455 = vadd.f32 %v431, %v444
        %v456 = vadd.f32 %v432, %v446
        %v457 = vadd.f32 %v433, %v448
        %v458 = vadd.f32 %v434, %v450
        %vm459 = vcmask 7168
        %460 = vst.msk [vmem:[#allocation3] sm:$0xff] %vm459, %v451
        %461 = vst.msk [vmem:[#allocation3 + $0x8] sm:$0xff] %vm459, %v452
        %462 = vst.msk [vmem:[#allocation3 + $0x10] sm:$0xff] %vm459, %v453
        %463 = vst.msk [vmem:[#allocation3 + $0x18] sm:$0xff] %vm459, %v454
        %464 = vst.msk [vmem:[#allocation3 + $0x20] sm:$0xff] %vm459, %v455
        %465 = vst.msk [vmem:[#allocation3 + $0x28] sm:$0xff] %vm459, %v456
        %466 = vst.msk [vmem:[#allocation3 + $0x30] sm:$0xff] %vm459, %v457
        %467 = vst.msk [vmem:[#allocation3 + $0x38] sm:$0xff] %vm459, %v458
        %v468 = vld [vmem:[#allocation4] sm:$0xff]
        %v469 = vld [vmem:[#allocation4 + $0x8] sm:$0xff]
        %v470 = vld [vmem:[#allocation4 + $0x10] sm:$0xff]
        %v471 = vld [vmem:[#allocation4 + $0x18] sm:$0xff]
        %v472 = vld [vmem:[#allocation4 + $0x20] sm:$0xff]
        %v473 = vld [vmem:[#allocation4 + $0x28] sm:$0xff]
        %v474 = vld [vmem:[#allocation4 + $0x30] sm:$0xff]
        %v475 = vld [vmem:[#allocation4 + $0x38] sm:$0xff]
        %v476 = vmul.f32 %v387, %v387
        %v477 = vmul.f32 %v390, %v390
        %v478 = vmul.f32 %v395, %v395
        %v479 = vmul.f32 %v398, %v398
        %v480 = vmul.f32 %v403, %v403
        %v481 = vmul.f32 %v406, %v406
        %v482 = vmul.f32 %v411, %v411
        %v483 = vmul.f32 %v414, %v414
        %484 = vadd.xlane.f32.xlu0 %v476
        %v485 = vpop.xlane.xlu0 %484
        %486 = vadd.xlane.f32.xlu0 %v477
        %v487 = vpop.xlane.xlu0 %486
        %488 = vadd.xlane.f32.xlu0 %v478
        %v489 = vpop.xlane.xlu0 %488
        %490 = vadd.xlane.f32.xlu0 %v479
        %v491 = vpop.xlane.xlu0 %490
        %492 = vadd.xlane.f32.xlu0 %v480
        %v493 = vpop.xlane.xlu0 %492
        %494 = vadd.xlane.f32.xlu0 %v481
        %v495 = vpop.xlane.xlu0 %494
        %496 = vadd.xlane.f32.xlu0 %v482
        %v497 = vpop.xlane.xlu0 %496
        %498 = vadd.xlane.f32.xlu0 %v483
        %v499 = vpop.xlane.xlu0 %498
        %v500 = vadd.f32 %v468, %v485
        %v501 = vadd.f32 %v469, %v487
        %v502 = vadd.f32 %v470, %v489
        %v503 = vadd.f32 %v471, %v491
        %v504 = vadd.f32 %v472, %v493
        %v505 = vadd.f32 %v473, %v495
        %v506 = vadd.f32 %v474, %v497
        %v507 = vadd.f32 %v475, %v499
        %508 = vst.msk [vmem:[#allocation4] sm:$0xff] %vm459, %v500
        %509 = vst.msk [vmem:[#allocation4 + $0x8] sm:$0xff] %vm459, %v501
        %510 = vst.msk [vmem:[#allocation4 + $0x10] sm:$0xff] %vm459, %v502
        %511 = vst.msk [vmem:[#allocation4 + $0x18] sm:$0xff] %vm459, %v503
        %512 = vst.msk [vmem:[#allocation4 + $0x20] sm:$0xff] %vm459, %v504
        %513 = vst.msk [vmem:[#allocation4 + $0x28] sm:$0xff] %vm459, %v505
        %514 = vst.msk [vmem:[#allocation4 + $0x30] sm:$0xff] %vm459, %v506
        %515 = vst.msk [vmem:[#allocation4 + $0x38] sm:$0xff] %vm459, %v507
      $region44: #{generator_forward.5} parent=35 // pred_fallthru
        _
      %p516 = scmp.eq.s32.totalorder %s19, 1
      %p517 = pnand %p516, %p231
      %p518 = pneg %p517
      // Predicated region
      $region45: #{generator_forward.5} parent=35 // pred_check
        _
      $region46: #{generator_forward.5} parent=35 // pred_check_branch
        %520 = sbr.rel (%p517) target = $region48
      $region47: #{generator_forward.5} parent=35 // pred_region
        %v521 = vld [vmem:[#allocation3] sm:$0xff]
        %v522 = vld [vmem:[#allocation3 + $0x8] sm:$0xff]
        %v523 = vld [vmem:[#allocation3 + $0x10] sm:$0xff]
        %v524 = vld [vmem:[#allocation3 + $0x18] sm:$0xff]
        %v525 = vld [vmem:[#allocation3 + $0x20] sm:$0xff]
        %v526 = vld [vmem:[#allocation3 + $0x28] sm:$0xff]
        %v527 = vld [vmem:[#allocation3 + $0x30] sm:$0xff]
        %v528 = vld [vmem:[#allocation3 + $0x38] sm:$0xff]
        %v529 = vmul.f32 %v521, 0.03125
        %v530 = vmul.f32 %v522, 0.03125
        %v531 = vmul.f32 %v523, 0.03125
        %v532 = vmul.f32 %v524, 0.03125
        %v533 = vmul.f32 %v525, 0.03125
        %v534 = vmul.f32 %v526, 0.03125
        %v535 = vmul.f32 %v527, 0.03125
        %v536 = vmul.f32 %v528, 0.03125
        %v537 = vld [vmem:[#allocation4] sm:$0xff]
        %v538 = vld [vmem:[#allocation4 + $0x8] sm:$0xff]
        %v539 = vld [vmem:[#allocation4 + $0x10] sm:$0xff]
        %v540 = vld [vmem:[#allocation4 + $0x18] sm:$0xff]
        %v541 = vld [vmem:[#allocation4 + $0x20] sm:$0xff]
        %v542 = vld [vmem:[#allocation4 + $0x28] sm:$0xff]
        %v543 = vld [vmem:[#allocation4 + $0x30] sm:$0xff]
        %v544 = vld [vmem:[#allocation4 + $0x38] sm:$0xff]
        %v545 = vmul.f32 %v537, 0.03125
        %v546 = vmul.f32 %v538, 0.03125
        %v547 = vmul.f32 %v539, 0.03125
        %v548 = vmul.f32 %v540, 0.03125
        %v549 = vmul.f32 %v541, 0.03125
        %v550 = vmul.f32 %v542, 0.03125
        %v551 = vmul.f32 %v543, 0.03125
        %v552 = vmul.f32 %v544, 0.03125
        %v553 = vmul.f32 %v529, %v529
        %v554 = vmul.f32 %v530, %v530
        %v555 = vmul.f32 %v531, %v531
        %v556 = vmul.f32 %v532, %v532
        %v557 = vmul.f32 %v533, %v533
        %v558 = vmul.f32 %v534, %v534
        %v559 = vmul.f32 %v535, %v535
        %v560 = vmul.f32 %v536, %v536
        %v561 = vsub.f32 %v545, %v553
        %v562 = vsub.f32 %v546, %v554
        %v563 = vsub.f32 %v547, %v555
        %v564 = vsub.f32 %v548, %v556
        %v565 = vsub.f32 %v549, %v557
        %v566 = vsub.f32 %v550, %v558
        %v567 = vsub.f32 %v551, %v559
        %v568 = vsub.f32 %v552, %v560
        %v569 = vmax.f32 %v561, 0.0
        %v570 = vmax.f32 %v562, 0.0
        %v571 = vmax.f32 %v563, 0.0
        %v572 = vmax.f32 %v564, 0.0
        %v573 = vmax.f32 %v565, 0.0
        %v574 = vmax.f32 %v566, 0.0
        %v575 = vmax.f32 %v567, 0.0
        %v576 = vmax.f32 %v568, 0.0
        %v577 = vld [vmem:[%s2] sm:$0xff]
        %v578 = vld [vmem:[%s2 + $0x8] sm:$0xff]
        %v579 = vld [vmem:[%s2 + $0x10] sm:$0xff]
        %v580 = vld [vmem:[%s2 + $0x18] sm:$0xff]
        %v581 = vld [vmem:[%s2 + $0x20] sm:$0xff]
        %v582 = vld [vmem:[%s2 + $0x28] sm:$0xff]
        %v583 = vld [vmem:[%s2 + $0x30] sm:$0xff]
        %v584 = vld [vmem:[%s2 + $0x38] sm:$0xff]
        %v585 = vadd.f32 %v569, 1e-05
        %v586 = vadd.f32 %v570, 1e-05
        %v587 = vadd.f32 %v571, 1e-05
        %v588 = vadd.f32 %v572, 1e-05
        %v589 = vadd.f32 %v573, 1e-05
        %v590 = vadd.f32 %v574, 1e-05
        %v591 = vadd.f32 %v575, 1e-05
        %v592 = vadd.f32 %v576, 1e-05
        %v593 = vrsqrt.pop %v585
        %v594 = vrsqrt.pop %v586
        %v595 = vrsqrt.pop %v587
        %v596 = vrsqrt.pop %v588
        %v597 = vrsqrt.pop %v589
        %v598 = vrsqrt.pop %v590
        %v599 = vrsqrt.pop %v591
        %v600 = vrsqrt.pop %v592
        %v601 = vmul.f32 %v577, %v593
        %v602 = vmul.f32 %v578, %v594
        %v603 = vmul.f32 %v579, %v595
        %v604 = vmul.f32 %v580, %v596
        %v605 = vmul.f32 %v581, %v597
        %v606 = vmul.f32 %v582, %v598
        %v607 = vmul.f32 %v583, %v599
        %v608 = vmul.f32 %v584, %v600
        %vm609 = vcmask 7168
        %610 = vst.msk [vmem:[#allocation5] sm:$0xff] %vm609, %v601
        %611 = vst.msk [vmem:[#allocation5 + $0x8] sm:$0xff] %vm609, %v602
        %612 = vst.msk [vmem:[#allocation5 + $0x10] sm:$0xff] %vm609, %v603
        %613 = vst.msk [vmem:[#allocation5 + $0x18] sm:$0xff] %vm609, %v604
        %614 = vst.msk [vmem:[#allocation5 + $0x20] sm:$0xff] %vm609, %v605
        %615 = vst.msk [vmem:[#allocation5 + $0x28] sm:$0xff] %vm609, %v606
        %616 = vst.msk [vmem:[#allocation5 + $0x30] sm:$0xff] %vm609, %v607
        %617 = vst.msk [vmem:[#allocation5 + $0x38] sm:$0xff] %vm609, %v608
        %v618 = vld [vmem:[%s3] sm:$0xff]
        %v619 = vld [vmem:[%s3 + $0x8] sm:$0xff]
        %v620 = vld [vmem:[%s3 + $0x10] sm:$0xff]
        %v621 = vld [vmem:[%s3 + $0x18] sm:$0xff]
        %v622 = vld [vmem:[%s3 + $0x20] sm:$0xff]
        %v623 = vld [vmem:[%s3 + $0x28] sm:$0xff]
        %v624 = vld [vmem:[%s3 + $0x30] sm:$0xff]
        %v625 = vld [vmem:[%s3 + $0x38] sm:$0xff]
        %v626 = vmul.f32 %v529, %v601
        %v627 = vmul.f32 %v530, %v602
        %v628 = vmul.f32 %v531, %v603
        %v629 = vmul.f32 %v532, %v604
        %v630 = vmul.f32 %v533, %v605
        %v631 = vmul.f32 %v534, %v606
        %v632 = vmul.f32 %v535, %v607
        %v633 = vmul.f32 %v536, %v608
        %v634 = vsub.f32 %v618, %v626
        %v635 = vsub.f32 %v619, %v627
        %v636 = vsub.f32 %v620, %v628
        %v637 = vsub.f32 %v621, %v629
        %v638 = vsub.f32 %v622, %v630
        %v639 = vsub.f32 %v623, %v631
        %v640 = vsub.f32 %v624, %v632
        %v641 = vsub.f32 %v625, %v633
        %642 = vst.msk [vmem:[#allocation6] sm:$0xff] %vm609, %v634
        %643 = vst.msk [vmem:[#allocation6 + $0x8] sm:$0xff] %vm609, %v635
        %644 = vst.msk [vmem:[#allocation6 + $0x10] sm:$0xff] %vm609, %v636
        %645 = vst.msk [vmem:[#allocation6 + $0x18] sm:$0xff] %vm609, %v637
        %646 = vst.msk [vmem:[#allocation6 + $0x20] sm:$0xff] %vm609, %v638
        %647 = vst.msk [vmem:[#allocation6 + $0x28] sm:$0xff] %vm609, %v639
        %648 = vst.msk [vmem:[#allocation6 + $0x30] sm:$0xff] %vm609, %v640
        %649 = vst.msk [vmem:[#allocation6 + $0x38] sm:$0xff] %vm609, %v641
      $region48: #{generator_forward.5} parent=35 // pred_fallthru
        _
      // Predicated region
      $region49: #{generator_forward.5} parent=35 // pred_check
        %p650 = pneg %p516
      $region50: #{generator_forward.5} parent=35 // pred_check_branch
        %652 = sbr.rel (%p650) target = $region52
      $region51: #{generator_forward.5} parent=35 // pred_region
        %s653 = smul.u32 %s20, 64
        %s654 = scalar_lea.vmem [#allocation2], %s653
        %v655 = vld [vmem:[%s654] sm:$0xff]
        %v656 = vld [vmem:[%s654 + $0x8] sm:$0xff]
        %v657 = vld [vmem:[%s654 + $0x10] sm:$0xff]
        %v658 = vld [vmem:[%s654 + $0x18] sm:$0xff]
        %v659 = vld [vmem:[%s654 + $0x20] sm:$0xff]
        %v660 = vld [vmem:[%s654 + $0x28] sm:$0xff]
        %v661 = vld [vmem:[%s654 + $0x30] sm:$0xff]
        %v662 = vld [vmem:[%s654 + $0x38] sm:$0xff]
        %v663 = vld [vmem:[#allocation5] sm:$0xff]
        %v664 = vld [vmem:[#allocation5 + $0x8] sm:$0xff]
        %v665 = vld [vmem:[#allocation5 + $0x10] sm:$0xff]
        %v666 = vld [vmem:[#allocation5 + $0x18] sm:$0xff]
        %v667 = vld [vmem:[#allocation5 + $0x20] sm:$0xff]
        %v668 = vld [vmem:[#allocation5 + $0x28] sm:$0xff]
        %v669 = vld [vmem:[#allocation5 + $0x30] sm:$0xff]
        %v670 = vld [vmem:[#allocation5 + $0x38] sm:$0xff]
        %672 = vset.pattern.permute.xlu0 0
        %673 = vperm.xlu0 %672, %v663
        %v674 = vpop.permute.xlu0 %673
        %677 = vset.pattern.permute.xlu0 0
        %678 = vperm.xlu0 %677, %v664
        %v679 = vpop.permute.xlu0 %678
        %682 = vset.pattern.permute.xlu0 0
        %683 = vperm.xlu0 %682, %v665
        %v684 = vpop.permute.xlu0 %683
        %687 = vset.pattern.permute.xlu0 0
        %688 = vperm.xlu0 %687, %v666
        %v689 = vpop.permute.xlu0 %688
        %692 = vset.pattern.permute.xlu0 0
        %693 = vperm.xlu0 %692, %v667
        %v694 = vpop.permute.xlu0 %693
        %697 = vset.pattern.permute.xlu0 0
        %698 = vperm.xlu0 %697, %v668
        %v699 = vpop.permute.xlu0 %698
        %702 = vset.pattern.permute.xlu0 0
        %703 = vperm.xlu0 %702, %v669
        %v704 = vpop.permute.xlu0 %703
        %707 = vset.pattern.permute.xlu0 0
        %708 = vperm.xlu0 %707, %v670
        %v709 = vpop.permute.xlu0 %708
        %v711 = vmul.f32 %v655, %v674
        %v712 = vmul.f32 %v656, %v679
        %v713 = vmul.f32 %v657, %v684
        %v714 = vmul.f32 %v658, %v689
        %v715 = vmul.f32 %v659, %v694
        %v716 = vmul.f32 %v660, %v699
        %v717 = vmul.f32 %v661, %v704
        %v718 = vmul.f32 %v662, %v709
        %v719 = vld [vmem:[#allocation6] sm:$0xff]
        %v720 = vld [vmem:[#allocation6 + $0x8] sm:$0xff]
        %v721 = vld [vmem:[#allocation6 + $0x10] sm:$0xff]
        %v722 = vld [vmem:[#allocation6 + $0x18] sm:$0xff]
        %v723 = vld [vmem:[#allocation6 + $0x20] sm:$0xff]
        %v724 = vld [vmem:[#allocation6 + $0x28] sm:$0xff]
        %v725 = vld [vmem:[#allocation6 + $0x30] sm:$0xff]
        %v726 = vld [vmem:[#allocation6 + $0x38] sm:$0xff]
        %728 = vset.pattern.permute.xlu0 0
        %729 = vperm.xlu0 %728, %v719
        %v730 = vpop.permute.xlu0 %729
        %733 = vset.pattern.permute.xlu0 0
        %734 = vperm.xlu0 %733, %v720
        %v735 = vpop.permute.xlu0 %734
        %738 = vset.pattern.permute.xlu0 0
        %739 = vperm.xlu0 %738, %v721
        %v740 = vpop.permute.xlu0 %739
        %743 = vset.pattern.permute.xlu0 0
        %744 = vperm.xlu0 %743, %v722
        %v745 = vpop.permute.xlu0 %744
        %748 = vset.pattern.permute.xlu0 0
        %749 = vperm.xlu0 %748, %v723
        %v750 = vpop.permute.xlu0 %749
        %753 = vset.pattern.permute.xlu0 0
        %754 = vperm.xlu0 %753, %v724
        %v755 = vpop.permute.xlu0 %754
        %758 = vset.pattern.permute.xlu0 0
        %759 = vperm.xlu0 %758, %v725
        %v760 = vpop.permute.xlu0 %759
        %763 = vset.pattern.permute.xlu0 0
        %764 = vperm.xlu0 %763, %v726
        %v765 = vpop.permute.xlu0 %764
        %v767 = vadd.f32 %v711, %v730
        %v768 = vadd.f32 %v712, %v735
        %v769 = vadd.f32 %v713, %v740
        %v770 = vadd.f32 %v714, %v745
        %v771 = vadd.f32 %v715, %v750
        %v772 = vadd.f32 %v716, %v755
        %v773 = vadd.f32 %v717, %v760
        %v774 = vadd.f32 %v718, %v765
        %v775 = vmax.f32 %v767, 0.0
        %v776 = vmax.f32 %v768, 0.0
        %v777 = vmax.f32 %v769, 0.0
        %v778 = vmax.f32 %v770, 0.0
        %v779 = vmax.f32 %v771, 0.0
        %v780 = vmax.f32 %v772, 0.0
        %v781 = vmax.f32 %v773, 0.0
        %v782 = vmax.f32 %v774, 0.0
        %v783 = vpack.c.bf16 %v776, %v775
        %v784 = vpack.c.bf16 %v778, %v777
        %v785 = vpack.c.bf16 %v780, %v779
        %v786 = vpack.c.bf16 %v782, %v781
        %v791 = vunpack.c.l.b16 %v783
        %v792 = vunpack.c.h.b16 %v783
        %v793 = vunpack.c.l.b16 %v784
        %v794 = vunpack.c.h.b16 %v784
        %v795 = vunpack.c.l.b16 %v785
        %v796 = vunpack.c.h.b16 %v785
        %v797 = vunpack.c.l.b16 %v786
        %v798 = vunpack.c.h.b16 %v786
        %v799 = vpack.c.b16 %v791, %v791
        %v800 = vpack.c.b16 %v792, %v792
        %v801 = vpack.c.b16 %v793, %v793
        %v802 = vpack.c.b16 %v794, %v794
        %v803 = vpack.c.b16 %v795, %v795
        %v804 = vpack.c.b16 %v796, %v796
        %v805 = vpack.c.b16 %v797, %v797
        %v806 = vpack.c.b16 %v798, %v798
        %815 = vst [vmem:[%s227] sm:$0xf] %v799
        %816 = vst [vmem:[%s227 + $0x4] sm:$0xf] %v800
        %817 = vst [vmem:[%s227 + $0x8] sm:$0xf] %v801
        %818 = vst [vmem:[%s227 + $0xc] sm:$0xf] %v802
        %819 = vst [vmem:[%s227 + $0x10] sm:$0xf] %v803
        %820 = vst [vmem:[%s227 + $0x14] sm:$0xf] %v804
        %821 = vst [vmem:[%s227 + $0x18] sm:$0xf] %v805
        %822 = vst [vmem:[%s227 + $0x1c] sm:$0xf] %v806
      $region52: #{generator_forward.5} parent=35 // pred_fallthru
        _
      %s823 = smul.u32 %s20, %s19
      %p824 = scmp.lt.s32.totalorder %s823, 0
      %s825 = scalar_select %p824, %s823, 0
      %s826 = smul.addr %s825, 4
      %s827 = scalar_lea.vmem %s4, %s826
      // Predicated region
      $region53: #{generator_forward.5} parent=35 // pred_check
        %p828 = pneg %p140
      $region54: #{generator_forward.5} parent=35 // pred_check_branch
        %830 = sbr.rel (%p828) target = $region56
      $region55: #{generator_forward.5} parent=35 // pred_region
        %s831 = smul.u32 %s20, %s19
      $region56: #{generator_forward.5} parent=35 // pred_fallthru
        _
    $region36: #{generator_forward.5} parent=5 // pred_fallthru
      _
    %p832 = scmp.le.s32.totalorder 2, %s10
    // Predicated region
    $region57: #{generator_forward.5} parent=5 // pred_check
      %p833 = pneg %p832
    $region58: #{generator_forward.5} parent=5 // pred_check_branch
      %835 = sbr.rel (%p833) target = $region60
    $region59: #{generator_forward.5} parent=5 // pred_region
      %s836 = ssub.s32 %s10, 2
      // Predicated region
      $region61: #{generator_forward.5} parent=59 // pred_check
        %p837 = pneg %p146
      $region62: #{generator_forward.5} parent=59 // pred_check_branch
        %839 = sbr.rel (%p837) target = $region64
      $region63: #{generator_forward.5} parent=59 // pred_region
        %s840 = smul.u32 %s22, %s21
        %p841 = scmp.lt.s32.totalorder %s840, 0
        %s842 = scalar_select %p841, %s840, 0
        %s843 = smul.addr %s842, 4
        %s844 = scalar_lea.vmem %s4, %s843
      $region64: #{generator_forward.5} parent=59 // pred_fallthru
        _
    $region60: #{generator_forward.5} parent=5 // pred_fallthru
      _
  $region6: #{generator_forward.5} parent=0 // loop_footer
    %s14 = sadd.s32 1, %s10
  $region7: #{generator_forward.5} parent=0 // loop_footer_branch
    %9 = sbr.rel target = $region3
  $region8: #{generator_forward.5} parent=0 // loop_exit
    _

// kernel: generator_forward.6
$region0: #{generator_forward.6}
  #allocation0 [shape = 'u32[]', space=smem, size = 0x4, offset = 0x4, fixed_abs, tag = 'smem constant byte address 0x4 - core index']
  #allocation1 [shape = 'u32[144,128]{1,0:T(1,128)}', space=vmem, size = 0x12000, scoped, tag = 'internal scratch']
  #allocation2 [shape = 'f32[1,32,128]{2,1,0:T(8,128)}', space=vmem, size = 0x4000, scoped, tag = 'scratch operand']
  #allocation3 [shape = 'f32[32,1]{1,0:T(8,128)}', space=vmem, size = 0x4000, scoped, tag = 'scratch operand']
  #allocation4 [shape = 'f32[32,1]{1,0:T(8,128)}', space=vmem, size = 0x4000, scoped, tag = 'scratch operand']
  #allocation5 [shape = 'f32[32,1]{1,0:T(8,128)}', space=vmem, size = 0x4000, scoped, tag = 'scratch operand']
  #allocation6 [shape = 'f32[32,1]{1,0:T(8,128)}', space=vmem, size = 0x4000, scoped, tag = 'scratch operand']
  %s0 = inlined_call_operand.vmem [shape: bf16[128,1024], index: 0, kind: input, shape index: {}]
  %s1 = inlined_call_operand.vmem [shape: bf16[32,1024], index: 1, kind: input, shape index: {}]
  %s2 = inlined_call_operand.vmem [shape: f32[32,1], index: 2, kind: input, shape index: {}]
  %s3 = inlined_call_operand.vmem [shape: f32[32,1], index: 3, kind: input, shape index: {}]
  %s4 = inlined_call_operand.vmem [shape: bf16[32,128], index: 4, kind: output, shape index: {}]
  %s5 = sld [smem:[#allocation0]]
  $region65: #{generator_forward.6} parent=0
    _
  %s7 = ssub.s32 1, %s5
  %s8 = scalar_select 0, %s7, %s5
  loop: start=0, step=1, limit=4
  $region2: #{generator_forward.6} parent=0 // loop_pre_header
    _
  $region3: #{generator_forward.6} parent=0 // loop_header
    %s10 = sphi 0, %s14
    %p11 = scmp.ge.s32.totalorder %s10, 4
    %s17 = sphi 0, %s29
    %s18 = sphi 0, %s25
    %s19 = sphi 0, %s17
    %s20 = sphi 0, %s18
    %s21 = sphi 0, %s19
    %s22 = sphi 0, %s20
    %s36 = sphi 0, %s38
    %s39 = sphi 0, %s36
    %s40 = sphi 0, %s39
    %s56 = sphi 0, %s40
    %s60 = sphi 0, %s60
    %s62 = sphi 0, %s60
    %s63 = sphi 0, %s62
    %s77 = sphi 0, %s63
    %s81 = sphi 0, %s81
    %s83 = sphi 0, %s81
    %s84 = sphi 0, %s83
    %s98 = sphi 0, %s84
    %s102 = sphi 0, %s102
    %s104 = sphi 0, %s102
    %s105 = sphi 0, %s104
    %s119 = sphi 0, %s105
    %s127 = sphi 0, %s129
    %s130 = sphi 0, %s127
    %s131 = sphi 0, %s130
    %s147 = sphi 0, %s131
  $region4: #{generator_forward.6} parent=0 // loop_header_branch
    %13 = sbr.rel (%p11) target = $region8
  $region5: #{generator_forward.6} parent=0 // loop_body
    %s15 = ssub.s32 %s10, 1
    %s16 = ssub.s32 %s10, 2
    %s23 = sadd.s32 1, %s18
    %p24 = scmp.ge.s32.totalorder %s23, 1
    %s25 = scalar_select %p24, 0, %s23
    %s26 = sadd.s32 1, %s17
    %s27 = scalar_select %p24, %s26, %s17
    %p28 = scmp.ge.s32.totalorder %s27, 2
    %s29 = scalar_select %p28, 0, %s27
    %s30 = ssub.s32 1, %s17
    %s31 = smul.u32 %s30, %s18
    %s32 = ssub.s32 1, %s29
    %s33 = smul.u32 %s32, %s25
    %s34 = ssub.s32 %s31, %s33
    %p35 = scmp.eq.s32.totalorder %s34, 0
    %s37 = sadd.s32 %s36, 1
    %s38 = scalar_select %p35, %s36, %s37
    %p41 = pneg %p35
    %p42 = scmp.eq.s32.totalorder %s10, 1
    %p43 = por %p41, %p42
    %p44 = scmp.ne.s32.totalorder %s36, %s39
    %p45 = scmp.eq.s32.totalorder %s10, 0
    %p46 = por %p44, %p45
    %p47 = scmp.ne.s32.totalorder %s36, %s39
    %p48 = scmp.eq.s32.totalorder %s15, 1
    %p49 = por %p47, %p48
    %p50 = scmp.ne.s32.totalorder %s39, %s40
    %p51 = scmp.eq.s32.totalorder %s15, 0
    %p52 = por %p50, %p51
    %p53 = scmp.ne.s32.totalorder %s39, %s40
    %p54 = scmp.eq.s32.totalorder %s16, 1
    %p55 = por %p53, %p54
    %p57 = scmp.ne.s32.totalorder %s40, %s56
    %p58 = scmp.eq.s32.totalorder %s16, 0
    %p59 = por %p57, %p58
    %s61 = sadd.s32 %s60, 1
    %p64 = scmp.eq.s32.totalorder %s10, 1
    %p65 = scmp.ne.s32.totalorder %s60, %s62
    %p66 = scmp.eq.s32.totalorder %s10, 0
    %p67 = por %p65, %p66
    %p68 = scmp.ne.s32.totalorder %s60, %s62
    %p69 = scmp.eq.s32.totalorder %s15, 1
    %p70 = por %p68, %p69
    %p71 = scmp.ne.s32.totalorder %s62, %s63
    %p72 = scmp.eq.s32.totalorder %s15, 0
    %p73 = por %p71, %p72
    %p74 = scmp.ne.s32.totalorder %s62, %s63
    %p75 = scmp.eq.s32.totalorder %s16, 1
    %p76 = por %p74, %p75
    %p78 = scmp.ne.s32.totalorder %s63, %s77
    %p79 = scmp.eq.s32.totalorder %s16, 0
    %p80 = por %p78, %p79
    %s82 = sadd.s32 %s81, 1
    %p85 = scmp.eq.s32.totalorder %s10, 1
    %p86 = scmp.ne.s32.totalorder %s81, %s83
    %p87 = scmp.eq.s32.totalorder %s10, 0
    %p88 = por %p86, %p87
    %p89 = scmp.ne.s32.totalorder %s81, %s83
    %p90 = scmp.eq.s32.totalorder %s15, 1
    %p91 = por %p89, %p90
    %p92 = scmp.ne.s32.totalorder %s83, %s84
    %p93 = scmp.eq.s32.totalorder %s15, 0
    %p94 = por %p92, %p93
    %p95 = scmp.ne.s32.totalorder %s83, %s84
    %p96 = scmp.eq.s32.totalorder %s16, 1
    %p97 = por %p95, %p96
    %p99 = scmp.ne.s32.totalorder %s84, %s98
    %p100 = scmp.eq.s32.totalorder %s16, 0
    %p101 = por %p99, %p100
    %s103 = sadd.s32 %s102, 1
    %p106 = scmp.eq.s32.totalorder %s10, 1
    %p107 = scmp.ne.s32.totalorder %s102, %s104
    %p108 = scmp.eq.s32.totalorder %s10, 0
    %p109 = por %p107, %p108
    %p110 = scmp.ne.s32.totalorder %s102, %s104
    %p111 = scmp.eq.s32.totalorder %s15, 1
    %p112 = por %p110, %p111
    %p113 = scmp.ne.s32.totalorder %s104, %s105
    %p114 = scmp.eq.s32.totalorder %s15, 0
    %p115 = por %p113, %p114
    %p116 = scmp.ne.s32.totalorder %s104, %s105
    %p117 = scmp.eq.s32.totalorder %s16, 1
    %p118 = por %p116, %p117
    %p120 = scmp.ne.s32.totalorder %s105, %s119
    %p121 = scmp.eq.s32.totalorder %s16, 0
    %p122 = por %p120, %p121
    %s123 = smul.u32 %s18, %s17
    %s124 = smul.u32 %s25, %s29
    %s125 = ssub.s32 %s123, %s124
    %p126 = scmp.eq.s32.totalorder %s125, 0
    %s128 = sadd.s32 %s127, 1
    %s129 = scalar_select %p126, %s127, %s128
    %p132 = pneg %p126
    %p133 = scmp.eq.s32.totalorder %s10, 1
    %p134 = por %p132, %p133
    %p135 = scmp.ne.s32.totalorder %s127, %s130
    %p136 = scmp.eq.s32.totalorder %s10, 0
    %p137 = por %p135, %p136
    %p138 = scmp.ne.s32.totalorder %s127, %s130
    %p139 = scmp.eq.s32.totalorder %s15, 1
    %p140 = por %p138, %p139
    %p141 = scmp.ne.s32.totalorder %s130, %s131
    %p142 = scmp.eq.s32.totalorder %s15, 0
    %p143 = por %p141, %p142
    %p144 = scmp.ne.s32.totalorder %s130, %s131
    %p145 = scmp.eq.s32.totalorder %s16, 1
    %p146 = por %p144, %p145
    %p148 = scmp.ne.s32.totalorder %s131, %s147
    %p149 = scmp.eq.s32.totalorder %s16, 0
    %p150 = por %p148, %p149
    %p151 = scmp.le.s32.totalorder 1, %s10
    %p152 = scmp.lt.s32.totalorder %s10, 3
    %p153 = pnand %p151, %p152
    %p154 = pneg %p153
    // Predicated region
    $region9: #{generator_forward.6} parent=5 // pred_check
      _
    $region10: #{generator_forward.6} parent=5 // pred_check_branch
      %156 = sbr.rel (%p153) target = $region12
    $region11: #{generator_forward.6} parent=5 // pred_region
      %s157 = ssub.s32 %s10, 1
      // Predicated region
      $region13: #{generator_forward.6} parent=11 // pred_check
        %p158 = pneg %p73
      $region14: #{generator_forward.6} parent=11 // pred_check_branch
        %160 = sbr.rel (%p158) target = $region16
      $region15: #{generator_forward.6} parent=11 // pred_region
        _
      $region16: #{generator_forward.6} parent=11 // pred_fallthru
        _
      // Predicated region
      $region17: #{generator_forward.6} parent=11 // pred_check
        %p161 = pneg %p94
      $region18: #{generator_forward.6} parent=11 // pred_check_branch
        %163 = sbr.rel (%p161) target = $region20
      $region19: #{generator_forward.6} parent=11 // pred_region
        _
      $region20: #{generator_forward.6} parent=11 // pred_fallthru
        _
      // Predicated region
      $region21: #{generator_forward.6} parent=11 // pred_check
        %p164 = pneg %p115
      $region22: #{generator_forward.6} parent=11 // pred_check_branch
        %166 = sbr.rel (%p164) target = $region24
      $region23: #{generator_forward.6} parent=11 // pred_region
        _
      $region24: #{generator_forward.6} parent=11 // pred_fallthru
        _
    $region12: #{generator_forward.6} parent=5 // pred_fallthru
      _
    %p167 = scmp.lt.s32.totalorder %s10, 2
    // Predicated region
    $region25: #{generator_forward.6} parent=5 // pred_check
      %p168 = pneg %p167
    $region26: #{generator_forward.6} parent=5 // pred_check_branch
      %170 = sbr.rel (%p168) target = $region28
    $region27: #{generator_forward.6} parent=5 // pred_region
      // Predicated region
      $region29: #{generator_forward.6} parent=27 // pred_check
        %p171 = pneg %p46
      $region30: #{generator_forward.6} parent=27 // pred_check_branch
        %173 = sbr.rel (%p171) target = $region32
      $region31: #{generator_forward.6} parent=27 // pred_region
        %s174 = ssub.s32 1, %s17
        %s175 = smul.u32 %s174, %s18
        %s176 = smul.u32 16, %s175
        %p177 = scmp.lt.s32.totalorder %s176, 15
        %s178 = scalar_select %p177, %s176, 15
        %s179 = smul.addr %s178, 8
        %s180 = smul.addr %s179, 4
        %s181 = scalar_lea.vmem %s0, %s180
        %s182 = ssub.s32 1, %s17
        %s183 = smul.u32 %s182, %s18
        %s184 = smul.u32 16, %s183
      $region32: #{generator_forward.6} parent=27 // pred_fallthru
        _
    $region28: #{generator_forward.6} parent=5 // pred_fallthru
      _
    %p185 = scmp.le.s32.totalorder 1, %s10
    %p186 = scmp.lt.s32.totalorder %s10, 3
    %p187 = pnand %p185, %p186
    %p188 = pneg %p187
    // Predicated region
    $region33: #{generator_forward.6} parent=5 // pred_check
      _
    $region34: #{generator_forward.6} parent=5 // pred_check_branch
      %190 = sbr.rel (%p187) target = $region36
    $region35: #{generator_forward.6} parent=5 // pred_region
      %s191 = ssub.s32 %s10, 1
      %s192 = ssub.s32 1, %s19
      %s193 = smul.u32 %s192, %s20
      %s194 = smul.u32 16, %s193
      %p195 = scmp.lt.s32.totalorder %s194, 15
      %s196 = scalar_select %p195, %s194, 15
      %s197 = smul.addr %s196, 8
      %s198 = smul.addr %s197, 4
      %s199 = scalar_lea.vmem %s0, %s198
      %p200 = pneg %p52
      %p201 = pneg %p49
      %p202 = pneg %p73
      %p203 = pneg %p70
      %p204 = pneg %p94
      %p205 = pneg %p91
      %p206 = pneg %p115
      %p207 = pneg %p112
      %p208 = pneg %p143
      %p209 = pneg %p140
      %s210 = smul.u32 %s20, %s19
      %p211 = scmp.lt.s32.totalorder %s210, 0
      %s212 = scalar_select %p211, %s210, 0
      %s213 = smul.addr %s212, 4
      %s214 = scalar_lea.vmem %s4, %s213
      %s215 = ssub.s32 1, %s19
      %s216 = smul.u32 %s215, %s20
      %s217 = smul.u32 16, %s216
      %p218 = scmp.lt.s32.totalorder %s217, 15
      %s219 = scalar_select %p218, %s217, 15
      %s220 = smul.addr %s219, 8
      %s221 = smul.addr %s220, 4
      %s222 = scalar_lea.vmem %s0, %s221
      %s223 = ssub.s32 1, %s19
      %s224 = smul.u32 %s223, %s20
      %s225 = smul.u32 16, %s224
      %s226 = smul.u32 %s20, %s19
      %p227 = scmp.lt.s32.totalorder %s226, 0
      %s228 = scalar_select %p227, %s226, 0
      %s229 = smul.addr %s228, 4
      %s230 = scalar_lea.vmem %s4, %s229
      %s231 = smul.u32 %s20, %s19
      %p233 = scmp.eq.s32.totalorder %s19, 0
      %p234 = scmp.eq.s32.totalorder %s20, 0
      %p235 = pnand %p233, %p234
      %p236 = pneg %p235
      // Predicated region
      $region37: #{generator_forward.6} parent=35 // pred_check
        _
      $region38: #{generator_forward.6} parent=35 // pred_check_branch
        %238 = sbr.rel (%p235) target = $region40
      $region39: #{generator_forward.6} parent=35 // pred_region
        %vm239 = vcmask 7168
        %240 = vst.msk [vmem:[#allocation3] sm:$0xff] %vm239, 0.0
        %241 = vst.msk [vmem:[#allocation3 + $0x8] sm:$0xff] %vm239, 0.0
        %242 = vst.msk [vmem:[#allocation3 + $0x10] sm:$0xff] %vm239, 0.0
        %243 = vst.msk [vmem:[#allocation3 + $0x18] sm:$0xff] %vm239, 0.0
        %244 = vst.msk [vmem:[#allocation4] sm:$0xff] %vm239, 0.0
        %245 = vst.msk [vmem:[#allocation4 + $0x8] sm:$0xff] %vm239, 0.0
        %246 = vst.msk [vmem:[#allocation4 + $0x10] sm:$0xff] %vm239, 0.0
        %247 = vst.msk [vmem:[#allocation4 + $0x18] sm:$0xff] %vm239, 0.0
      $region40: #{generator_forward.6} parent=35 // pred_fallthru
        _
      // Predicated region
      $region41: #{generator_forward.6} parent=35 // pred_check
        %p248 = pneg %p233
      $region42: #{generator_forward.6} parent=35 // pred_check_branch
        %250 = sbr.rel (%p248) target = $region44
      $region43: #{generator_forward.6} parent=35 // pred_region
        %v251 = vld [vmem:[%s1] sm:$0xff]
        %v252 = vld [vmem:[%s1 + $0x8] sm:$0xff]
        %v253 = vld [vmem:[%s1 + $0x10] sm:$0xff]
        %v254 = vld [vmem:[%s1 + $0x18] sm:$0xff]
        %v255 = vld [vmem:[%s1 + $0x20] sm:$0xff]
        %v256 = vld [vmem:[%s1 + $0x28] sm:$0xff]
        %v257 = vld [vmem:[%s1 + $0x30] sm:$0xff]
        %v258 = vld [vmem:[%s1 + $0x38] sm:$0xff]
        %v259 = vld [vmem:[%s1 + $0x40] sm:$0xff]
        %v260 = vld [vmem:[%s1 + $0x48] sm:$0xff]
        %v261 = vld [vmem:[%s1 + $0x50] sm:$0xff]
        %v262 = vld [vmem:[%s1 + $0x58] sm:$0xff]
        %v263 = vld [vmem:[%s1 + $0x60] sm:$0xff]
        %v264 = vld [vmem:[%s1 + $0x68] sm:$0xff]
        %v265 = vld [vmem:[%s1 + $0x70] sm:$0xff]
        %v266 = vld [vmem:[%s1 + $0x78] sm:$0xff]
        %v267 = vld [vmem:[%s222] sm:$0xff]
        %v268 = vld [vmem:[%s222 + $0x8] sm:$0xff]
        %v269 = vld [vmem:[%s222 + $0x10] sm:$0xff]
        %v270 = vld [vmem:[%s222 + $0x18] sm:$0xff]
        %v271 = vld [vmem:[%s222 + $0x20] sm:$0xff]
        %v272 = vld [vmem:[%s222 + $0x28] sm:$0xff]
        %v273 = vld [vmem:[%s222 + $0x30] sm:$0xff]
        %v274 = vld [vmem:[%s222 + $0x38] sm:$0xff]
        %v275 = vld [vmem:[%s222 + $0x40] sm:$0xff]
        %v276 = vld [vmem:[%s222 + $0x48] sm:$0xff]
        %v277 = vld [vmem:[%s222 + $0x50] sm:$0xff]
        %v278 = vld [vmem:[%s222 + $0x58] sm:$0xff]
        %v279 = vld [vmem:[%s222 + $0x60] sm:$0xff]
        %v280 = vld [vmem:[%s222 + $0x68] sm:$0xff]
        %v281 = vld [vmem:[%s222 + $0x70] sm:$0xff]
        %v282 = vld [vmem:[%s222 + $0x78] sm:$0xff]
        %v283 = vld [vmem:[%s222 + $0x80] sm:$0xff]
        %v284 = vld [vmem:[%s222 + $0x88] sm:$0xff]
        %v285 = vld [vmem:[%s222 + $0x90] sm:$0xff]
        %v286 = vld [vmem:[%s222 + $0x98] sm:$0xff]
        %v287 = vld [vmem:[%s222 + $0xa0] sm:$0xff]
        %v288 = vld [vmem:[%s222 + $0xa8] sm:$0xff]
        %v289 = vld [vmem:[%s222 + $0xb0] sm:$0xff]
        %v290 = vld [vmem:[%s222 + $0xb8] sm:$0xff]
        %v291 = vld [vmem:[%s222 + $0xc0] sm:$0xff]
        %v292 = vld [vmem:[%s222 + $0xc8] sm:$0xff]
        %v293 = vld [vmem:[%s222 + $0xd0] sm:$0xff]
        %v294 = vld [vmem:[%s222 + $0xd8] sm:$0xff]
        %v295 = vld [vmem:[%s222 + $0xe0] sm:$0xff]
        %v296 = vld [vmem:[%s222 + $0xe8] sm:$0xff]
        %v297 = vld [vmem:[%s222 + $0xf0] sm:$0xff]
        %v298 = vld [vmem:[%s222 + $0xf8] sm:$0xff]
        %v299 = vld [vmem:[%s222 + $0x100] sm:$0xff]
        %v300 = vld [vmem:[%s222 + $0x108] sm:$0xff]
        %v301 = vld [vmem:[%s222 + $0x110] sm:$0xff]
        %v302 = vld [vmem:[%s222 + $0x118] sm:$0xff]
        %v303 = vld [vmem:[%s222 + $0x120] sm:$0xff]
        %v304 = vld [vmem:[%s222 + $0x128] sm:$0xff]
        %v305 = vld [vmem:[%s222 + $0x130] sm:$0xff]
        %v306 = vld [vmem:[%s222 + $0x138] sm:$0xff]
        %v307 = vld [vmem:[%s222 + $0x140] sm:$0xff]
        %v308 = vld [vmem:[%s222 + $0x148] sm:$0xff]
        %v309 = vld [vmem:[%s222 + $0x150] sm:$0xff]
        %v310 = vld [vmem:[%s222 + $0x158] sm:$0xff]
        %v311 = vld [vmem:[%s222 + $0x160] sm:$0xff]
        %v312 = vld [vmem:[%s222 + $0x168] sm:$0xff]
        %v313 = vld [vmem:[%s222 + $0x170] sm:$0xff]
        %v314 = vld [vmem:[%s222 + $0x178] sm:$0xff]
        %v315 = vld [vmem:[%s222 + $0x180] sm:$0xff]
        %v316 = vld [vmem:[%s222 + $0x188] sm:$0xff]
        %v317 = vld [vmem:[%s222 + $0x190] sm:$0xff]
        %v318 = vld [vmem:[%s222 + $0x198] sm:$0xff]
        %v319 = vld [vmem:[%s222 + $0x1a0] sm:$0xff]
        %v320 = vld [vmem:[%s222 + $0x1a8] sm:$0xff]
        %v321 = vld [vmem:[%s222 + $0x1b0] sm:$0xff]
        %v322 = vld [vmem:[%s222 + $0x1b8] sm:$0xff]
        %v323 = vld [vmem:[%s222 + $0x1c0] sm:$0xff]
        %v324 = vld [vmem:[%s222 + $0x1c8] sm:$0xff]
        %v325 = vld [vmem:[%s222 + $0x1d0] sm:$0xff]
        %v326 = vld [vmem:[%s222 + $0x1d8] sm:$0xff]
        %v327 = vld [vmem:[%s222 + $0x1e0] sm:$0xff]
        %v328 = vld [vmem:[%s222 + $0x1e8] sm:$0xff]
        %v329 = vld [vmem:[%s222 + $0x1f0] sm:$0xff]
        %v330 = vld [vmem:[%s222 + $0x1f8] sm:$0xff]
        %v347 = vunpack.c.l.b16 %v251
        %v348 = vunpack.c.h.b16 %v251
        %v349 = vunpack.c.l.b16 %v252
        %v350 = vunpack.c.h.b16 %v252
        %v351 = vunpack.c.l.b16 %v253
        %v352 = vunpack.c.h.b16 %v253
        %v353 = vunpack.c.l.b16 %v254
        %v354 = vunpack.c.h.b16 %v254
        %v355 = vunpack.c.l.b16 %v255
        %v356 = vunpack.c.h.b16 %v255
        %v357 = vunpack.c.l.b16 %v256
        %v358 = vunpack.c.h.b16 %v256
        %v359 = vunpack.c.l.b16 %v257
        %v360 = vunpack.c.h.b16 %v257
        %v361 = vunpack.c.l.b16 %v258
        %v362 = vunpack.c.h.b16 %v258
        %v363 = vunpack.c.l.b16 %v259
        %v364 = vunpack.c.h.b16 %v259
        %v365 = vunpack.c.l.b16 %v260
        %v366 = vunpack.c.h.b16 %v260
        %v367 = vunpack.c.l.b16 %v261
        %v368 = vunpack.c.h.b16 %v261
        %v369 = vunpack.c.l.b16 %v262
        %v370 = vunpack.c.h.b16 %v262
        %v371 = vunpack.c.l.b16 %v263
        %v372 = vunpack.c.h.b16 %v263
        %v373 = vunpack.c.l.b16 %v264
        %v374 = vunpack.c.h.b16 %v264
        %v375 = vunpack.c.l.b16 %v265
        %v376 = vunpack.c.h.b16 %v265
        %v377 = vunpack.c.l.b16 %v266
        %v378 = vunpack.c.h.b16 %v266
        %v379 = vpack.c.b16 %v355, %v347
        %v380 = vpack.c.b16 %v356, %v348
        %v381 = vpack.c.b16 %v357, %v349
        %v382 = vpack.c.b16 %v358, %v350
        %v383 = vpack.c.b16 %v359, %v351
        %v384 = vpack.c.b16 %v360, %v352
        %v385 = vpack.c.b16 %v361, %v353
        %v386 = vpack.c.b16 %v362, %v354
        %v387 = vpack.c.b16 %v371, %v363
        %v388 = vpack.c.b16 %v372, %v364
        %v389 = vpack.c.b16 %v373, %v365
        %v390 = vpack.c.b16 %v374, %v366
        %v391 = vpack.c.b16 %v375, %v367
        %v392 = vpack.c.b16 %v376, %v368
        %v393 = vpack.c.b16 %v377, %v369
        %v394 = vpack.c.b16 %v378, %v370
        %v475 = vunpack.c.l.b16 %v267
        %v476 = vunpack.c.h.b16 %v267
        %v477 = vunpack.c.l.b16 %v268
        %v478 = vunpack.c.h.b16 %v268
        %v479 = vunpack.c.l.b16 %v269
        %v480 = vunpack.c.h.b16 %v269
        %v481 = vunpack.c.l.b16 %v270
        %v482 = vunpack.c.h.b16 %v270
        %v483 = vunpack.c.l.b16 %v271
        %v484 = vunpack.c.h.b16 %v271
        %v485 = vunpack.c.l.b16 %v272
        %v486 = vunpack.c.h.b16 %v272
        %v487 = vunpack.c.l.b16 %v273
        %v488 = vunpack.c.h.b16 %v273
        %v489 = vunpack.c.l.b16 %v274
        %v490 = vunpack.c.h.b16 %v274
        %v491 = vunpack.c.l.b16 %v275
        %v492 = vunpack.c.h.b16 %v275
        %v493 = vunpack.c.l.b16 %v276
        %v494 = vunpack.c.h.b16 %v276
        %v495 = vunpack.c.l.b16 %v277
        %v496 = vunpack.c.h.b16 %v277
        %v497 = vunpack.c.l.b16 %v278
        %v498 = vunpack.c.h.b16 %v278
        %v499 = vunpack.c.l.b16 %v279
        %v500 = vunpack.c.h.b16 %v279
        %v501 = vunpack.c.l.b16 %v280
        %v502 = vunpack.c.h.b16 %v280
        %v503 = vunpack.c.l.b16 %v281
        %v504 = vunpack.c.h.b16 %v281
        %v505 = vunpack.c.l.b16 %v282
        %v506 = vunpack.c.h.b16 %v282
        %v507 = vunpack.c.l.b16 %v283
        %v508 = vunpack.c.h.b16 %v283
        %v509 = vunpack.c.l.b16 %v284
        %v510 = vunpack.c.h.b16 %v284
        %v511 = vunpack.c.l.b16 %v285
        %v512 = vunpack.c.h.b16 %v285
        %v513 = vunpack.c.l.b16 %v286
        %v514 = vunpack.c.h.b16 %v286
        %v515 = vunpack.c.l.b16 %v287
        %v516 = vunpack.c.h.b16 %v287
        %v517 = vunpack.c.l.b16 %v288
        %v518 = vunpack.c.h.b16 %v288
        %v519 = vunpack.c.l.b16 %v289
        %v520 = vunpack.c.h.b16 %v289
        %v521 = vunpack.c.l.b16 %v290
        %v522 = vunpack.c.h.b16 %v290
        %v523 = vunpack.c.l.b16 %v291
        %v524 = vunpack.c.h.b16 %v291
        %v525 = vunpack.c.l.b16 %v292
        %v526 = vunpack.c.h.b16 %v292
        %v527 = vunpack.c.l.b16 %v293
        %v528 = vunpack.c.h.b16 %v293
        %v529 = vunpack.c.l.b16 %v294
        %v530 = vunpack.c.h.b16 %v294
        %v531 = vunpack.c.l.b16 %v295
        %v532 = vunpack.c.h.b16 %v295
        %v533 = vunpack.c.l.b16 %v296
        %v534 = vunpack.c.h.b16 %v296
        %v535 = vunpack.c.l.b16 %v297
        %v536 = vunpack.c.h.b16 %v297
        %v537 = vunpack.c.l.b16 %v298
        %v538 = vunpack.c.h.b16 %v298
        %v539 = vunpack.c.l.b16 %v299
        %v540 = vunpack.c.h.b16 %v299
        %v541 = vunpack.c.l.b16 %v300
        %v542 = vunpack.c.h.b16 %v300
        %v543 = vunpack.c.l.b16 %v301
        %v544 = vunpack.c.h.b16 %v301
        %v545 = vunpack.c.l.b16 %v302
        %v546 = vunpack.c.h.b16 %v302
        %v547 = vunpack.c.l.b16 %v303
        %v548 = vunpack.c.h.b16 %v303
        %v549 = vunpack.c.l.b16 %v304
        %v550 = vunpack.c.h.b16 %v304
        %v551 = vunpack.c.l.b16 %v305
        %v552 = vunpack.c.h.b16 %v305
        %v553 = vunpack.c.l.b16 %v306
        %v554 = vunpack.c.h.b16 %v306
        %v555 = vunpack.c.l.b16 %v307
        %v556 = vunpack.c.h.b16 %v307
        %v557 = vunpack.c.l.b16 %v308
        %v558 = vunpack.c.h.b16 %v308
        %v559 = vunpack.c.l.b16 %v309
        %v560 = vunpack.c.h.b16 %v309
        %v561 = vunpack.c.l.b16 %v310
        %v562 = vunpack.c.h.b16 %v310
        %v563 = vunpack.c.l.b16 %v311
        %v564 = vunpack.c.h.b16 %v311
        %v565 = vunpack.c.l.b16 %v312
        %v566 = vunpack.c.h.b16 %v312
        %v567 = vunpack.c.l.b16 %v313
        %v568 = vunpack.c.h.b16 %v313
        %v569 = vunpack.c.l.b16 %v314
        %v570 = vunpack.c.h.b16 %v314
        %v571 = vunpack.c.l.b16 %v315
        %v572 = vunpack.c.h.b16 %v315
        %v573 = vunpack.c.l.b16 %v316
        %v574 = vunpack.c.h.b16 %v316
        %v575 = vunpack.c.l.b16 %v317
        %v576 = vunpack.c.h.b16 %v317
        %v577 = vunpack.c.l.b16 %v318
        %v578 = vunpack.c.h.b16 %v318
        %v579 = vunpack.c.l.b16 %v319
        %v580 = vunpack.c.h.b16 %v319
        %v581 = vunpack.c.l.b16 %v320
        %v582 = vunpack.c.h.b16 %v320
        %v583 = vunpack.c.l.b16 %v321
        %v584 = vunpack.c.h.b16 %v321
        %v585 = vunpack.c.l.b16 %v322
        %v586 = vunpack.c.h.b16 %v322
        %v587 = vunpack.c.l.b16 %v323
        %v588 = vunpack.c.h.b16 %v323
        %v589 = vunpack.c.l.b16 %v324
        %v590 = vunpack.c.h.b16 %v324
        %v591 = vunpack.c.l.b16 %v325
        %v592 = vunpack.c.h.b16 %v325
        %v593 = vunpack.c.l.b16 %v326
        %v594 = vunpack.c.h.b16 %v326
        %v595 = vunpack.c.l.b16 %v327
        %v596 = vunpack.c.h.b16 %v327
        %v597 = vunpack.c.l.b16 %v328
        %v598 = vunpack.c.h.b16 %v328
        %v599 = vunpack.c.l.b16 %v329
        %v600 = vunpack.c.h.b16 %v329
        %v601 = vunpack.c.l.b16 %v330
        %v602 = vunpack.c.h.b16 %v330
        %v603 = vpack.c.b16 %v483, %v475
        %v604 = vpack.c.b16 %v484, %v476
        %v605 = vpack.c.b16 %v485, %v477
        %v606 = vpack.c.b16 %v486, %v478
        %v607 = vpack.c.b16 %v487, %v479
        %v608 = vpack.c.b16 %v488, %v480
        %v609 = vpack.c.b16 %v489, %v481
        %v610 = vpack.c.b16 %v490, %v482
        %v611 = vpack.c.b16 %v499, %v491
        %v612 = vpack.c.b16 %v500, %v492
        %v613 = vpack.c.b16 %v501, %v493
        %v614 = vpack.c.b16 %v502, %v494
        %v615 = vpack.c.b16 %v503, %v495
        %v616 = vpack.c.b16 %v504, %v496
        %v617 = vpack.c.b16 %v505, %v497
        %v618 = vpack.c.b16 %v506, %v498
        %v619 = vpack.c.b16 %v515, %v507
        %v620 = vpack.c.b16 %v516, %v508
        %v621 = vpack.c.b16 %v517, %v509
        %v622 = vpack.c.b16 %v518, %v510
        %v623 = vpack.c.b16 %v519, %v511
        %v624 = vpack.c.b16 %v520, %v512
        %v625 = vpack.c.b16 %v521, %v513
        %v626 = vpack.c.b16 %v522, %v514
        %v627 = vpack.c.b16 %v531, %v523
        %v628 = vpack.c.b16 %v532, %v524
        %v629 = vpack.c.b16 %v533, %v525
        %v630 = vpack.c.b16 %v534, %v526
        %v631 = vpack.c.b16 %v535, %v527
        %v632 = vpack.c.b16 %v536, %v528
        %v633 = vpack.c.b16 %v537, %v529
        %v634 = vpack.c.b16 %v538, %v530
        %v635 = vpack.c.b16 %v547, %v539
        %v636 = vpack.c.b16 %v548, %v540
        %v637 = vpack.c.b16 %v549, %v541
        %v638 = vpack.c.b16 %v550, %v542
        %v639 = vpack.c.b16 %v551, %v543
        %v640 = vpack.c.b16 %v552, %v544
        %v641 = vpack.c.b16 %v553, %v545
        %v642 = vpack.c.b16 %v554, %v546
        %v643 = vpack.c.b16 %v563, %v555
        %v644 = vpack.c.b16 %v564, %v556
        %v645 = vpack.c.b16 %v565, %v557
        %v646 = vpack.c.b16 %v566, %v558
        %v647 = vpack.c.b16 %v567, %v559
        %v648 = vpack.c.b16 %v568, %v560
        %v649 = vpack.c.b16 %v569, %v561
        %v650 = vpack.c.b16 %v570, %v562
        %v651 = vpack.c.b16 %v579, %v571
        %v652 = vpack.c.b16 %v580, %v572
        %v653 = vpack.c.b16 %v581, %v573
        %v654 = vpack.c.b16 %v582, %v574
        %v655 = vpack.c.b16 %v583, %v575
        %v656 = vpack.c.b16 %v584, %v576
        %v657 = vpack.c.b16 %v585, %v577
        %v658 = vpack.c.b16 %v586, %v578
        %v659 = vpack.c.b16 %v595, %v587
        %v660 = vpack.c.b16 %v596, %v588
        %v661 = vpack.c.b16 %v597, %v589
        %v662 = vpack.c.b16 %v598, %v590
        %v663 = vpack.c.b16 %v599, %v591
        %v664 = vpack.c.b16 %v600, %v592
        %v665 = vpack.c.b16 %v601, %v593
        %v666 = vpack.c.b16 %v602, %v594
        %731 = vmatprep.subr.bf16.mxu0 %v604
        %732 = vmatpush1.bf16.xpose.msra.mxu0 %v603
        %733 = vmatprep.subr.bf16.mxu0 %v612
        %734 = vmatpush1.bf16.xpose.msra.mxu0 %v611
        %735 = vmatprep.subr.bf16.mxu0 %v620
        %736 = vmatpush1.bf16.xpose.msra.mxu0 %v619
        %737 = vmatprep.subr.bf16.mxu0 %v628
        %738 = vmatpush1.bf16.xpose.msra.mxu0 %v627
        %739 = vmatprep.subr.bf16.mxu0 %v636
        %740 = vmatpush1.bf16.xpose.msra.mxu0 %v635
        %741 = vmatprep.subr.bf16.mxu0 %v644
        %742 = vmatpush1.bf16.xpose.msra.mxu0 %v643
        %743 = vmatprep.subr.bf16.mxu0 %v652
        %744 = vmatpush1.bf16.xpose.msra.mxu0 %v651
        %745 = vmatprep.subr.bf16.mxu0 %v660
        %746 = vmatpush1.bf16.xpose.msra.mxu0 %v659
        %747 = vmatprep.subr.bf16.mxu0 0
        %748 = vmatpush1.bf16.xpose.msra.mxu0 0
        %749 = vmatprep.subr.bf16.mxu0 0
        %750 = vmatpush1.bf16.xpose.msra.mxu0 0
        %751 = vmatprep.subr.bf16.mxu0 0
        %752 = vmatpush1.bf16.xpose.msra.mxu0 0
        %753 = vmatprep.subr.bf16.mxu0 0
        %754 = vmatpush1.bf16.xpose.msra.mxu0 0
        %755 = vmatprep.subr.bf16.mxu0 0
        %756 = vmatpush1.bf16.xpose.msra.mxu0 0
        %757 = vmatprep.subr.bf16.mxu0 0
        %758 = vmatpush1.bf16.xpose.msra.mxu0 0
        %759 = vmatprep.subr.bf16.mxu0 0
        %760 = vmatpush1.bf16.xpose.msra.mxu0 0
        %761 = vmatprep.subr.bf16.mxu0 0
        %762 = vmatpush1.bf16.xpose.msra.mxu0 0
        %763 = vmatprep.mubr.bf16.mxu0 %v380
        %764 = vmatmul.mubr.bf16.gmra.mrb[0].mxu0 %v379
        %v765 = vpop.f32.mrb[0].mxu0
        %v766 = vadd.f32 0.0, %v765
        %v767 = vpop.f32.mrb[0].mxu0
        %v768 = vpop.f32.mrb[0].mxu0
        %v769 = vadd.f32 0.0, %v768
        %v770 = vpop.f32.mrb[0].mxu0
        %771 = vmatprep.mubr.bf16.mxu0 %v388
        %772 = vmatmul.mubr.bf16.gmra.mrb[0].mxu0 %v387
        %v773 = vpop.f32.mrb[0].mxu0
        %v774 = vadd.f32 0.0, %v773
        %v775 = vpop.f32.mrb[0].mxu0
        %v776 = vpop.f32.mrb[0].mxu0
        %v777 = vadd.f32 0.0, %v776
        %v778 = vpop.f32.mrb[0].mxu0
        %779 = vdwg.mxu0
        %780 = vmatprep.subr.bf16.mxu0 %v606
        %781 = vmatpush1.bf16.xpose.msra.mxu0 %v605
        %782 = vmatprep.subr.bf16.mxu0 %v614
        %783 = vmatpush1.bf16.xpose.msra.mxu0 %v613
        %784 = vmatprep.subr.bf16.mxu0 %v622
        %785 = vmatpush1.bf16.xpose.msra.mxu0 %v621
        %786 = vmatprep.subr.bf16.mxu0 %v630
        %787 = vmatpush1.bf16.xpose.msra.mxu0 %v629
        %788 = vmatprep.subr.bf16.mxu0 %v638
        %789 = vmatpush1.bf16.xpose.msra.mxu0 %v637
        %790 = vmatprep.subr.bf16.mxu0 %v646
        %791 = vmatpush1.bf16.xpose.msra.mxu0 %v645
        %792 = vmatprep.subr.bf16.mxu0 %v654
        %793 = vmatpush1.bf16.xpose.msra.mxu0 %v653
        %794 = vmatprep.subr.bf16.mxu0 %v662
        %795 = vmatpush1.bf16.xpose.msra.mxu0 %v661
        %796 = vmatprep.subr.bf16.mxu0 0
        %797 = vmatpush1.bf16.xpose.msra.mxu0 0
        %798 = vmatprep.subr.bf16.mxu0 0
        %799 = vmatpush1.bf16.xpose.msra.mxu0 0
        %800 = vmatprep.subr.bf16.mxu0 0
        %801 = vmatpush1.bf16.xpose.msra.mxu0 0
        %802 = vmatprep.subr.bf16.mxu0 0
        %803 = vmatpush1.bf16.xpose.msra.mxu0 0
        %804 = vmatprep.subr.bf16.mxu0 0
        %805 = vmatpush1.bf16.xpose.msra.mxu0 0
        %806 = vmatprep.subr.bf16.mxu0 0
        %807 = vmatpush1.bf16.xpose.msra.mxu0 0
        %808 = vmatprep.subr.bf16.mxu0 0
        %809 = vmatpush1.bf16.xpose.msra.mxu0 0
        %810 = vmatprep.subr.bf16.mxu0 0
        %811 = vmatpush1.bf16.xpose.msra.mxu0 0
        %812 = vmatprep.mubr.bf16.mxu0 %v382
        %813 = vmatmul.mubr.bf16.gmra.mrb[0].mxu0 %v381
        %v814 = vpop.f32.mrb[0].mxu0
        %v815 = vadd.f32 %v766, %v814
        %v816 = vpop.f32.mrb[0].mxu0
        %v817 = vpop.f32.mrb[0].mxu0
        %v818 = vadd.f32 %v769, %v817
        %v819 = vpop.f32.mrb[0].mxu0
        %820 = vmatprep.mubr.bf16.mxu0 %v390
        %821 = vmatmul.mubr.bf16.gmra.mrb[0].mxu0 %v389
        %v822 = vpop.f32.mrb[0].mxu0
        %v823 = vadd.f32 %v774, %v822
        %v824 = vpop.f32.mrb[0].mxu0
        %v825 = vpop.f32.mrb[0].mxu0
        %v826 = vadd.f32 %v777, %v825
        %v827 = vpop.f32.mrb[0].mxu0
        %828 = vdwg.mxu0
        %829 = vmatprep.subr.bf16.mxu0 %v608
        %830 = vmatpush1.bf16.xpose.msra.mxu0 %v607
        %831 = vmatprep.subr.bf16.mxu0 %v616
        %832 = vmatpush1.bf16.xpose.msra.mxu0 %v615
        %833 = vmatprep.subr.bf16.mxu0 %v624
        %834 = vmatpush1.bf16.xpose.msra.mxu0 %v623
        %835 = vmatprep.subr.bf16.mxu0 %v632
        %836 = vmatpush1.bf16.xpose.msra.mxu0 %v631
        %837 = vmatprep.subr.bf16.mxu0 %v640
        %838 = vmatpush1.bf16.xpose.msra.mxu0 %v639
        %839 = vmatprep.subr.bf16.mxu0 %v648
        %840 = vmatpush1.bf16.xpose.msra.mxu0 %v647
        %841 = vmatprep.subr.bf16.mxu0 %v656
        %842 = vmatpush1.bf16.xpose.msra.mxu0 %v655
        %843 = vmatprep.subr.bf16.mxu0 %v664
        %844 = vmatpush1.bf16.xpose.msra.mxu0 %v663
        %845 = vmatprep.subr.bf16.mxu0 0
        %846 = vmatpush1.bf16.xpose.msra.mxu0 0
        %847 = vmatprep.subr.bf16.mxu0 0
        %848 = vmatpush1.bf16.xpose.msra.mxu0 0
        %849 = vmatprep.subr.bf16.mxu0 0
        %850 = vmatpush1.bf16.xpose.msra.mxu0 0
        %851 = vmatprep.subr.bf16.mxu0 0
        %852 = vmatpush1.bf16.xpose.msra.mxu0 0
        %853 = vmatprep.subr.bf16.mxu0 0
        %854 = vmatpush1.bf16.xpose.msra.mxu0 0
        %855 = vmatprep.subr.bf16.mxu0 0
        %856 = vmatpush1.bf16.xpose.msra.mxu0 0
        %857 = vmatprep.subr.bf16.mxu0 0
        %858 = vmatpush1.bf16.xpose.msra.mxu0 0
        %859 = vmatprep.subr.bf16.mxu0 0
        %860 = vmatpush1.bf16.xpose.msra.mxu0 0
        %861 = vmatprep.mubr.bf16.mxu0 %v384
        %862 = vmatmul.mubr.bf16.gmra.mrb[0].mxu0 %v383
        %v863 = vpop.f32.mrb[0].mxu0
        %v864 = vadd.f32 %v815, %v863
        %v865 = vpop.f32.mrb[0].mxu0
        %v866 = vpop.f32.mrb[0].mxu0
        %v867 = vadd.f32 %v818, %v866
        %v868 = vpop.f32.mrb[0].mxu0
        %869 = vmatprep.mubr.bf16.mxu0 %v392
        %870 = vmatmul.mubr.bf16.gmra.mrb[0].mxu0 %v391
        %v871 = vpop.f32.mrb[0].mxu0
        %v872 = vadd.f32 %v823, %v871
        %v873 = vpop.f32.mrb[0].mxu0
        %v874 = vpop.f32.mrb[0].mxu0
        %v875 = vadd.f32 %v826, %v874
        %v876 = vpop.f32.mrb[0].mxu0
        %877 = vdwg.mxu0
        %878 = vmatprep.subr.bf16.mxu0 %v610
        %879 = vmatpush1.bf16.xpose.msra.mxu0 %v609
        %880 = vmatprep.subr.bf16.mxu0 %v618
        %881 = vmatpush1.bf16.xpose.msra.mxu0 %v617
        %882 = vmatprep.subr.bf16.mxu0 %v626
        %883 = vmatpush1.bf16.xpose.msra.mxu0 %v625
        %884 = vmatprep.subr.bf16.mxu0 %v634
        %885 = vmatpush1.bf16.xpose.msra.mxu0 %v633
        %886 = vmatprep.subr.bf16.mxu0 %v642
        %887 = vmatpush1.bf16.xpose.msra.mxu0 %v641
        %888 = vmatprep.subr.bf16.mxu0 %v650
        %889 = vmatpush1.bf16.xpose.msra.mxu0 %v649
        %890 = vmatprep.subr.bf16.mxu0 %v658
        %891 = vmatpush1.bf16.xpose.msra.mxu0 %v657
        %892 = vmatprep.subr.bf16.mxu0 %v666
        %893 = vmatpush1.bf16.xpose.msra.mxu0 %v665
        %894 = vmatprep.subr.bf16.mxu0 0
        %895 = vmatpush1.bf16.xpose.msra.mxu0 0
        %896 = vmatprep.subr.bf16.mxu0 0
        %897 = vmatpush1.bf16.xpose.msra.mxu0 0
        %898 = vmatprep.subr.bf16.mxu0 0
        %899 = vmatpush1.bf16.xpose.msra.mxu0 0
        %900 = vmatprep.subr.bf16.mxu0 0
        %901 = vmatpush1.bf16.xpose.msra.mxu0 0
        %902 = vmatprep.subr.bf16.mxu0 0
        %903 = vmatpush1.bf16.xpose.msra.mxu0 0
        %904 = vmatprep.subr.bf16.mxu0 0
        %905 = vmatpush1.bf16.xpose.msra.mxu0 0
        %906 = vmatprep.subr.bf16.mxu0 0
        %907 = vmatpush1.bf16.xpose.msra.mxu0 0
        %908 = vmatprep.subr.bf16.mxu0 0
        %909 = vmatpush1.bf16.xpose.msra.mxu0 0
        %910 = vmatprep.mubr.bf16.mxu0 %v386
        %911 = vmatmul.mubr.bf16.gmra.mrb[0].mxu0 %v385
        %v912 = vpop.f32.mrb[0].mxu0
        %v913 = vadd.f32 %v864, %v912
        %v914 = vpop.f32.mrb[0].mxu0
        %v915 = vpop.f32.mrb[0].mxu0
        %v916 = vadd.f32 %v867, %v915
        %v917 = vpop.f32.mrb[0].mxu0
        %918 = vmatprep.mubr.bf16.mxu0 %v394
        %919 = vmatmul.mubr.bf16.gmra.mrb[0].mxu0 %v393
        %v920 = vpop.f32.mrb[0].mxu0
        %v921 = vadd.f32 %v872, %v920
        %v922 = vpop.f32.mrb[0].mxu0
        %v923 = vpop.f32.mrb[0].mxu0
        %v924 = vadd.f32 %v875, %v923
        %v925 = vpop.f32.mrb[0].mxu0
        %926 = vdwg.mxu0
        %s927 = smul.u32 %s20, 32
        %s928 = scalar_lea.vmem [#allocation2], %s927
        %929 = vst [vmem:[%s928] sm:$0xff] %v913
        %930 = vst [vmem:[%s928 + $0x8] sm:$0xff] %v916
        %931 = vst [vmem:[%s928 + $0x10] sm:$0xff] %v921
        %932 = vst [vmem:[%s928 + $0x18] sm:$0xff] %v924
        %v933 = vld [vmem:[#allocation3] sm:$0xff]
        %v934 = vld [vmem:[#allocation3 + $0x8] sm:$0xff]
        %v935 = vld [vmem:[#allocation3 + $0x10] sm:$0xff]
        %v936 = vld [vmem:[#allocation3 + $0x18] sm:$0xff]
        %937 = vadd.xlane.f32.xlu0 %v913
        %v938 = vpop.xlane.xlu0 %937
        %939 = vadd.xlane.f32.xlu0 %v916
        %v940 = vpop.xlane.xlu0 %939
        %941 = vadd.xlane.f32.xlu0 %v921
        %v942 = vpop.xlane.xlu0 %941
        %943 = vadd.xlane.f32.xlu0 %v924
        %v944 = vpop.xlane.xlu0 %943
        %v945 = vadd.f32 %v933, %v938
        %v946 = vadd.f32 %v934, %v940
        %v947 = vadd.f32 %v935, %v942
        %v948 = vadd.f32 %v936, %v944
        %vm949 = vcmask 7168
        %950 = vst.msk [vmem:[#allocation3] sm:$0xff] %vm949, %v945
        %951 = vst.msk [vmem:[#allocation3 + $0x8] sm:$0xff] %vm949, %v946
        %952 = vst.msk [vmem:[#allocation3 + $0x10] sm:$0xff] %vm949, %v947
        %953 = vst.msk [vmem:[#allocation3 + $0x18] sm:$0xff] %vm949, %v948
        %v954 = vld [vmem:[#allocation4] sm:$0xff]
        %v955 = vld [vmem:[#allocation4 + $0x8] sm:$0xff]
        %v956 = vld [vmem:[#allocation4 + $0x10] sm:$0xff]
        %v957 = vld [vmem:[#allocation4 + $0x18] sm:$0xff]
        %v958 = vmul.f32 %v913, %v913
        %v959 = vmul.f32 %v916, %v916
        %v960 = vmul.f32 %v921, %v921
        %v961 = vmul.f32 %v924, %v924
        %962 = vadd.xlane.f32.xlu0 %v958
        %v963 = vpop.xlane.xlu0 %962
        %964 = vadd.xlane.f32.xlu0 %v959
        %v965 = vpop.xlane.xlu0 %964
        %966 = vadd.xlane.f32.xlu0 %v960
        %v967 = vpop.xlane.xlu0 %966
        %968 = vadd.xlane.f32.xlu0 %v961
        %v969 = vpop.xlane.xlu0 %968
        %v970 = vadd.f32 %v954, %v963
        %v971 = vadd.f32 %v955, %v965
        %v972 = vadd.f32 %v956, %v967
        %v973 = vadd.f32 %v957, %v969
        %974 = vst.msk [vmem:[#allocation4] sm:$0xff] %vm949, %v970
        %975 = vst.msk [vmem:[#allocation4 + $0x8] sm:$0xff] %vm949, %v971
        %976 = vst.msk [vmem:[#allocation4 + $0x10] sm:$0xff] %vm949, %v972
        %977 = vst.msk [vmem:[#allocation4 + $0x18] sm:$0xff] %vm949, %v973
      $region44: #{generator_forward.6} parent=35 // pred_fallthru
        _
      %p978 = scmp.eq.s32.totalorder %s19, 1
      %p979 = pnand %p978, %p234
      %p980 = pneg %p979
      // Predicated region
      $region45: #{generator_forward.6} parent=35 // pred_check
        _
      $region46: #{generator_forward.6} parent=35 // pred_check_branch
        %982 = sbr.rel (%p979) target = $region48
      $region47: #{generator_forward.6} parent=35 // pred_region
        %v983 = vld [vmem:[#allocation3] sm:$0xff]
        %v984 = vld [vmem:[#allocation3 + $0x8] sm:$0xff]
        %v985 = vld [vmem:[#allocation3 + $0x10] sm:$0xff]
        %v986 = vld [vmem:[#allocation3 + $0x18] sm:$0xff]
        %v987 = vmul.f32 %v983, 0.0078125
        %v988 = vmul.f32 %v984, 0.0078125
        %v989 = vmul.f32 %v985, 0.0078125
        %v990 = vmul.f32 %v986, 0.0078125
        %v991 = vld [vmem:[#allocation4] sm:$0xff]
        %v992 = vld [vmem:[#allocation4 + $0x8] sm:$0xff]
        %v993 = vld [vmem:[#allocation4 + $0x10] sm:$0xff]
        %v994 = vld [vmem:[#allocation4 + $0x18] sm:$0xff]
        %v995 = vmul.f32 %v991, 0.0078125
        %v996 = vmul.f32 %v992, 0.0078125
        %v997 = vmul.f32 %v993, 0.0078125
        %v998 = vmul.f32 %v994, 0.0078125
        %v999 = vmul.f32 %v987, %v987
        %v1000 = vmul.f32 %v988, %v988
        %v1001 = vmul.f32 %v989, %v989
        %v1002 = vmul.f32 %v990, %v990
        %v1003 = vsub.f32 %v995, %v999
        %v1004 = vsub.f32 %v996, %v1000
        %v1005 = vsub.f32 %v997, %v1001
        %v1006 = vsub.f32 %v998, %v1002
        %v1007 = vmax.f32 %v1003, 0.0
        %v1008 = vmax.f32 %v1004, 0.0
        %v1009 = vmax.f32 %v1005, 0.0
        %v1010 = vmax.f32 %v1006, 0.0
        %v1011 = vld [vmem:[%s2] sm:$0xff]
        %v1012 = vld [vmem:[%s2 + $0x8] sm:$0xff]
        %v1013 = vld [vmem:[%s2 + $0x10] sm:$0xff]
        %v1014 = vld [vmem:[%s2 + $0x18] sm:$0xff]
        %v1015 = vadd.f32 %v1007, 1e-05
        %v1016 = vadd.f32 %v1008, 1e-05
        %v1017 = vadd.f32 %v1009, 1e-05
        %v1018 = vadd.f32 %v1010, 1e-05
        %v1019 = vrsqrt.pop %v1015
        %v1020 = vrsqrt.pop %v1016
        %v1021 = vrsqrt.pop %v1017
        %v1022 = vrsqrt.pop %v1018
        %v1023 = vmul.f32 %v1011, %v1019
        %v1024 = vmul.f32 %v1012, %v1020
        %v1025 = vmul.f32 %v1013, %v1021
        %v1026 = vmul.f32 %v1014, %v1022
        %vm1027 = vcmask 7168
        %1028 = vst.msk [vmem:[#allocation5] sm:$0xff] %vm1027, %v1023
        %1029 = vst.msk [vmem:[#allocation5 + $0x8] sm:$0xff] %vm1027, %v1024
        %1030 = vst.msk [vmem:[#allocation5 + $0x10] sm:$0xff] %vm1027, %v1025
        %1031 = vst.msk [vmem:[#allocation5 + $0x18] sm:$0xff] %vm1027, %v1026
        %v1032 = vld [vmem:[%s3] sm:$0xff]
        %v1033 = vld [vmem:[%s3 + $0x8] sm:$0xff]
        %v1034 = vld [vmem:[%s3 + $0x10] sm:$0xff]
        %v1035 = vld [vmem:[%s3 + $0x18] sm:$0xff]
        %v1036 = vmul.f32 %v987, %v1023
        %v1037 = vmul.f32 %v988, %v1024
        %v1038 = vmul.f32 %v989, %v1025
        %v1039 = vmul.f32 %v990, %v1026
        %v1040 = vsub.f32 %v1032, %v1036
        %v1041 = vsub.f32 %v1033, %v1037
        %v1042 = vsub.f32 %v1034, %v1038
        %v1043 = vsub.f32 %v1035, %v1039
        %1044 = vst.msk [vmem:[#allocation6] sm:$0xff] %vm1027, %v1040
        %1045 = vst.msk [vmem:[#allocation6 + $0x8] sm:$0xff] %vm1027, %v1041
        %1046 = vst.msk [vmem:[#allocation6 + $0x10] sm:$0xff] %vm1027, %v1042
        %1047 = vst.msk [vmem:[#allocation6 + $0x18] sm:$0xff] %vm1027, %v1043
      $region48: #{generator_forward.6} parent=35 // pred_fallthru
        _
      // Predicated region
      $region49: #{generator_forward.6} parent=35 // pred_check
        %p1048 = pneg %p978
      $region50: #{generator_forward.6} parent=35 // pred_check_branch
        %1050 = sbr.rel (%p1048) target = $region52
      $region51: #{generator_forward.6} parent=35 // pred_region
        %s1051 = smul.u32 %s20, 32
        %s1052 = scalar_lea.vmem [#allocation2], %s1051
        %v1053 = vld [vmem:[%s1052] sm:$0xff]
        %v1054 = vld [vmem:[%s1052 + $0x8] sm:$0xff]
        %v1055 = vld [vmem:[%s1052 + $0x10] sm:$0xff]
        %v1056 = vld [vmem:[%s1052 + $0x18] sm:$0xff]
        %v1057 = vld [vmem:[#allocation5] sm:$0xff]
        %v1058 = vld [vmem:[#allocation5 + $0x8] sm:$0xff]
        %v1059 = vld [vmem:[#allocation5 + $0x10] sm:$0xff]
        %v1060 = vld [vmem:[#allocation5 + $0x18] sm:$0xff]
        %1062 = vset.pattern.permute.xlu0 0
        %1063 = vperm.xlu0 %1062, %v1057
        %v1064 = vpop.permute.xlu0 %1063
        %1067 = vset.pattern.permute.xlu0 0
        %1068 = vperm.xlu0 %1067, %v1058
        %v1069 = vpop.permute.xlu0 %1068
        %1072 = vset.pattern.permute.xlu0 0
        %1073 = vperm.xlu0 %1072, %v1059
        %v1074 = vpop.permute.xlu0 %1073
        %1077 = vset.pattern.permute.xlu0 0
        %1078 = vperm.xlu0 %1077, %v1060
        %v1079 = vpop.permute.xlu0 %1078
        %v1081 = vmul.f32 %v1053, %v1064
        %v1082 = vmul.f32 %v1054, %v1069
        %v1083 = vmul.f32 %v1055, %v1074
        %v1084 = vmul.f32 %v1056, %v1079
        %v1085 = vld [vmem:[#allocation6] sm:$0xff]
        %v1086 = vld [vmem:[#allocation6 + $0x8] sm:$0xff]
        %v1087 = vld [vmem:[#allocation6 + $0x10] sm:$0xff]
        %v1088 = vld [vmem:[#allocation6 + $0x18] sm:$0xff]
        %1090 = vset.pattern.permute.xlu0 0
        %1091 = vperm.xlu0 %1090, %v1085
        %v1092 = vpop.permute.xlu0 %1091
        %1095 = vset.pattern.permute.xlu0 0
        %1096 = vperm.xlu0 %1095, %v1086
        %v1097 = vpop.permute.xlu0 %1096
        %1100 = vset.pattern.permute.xlu0 0
        %1101 = vperm.xlu0 %1100, %v1087
        %v1102 = vpop.permute.xlu0 %1101
        %1105 = vset.pattern.permute.xlu0 0
        %1106 = vperm.xlu0 %1105, %v1088
        %v1107 = vpop.permute.xlu0 %1106
        %v1109 = vadd.f32 %v1081, %v1092
        %v1110 = vadd.f32 %v1082, %v1097
        %v1111 = vadd.f32 %v1083, %v1102
        %v1112 = vadd.f32 %v1084, %v1107
        %v1113 = vmax.f32 %v1109, 0.0
        %v1114 = vmax.f32 %v1110, 0.0
        %v1115 = vmax.f32 %v1111, 0.0
        %v1116 = vmax.f32 %v1112, 0.0
        %v1117 = vpack.c.bf16 %v1114, %v1113
        %v1118 = vpack.c.bf16 %v1116, %v1115
        %v1121 = vunpack.c.l.b16 %v1117
        %v1122 = vunpack.c.h.b16 %v1117
        %v1123 = vunpack.c.l.b16 %v1118
        %v1124 = vunpack.c.h.b16 %v1118
        %v1125 = vpack.c.b16 %v1121, %v1121
        %v1126 = vpack.c.b16 %v1122, %v1122
        %v1127 = vpack.c.b16 %v1123, %v1123
        %v1128 = vpack.c.b16 %v1124, %v1124
        %1133 = vst [vmem:[%s230] sm:$0xf] %v1125
        %1134 = vst [vmem:[%s230 + $0x4] sm:$0xf] %v1126
        %1135 = vst [vmem:[%s230 + $0x8] sm:$0xf] %v1127
        %1136 = vst [vmem:[%s230 + $0xc] sm:$0xf] %v1128
      $region52: #{generator_forward.6} parent=35 // pred_fallthru
        _
      %s1137 = smul.u32 %s20, %s19
      %p1138 = scmp.lt.s32.totalorder %s1137, 0
      %s1139 = scalar_select %p1138, %s1137, 0
      %s1140 = smul.addr %s1139, 4
      %s1141 = scalar_lea.vmem %s4, %s1140
      // Predicated region
      $region53: #{generator_forward.6} parent=35 // pred_check
        %p1142 = pneg %p140
      $region54: #{generator_forward.6} parent=35 // pred_check_branch
        %1144 = sbr.rel (%p1142) target = $region56
      $region55: #{generator_forward.6} parent=35 // pred_region
        %s1145 = smul.u32 %s20, %s19
      $region56: #{generator_forward.6} parent=35 // pred_fallthru
        _
    $region36: #{generator_forward.6} parent=5 // pred_fallthru
      _
    %p1146 = scmp.le.s32.totalorder 2, %s10
    // Predicated region
    $region57: #{generator_forward.6} parent=5 // pred_check
      %p1147 = pneg %p1146
    $region58: #{generator_forward.6} parent=5 // pred_check_branch
      %1149 = sbr.rel (%p1147) target = $region60
    $region59: #{generator_forward.6} parent=5 // pred_region
      %s1150 = ssub.s32 %s10, 2
      // Predicated region
      $region61: #{generator_forward.6} parent=59 // pred_check
        %p1151 = pneg %p146
      $region62: #{generator_forward.6} parent=59 // pred_check_branch
        %1153 = sbr.rel (%p1151) target = $region64
      $region63: #{generator_forward.6} parent=59 // pred_region
        %s1154 = smul.u32 %s22, %s21
        %p1155 = scmp.lt.s32.totalorder %s1154, 0
        %s1156 = scalar_select %p1155, %s1154, 0
        %s1157 = smul.addr %s1156, 4
        %s1158 = scalar_lea.vmem %s4, %s1157
      $region64: #{generator_forward.6} parent=59 // pred_fallthru
        _
    $region60: #{generator_forward.6} parent=5 // pred_fallthru
      _
  $region6: #{generator_forward.6} parent=0 // loop_footer
    %s14 = sadd.s32 1, %s10
  $region7: #{generator_forward.6} parent=0 // loop_footer_branch
    %9 = sbr.rel target = $region3
  $region8: #{generator_forward.6} parent=0 // loop_exit
    _

// kernel: generator_forward.7
$region0: #{generator_forward.7}
  #allocation0 [shape = 'u32[]', space=smem, size = 0x4, offset = 0x4, fixed_abs, tag = 'smem constant byte address 0x4 - core index']
  #allocation1 [shape = 'u32[144,128]{1,0:T(1,128)}', space=vmem, size = 0x12000, scoped, tag = 'internal scratch']
  #allocation2 [shape = 'f32[1,16,512]{2,1,0:T(8,128)}', space=vmem, size = 0x8000, scoped, tag = 'scratch operand']
  #allocation3 [shape = 'f32[16,1]{1,0:T(8,128)}', space=vmem, size = 0x2000, scoped, tag = 'scratch operand']
  #allocation4 [shape = 'f32[16,1]{1,0:T(8,128)}', space=vmem, size = 0x2000, scoped, tag = 'scratch operand']
  #allocation5 [shape = 'f32[16,1]{1,0:T(8,128)}', space=vmem, size = 0x2000, scoped, tag = 'scratch operand']
  #allocation6 [shape = 'f32[16,1]{1,0:T(8,128)}', space=vmem, size = 0x2000, scoped, tag = 'scratch operand']
  %s0 = inlined_call_operand.vmem [shape: bf16[512,512], index: 0, kind: input, shape index: {}]
  %s1 = inlined_call_operand.vmem [shape: bf16[16,512], index: 1, kind: input, shape index: {}]
  %s2 = inlined_call_operand.vmem [shape: f32[16,1], index: 2, kind: input, shape index: {}]
  %s3 = inlined_call_operand.vmem [shape: f32[16,1], index: 3, kind: input, shape index: {}]
  %s4 = inlined_call_operand.vmem [shape: bf16[16,512], index: 4, kind: output, shape index: {}]
  %s5 = sld [smem:[#allocation0]]
  $region65: #{generator_forward.7} parent=0
    _
  %s7 = ssub.s32 1, %s5
  %s8 = scalar_select 0, %s7, %s5
  loop: start=0, step=1, limit=4
  $region2: #{generator_forward.7} parent=0 // loop_pre_header
    _
  $region3: #{generator_forward.7} parent=0 // loop_header
    %s10 = sphi 0, %s14
    %p11 = scmp.ge.s32.totalorder %s10, 4
    %s17 = sphi 0, %s29
    %s18 = sphi 0, %s25
    %s19 = sphi 0, %s17
    %s20 = sphi 0, %s18
    %s21 = sphi 0, %s19
    %s22 = sphi 0, %s20
    %s36 = sphi 0, %s38
    %s39 = sphi 0, %s36
    %s40 = sphi 0, %s39
    %s56 = sphi 0, %s40
    %s60 = sphi 0, %s60
    %s62 = sphi 0, %s60
    %s63 = sphi 0, %s62
    %s77 = sphi 0, %s63
    %s81 = sphi 0, %s81
    %s83 = sphi 0, %s81
    %s84 = sphi 0, %s83
    %s98 = sphi 0, %s84
    %s102 = sphi 0, %s102
    %s104 = sphi 0, %s102
    %s105 = sphi 0, %s104
    %s119 = sphi 0, %s105
    %s127 = sphi 0, %s129
    %s130 = sphi 0, %s127
    %s131 = sphi 0, %s130
    %s147 = sphi 0, %s131
  $region4: #{generator_forward.7} parent=0 // loop_header_branch
    %13 = sbr.rel (%p11) target = $region8
  $region5: #{generator_forward.7} parent=0 // loop_body
    %s15 = ssub.s32 %s10, 1
    %s16 = ssub.s32 %s10, 2
    %s23 = sadd.s32 1, %s18
    %p24 = scmp.ge.s32.totalorder %s23, 1
    %s25 = scalar_select %p24, 0, %s23
    %s26 = sadd.s32 1, %s17
    %s27 = scalar_select %p24, %s26, %s17
    %p28 = scmp.ge.s32.totalorder %s27, 2
    %s29 = scalar_select %p28, 0, %s27
    %s30 = ssub.s32 1, %s17
    %s31 = smul.u32 %s30, %s18
    %s32 = ssub.s32 1, %s29
    %s33 = smul.u32 %s32, %s25
    %s34 = ssub.s32 %s31, %s33
    %p35 = scmp.eq.s32.totalorder %s34, 0
    %s37 = sadd.s32 %s36, 1
    %s38 = scalar_select %p35, %s36, %s37
    %p41 = pneg %p35
    %p42 = scmp.eq.s32.totalorder %s10, 1
    %p43 = por %p41, %p42
    %p44 = scmp.ne.s32.totalorder %s36, %s39
    %p45 = scmp.eq.s32.totalorder %s10, 0
    %p46 = por %p44, %p45
    %p47 = scmp.ne.s32.totalorder %s36, %s39
    %p48 = scmp.eq.s32.totalorder %s15, 1
    %p49 = por %p47, %p48
    %p50 = scmp.ne.s32.totalorder %s39, %s40
    %p51 = scmp.eq.s32.totalorder %s15, 0
    %p52 = por %p50, %p51
    %p53 = scmp.ne.s32.totalorder %s39, %s40
    %p54 = scmp.eq.s32.totalorder %s16, 1
    %p55 = por %p53, %p54
    %p57 = scmp.ne.s32.totalorder %s40, %s56
    %p58 = scmp.eq.s32.totalorder %s16, 0
    %p59 = por %p57, %p58
    %s61 = sadd.s32 %s60, 1
    %p64 = scmp.eq.s32.totalorder %s10, 1
    %p65 = scmp.ne.s32.totalorder %s60, %s62
    %p66 = scmp.eq.s32.totalorder %s10, 0
    %p67 = por %p65, %p66
    %p68 = scmp.ne.s32.totalorder %s60, %s62
    %p69 = scmp.eq.s32.totalorder %s15, 1
    %p70 = por %p68, %p69
    %p71 = scmp.ne.s32.totalorder %s62, %s63
    %p72 = scmp.eq.s32.totalorder %s15, 0
    %p73 = por %p71, %p72
    %p74 = scmp.ne.s32.totalorder %s62, %s63
    %p75 = scmp.eq.s32.totalorder %s16, 1
    %p76 = por %p74, %p75
    %p78 = scmp.ne.s32.totalorder %s63, %s77
    %p79 = scmp.eq.s32.totalorder %s16, 0
    %p80 = por %p78, %p79
    %s82 = sadd.s32 %s81, 1
    %p85 = scmp.eq.s32.totalorder %s10, 1
    %p86 = scmp.ne.s32.totalorder %s81, %s83
    %p87 = scmp.eq.s32.totalorder %s10, 0
    %p88 = por %p86, %p87
    %p89 = scmp.ne.s32.totalorder %s81, %s83
    %p90 = scmp.eq.s32.totalorder %s15, 1
    %p91 = por %p89, %p90
    %p92 = scmp.ne.s32.totalorder %s83, %s84
    %p93 = scmp.eq.s32.totalorder %s15, 0
    %p94 = por %p92, %p93
    %p95 = scmp.ne.s32.totalorder %s83, %s84
    %p96 = scmp.eq.s32.totalorder %s16, 1
    %p97 = por %p95, %p96
    %p99 = scmp.ne.s32.totalorder %s84, %s98
    %p100 = scmp.eq.s32.totalorder %s16, 0
    %p101 = por %p99, %p100
    %s103 = sadd.s32 %s102, 1
    %p106 = scmp.eq.s32.totalorder %s10, 1
    %p107 = scmp.ne.s32.totalorder %s102, %s104
    %p108 = scmp.eq.s32.totalorder %s10, 0
    %p109 = por %p107, %p108
    %p110 = scmp.ne.s32.totalorder %s102, %s104
    %p111 = scmp.eq.s32.totalorder %s15, 1
    %p112 = por %p110, %p111
    %p113 = scmp.ne.s32.totalorder %s104, %s105
    %p114 = scmp.eq.s32.totalorder %s15, 0
    %p115 = por %p113, %p114
    %p116 = scmp.ne.s32.totalorder %s104, %s105
    %p117 = scmp.eq.s32.totalorder %s16, 1
    %p118 = por %p116, %p117
    %p120 = scmp.ne.s32.totalorder %s105, %s119
    %p121 = scmp.eq.s32.totalorder %s16, 0
    %p122 = por %p120, %p121
    %s123 = smul.u32 %s18, %s17
    %s124 = smul.u32 %s25, %s29
    %s125 = ssub.s32 %s123, %s124
    %p126 = scmp.eq.s32.totalorder %s125, 0
    %s128 = sadd.s32 %s127, 1
    %s129 = scalar_select %p126, %s127, %s128
    %p132 = pneg %p126
    %p133 = scmp.eq.s32.totalorder %s10, 1
    %p134 = por %p132, %p133
    %p135 = scmp.ne.s32.totalorder %s127, %s130
    %p136 = scmp.eq.s32.totalorder %s10, 0
    %p137 = por %p135, %p136
    %p138 = scmp.ne.s32.totalorder %s127, %s130
    %p139 = scmp.eq.s32.totalorder %s15, 1
    %p140 = por %p138, %p139
    %p141 = scmp.ne.s32.totalorder %s130, %s131
    %p142 = scmp.eq.s32.totalorder %s15, 0
    %p143 = por %p141, %p142
    %p144 = scmp.ne.s32.totalorder %s130, %s131
    %p145 = scmp.eq.s32.totalorder %s16, 1
    %p146 = por %p144, %p145
    %p148 = scmp.ne.s32.totalorder %s131, %s147
    %p149 = scmp.eq.s32.totalorder %s16, 0
    %p150 = por %p148, %p149
    %p151 = scmp.le.s32.totalorder 1, %s10
    %p152 = scmp.lt.s32.totalorder %s10, 3
    %p153 = pnand %p151, %p152
    %p154 = pneg %p153
    // Predicated region
    $region9: #{generator_forward.7} parent=5 // pred_check
      _
    $region10: #{generator_forward.7} parent=5 // pred_check_branch
      %156 = sbr.rel (%p153) target = $region12
    $region11: #{generator_forward.7} parent=5 // pred_region
      %s157 = ssub.s32 %s10, 1
      // Predicated region
      $region13: #{generator_forward.7} parent=11 // pred_check
        %p158 = pneg %p73
      $region14: #{generator_forward.7} parent=11 // pred_check_branch
        %160 = sbr.rel (%p158) target = $region16
      $region15: #{generator_forward.7} parent=11 // pred_region
        _
      $region16: #{generator_forward.7} parent=11 // pred_fallthru
        _
      // Predicated region
      $region17: #{generator_forward.7} parent=11 // pred_check
        %p161 = pneg %p94
      $region18: #{generator_forward.7} parent=11 // pred_check_branch
        %163 = sbr.rel (%p161) target = $region20
      $region19: #{generator_forward.7} parent=11 // pred_region
        _
      $region20: #{generator_forward.7} parent=11 // pred_fallthru
        _
      // Predicated region
      $region21: #{generator_forward.7} parent=11 // pred_check
        %p164 = pneg %p115
      $region22: #{generator_forward.7} parent=11 // pred_check_branch
        %166 = sbr.rel (%p164) target = $region24
      $region23: #{generator_forward.7} parent=11 // pred_region
        _
      $region24: #{generator_forward.7} parent=11 // pred_fallthru
        _
    $region12: #{generator_forward.7} parent=5 // pred_fallthru
      _
    %p167 = scmp.lt.s32.totalorder %s10, 2
    // Predicated region
    $region25: #{generator_forward.7} parent=5 // pred_check
      %p168 = pneg %p167
    $region26: #{generator_forward.7} parent=5 // pred_check_branch
      %170 = sbr.rel (%p168) target = $region28
    $region27: #{generator_forward.7} parent=5 // pred_region
      // Predicated region
      $region29: #{generator_forward.7} parent=27 // pred_check
        %p171 = pneg %p46
      $region30: #{generator_forward.7} parent=27 // pred_check_branch
        %173 = sbr.rel (%p171) target = $region32
      $region31: #{generator_forward.7} parent=27 // pred_region
        %s174 = ssub.s32 1, %s17
        %s175 = smul.u32 %s174, %s18
        %s176 = smul.u32 64, %s175
        %p177 = scmp.lt.s32.totalorder %s176, 63
        %s178 = scalar_select %p177, %s176, 63
        %s179 = smul.addr %s178, 4
        %s180 = smul.addr %s179, 4
        %s181 = scalar_lea.vmem %s0, %s180
        %s182 = ssub.s32 1, %s17
        %s183 = smul.u32 %s182, %s18
        %s184 = smul.u32 64, %s183
      $region32: #{generator_forward.7} parent=27 // pred_fallthru
        _
    $region28: #{generator_forward.7} parent=5 // pred_fallthru
      _
    %p185 = scmp.le.s32.totalorder 1, %s10
    %p186 = scmp.lt.s32.totalorder %s10, 3
    %p187 = pnand %p185, %p186
    %p188 = pneg %p187
    // Predicated region
    $region33: #{generator_forward.7} parent=5 // pred_check
      _
    $region34: #{generator_forward.7} parent=5 // pred_check_branch
      %190 = sbr.rel (%p187) target = $region36
    $region35: #{generator_forward.7} parent=5 // pred_region
      %s191 = ssub.s32 %s10, 1
      %s192 = ssub.s32 1, %s19
      %s193 = smul.u32 %s192, %s20
      %s194 = smul.u32 64, %s193
      %p195 = scmp.lt.s32.totalorder %s194, 63
      %s196 = scalar_select %p195, %s194, 63
      %s197 = smul.addr %s196, 4
      %s198 = smul.addr %s197, 4
      %s199 = scalar_lea.vmem %s0, %s198
      %p200 = pneg %p52
      %p201 = pneg %p49
      %p202 = pneg %p73
      %p203 = pneg %p70
      %p204 = pneg %p94
      %p205 = pneg %p91
      %p206 = pneg %p115
      %p207 = pneg %p112
      %p208 = pneg %p143
      %p209 = pneg %p140
      %s210 = smul.u32 %s20, %s19
      %s211 = smul.u32 4, %s210
      %p212 = scmp.lt.s32.totalorder %s211, 3
      %s213 = scalar_select %p212, %s211, 3
      %s214 = smul.addr %s213, 4
      %s215 = scalar_lea.vmem %s4, %s214
      %s216 = ssub.s32 1, %s19
      %s217 = smul.u32 %s216, %s20
      %s218 = smul.u32 64, %s217
      %p219 = scmp.lt.s32.totalorder %s218, 63
      %s220 = scalar_select %p219, %s218, 63
      %s221 = smul.addr %s220, 4
      %s222 = smul.addr %s221, 4
      %s223 = scalar_lea.vmem %s0, %s222
      %s224 = ssub.s32 1, %s19
      %s225 = smul.u32 %s224, %s20
      %s226 = smul.u32 64, %s225
      %s227 = smul.u32 %s20, %s19
      %s228 = smul.u32 4, %s227
      %p229 = scmp.lt.s32.totalorder %s228, 3
      %s230 = scalar_select %p229, %s228, 3
      %s231 = smul.addr %s230, 4
      %s232 = scalar_lea.vmem %s4, %s231
      %s233 = smul.u32 %s20, %s19
      %s234 = smul.u32 4, %s233
      %p235 = scmp.eq.s32.totalorder %s19, 0
      %p236 = scmp.eq.s32.totalorder %s20, 0
      %p237 = pnand %p235, %p236
      %p238 = pneg %p237
      // Predicated region
      $region37: #{generator_forward.7} parent=35 // pred_check
        _
      $region38: #{generator_forward.7} parent=35 // pred_check_branch
        %240 = sbr.rel (%p237) target = $region40
      $region39: #{generator_forward.7} parent=35 // pred_region
        %vm241 = vcmask 7168
        %242 = vst.msk [vmem:[#allocation3] sm:$0xff] %vm241, 0.0
        %243 = vst.msk [vmem:[#allocation3 + $0x8] sm:$0xff] %vm241, 0.0
        %244 = vst.msk [vmem:[#allocation4] sm:$0xff] %vm241, 0.0
        %245 = vst.msk [vmem:[#allocation4 + $0x8] sm:$0xff] %vm241, 0.0
      $region40: #{generator_forward.7} parent=35 // pred_fallthru
        _
      // Predicated region
      $region41: #{generator_forward.7} parent=35 // pred_check
        %p246 = pneg %p235
      $region42: #{generator_forward.7} parent=35 // pred_check_branch
        %248 = sbr.rel (%p246) target = $region44
      $region43: #{generator_forward.7} parent=35 // pred_region
        %v249 = vld [vmem:[%s1] sm:$0xff]
        %v250 = vld [vmem:[%s1 + $0x8] sm:$0xff]
        %v251 = vld [vmem:[%s1 + $0x10] sm:$0xff]
        %v252 = vld [vmem:[%s1 + $0x18] sm:$0xff]
        %v253 = vld [vmem:[%s223] sm:$0xff]
        %v254 = vld [vmem:[%s223 + $0x8] sm:$0xff]
        %v255 = vld [vmem:[%s223 + $0x10] sm:$0xff]
        %v256 = vld [vmem:[%s223 + $0x18] sm:$0xff]
        %v257 = vld [vmem:[%s223 + $0x20] sm:$0xff]
        %v258 = vld [vmem:[%s223 + $0x28] sm:$0xff]
        %v259 = vld [vmem:[%s223 + $0x30] sm:$0xff]
        %v260 = vld [vmem:[%s223 + $0x38] sm:$0xff]
        %v261 = vld [vmem:[%s223 + $0x40] sm:$0xff]
        %v262 = vld [vmem:[%s223 + $0x48] sm:$0xff]
        %v263 = vld [vmem:[%s223 + $0x50] sm:$0xff]
        %v264 = vld [vmem:[%s223 + $0x58] sm:$0xff]
        %v265 = vld [vmem:[%s223 + $0x60] sm:$0xff]
        %v266 = vld [vmem:[%s223 + $0x68] sm:$0xff]
        %v267 = vld [vmem:[%s223 + $0x70] sm:$0xff]
        %v268 = vld [vmem:[%s223 + $0x78] sm:$0xff]
        %v269 = vld [vmem:[%s223 + $0x80] sm:$0xff]
        %v270 = vld [vmem:[%s223 + $0x88] sm:$0xff]
        %v271 = vld [vmem:[%s223 + $0x90] sm:$0xff]
        %v272 = vld [vmem:[%s223 + $0x98] sm:$0xff]
        %v273 = vld [vmem:[%s223 + $0xa0] sm:$0xff]
        %v274 = vld [vmem:[%s223 + $0xa8] sm:$0xff]
        %v275 = vld [vmem:[%s223 + $0xb0] sm:$0xff]
        %v276 = vld [vmem:[%s223 + $0xb8] sm:$0xff]
        %v277 = vld [vmem:[%s223 + $0xc0] sm:$0xff]
        %v278 = vld [vmem:[%s223 + $0xc8] sm:$0xff]
        %v279 = vld [vmem:[%s223 + $0xd0] sm:$0xff]
        %v280 = vld [vmem:[%s223 + $0xd8] sm:$0xff]
        %v281 = vld [vmem:[%s223 + $0xe0] sm:$0xff]
        %v282 = vld [vmem:[%s223 + $0xe8] sm:$0xff]
        %v283 = vld [vmem:[%s223 + $0xf0] sm:$0xff]
        %v284 = vld [vmem:[%s223 + $0xf8] sm:$0xff]
        %v285 = vld [vmem:[%s223 + $0x100] sm:$0xff]
        %v286 = vld [vmem:[%s223 + $0x108] sm:$0xff]
        %v287 = vld [vmem:[%s223 + $0x110] sm:$0xff]
        %v288 = vld [vmem:[%s223 + $0x118] sm:$0xff]
        %v289 = vld [vmem:[%s223 + $0x120] sm:$0xff]
        %v290 = vld [vmem:[%s223 + $0x128] sm:$0xff]
        %v291 = vld [vmem:[%s223 + $0x130] sm:$0xff]
        %v292 = vld [vmem:[%s223 + $0x138] sm:$0xff]
        %v293 = vld [vmem:[%s223 + $0x140] sm:$0xff]
        %v294 = vld [vmem:[%s223 + $0x148] sm:$0xff]
        %v295 = vld [vmem:[%s223 + $0x150] sm:$0xff]
        %v296 = vld [vmem:[%s223 + $0x158] sm:$0xff]
        %v297 = vld [vmem:[%s223 + $0x160] sm:$0xff]
        %v298 = vld [vmem:[%s223 + $0x168] sm:$0xff]
        %v299 = vld [vmem:[%s223 + $0x170] sm:$0xff]
        %v300 = vld [vmem:[%s223 + $0x178] sm:$0xff]
        %v301 = vld [vmem:[%s223 + $0x180] sm:$0xff]
        %v302 = vld [vmem:[%s223 + $0x188] sm:$0xff]
        %v303 = vld [vmem:[%s223 + $0x190] sm:$0xff]
        %v304 = vld [vmem:[%s223 + $0x198] sm:$0xff]
        %v305 = vld [vmem:[%s223 + $0x1a0] sm:$0xff]
        %v306 = vld [vmem:[%s223 + $0x1a8] sm:$0xff]
        %v307 = vld [vmem:[%s223 + $0x1b0] sm:$0xff]
        %v308 = vld [vmem:[%s223 + $0x1b8] sm:$0xff]
        %v309 = vld [vmem:[%s223 + $0x1c0] sm:$0xff]
        %v310 = vld [vmem:[%s223 + $0x1c8] sm:$0xff]
        %v311 = vld [vmem:[%s223 + $0x1d0] sm:$0xff]
        %v312 = vld [vmem:[%s223 + $0x1d8] sm:$0xff]
        %v313 = vld [vmem:[%s223 + $0x1e0] sm:$0xff]
        %v314 = vld [vmem:[%s223 + $0x1e8] sm:$0xff]
        %v315 = vld [vmem:[%s223 + $0x1f0] sm:$0xff]
        %v316 = vld [vmem:[%s223 + $0x1f8] sm:$0xff]
        %v317 = vld [vmem:[%s223 + $0x200] sm:$0xff]
        %v318 = vld [vmem:[%s223 + $0x208] sm:$0xff]
        %v319 = vld [vmem:[%s223 + $0x210] sm:$0xff]
        %v320 = vld [vmem:[%s223 + $0x218] sm:$0xff]
        %v321 = vld [vmem:[%s223 + $0x220] sm:$0xff]
        %v322 = vld [vmem:[%s223 + $0x228] sm:$0xff]
        %v323 = vld [vmem:[%s223 + $0x230] sm:$0xff]
        %v324 = vld [vmem:[%s223 + $0x238] sm:$0xff]
        %v325 = vld [vmem:[%s223 + $0x240] sm:$0xff]
        %v326 = vld [vmem:[%s223 + $0x248] sm:$0xff]
        %v327 = vld [vmem:[%s223 + $0x250] sm:$0xff]
        %v328 = vld [vmem:[%s223 + $0x258] sm:$0xff]
        %v329 = vld [vmem:[%s223 + $0x260] sm:$0xff]
        %v330 = vld [vmem:[%s223 + $0x268] sm:$0xff]
        %v331 = vld [vmem:[%s223 + $0x270] sm:$0xff]
        %v332 = vld [vmem:[%s223 + $0x278] sm:$0xff]
        %v333 = vld [vmem:[%s223 + $0x280] sm:$0xff]
        %v334 = vld [vmem:[%s223 + $0x288] sm:$0xff]
        %v335 = vld [vmem:[%s223 + $0x290] sm:$0xff]
        %v336 = vld [vmem:[%s223 + $0x298] sm:$0xff]
        %v337 = vld [vmem:[%s223 + $0x2a0] sm:$0xff]
        %v338 = vld [vmem:[%s223 + $0x2a8] sm:$0xff]
        %v339 = vld [vmem:[%s223 + $0x2b0] sm:$0xff]
        %v340 = vld [vmem:[%s223 + $0x2b8] sm:$0xff]
        %v341 = vld [vmem:[%s223 + $0x2c0] sm:$0xff]
        %v342 = vld [vmem:[%s223 + $0x2c8] sm:$0xff]
        %v343 = vld [vmem:[%s223 + $0x2d0] sm:$0xff]
        %v344 = vld [vmem:[%s223 + $0x2d8] sm:$0xff]
        %v345 = vld [vmem:[%s223 + $0x2e0] sm:$0xff]
        %v346 = vld [vmem:[%s223 + $0x2e8] sm:$0xff]
        %v347 = vld [vmem:[%s223 + $0x2f0] sm:$0xff]
        %v348 = vld [vmem:[%s223 + $0x2f8] sm:$0xff]
        %v349 = vld [vmem:[%s223 + $0x300] sm:$0xff]
        %v350 = vld [vmem:[%s223 + $0x308] sm:$0xff]
        %v351 = vld [vmem:[%s223 + $0x310] sm:$0xff]
        %v352 = vld [vmem:[%s223 + $0x318] sm:$0xff]
        %v353 = vld [vmem:[%s223 + $0x320] sm:$0xff]
        %v354 = vld [vmem:[%s223 + $0x328] sm:$0xff]
        %v355 = vld [vmem:[%s223 + $0x330] sm:$0xff]
        %v356 = vld [vmem:[%s223 + $0x338] sm:$0xff]
        %v357 = vld [vmem:[%s223 + $0x340] sm:$0xff]
        %v358 = vld [vmem:[%s223 + $0x348] sm:$0xff]
        %v359 = vld [vmem:[%s223 + $0x350] sm:$0xff]
        %v360 = vld [vmem:[%s223 + $0x358] sm:$0xff]
        %v361 = vld [vmem:[%s223 + $0x360] sm:$0xff]
        %v362 = vld [vmem:[%s223 + $0x368] sm:$0xff]
        %v363 = vld [vmem:[%s223 + $0x370] sm:$0xff]
        %v364 = vld [vmem:[%s223 + $0x378] sm:$0xff]
        %v365 = vld [vmem:[%s223 + $0x380] sm:$0xff]
        %v366 = vld [vmem:[%s223 + $0x388] sm:$0xff]
        %v367 = vld [vmem:[%s223 + $0x390] sm:$0xff]
        %v368 = vld [vmem:[%s223 + $0x398] sm:$0xff]
        %v369 = vld [vmem:[%s223 + $0x3a0] sm:$0xff]
        %v370 = vld [vmem:[%s223 + $0x3a8] sm:$0xff]
        %v371 = vld [vmem:[%s223 + $0x3b0] sm:$0xff]
        %v372 = vld [vmem:[%s223 + $0x3b8] sm:$0xff]
        %v373 = vld [vmem:[%s223 + $0x3c0] sm:$0xff]
        %v374 = vld [vmem:[%s223 + $0x3c8] sm:$0xff]
        %v375 = vld [vmem:[%s223 + $0x3d0] sm:$0xff]
        %v376 = vld [vmem:[%s223 + $0x3d8] sm:$0xff]
        %v377 = vld [vmem:[%s223 + $0x3e0] sm:$0xff]
        %v378 = vld [vmem:[%s223 + $0x3e8] sm:$0xff]
        %v379 = vld [vmem:[%s223 + $0x3f0] sm:$0xff]
        %v380 = vld [vmem:[%s223 + $0x3f8] sm:$0xff]
        %v385 = vunpack.c.l.b16 %v249
        %v386 = vunpack.c.h.b16 %v249
        %v387 = vunpack.c.l.b16 %v250
        %v388 = vunpack.c.h.b16 %v250
        %v389 = vunpack.c.l.b16 %v251
        %v390 = vunpack.c.h.b16 %v251
        %v391 = vunpack.c.l.b16 %v252
        %v392 = vunpack.c.h.b16 %v252
        %v393 = vpack.c.b16 %v389, %v385
        %v394 = vpack.c.b16 %v390, %v386
        %v395 = vpack.c.b16 %v391, %v387
        %v396 = vpack.c.b16 %v392, %v388
        %v529 = vunpack.c.l.b16 %v253
        %v530 = vunpack.c.h.b16 %v253
        %v531 = vunpack.c.l.b16 %v254
        %v532 = vunpack.c.h.b16 %v254
        %v533 = vunpack.c.l.b16 %v255
        %v534 = vunpack.c.h.b16 %v255
        %v535 = vunpack.c.l.b16 %v256
        %v536 = vunpack.c.h.b16 %v256
        %v537 = vunpack.c.l.b16 %v257
        %v538 = vunpack.c.h.b16 %v257
        %v539 = vunpack.c.l.b16 %v258
        %v540 = vunpack.c.h.b16 %v258
        %v541 = vunpack.c.l.b16 %v259
        %v542 = vunpack.c.h.b16 %v259
        %v543 = vunpack.c.l.b16 %v260
        %v544 = vunpack.c.h.b16 %v260
        %v545 = vunpack.c.l.b16 %v261
        %v546 = vunpack.c.h.b16 %v261
        %v547 = vunpack.c.l.b16 %v262
        %v548 = vunpack.c.h.b16 %v262
        %v549 = vunpack.c.l.b16 %v263
        %v550 = vunpack.c.h.b16 %v263
        %v551 = vunpack.c.l.b16 %v264
        %v552 = vunpack.c.h.b16 %v264
        %v553 = vunpack.c.l.b16 %v265
        %v554 = vunpack.c.h.b16 %v265
        %v555 = vunpack.c.l.b16 %v266
        %v556 = vunpack.c.h.b16 %v266
        %v557 = vunpack.c.l.b16 %v267
        %v558 = vunpack.c.h.b16 %v267
        %v559 = vunpack.c.l.b16 %v268
        %v560 = vunpack.c.h.b16 %v268
        %v561 = vunpack.c.l.b16 %v269
        %v562 = vunpack.c.h.b16 %v269
        %v563 = vunpack.c.l.b16 %v270
        %v564 = vunpack.c.h.b16 %v270
        %v565 = vunpack.c.l.b16 %v271
        %v566 = vunpack.c.h.b16 %v271
        %v567 = vunpack.c.l.b16 %v272
        %v568 = vunpack.c.h.b16 %v272
        %v569 = vunpack.c.l.b16 %v273
        %v570 = vunpack.c.h.b16 %v273
        %v571 = vunpack.c.l.b16 %v274
        %v572 = vunpack.c.h.b16 %v274
        %v573 = vunpack.c.l.b16 %v275
        %v574 = vunpack.c.h.b16 %v275
        %v575 = vunpack.c.l.b16 %v276
        %v576 = vunpack.c.h.b16 %v276
        %v577 = vunpack.c.l.b16 %v277
        %v578 = vunpack.c.h.b16 %v277
        %v579 = vunpack.c.l.b16 %v278
        %v580 = vunpack.c.h.b16 %v278
        %v581 = vunpack.c.l.b16 %v279
        %v582 = vunpack.c.h.b16 %v279
        %v583 = vunpack.c.l.b16 %v280
        %v584 = vunpack.c.h.b16 %v280
        %v585 = vunpack.c.l.b16 %v281
        %v586 = vunpack.c.h.b16 %v281
        %v587 = vunpack.c.l.b16 %v282
        %v588 = vunpack.c.h.b16 %v282
        %v589 = vunpack.c.l.b16 %v283
        %v590 = vunpack.c.h.b16 %v283
        %v591 = vunpack.c.l.b16 %v284
        %v592 = vunpack.c.h.b16 %v284
        %v593 = vunpack.c.l.b16 %v285
        %v594 = vunpack.c.h.b16 %v285
        %v595 = vunpack.c.l.b16 %v286
        %v596 = vunpack.c.h.b16 %v286
        %v597 = vunpack.c.l.b16 %v287
        %v598 = vunpack.c.h.b16 %v287
        %v599 = vunpack.c.l.b16 %v288
        %v600 = vunpack.c.h.b16 %v288
        %v601 = vunpack.c.l.b16 %v289
        %v602 = vunpack.c.h.b16 %v289
        %v603 = vunpack.c.l.b16 %v290
        %v604 = vunpack.c.h.b16 %v290
        %v605 = vunpack.c.l.b16 %v291
        %v606 = vunpack.c.h.b16 %v291
        %v607 = vunpack.c.l.b16 %v292
        %v608 = vunpack.c.h.b16 %v292
        %v609 = vunpack.c.l.b16 %v293
        %v610 = vunpack.c.h.b16 %v293
        %v611 = vunpack.c.l.b16 %v294
        %v612 = vunpack.c.h.b16 %v294
        %v613 = vunpack.c.l.b16 %v295
        %v614 = vunpack.c.h.b16 %v295
        %v615 = vunpack.c.l.b16 %v296
        %v616 = vunpack.c.h.b16 %v296
        %v617 = vunpack.c.l.b16 %v297
        %v618 = vunpack.c.h.b16 %v297
        %v619 = vunpack.c.l.b16 %v298
        %v620 = vunpack.c.h.b16 %v298
        %v621 = vunpack.c.l.b16 %v299
        %v622 = vunpack.c.h.b16 %v299
        %v623 = vunpack.c.l.b16 %v300
        %v624 = vunpack.c.h.b16 %v300
        %v625 = vunpack.c.l.b16 %v301
        %v626 = vunpack.c.h.b16 %v301
        %v627 = vunpack.c.l.b16 %v302
        %v628 = vunpack.c.h.b16 %v302
        %v629 = vunpack.c.l.b16 %v303
        %v630 = vunpack.c.h.b16 %v303
        %v631 = vunpack.c.l.b16 %v304
        %v632 = vunpack.c.h.b16 %v304
        %v633 = vunpack.c.l.b16 %v305
        %v634 = vunpack.c.h.b16 %v305
        %v635 = vunpack.c.l.b16 %v306
        %v636 = vunpack.c.h.b16 %v306
        %v637 = vunpack.c.l.b16 %v307
        %v638 = vunpack.c.h.b16 %v307
        %v639 = vunpack.c.l.b16 %v308
        %v640 = vunpack.c.h.b16 %v308
        %v641 = vunpack.c.l.b16 %v309
        %v642 = vunpack.c.h.b16 %v309
        %v643 = vunpack.c.l.b16 %v310
        %v644 = vunpack.c.h.b16 %v310
        %v645 = vunpack.c.l.b16 %v311
        %v646 = vunpack.c.h.b16 %v311
        %v647 = vunpack.c.l.b16 %v312
        %v648 = vunpack.c.h.b16 %v312
        %v649 = vunpack.c.l.b16 %v313
        %v650 = vunpack.c.h.b16 %v313
        %v651 = vunpack.c.l.b16 %v314
        %v652 = vunpack.c.h.b16 %v314
        %v653 = vunpack.c.l.b16 %v315
        %v654 = vunpack.c.h.b16 %v315
        %v655 = vunpack.c.l.b16 %v316
        %v656 = vunpack.c.h.b16 %v316
        %v657 = vunpack.c.l.b16 %v317
        %v658 = vunpack.c.h.b16 %v317
        %v659 = vunpack.c.l.b16 %v318
        %v660 = vunpack.c.h.b16 %v318
        %v661 = vunpack.c.l.b16 %v319
        %v662 = vunpack.c.h.b16 %v319
        %v663 = vunpack.c.l.b16 %v320
        %v664 = vunpack.c.h.b16 %v320
        %v665 = vunpack.c.l.b16 %v321
        %v666 = vunpack.c.h.b16 %v321
        %v667 = vunpack.c.l.b16 %v322
        %v668 = vunpack.c.h.b16 %v322
        %v669 = vunpack.c.l.b16 %v323
        %v670 = vunpack.c.h.b16 %v323
        %v671 = vunpack.c.l.b16 %v324
        %v672 = vunpack.c.h.b16 %v324
        %v673 = vunpack.c.l.b16 %v325
        %v674 = vunpack.c.h.b16 %v325
        %v675 = vunpack.c.l.b16 %v326
        %v676 = vunpack.c.h.b16 %v326
        %v677 = vunpack.c.l.b16 %v327
        %v678 = vunpack.c.h.b16 %v327
        %v679 = vunpack.c.l.b16 %v328
        %v680 = vunpack.c.h.b16 %v328
        %v681 = vunpack.c.l.b16 %v329
        %v682 = vunpack.c.h.b16 %v329
        %v683 = vunpack.c.l.b16 %v330
        %v684 = vunpack.c.h.b16 %v330
        %v685 = vunpack.c.l.b16 %v331
        %v686 = vunpack.c.h.b16 %v331
        %v687 = vunpack.c.l.b16 %v332
        %v688 = vunpack.c.h.b16 %v332
        %v689 = vunpack.c.l.b16 %v333
        %v690 = vunpack.c.h.b16 %v333
        %v691 = vunpack.c.l.b16 %v334
        %v692 = vunpack.c.h.b16 %v334
        %v693 = vunpack.c.l.b16 %v335
        %v694 = vunpack.c.h.b16 %v335
        %v695 = vunpack.c.l.b16 %v336
        %v696 = vunpack.c.h.b16 %v336
        %v697 = vunpack.c.l.b16 %v337
        %v698 = vunpack.c.h.b16 %v337
        %v699 = vunpack.c.l.b16 %v338
        %v700 = vunpack.c.h.b16 %v338
        %v701 = vunpack.c.l.b16 %v339
        %v702 = vunpack.c.h.b16 %v339
        %v703 = vunpack.c.l.b16 %v340
        %v704 = vunpack.c.h.b16 %v340
        %v705 = vunpack.c.l.b16 %v341
        %v706 = vunpack.c.h.b16 %v341
        %v707 = vunpack.c.l.b16 %v342
        %v708 = vunpack.c.h.b16 %v342
        %v709 = vunpack.c.l.b16 %v343
        %v710 = vunpack.c.h.b16 %v343
        %v711 = vunpack.c.l.b16 %v344
        %v712 = vunpack.c.h.b16 %v344
        %v713 = vunpack.c.l.b16 %v345
        %v714 = vunpack.c.h.b16 %v345
        %v715 = vunpack.c.l.b16 %v346
        %v716 = vunpack.c.h.b16 %v346
        %v717 = vunpack.c.l.b16 %v347
        %v718 = vunpack.c.h.b16 %v347
        %v719 = vunpack.c.l.b16 %v348
        %v720 = vunpack.c.h.b16 %v348
        %v721 = vunpack.c.l.b16 %v349
        %v722 = vunpack.c.h.b16 %v349
        %v723 = vunpack.c.l.b16 %v350
        %v724 = vunpack.c.h.b16 %v350
        %v725 = vunpack.c.l.b16 %v351
        %v726 = vunpack.c.h.b16 %v351
        %v727 = vunpack.c.l.b16 %v352
        %v728 = vunpack.c.h.b16 %v352
        %v729 = vunpack.c.l.b16 %v353
        %v730 = vunpack.c.h.b16 %v353
        %v731 = vunpack.c.l.b16 %v354
        %v732 = vunpack.c.h.b16 %v354
        %v733 = vunpack.c.l.b16 %v355
        %v734 = vunpack.c.h.b16 %v355
        %v735 = vunpack.c.l.b16 %v356
        %v736 = vunpack.c.h.b16 %v356
        %v737 = vunpack.c.l.b16 %v357
        %v738 = vunpack.c.h.b16 %v357
        %v739 = vunpack.c.l.b16 %v358
        %v740 = vunpack.c.h.b16 %v358
        %v741 = vunpack.c.l.b16 %v359
        %v742 = vunpack.c.h.b16 %v359
        %v743 = vunpack.c.l.b16 %v360
        %v744 = vunpack.c.h.b16 %v360
        %v745 = vunpack.c.l.b16 %v361
        %v746 = vunpack.c.h.b16 %v361
        %v747 = vunpack.c.l.b16 %v362
        %v748 = vunpack.c.h.b16 %v362
        %v749 = vunpack.c.l.b16 %v363
        %v750 = vunpack.c.h.b16 %v363
        %v751 = vunpack.c.l.b16 %v364
        %v752 = vunpack.c.h.b16 %v364
        %v753 = vunpack.c.l.b16 %v365
        %v754 = vunpack.c.h.b16 %v365
        %v755 = vunpack.c.l.b16 %v366
        %v756 = vunpack.c.h.b16 %v366
        %v757 = vunpack.c.l.b16 %v367
        %v758 = vunpack.c.h.b16 %v367
        %v759 = vunpack.c.l.b16 %v368
        %v760 = vunpack.c.h.b16 %v368
        %v761 = vunpack.c.l.b16 %v369
        %v762 = vunpack.c.h.b16 %v369
        %v763 = vunpack.c.l.b16 %v370
        %v764 = vunpack.c.h.b16 %v370
        %v765 = vunpack.c.l.b16 %v371
        %v766 = vunpack.c.h.b16 %v371
        %v767 = vunpack.c.l.b16 %v372
        %v768 = vunpack.c.h.b16 %v372
        %v769 = vunpack.c.l.b16 %v373
        %v770 = vunpack.c.h.b16 %v373
        %v771 = vunpack.c.l.b16 %v374
        %v772 = vunpack.c.h.b16 %v374
        %v773 = vunpack.c.l.b16 %v375
        %v774 = vunpack.c.h.b16 %v375
        %v775 = vunpack.c.l.b16 %v376
        %v776 = vunpack.c.h.b16 %v376
        %v777 = vunpack.c.l.b16 %v377
        %v778 = vunpack.c.h.b16 %v377
        %v779 = vunpack.c.l.b16 %v378
        %v780 = vunpack.c.h.b16 %v378
        %v781 = vunpack.c.l.b16 %v379
        %v782 = vunpack.c.h.b16 %v379
        %v783 = vunpack.c.l.b16 %v380
        %v784 = vunpack.c.h.b16 %v380
        %v785 = vpack.c.b16 %v533, %v529
        %v786 = vpack.c.b16 %v534, %v530
        %v787 = vpack.c.b16 %v535, %v531
        %v788 = vpack.c.b16 %v536, %v532
        %v789 = vpack.c.b16 %v541, %v537
        %v790 = vpack.c.b16 %v542, %v538
        %v791 = vpack.c.b16 %v543, %v539
        %v792 = vpack.c.b16 %v544, %v540
        %v793 = vpack.c.b16 %v549, %v545
        %v794 = vpack.c.b16 %v550, %v546
        %v795 = vpack.c.b16 %v551, %v547
        %v796 = vpack.c.b16 %v552, %v548
        %v797 = vpack.c.b16 %v557, %v553
        %v798 = vpack.c.b16 %v558, %v554
        %v799 = vpack.c.b16 %v559, %v555
        %v800 = vpack.c.b16 %v560, %v556
        %v801 = vpack.c.b16 %v565, %v561
        %v802 = vpack.c.b16 %v566, %v562
        %v803 = vpack.c.b16 %v567, %v563
        %v804 = vpack.c.b16 %v568, %v564
        %v805 = vpack.c.b16 %v573, %v569
        %v806 = vpack.c.b16 %v574, %v570
        %v807 = vpack.c.b16 %v575, %v571
        %v808 = vpack.c.b16 %v576, %v572
        %v809 = vpack.c.b16 %v581, %v577
        %v810 = vpack.c.b16 %v582, %v578
        %v811 = vpack.c.b16 %v583, %v579
        %v812 = vpack.c.b16 %v584, %v580
        %v813 = vpack.c.b16 %v589, %v585
        %v814 = vpack.c.b16 %v590, %v586
        %v815 = vpack.c.b16 %v591, %v587
        %v816 = vpack.c.b16 %v592, %v588
        %v817 = vpack.c.b16 %v597, %v593
        %v818 = vpack.c.b16 %v598, %v594
        %v819 = vpack.c.b16 %v599, %v595
        %v820 = vpack.c.b16 %v600, %v596
        %v821 = vpack.c.b16 %v605, %v601
        %v822 = vpack.c.b16 %v606, %v602
        %v823 = vpack.c.b16 %v607, %v603
        %v824 = vpack.c.b16 %v608, %v604
        %v825 = vpack.c.b16 %v613, %v609
        %v826 = vpack.c.b16 %v614, %v610
        %v827 = vpack.c.b16 %v615, %v611
        %v828 = vpack.c.b16 %v616, %v612
        %v829 = vpack.c.b16 %v621, %v617
        %v830 = vpack.c.b16 %v622, %v618
        %v831 = vpack.c.b16 %v623, %v619
        %v832 = vpack.c.b16 %v624, %v620
        %v833 = vpack.c.b16 %v629, %v625
        %v834 = vpack.c.b16 %v630, %v626
        %v835 = vpack.c.b16 %v631, %v627
        %v836 = vpack.c.b16 %v632, %v628
        %v837 = vpack.c.b16 %v637, %v633
        %v838 = vpack.c.b16 %v638, %v634
        %v839 = vpack.c.b16 %v639, %v635
        %v840 = vpack.c.b16 %v640, %v636
        %v841 = vpack.c.b16 %v645, %v641
        %v842 = vpack.c.b16 %v646, %v642
        %v843 = vpack.c.b16 %v647, %v643
        %v844 = vpack.c.b16 %v648, %v644
        %v845 = vpack.c.b16 %v653, %v649
        %v846 = vpack.c.b16 %v654, %v650
        %v847 = vpack.c.b16 %v655, %v651
        %v848 = vpack.c.b16 %v656, %v652
        %v849 = vpack.c.b16 %v661, %v657
        %v850 = vpack.c.b16 %v662, %v658
        %v851 = vpack.c.b16 %v663, %v659
        %v852 = vpack.c.b16 %v664, %v660
        %v853 = vpack.c.b16 %v669, %v665
        %v854 = vpack.c.b16 %v670, %v666
        %v855 = vpack.c.b16 %v671, %v667
        %v856 = vpack.c.b16 %v672, %v668
        %v857 = vpack.c.b16 %v677, %v673
        %v858 = vpack.c.b16 %v678, %v674
        %v859 = vpack.c.b16 %v679, %v675
        %v860 = vpack.c.b16 %v680, %v676
        %v861 = vpack.c.b16 %v685, %v681
        %v862 = vpack.c.b16 %v686, %v682
        %v863 = vpack.c.b16 %v687, %v683
        %v864 = vpack.c.b16 %v688, %v684
        %v865 = vpack.c.b16 %v693, %v689
        %v866 = vpack.c.b16 %v694, %v690
        %v867 = vpack.c.b16 %v695, %v691
        %v868 = vpack.c.b16 %v696, %v692
        %v869 = vpack.c.b16 %v701, %v697
        %v870 = vpack.c.b16 %v702, %v698
        %v871 = vpack.c.b16 %v703, %v699
        %v872 = vpack.c.b16 %v704, %v700
        %v873 = vpack.c.b16 %v709, %v705
        %v874 = vpack.c.b16 %v710, %v706
        %v875 = vpack.c.b16 %v711, %v707
        %v876 = vpack.c.b16 %v712, %v708
        %v877 = vpack.c.b16 %v717, %v713
        %v878 = vpack.c.b16 %v718, %v714
        %v879 = vpack.c.b16 %v719, %v715
        %v880 = vpack.c.b16 %v720, %v716
        %v881 = vpack.c.b16 %v725, %v721
        %v882 = vpack.c.b16 %v726, %v722
        %v883 = vpack.c.b16 %v727, %v723
        %v884 = vpack.c.b16 %v728, %v724
        %v885 = vpack.c.b16 %v733, %v729
        %v886 = vpack.c.b16 %v734, %v730
        %v887 = vpack.c.b16 %v735, %v731
        %v888 = vpack.c.b16 %v736, %v732
        %v889 = vpack.c.b16 %v741, %v737
        %v890 = vpack.c.b16 %v742, %v738
        %v891 = vpack.c.b16 %v743, %v739
        %v892 = vpack.c.b16 %v744, %v740
        %v893 = vpack.c.b16 %v749, %v745
        %v894 = vpack.c.b16 %v750, %v746
        %v895 = vpack.c.b16 %v751, %v747
        %v896 = vpack.c.b16 %v752, %v748
        %v897 = vpack.c.b16 %v757, %v753
        %v898 = vpack.c.b16 %v758, %v754
        %v899 = vpack.c.b16 %v759, %v755
        %v900 = vpack.c.b16 %v760, %v756
        %v901 = vpack.c.b16 %v765, %v761
        %v902 = vpack.c.b16 %v766, %v762
        %v903 = vpack.c.b16 %v767, %v763
        %v904 = vpack.c.b16 %v768, %v764
        %v905 = vpack.c.b16 %v773, %v769
        %v906 = vpack.c.b16 %v774, %v770
        %v907 = vpack.c.b16 %v775, %v771
        %v908 = vpack.c.b16 %v776, %v772
        %v909 = vpack.c.b16 %v781, %v777
        %v910 = vpack.c.b16 %v782, %v778
        %v911 = vpack.c.b16 %v783, %v779
        %v912 = vpack.c.b16 %v784, %v780
        %1041 = vmatprep.subr.bf16.mxu0 %v786
        %1042 = vmatpush1.bf16.xpose.msra.mxu0 %v785
        %1043 = vmatprep.subr.bf16.mxu0 %v790
        %1044 = vmatpush1.bf16.xpose.msra.mxu0 %v789
        %1045 = vmatprep.subr.bf16.mxu0 %v794
        %1046 = vmatpush1.bf16.xpose.msra.mxu0 %v793
        %1047 = vmatprep.subr.bf16.mxu0 %v798
        %1048 = vmatpush1.bf16.xpose.msra.mxu0 %v797
        %1049 = vmatprep.subr.bf16.mxu0 %v802
        %1050 = vmatpush1.bf16.xpose.msra.mxu0 %v801
        %1051 = vmatprep.subr.bf16.mxu0 %v806
        %1052 = vmatpush1.bf16.xpose.msra.mxu0 %v805
        %1053 = vmatprep.subr.bf16.mxu0 %v810
        %1054 = vmatpush1.bf16.xpose.msra.mxu0 %v809
        %1055 = vmatprep.subr.bf16.mxu0 %v814
        %1056 = vmatpush1.bf16.xpose.msra.mxu0 %v813
        %1057 = vmatprep.subr.bf16.mxu0 %v818
        %1058 = vmatpush1.bf16.xpose.msra.mxu0 %v817
        %1059 = vmatprep.subr.bf16.mxu0 %v822
        %1060 = vmatpush1.bf16.xpose.msra.mxu0 %v821
        %1061 = vmatprep.subr.bf16.mxu0 %v826
        %1062 = vmatpush1.bf16.xpose.msra.mxu0 %v825
        %1063 = vmatprep.subr.bf16.mxu0 %v830
        %1064 = vmatpush1.bf16.xpose.msra.mxu0 %v829
        %1065 = vmatprep.subr.bf16.mxu0 %v834
        %1066 = vmatpush1.bf16.xpose.msra.mxu0 %v833
        %1067 = vmatprep.subr.bf16.mxu0 %v838
        %1068 = vmatpush1.bf16.xpose.msra.mxu0 %v837
        %1069 = vmatprep.subr.bf16.mxu0 %v842
        %1070 = vmatpush1.bf16.xpose.msra.mxu0 %v841
        %1071 = vmatprep.subr.bf16.mxu0 %v846
        %1072 = vmatpush1.bf16.xpose.msra.mxu0 %v845
        %1073 = vmatprep.mubr.bf16.mxu0 %v394
        %1074 = vmatmul.mubr.bf16.gmra.mrb[0].mxu0 %v393
        %v1075 = vpop.f32.mrb[0].mxu0
        %v1076 = vadd.f32 0.0, %v1075
        %v1077 = vpop.f32.mrb[0].mxu0
        %v1078 = vadd.f32 0.0, %v1077
        %v1079 = vpop.f32.mrb[0].mxu0
        %v1080 = vadd.f32 0.0, %v1079
        %v1081 = vpop.f32.mrb[0].mxu0
        %v1082 = vadd.f32 0.0, %v1081
        %1083 = vdwg.mxu0
        %1084 = vmatprep.subr.bf16.mxu0 %v788
        %1085 = vmatpush1.bf16.xpose.msra.mxu0 %v787
        %1086 = vmatprep.subr.bf16.mxu0 %v792
        %1087 = vmatpush1.bf16.xpose.msra.mxu0 %v791
        %1088 = vmatprep.subr.bf16.mxu0 %v796
        %1089 = vmatpush1.bf16.xpose.msra.mxu0 %v795
        %1090 = vmatprep.subr.bf16.mxu0 %v800
        %1091 = vmatpush1.bf16.xpose.msra.mxu0 %v799
        %1092 = vmatprep.subr.bf16.mxu0 %v804
        %1093 = vmatpush1.bf16.xpose.msra.mxu0 %v803
        %1094 = vmatprep.subr.bf16.mxu0 %v808
        %1095 = vmatpush1.bf16.xpose.msra.mxu0 %v807
        %1096 = vmatprep.subr.bf16.mxu0 %v812
        %1097 = vmatpush1.bf16.xpose.msra.mxu0 %v811
        %1098 = vmatprep.subr.bf16.mxu0 %v816
        %1099 = vmatpush1.bf16.xpose.msra.mxu0 %v815
        %1100 = vmatprep.subr.bf16.mxu0 %v820
        %1101 = vmatpush1.bf16.xpose.msra.mxu0 %v819
        %1102 = vmatprep.subr.bf16.mxu0 %v824
        %1103 = vmatpush1.bf16.xpose.msra.mxu0 %v823
        %1104 = vmatprep.subr.bf16.mxu0 %v828
        %1105 = vmatpush1.bf16.xpose.msra.mxu0 %v827
        %1106 = vmatprep.subr.bf16.mxu0 %v832
        %1107 = vmatpush1.bf16.xpose.msra.mxu0 %v831
        %1108 = vmatprep.subr.bf16.mxu0 %v836
        %1109 = vmatpush1.bf16.xpose.msra.mxu0 %v835
        %1110 = vmatprep.subr.bf16.mxu0 %v840
        %1111 = vmatpush1.bf16.xpose.msra.mxu0 %v839
        %1112 = vmatprep.subr.bf16.mxu0 %v844
        %1113 = vmatpush1.bf16.xpose.msra.mxu0 %v843
        %1114 = vmatprep.subr.bf16.mxu0 %v848
        %1115 = vmatpush1.bf16.xpose.msra.mxu0 %v847
        %1116 = vmatprep.mubr.bf16.mxu0 %v396
        %1117 = vmatmul.mubr.bf16.gmra.mrb[0].mxu0 %v395
        %v1118 = vpop.f32.mrb[0].mxu0
        %v1119 = vadd.f32 %v1076, %v1118
        %v1120 = vpop.f32.mrb[0].mxu0
        %v1121 = vadd.f32 %v1078, %v1120
        %v1122 = vpop.f32.mrb[0].mxu0
        %v1123 = vadd.f32 %v1080, %v1122
        %v1124 = vpop.f32.mrb[0].mxu0
        %v1125 = vadd.f32 %v1082, %v1124
        %1126 = vdwg.mxu0
        %1127 = vmatprep.subr.bf16.mxu0 %v850
        %1128 = vmatpush1.bf16.xpose.msra.mxu0 %v849
        %1129 = vmatprep.subr.bf16.mxu0 %v854
        %1130 = vmatpush1.bf16.xpose.msra.mxu0 %v853
        %1131 = vmatprep.subr.bf16.mxu0 %v858
        %1132 = vmatpush1.bf16.xpose.msra.mxu0 %v857
        %1133 = vmatprep.subr.bf16.mxu0 %v862
        %1134 = vmatpush1.bf16.xpose.msra.mxu0 %v861
        %1135 = vmatprep.subr.bf16.mxu0 %v866
        %1136 = vmatpush1.bf16.xpose.msra.mxu0 %v865
        %1137 = vmatprep.subr.bf16.mxu0 %v870
        %1138 = vmatpush1.bf16.xpose.msra.mxu0 %v869
        %1139 = vmatprep.subr.bf16.mxu0 %v874
        %1140 = vmatpush1.bf16.xpose.msra.mxu0 %v873
        %1141 = vmatprep.subr.bf16.mxu0 %v878
        %1142 = vmatpush1.bf16.xpose.msra.mxu0 %v877
        %1143 = vmatprep.subr.bf16.mxu0 %v882
        %1144 = vmatpush1.bf16.xpose.msra.mxu0 %v881
        %1145 = vmatprep.subr.bf16.mxu0 %v886
        %1146 = vmatpush1.bf16.xpose.msra.mxu0 %v885
        %1147 = vmatprep.subr.bf16.mxu0 %v890
        %1148 = vmatpush1.bf16.xpose.msra.mxu0 %v889
        %1149 = vmatprep.subr.bf16.mxu0 %v894
        %1150 = vmatpush1.bf16.xpose.msra.mxu0 %v893
        %1151 = vmatprep.subr.bf16.mxu0 %v898
        %1152 = vmatpush1.bf16.xpose.msra.mxu0 %v897
        %1153 = vmatprep.subr.bf16.mxu0 %v902
        %1154 = vmatpush1.bf16.xpose.msra.mxu0 %v901
        %1155 = vmatprep.subr.bf16.mxu0 %v906
        %1156 = vmatpush1.bf16.xpose.msra.mxu0 %v905
        %1157 = vmatprep.subr.bf16.mxu0 %v910
        %1158 = vmatpush1.bf16.xpose.msra.mxu0 %v909
        %1159 = vmatprep.mubr.bf16.mxu0 %v394
        %1160 = vmatmul.mubr.bf16.gmra.mrb[0].mxu0 %v393
        %v1161 = vpop.f32.mrb[0].mxu0
        %v1162 = vadd.f32 0.0, %v1161
        %v1163 = vpop.f32.mrb[0].mxu0
        %v1164 = vadd.f32 0.0, %v1163
        %v1165 = vpop.f32.mrb[0].mxu0
        %v1166 = vadd.f32 0.0, %v1165
        %v1167 = vpop.f32.mrb[0].mxu0
        %v1168 = vadd.f32 0.0, %v1167
        %1169 = vdwg.mxu0
        %1170 = vmatprep.subr.bf16.mxu0 %v852
        %1171 = vmatpush1.bf16.xpose.msra.mxu0 %v851
        %1172 = vmatprep.subr.bf16.mxu0 %v856
        %1173 = vmatpush1.bf16.xpose.msra.mxu0 %v855
        %1174 = vmatprep.subr.bf16.mxu0 %v860
        %1175 = vmatpush1.bf16.xpose.msra.mxu0 %v859
        %1176 = vmatprep.subr.bf16.mxu0 %v864
        %1177 = vmatpush1.bf16.xpose.msra.mxu0 %v863
        %1178 = vmatprep.subr.bf16.mxu0 %v868
        %1179 = vmatpush1.bf16.xpose.msra.mxu0 %v867
        %1180 = vmatprep.subr.bf16.mxu0 %v872
        %1181 = vmatpush1.bf16.xpose.msra.mxu0 %v871
        %1182 = vmatprep.subr.bf16.mxu0 %v876
        %1183 = vmatpush1.bf16.xpose.msra.mxu0 %v875
        %1184 = vmatprep.subr.bf16.mxu0 %v880
        %1185 = vmatpush1.bf16.xpose.msra.mxu0 %v879
        %1186 = vmatprep.subr.bf16.mxu0 %v884
        %1187 = vmatpush1.bf16.xpose.msra.mxu0 %v883
        %1188 = vmatprep.subr.bf16.mxu0 %v888
        %1189 = vmatpush1.bf16.xpose.msra.mxu0 %v887
        %1190 = vmatprep.subr.bf16.mxu0 %v892
        %1191 = vmatpush1.bf16.xpose.msra.mxu0 %v891
        %1192 = vmatprep.subr.bf16.mxu0 %v896
        %1193 = vmatpush1.bf16.xpose.msra.mxu0 %v895
        %1194 = vmatprep.subr.bf16.mxu0 %v900
        %1195 = vmatpush1.bf16.xpose.msra.mxu0 %v899
        %1196 = vmatprep.subr.bf16.mxu0 %v904
        %1197 = vmatpush1.bf16.xpose.msra.mxu0 %v903
        %1198 = vmatprep.subr.bf16.mxu0 %v908
        %1199 = vmatpush1.bf16.xpose.msra.mxu0 %v907
        %1200 = vmatprep.subr.bf16.mxu0 %v912
        %1201 = vmatpush1.bf16.xpose.msra.mxu0 %v911
        %1202 = vmatprep.mubr.bf16.mxu0 %v396
        %1203 = vmatmul.mubr.bf16.gmra.mrb[0].mxu0 %v395
        %v1204 = vpop.f32.mrb[0].mxu0
        %v1205 = vadd.f32 %v1162, %v1204
        %v1206 = vpop.f32.mrb[0].mxu0
        %v1207 = vadd.f32 %v1164, %v1206
        %v1208 = vpop.f32.mrb[0].mxu0
        %v1209 = vadd.f32 %v1166, %v1208
        %v1210 = vpop.f32.mrb[0].mxu0
        %v1211 = vadd.f32 %v1168, %v1210
        %1212 = vdwg.mxu0
        %s1213 = smul.u32 %s20, 8
        %s1214 = smul.addr %s1213, 8
        %s1215 = scalar_lea.vmem [#allocation2], %s1214
        %1216 = vst [vmem:[%s1215] sm:$0xff] %v1119
        %1217 = vst [vmem:[%s1215 + $0x8] sm:$0xff] %v1121
        %1218 = vst [vmem:[%s1215 + $0x10] sm:$0xff] %v1205
        %1219 = vst [vmem:[%s1215 + $0x18] sm:$0xff] %v1207
        %1220 = vst [vmem:[%s1215 + $0x20] sm:$0xff] %v1123
        %1221 = vst [vmem:[%s1215 + $0x28] sm:$0xff] %v1125
        %1222 = vst [vmem:[%s1215 + $0x30] sm:$0xff] %v1209
        %1223 = vst [vmem:[%s1215 + $0x38] sm:$0xff] %v1211
        %v1224 = vld [vmem:[#allocation3] sm:$0xff]
        %v1225 = vld [vmem:[#allocation3 + $0x8] sm:$0xff]
        %v1226 = vadd.f32 %v1119, %v1121
        %v1227 = vadd.f32 %v1226, %v1205
        %v1228 = vadd.f32 %v1227, %v1207
        %1229 = vadd.xlane.f32.xlu0 %v1228
        %v1230 = vpop.xlane.xlu0 %1229
        %v1231 = vadd.f32 %v1123, %v1125
        %v1232 = vadd.f32 %v1231, %v1209
        %v1233 = vadd.f32 %v1232, %v1211
        %1234 = vadd.xlane.f32.xlu0 %v1233
        %v1235 = vpop.xlane.xlu0 %1234
        %v1236 = vadd.f32 %v1224, %v1230
        %v1237 = vadd.f32 %v1225, %v1235
        %vm1238 = vcmask 7168
        %1239 = vst.msk [vmem:[#allocation3] sm:$0xff] %vm1238, %v1236
        %1240 = vst.msk [vmem:[#allocation3 + $0x8] sm:$0xff] %vm1238, %v1237
        %v1241 = vld [vmem:[#allocation4] sm:$0xff]
        %v1242 = vld [vmem:[#allocation4 + $0x8] sm:$0xff]
        %v1243 = vmul.f32 %v1119, %v1119
        %v1244 = vmul.f32 %v1121, %v1121
        %v1245 = vmul.f32 %v1205, %v1205
        %v1246 = vmul.f32 %v1207, %v1207
        %v1247 = vmul.f32 %v1123, %v1123
        %v1248 = vmul.f32 %v1125, %v1125
        %v1249 = vmul.f32 %v1209, %v1209
        %v1250 = vmul.f32 %v1211, %v1211
        %v1251 = vadd.f32 %v1243, %v1244
        %v1252 = vadd.f32 %v1251, %v1245
        %v1253 = vadd.f32 %v1252, %v1246
        %1254 = vadd.xlane.f32.xlu0 %v1253
        %v1255 = vpop.xlane.xlu0 %1254
        %v1256 = vadd.f32 %v1247, %v1248
        %v1257 = vadd.f32 %v1256, %v1249
        %v1258 = vadd.f32 %v1257, %v1250
        %1259 = vadd.xlane.f32.xlu0 %v1258
        %v1260 = vpop.xlane.xlu0 %1259
        %v1261 = vadd.f32 %v1241, %v1255
        %v1262 = vadd.f32 %v1242, %v1260
        %1263 = vst.msk [vmem:[#allocation4] sm:$0xff] %vm1238, %v1261
        %1264 = vst.msk [vmem:[#allocation4 + $0x8] sm:$0xff] %vm1238, %v1262
      $region44: #{generator_forward.7} parent=35 // pred_fallthru
        _
      %p1265 = scmp.eq.s32.totalorder %s19, 1
      %p1266 = pnand %p1265, %p236
      %p1267 = pneg %p1266
      // Predicated region
      $region45: #{generator_forward.7} parent=35 // pred_check
        _
      $region46: #{generator_forward.7} parent=35 // pred_check_branch
        %1269 = sbr.rel (%p1266) target = $region48
      $region47: #{generator_forward.7} parent=35 // pred_region
        %v1270 = vld [vmem:[#allocation3] sm:$0xff]
        %v1271 = vld [vmem:[#allocation3 + $0x8] sm:$0xff]
        %v1272 = vmul.f32 %v1270, 0.001953125
        %v1273 = vmul.f32 %v1271, 0.001953125
        %v1274 = vld [vmem:[#allocation4] sm:$0xff]
        %v1275 = vld [vmem:[#allocation4 + $0x8] sm:$0xff]
        %v1276 = vmul.f32 %v1274, 0.001953125
        %v1277 = vmul.f32 %v1275, 0.001953125
        %v1278 = vmul.f32 %v1272, %v1272
        %v1279 = vmul.f32 %v1273, %v1273
        %v1280 = vsub.f32 %v1276, %v1278
        %v1281 = vsub.f32 %v1277, %v1279
        %v1282 = vmax.f32 %v1280, 0.0
        %v1283 = vmax.f32 %v1281, 0.0
        %v1284 = vld [vmem:[%s2] sm:$0xff]
        %v1285 = vld [vmem:[%s2 + $0x8] sm:$0xff]
        %v1286 = vadd.f32 %v1282, 1e-05
        %v1287 = vadd.f32 %v1283, 1e-05
        %v1288 = vrsqrt.pop %v1286
        %v1289 = vrsqrt.pop %v1287
        %v1290 = vmul.f32 %v1284, %v1288
        %v1291 = vmul.f32 %v1285, %v1289
        %vm1292 = vcmask 7168
        %1293 = vst.msk [vmem:[#allocation5] sm:$0xff] %vm1292, %v1290
        %1294 = vst.msk [vmem:[#allocation5 + $0x8] sm:$0xff] %vm1292, %v1291
        %v1295 = vld [vmem:[%s3] sm:$0xff]
        %v1296 = vld [vmem:[%s3 + $0x8] sm:$0xff]
        %v1297 = vmul.f32 %v1272, %v1290
        %v1298 = vmul.f32 %v1273, %v1291
        %v1299 = vsub.f32 %v1295, %v1297
        %v1300 = vsub.f32 %v1296, %v1298
        %1301 = vst.msk [vmem:[#allocation6] sm:$0xff] %vm1292, %v1299
        %1302 = vst.msk [vmem:[#allocation6 + $0x8] sm:$0xff] %vm1292, %v1300
      $region48: #{generator_forward.7} parent=35 // pred_fallthru
        _
      // Predicated region
      $region49: #{generator_forward.7} parent=35 // pred_check
        %p1303 = pneg %p1265
      $region50: #{generator_forward.7} parent=35 // pred_check_branch
        %1305 = sbr.rel (%p1303) target = $region52
      $region51: #{generator_forward.7} parent=35 // pred_region
        %s1306 = smul.u32 %s20, 8
        %s1307 = smul.addr %s1306, 8
        %s1308 = scalar_lea.vmem [#allocation2], %s1307
        %v1309 = vld [vmem:[%s1308] sm:$0xff]
        %v1310 = vld [vmem:[%s1308 + $0x8] sm:$0xff]
        %v1311 = vld [vmem:[%s1308 + $0x10] sm:$0xff]
        %v1312 = vld [vmem:[%s1308 + $0x18] sm:$0xff]
        %v1313 = vld [vmem:[%s1308 + $0x20] sm:$0xff]
        %v1314 = vld [vmem:[%s1308 + $0x28] sm:$0xff]
        %v1315 = vld [vmem:[%s1308 + $0x30] sm:$0xff]
        %v1316 = vld [vmem:[%s1308 + $0x38] sm:$0xff]
        %v1317 = vld [vmem:[#allocation5] sm:$0xff]
        %v1318 = vld [vmem:[#allocation5 + $0x8] sm:$0xff]
        %1320 = vset.pattern.permute.xlu0 0
        %1321 = vperm.xlu0 %1320, %v1317
        %v1322 = vpop.permute.xlu0 %1321
        %1325 = vset.pattern.permute.xlu0 0
        %1326 = vperm.xlu0 %1325, %v1318
        %v1327 = vpop.permute.xlu0 %1326
        %v1329 = vmul.f32 %v1309, %v1322
        %v1330 = vmul.f32 %v1310, %v1322
        %v1331 = vmul.f32 %v1311, %v1322
        %v1332 = vmul.f32 %v1312, %v1322
        %v1333 = vmul.f32 %v1313, %v1327
        %v1334 = vmul.f32 %v1314, %v1327
        %v1335 = vmul.f32 %v1315, %v1327
        %v1336 = vmul.f32 %v1316, %v1327
        %v1337 = vld [vmem:[#allocation6] sm:$0xff]
        %v1338 = vld [vmem:[#allocation6 + $0x8] sm:$0xff]
        %1340 = vset.pattern.permute.xlu0 0
        %1341 = vperm.xlu0 %1340, %v1337
        %v1342 = vpop.permute.xlu0 %1341
        %1345 = vset.pattern.permute.xlu0 0
        %1346 = vperm.xlu0 %1345, %v1338
        %v1347 = vpop.permute.xlu0 %1346
        %v1349 = vadd.f32 %v1329, %v1342
        %v1350 = vadd.f32 %v1330, %v1342
        %v1351 = vadd.f32 %v1331, %v1342
        %v1352 = vadd.f32 %v1332, %v1342
        %v1353 = vadd.f32 %v1333, %v1347
        %v1354 = vadd.f32 %v1334, %v1347
        %v1355 = vadd.f32 %v1335, %v1347
        %v1356 = vadd.f32 %v1336, %v1347
        %v1357 = vmax.f32 %v1349, 0.0
        %v1358 = vmax.f32 %v1350, 0.0
        %v1359 = vmax.f32 %v1351, 0.0
        %v1360 = vmax.f32 %v1352, 0.0
        %v1361 = vmax.f32 %v1353, 0.0
        %v1362 = vmax.f32 %v1354, 0.0
        %v1363 = vmax.f32 %v1355, 0.0
        %v1364 = vmax.f32 %v1356, 0.0
        %v1365 = vpack.c.bf16 %v1361, %v1357
        %v1366 = vpack.c.bf16 %v1362, %v1358
        %v1367 = vpack.c.bf16 %v1363, %v1359
        %v1368 = vpack.c.bf16 %v1364, %v1360
        %v1373 = vunpack.c.l.b16 %v1365
        %v1374 = vunpack.c.l.b16 %v1366
        %v1375 = vunpack.c.l.b16 %v1367
        %v1376 = vunpack.c.l.b16 %v1368
        %v1377 = vunpack.c.h.b16 %v1365
        %v1378 = vunpack.c.h.b16 %v1366
        %v1379 = vunpack.c.h.b16 %v1367
        %v1380 = vunpack.c.h.b16 %v1368
        %v1381 = vpack.c.b16 %v1374, %v1373
        %v1382 = vpack.c.b16 %v1376, %v1375
        %v1383 = vpack.c.b16 %v1378, %v1377
        %v1384 = vpack.c.b16 %v1380, %v1379
        %1389 = vst [vmem:[%s232] sm:$0xff] %v1381
        %1390 = vst [vmem:[%s232 + $0x8] sm:$0xff] %v1382
        %1391 = vst [vmem:[%s232 + $0x10] sm:$0xff] %v1383
        %1392 = vst [vmem:[%s232 + $0x18] sm:$0xff] %v1384
      $region52: #{generator_forward.7} parent=35 // pred_fallthru
        _
      %s1393 = smul.u32 %s20, %s19
      %s1394 = smul.u32 4, %s1393
      %p1395 = scmp.lt.s32.totalorder %s1394, 3
      %s1396 = scalar_select %p1395, %s1394, 3
      %s1397 = smul.addr %s1396, 4
      %s1398 = scalar_lea.vmem %s4, %s1397
      // Predicated region
      $region53: #{generator_forward.7} parent=35 // pred_check
        %p1399 = pneg %p140
      $region54: #{generator_forward.7} parent=35 // pred_check_branch
        %1401 = sbr.rel (%p1399) target = $region56
      $region55: #{generator_forward.7} parent=35 // pred_region
        %s1402 = smul.u32 %s20, %s19
        %s1403 = smul.u32 4, %s1402
      $region56: #{generator_forward.7} parent=35 // pred_fallthru
        _
    $region36: #{generator_forward.7} parent=5 // pred_fallthru
      _
    %p1404 = scmp.le.s32.totalorder 2, %s10
    // Predicated region
    $region57: #{generator_forward.7} parent=5 // pred_check
      %p1405 = pneg %p1404
    $region58: #{generator_forward.7} parent=5 // pred_check_branch
      %1407 = sbr.rel (%p1405) target = $region60
    $region59: #{generator_forward.7} parent=5 // pred_region
      %s1408 = ssub.s32 %s10, 2
      // Predicated region
      $region61: #{generator_forward.7} parent=59 // pred_check
        %p1409 = pneg %p146
      $region62: #{generator_forward.7} parent=59 // pred_check_branch
        %1411 = sbr.rel (%p1409) target = $region64
      $region63: #{generator_forward.7} parent=59 // pred_region
        %s1412 = smul.u32 %s22, %s21
        %s1413 = smul.u32 4, %s1412
        %p1414 = scmp.lt.s32.totalorder %s1413, 3
        %s1415 = scalar_select %p1414, %s1413, 3
        %s1416 = smul.addr %s1415, 4
        %s1417 = scalar_lea.vmem %s4, %s1416
      $region64: #{generator_forward.7} parent=59 // pred_fallthru
        _
    $region60: #{generator_forward.7} parent=5 // pred_fallthru
      _
  $region6: #{generator_forward.7} parent=0 // loop_footer
    %s14 = sadd.s32 1, %s10
  $region7: #{generator_forward.7} parent=0 // loop_footer_branch
    %9 = sbr.rel target = $region3
  $region8: #{generator_forward.7} parent=0 // loop_exit
    _

// kernel: generator_forward.8
$region0: #{generator_forward.8}
  #allocation0 [shape = 'u32[]', space=smem, size = 0x4, offset = 0x4, fixed_abs, tag = 'smem constant byte address 0x4 - core index']
  #allocation1 [shape = 'u32[144,128]{1,0:T(1,128)}', space=vmem, size = 0x12000, scoped, tag = 'internal scratch']
  #allocation2 [shape = 'f32[1,8,2048]{2,1,0:T(8,128)}', space=vmem, size = 0x10000, scoped, tag = 'scratch operand']
  #allocation3 [shape = 'f32[8,1]{1,0:T(8,128)}', space=vmem, size = 0x1000, scoped, tag = 'scratch operand']
  #allocation4 [shape = 'f32[8,1]{1,0:T(8,128)}', space=vmem, size = 0x1000, scoped, tag = 'scratch operand']
  #allocation5 [shape = 'f32[8,1]{1,0:T(8,128)}', space=vmem, size = 0x1000, scoped, tag = 'scratch operand']
  #allocation6 [shape = 'f32[8,1]{1,0:T(8,128)}', space=vmem, size = 0x1000, scoped, tag = 'scratch operand']
  %s0 = inlined_call_operand.vmem [shape: bf16[2048,256], index: 0, kind: input, shape index: {}]
  %s1 = inlined_call_operand.vmem [shape: bf16[8,256], index: 1, kind: input, shape index: {}]
  %s2 = inlined_call_operand.vmem [shape: f32[8,1], index: 2, kind: input, shape index: {}]
  %s3 = inlined_call_operand.vmem [shape: f32[8,1], index: 3, kind: input, shape index: {}]
  %s4 = inlined_call_operand.vmem [shape: bf16[8,2048], index: 4, kind: output, shape index: {}]
  %s5 = sld [smem:[#allocation0]]
  $region65: #{generator_forward.8} parent=0
    _
  %s7 = ssub.s32 1, %s5
  %s8 = scalar_select 0, %s7, %s5
  loop: start=0, step=1, limit=4
  $region2: #{generator_forward.8} parent=0 // loop_pre_header
    _
  $region3: #{generator_forward.8} parent=0 // loop_header
    %s10 = sphi 0, %s14
    %p11 = scmp.ge.s32.totalorder %s10, 4
    %s17 = sphi 0, %s29
    %s18 = sphi 0, %s25
    %s19 = sphi 0, %s17
    %s20 = sphi 0, %s18
    %s21 = sphi 0, %s19
    %s22 = sphi 0, %s20
    %s36 = sphi 0, %s38
    %s39 = sphi 0, %s36
    %s40 = sphi 0, %s39
    %s56 = sphi 0, %s40
    %s60 = sphi 0, %s60
    %s62 = sphi 0, %s60
    %s63 = sphi 0, %s62
    %s77 = sphi 0, %s63
    %s81 = sphi 0, %s81
    %s83 = sphi 0, %s81
    %s84 = sphi 0, %s83
    %s98 = sphi 0, %s84
    %s102 = sphi 0, %s102
    %s104 = sphi 0, %s102
    %s105 = sphi 0, %s104
    %s119 = sphi 0, %s105
    %s127 = sphi 0, %s129
    %s130 = sphi 0, %s127
    %s131 = sphi 0, %s130
    %s147 = sphi 0, %s131
  $region4: #{generator_forward.8} parent=0 // loop_header_branch
    %13 = sbr.rel (%p11) target = $region8
  $region5: #{generator_forward.8} parent=0 // loop_body
    %s15 = ssub.s32 %s10, 1
    %s16 = ssub.s32 %s10, 2
    %s23 = sadd.s32 1, %s18
    %p24 = scmp.ge.s32.totalorder %s23, 1
    %s25 = scalar_select %p24, 0, %s23
    %s26 = sadd.s32 1, %s17
    %s27 = scalar_select %p24, %s26, %s17
    %p28 = scmp.ge.s32.totalorder %s27, 2
    %s29 = scalar_select %p28, 0, %s27
    %s30 = ssub.s32 1, %s17
    %s31 = smul.u32 %s30, %s18
    %s32 = ssub.s32 1, %s29
    %s33 = smul.u32 %s32, %s25
    %s34 = ssub.s32 %s31, %s33
    %p35 = scmp.eq.s32.totalorder %s34, 0
    %s37 = sadd.s32 %s36, 1
    %s38 = scalar_select %p35, %s36, %s37
    %p41 = pneg %p35
    %p42 = scmp.eq.s32.totalorder %s10, 1
    %p43 = por %p41, %p42
    %p44 = scmp.ne.s32.totalorder %s36, %s39
    %p45 = scmp.eq.s32.totalorder %s10, 0
    %p46 = por %p44, %p45
    %p47 = scmp.ne.s32.totalorder %s36, %s39
    %p48 = scmp.eq.s32.totalorder %s15, 1
    %p49 = por %p47, %p48
    %p50 = scmp.ne.s32.totalorder %s39, %s40
    %p51 = scmp.eq.s32.totalorder %s15, 0
    %p52 = por %p50, %p51
    %p53 = scmp.ne.s32.totalorder %s39, %s40
    %p54 = scmp.eq.s32.totalorder %s16, 1
    %p55 = por %p53, %p54
    %p57 = scmp.ne.s32.totalorder %s40, %s56
    %p58 = scmp.eq.s32.totalorder %s16, 0
    %p59 = por %p57, %p58
    %s61 = sadd.s32 %s60, 1
    %p64 = scmp.eq.s32.totalorder %s10, 1
    %p65 = scmp.ne.s32.totalorder %s60, %s62
    %p66 = scmp.eq.s32.totalorder %s10, 0
    %p67 = por %p65, %p66
    %p68 = scmp.ne.s32.totalorder %s60, %s62
    %p69 = scmp.eq.s32.totalorder %s15, 1
    %p70 = por %p68, %p69
    %p71 = scmp.ne.s32.totalorder %s62, %s63
    %p72 = scmp.eq.s32.totalorder %s15, 0
    %p73 = por %p71, %p72
    %p74 = scmp.ne.s32.totalorder %s62, %s63
    %p75 = scmp.eq.s32.totalorder %s16, 1
    %p76 = por %p74, %p75
    %p78 = scmp.ne.s32.totalorder %s63, %s77
    %p79 = scmp.eq.s32.totalorder %s16, 0
    %p80 = por %p78, %p79
    %s82 = sadd.s32 %s81, 1
    %p85 = scmp.eq.s32.totalorder %s10, 1
    %p86 = scmp.ne.s32.totalorder %s81, %s83
    %p87 = scmp.eq.s32.totalorder %s10, 0
    %p88 = por %p86, %p87
    %p89 = scmp.ne.s32.totalorder %s81, %s83
    %p90 = scmp.eq.s32.totalorder %s15, 1
    %p91 = por %p89, %p90
    %p92 = scmp.ne.s32.totalorder %s83, %s84
    %p93 = scmp.eq.s32.totalorder %s15, 0
    %p94 = por %p92, %p93
    %p95 = scmp.ne.s32.totalorder %s83, %s84
    %p96 = scmp.eq.s32.totalorder %s16, 1
    %p97 = por %p95, %p96
    %p99 = scmp.ne.s32.totalorder %s84, %s98
    %p100 = scmp.eq.s32.totalorder %s16, 0
    %p101 = por %p99, %p100
    %s103 = sadd.s32 %s102, 1
    %p106 = scmp.eq.s32.totalorder %s10, 1
    %p107 = scmp.ne.s32.totalorder %s102, %s104
    %p108 = scmp.eq.s32.totalorder %s10, 0
    %p109 = por %p107, %p108
    %p110 = scmp.ne.s32.totalorder %s102, %s104
    %p111 = scmp.eq.s32.totalorder %s15, 1
    %p112 = por %p110, %p111
    %p113 = scmp.ne.s32.totalorder %s104, %s105
    %p114 = scmp.eq.s32.totalorder %s15, 0
    %p115 = por %p113, %p114
    %p116 = scmp.ne.s32.totalorder %s104, %s105
    %p117 = scmp.eq.s32.totalorder %s16, 1
    %p118 = por %p116, %p117
    %p120 = scmp.ne.s32.totalorder %s105, %s119
    %p121 = scmp.eq.s32.totalorder %s16, 0
    %p122 = por %p120, %p121
    %s123 = smul.u32 %s18, %s17
    %s124 = smul.u32 %s25, %s29
    %s125 = ssub.s32 %s123, %s124
    %p126 = scmp.eq.s32.totalorder %s125, 0
    %s128 = sadd.s32 %s127, 1
    %s129 = scalar_select %p126, %s127, %s128
    %p132 = pneg %p126
    %p133 = scmp.eq.s32.totalorder %s10, 1
    %p134 = por %p132, %p133
    %p135 = scmp.ne.s32.totalorder %s127, %s130
    %p136 = scmp.eq.s32.totalorder %s10, 0
    %p137 = por %p135, %p136
    %p138 = scmp.ne.s32.totalorder %s127, %s130
    %p139 = scmp.eq.s32.totalorder %s15, 1
    %p140 = por %p138, %p139
    %p141 = scmp.ne.s32.totalorder %s130, %s131
    %p142 = scmp.eq.s32.totalorder %s15, 0
    %p143 = por %p141, %p142
    %p144 = scmp.ne.s32.totalorder %s130, %s131
    %p145 = scmp.eq.s32.totalorder %s16, 1
    %p146 = por %p144, %p145
    %p148 = scmp.ne.s32.totalorder %s131, %s147
    %p149 = scmp.eq.s32.totalorder %s16, 0
    %p150 = por %p148, %p149
    %p151 = scmp.le.s32.totalorder 1, %s10
    %p152 = scmp.lt.s32.totalorder %s10, 3
    %p153 = pnand %p151, %p152
    %p154 = pneg %p153
    // Predicated region
    $region9: #{generator_forward.8} parent=5 // pred_check
      _
    $region10: #{generator_forward.8} parent=5 // pred_check_branch
      %156 = sbr.rel (%p153) target = $region12
    $region11: #{generator_forward.8} parent=5 // pred_region
      %s157 = ssub.s32 %s10, 1
      // Predicated region
      $region13: #{generator_forward.8} parent=11 // pred_check
        %p158 = pneg %p73
      $region14: #{generator_forward.8} parent=11 // pred_check_branch
        %160 = sbr.rel (%p158) target = $region16
      $region15: #{generator_forward.8} parent=11 // pred_region
        _
      $region16: #{generator_forward.8} parent=11 // pred_fallthru
        _
      // Predicated region
      $region17: #{generator_forward.8} parent=11 // pred_check
        %p161 = pneg %p94
      $region18: #{generator_forward.8} parent=11 // pred_check_branch
        %163 = sbr.rel (%p161) target = $region20
      $region19: #{generator_forward.8} parent=11 // pred_region
        _
      $region20: #{generator_forward.8} parent=11 // pred_fallthru
        _
      // Predicated region
      $region21: #{generator_forward.8} parent=11 // pred_check
        %p164 = pneg %p115
      $region22: #{generator_forward.8} parent=11 // pred_check_branch
        %166 = sbr.rel (%p164) target = $region24
      $region23: #{generator_forward.8} parent=11 // pred_region
        _
      $region24: #{generator_forward.8} parent=11 // pred_fallthru
        _
    $region12: #{generator_forward.8} parent=5 // pred_fallthru
      _
    %p167 = scmp.lt.s32.totalorder %s10, 2
    // Predicated region
    $region25: #{generator_forward.8} parent=5 // pred_check
      %p168 = pneg %p167
    $region26: #{generator_forward.8} parent=5 // pred_check_branch
      %170 = sbr.rel (%p168) target = $region28
    $region27: #{generator_forward.8} parent=5 // pred_region
      // Predicated region
      $region29: #{generator_forward.8} parent=27 // pred_check
        %p171 = pneg %p46
      $region30: #{generator_forward.8} parent=27 // pred_check_branch
        %173 = sbr.rel (%p171) target = $region32
      $region31: #{generator_forward.8} parent=27 // pred_region
        %s174 = ssub.s32 1, %s17
        %s175 = smul.u32 %s174, %s18
        %s176 = smul.u32 256, %s175
        %p177 = scmp.lt.s32.totalorder %s176, 255
        %s178 = scalar_select %p177, %s176, 255
        %s179 = smul.addr %s178, 2
        %s180 = smul.addr %s179, 4
        %s181 = scalar_lea.vmem %s0, %s180
        %s182 = ssub.s32 1, %s17
        %s183 = smul.u32 %s182, %s18
        %s184 = smul.u32 256, %s183
      $region32: #{generator_forward.8} parent=27 // pred_fallthru
        _
    $region28: #{generator_forward.8} parent=5 // pred_fallthru
      _
    %p185 = scmp.le.s32.totalorder 1, %s10
    %p186 = scmp.lt.s32.totalorder %s10, 3
    %p187 = pnand %p185, %p186
    %p188 = pneg %p187
    // Predicated region
    $region33: #{generator_forward.8} parent=5 // pred_check
      _
    $region34: #{generator_forward.8} parent=5 // pred_check_branch
      %190 = sbr.rel (%p187) target = $region36
    $region35: #{generator_forward.8} parent=5 // pred_region
      %s191 = ssub.s32 %s10, 1
      %s192 = ssub.s32 1, %s19
      %s193 = smul.u32 %s192, %s20
      %s194 = smul.u32 256, %s193
      %p195 = scmp.lt.s32.totalorder %s194, 255
      %s196 = scalar_select %p195, %s194, 255
      %s197 = smul.addr %s196, 2
      %s198 = smul.addr %s197, 4
      %s199 = scalar_lea.vmem %s0, %s198
      %p200 = pneg %p52
      %p201 = pneg %p49
      %p202 = pneg %p73
      %p203 = pneg %p70
      %p204 = pneg %p94
      %p205 = pneg %p91
      %p206 = pneg %p115
      %p207 = pneg %p112
      %p208 = pneg %p143
      %p209 = pneg %p140
      %s210 = smul.u32 %s20, %s19
      %s211 = smul.u32 16, %s210
      %p212 = scmp.lt.s32.totalorder %s211, 15
      %s213 = scalar_select %p212, %s211, 15
      %s214 = smul.addr %s213, 4
      %s215 = scalar_lea.vmem %s4, %s214
      %s216 = ssub.s32 1, %s19
      %s217 = smul.u32 %s216, %s20
      %s218 = smul.u32 256, %s217
      %p219 = scmp.lt.s32.totalorder %s218, 255
      %s220 = scalar_select %p219, %s218, 255
      %s221 = smul.addr %s220, 2
      %s222 = smul.addr %s221, 4
      %s223 = scalar_lea.vmem %s0, %s222
      %s224 = ssub.s32 1, %s19
      %s225 = smul.u32 %s224, %s20
      %s226 = smul.u32 256, %s225
      %s227 = smul.u32 %s20, %s19
      %s228 = smul.u32 16, %s227
      %p229 = scmp.lt.s32.totalorder %s228, 15
      %s230 = scalar_select %p229, %s228, 15
      %s231 = smul.addr %s230, 4
      %s232 = scalar_lea.vmem %s4, %s231
      %s233 = smul.u32 %s20, %s19
      %s234 = smul.u32 16, %s233
      %p235 = scmp.eq.s32.totalorder %s19, 0
      %p236 = scmp.eq.s32.totalorder %s20, 0
      %p237 = pnand %p235, %p236
      %p238 = pneg %p237
      // Predicated region
      $region37: #{generator_forward.8} parent=35 // pred_check
        _
      $region38: #{generator_forward.8} parent=35 // pred_check_branch
        %240 = sbr.rel (%p237) target = $region40
      $region39: #{generator_forward.8} parent=35 // pred_region
        %vm241 = vcmask 7168
        %242 = vst.msk [vmem:[#allocation3] sm:$0xff] %vm241, 0.0
        %243 = vst.msk [vmem:[#allocation4] sm:$0xff] %vm241, 0.0
      $region40: #{generator_forward.8} parent=35 // pred_fallthru
        _
      // Predicated region
      $region41: #{generator_forward.8} parent=35 // pred_check
        %p244 = pneg %p235
      $region42: #{generator_forward.8} parent=35 // pred_check_branch
        %246 = sbr.rel (%p244) target = $region44
      $region43: #{generator_forward.8} parent=35 // pred_region
        %v247 = vld [vmem:[%s1] sm:$0xff]
        %v248 = vld [vmem:[%s223] sm:$0xff]
        %v249 = vld [vmem:[%s223 + $0x8] sm:$0xff]
        %v250 = vld [vmem:[%s223 + $0x10] sm:$0xff]
        %v251 = vld [vmem:[%s223 + $0x18] sm:$0xff]
        %v252 = vld [vmem:[%s223 + $0x20] sm:$0xff]
        %v253 = vld [vmem:[%s223 + $0x28] sm:$0xff]
        %v254 = vld [vmem:[%s223 + $0x30] sm:$0xff]
        %v255 = vld [vmem:[%s223 + $0x38] sm:$0xff]
        %v256 = vld [vmem:[%s223 + $0x40] sm:$0xff]
        %v257 = vld [vmem:[%s223 + $0x48] sm:$0xff]
        %v258 = vld [vmem:[%s223 + $0x50] sm:$0xff]
        %v259 = vld [vmem:[%s223 + $0x58] sm:$0xff]
        %v260 = vld [vmem:[%s223 + $0x60] sm:$0xff]
        %v261 = vld [vmem:[%s223 + $0x68] sm:$0xff]
        %v262 = vld [vmem:[%s223 + $0x70] sm:$0xff]
        %v263 = vld [vmem:[%s223 + $0x78] sm:$0xff]
        %v264 = vld [vmem:[%s223 + $0x80] sm:$0xff]
        %v265 = vld [vmem:[%s223 + $0x88] sm:$0xff]
        %v266 = vld [vmem:[%s223 + $0x90] sm:$0xff]
        %v267 = vld [vmem:[%s223 + $0x98] sm:$0xff]
        %v268 = vld [vmem:[%s223 + $0xa0] sm:$0xff]
        %v269 = vld [vmem:[%s223 + $0xa8] sm:$0xff]
        %v270 = vld [vmem:[%s223 + $0xb0] sm:$0xff]
        %v271 = vld [vmem:[%s223 + $0xb8] sm:$0xff]
        %v272 = vld [vmem:[%s223 + $0xc0] sm:$0xff]
        %v273 = vld [vmem:[%s223 + $0xc8] sm:$0xff]
        %v274 = vld [vmem:[%s223 + $0xd0] sm:$0xff]
        %v275 = vld [vmem:[%s223 + $0xd8] sm:$0xff]
        %v276 = vld [vmem:[%s223 + $0xe0] sm:$0xff]
        %v277 = vld [vmem:[%s223 + $0xe8] sm:$0xff]
        %v278 = vld [vmem:[%s223 + $0xf0] sm:$0xff]
        %v279 = vld [vmem:[%s223 + $0xf8] sm:$0xff]
        %v280 = vld [vmem:[%s223 + $0x100] sm:$0xff]
        %v281 = vld [vmem:[%s223 + $0x108] sm:$0xff]
        %v282 = vld [vmem:[%s223 + $0x110] sm:$0xff]
        %v283 = vld [vmem:[%s223 + $0x118] sm:$0xff]
        %v284 = vld [vmem:[%s223 + $0x120] sm:$0xff]
        %v285 = vld [vmem:[%s223 + $0x128] sm:$0xff]
        %v286 = vld [vmem:[%s223 + $0x130] sm:$0xff]
        %v287 = vld [vmem:[%s223 + $0x138] sm:$0xff]
        %v288 = vld [vmem:[%s223 + $0x140] sm:$0xff]
        %v289 = vld [vmem:[%s223 + $0x148] sm:$0xff]
        %v290 = vld [vmem:[%s223 + $0x150] sm:$0xff]
        %v291 = vld [vmem:[%s223 + $0x158] sm:$0xff]
        %v292 = vld [vmem:[%s223 + $0x160] sm:$0xff]
        %v293 = vld [vmem:[%s223 + $0x168] sm:$0xff]
        %v294 = vld [vmem:[%s223 + $0x170] sm:$0xff]
        %v295 = vld [vmem:[%s223 + $0x178] sm:$0xff]
        %v296 = vld [vmem:[%s223 + $0x180] sm:$0xff]
        %v297 = vld [vmem:[%s223 + $0x188] sm:$0xff]
        %v298 = vld [vmem:[%s223 + $0x190] sm:$0xff]
        %v299 = vld [vmem:[%s223 + $0x198] sm:$0xff]
        %v300 = vld [vmem:[%s223 + $0x1a0] sm:$0xff]
        %v301 = vld [vmem:[%s223 + $0x1a8] sm:$0xff]
        %v302 = vld [vmem:[%s223 + $0x1b0] sm:$0xff]
        %v303 = vld [vmem:[%s223 + $0x1b8] sm:$0xff]
        %v304 = vld [vmem:[%s223 + $0x1c0] sm:$0xff]
        %v305 = vld [vmem:[%s223 + $0x1c8] sm:$0xff]
        %v306 = vld [vmem:[%s223 + $0x1d0] sm:$0xff]
        %v307 = vld [vmem:[%s223 + $0x1d8] sm:$0xff]
        %v308 = vld [vmem:[%s223 + $0x1e0] sm:$0xff]
        %v309 = vld [vmem:[%s223 + $0x1e8] sm:$0xff]
        %v310 = vld [vmem:[%s223 + $0x1f0] sm:$0xff]
        %v311 = vld [vmem:[%s223 + $0x1f8] sm:$0xff]
        %v312 = vld [vmem:[%s223 + $0x200] sm:$0xff]
        %v313 = vld [vmem:[%s223 + $0x208] sm:$0xff]
        %v314 = vld [vmem:[%s223 + $0x210] sm:$0xff]
        %v315 = vld [vmem:[%s223 + $0x218] sm:$0xff]
        %v316 = vld [vmem:[%s223 + $0x220] sm:$0xff]
        %v317 = vld [vmem:[%s223 + $0x228] sm:$0xff]
        %v318 = vld [vmem:[%s223 + $0x230] sm:$0xff]
        %v319 = vld [vmem:[%s223 + $0x238] sm:$0xff]
        %v320 = vld [vmem:[%s223 + $0x240] sm:$0xff]
        %v321 = vld [vmem:[%s223 + $0x248] sm:$0xff]
        %v322 = vld [vmem:[%s223 + $0x250] sm:$0xff]
        %v323 = vld [vmem:[%s223 + $0x258] sm:$0xff]
        %v324 = vld [vmem:[%s223 + $0x260] sm:$0xff]
        %v325 = vld [vmem:[%s223 + $0x268] sm:$0xff]
        %v326 = vld [vmem:[%s223 + $0x270] sm:$0xff]
        %v327 = vld [vmem:[%s223 + $0x278] sm:$0xff]
        %v328 = vld [vmem:[%s223 + $0x280] sm:$0xff]
        %v329 = vld [vmem:[%s223 + $0x288] sm:$0xff]
        %v330 = vld [vmem:[%s223 + $0x290] sm:$0xff]
        %v331 = vld [vmem:[%s223 + $0x298] sm:$0xff]
        %v332 = vld [vmem:[%s223 + $0x2a0] sm:$0xff]
        %v333 = vld [vmem:[%s223 + $0x2a8] sm:$0xff]
        %v334 = vld [vmem:[%s223 + $0x2b0] sm:$0xff]
        %v335 = vld [vmem:[%s223 + $0x2b8] sm:$0xff]
        %v336 = vld [vmem:[%s223 + $0x2c0] sm:$0xff]
        %v337 = vld [vmem:[%s223 + $0x2c8] sm:$0xff]
        %v338 = vld [vmem:[%s223 + $0x2d0] sm:$0xff]
        %v339 = vld [vmem:[%s223 + $0x2d8] sm:$0xff]
        %v340 = vld [vmem:[%s223 + $0x2e0] sm:$0xff]
        %v341 = vld [vmem:[%s223 + $0x2e8] sm:$0xff]
        %v342 = vld [vmem:[%s223 + $0x2f0] sm:$0xff]
        %v343 = vld [vmem:[%s223 + $0x2f8] sm:$0xff]
        %v344 = vld [vmem:[%s223 + $0x300] sm:$0xff]
        %v345 = vld [vmem:[%s223 + $0x308] sm:$0xff]
        %v346 = vld [vmem:[%s223 + $0x310] sm:$0xff]
        %v347 = vld [vmem:[%s223 + $0x318] sm:$0xff]
        %v348 = vld [vmem:[%s223 + $0x320] sm:$0xff]
        %v349 = vld [vmem:[%s223 + $0x328] sm:$0xff]
        %v350 = vld [vmem:[%s223 + $0x330] sm:$0xff]
        %v351 = vld [vmem:[%s223 + $0x338] sm:$0xff]
        %v352 = vld [vmem:[%s223 + $0x340] sm:$0xff]
        %v353 = vld [vmem:[%s223 + $0x348] sm:$0xff]
        %v354 = vld [vmem:[%s223 + $0x350] sm:$0xff]
        %v355 = vld [vmem:[%s223 + $0x358] sm:$0xff]
        %v356 = vld [vmem:[%s223 + $0x360] sm:$0xff]
        %v357 = vld [vmem:[%s223 + $0x368] sm:$0xff]
        %v358 = vld [vmem:[%s223 + $0x370] sm:$0xff]
        %v359 = vld [vmem:[%s223 + $0x378] sm:$0xff]
        %v360 = vld [vmem:[%s223 + $0x380] sm:$0xff]
        %v361 = vld [vmem:[%s223 + $0x388] sm:$0xff]
        %v362 = vld [vmem:[%s223 + $0x390] sm:$0xff]
        %v363 = vld [vmem:[%s223 + $0x398] sm:$0xff]
        %v364 = vld [vmem:[%s223 + $0x3a0] sm:$0xff]
        %v365 = vld [vmem:[%s223 + $0x3a8] sm:$0xff]
        %v366 = vld [vmem:[%s223 + $0x3b0] sm:$0xff]
        %v367 = vld [vmem:[%s223 + $0x3b8] sm:$0xff]
        %v368 = vld [vmem:[%s223 + $0x3c0] sm:$0xff]
        %v369 = vld [vmem:[%s223 + $0x3c8] sm:$0xff]
        %v370 = vld [vmem:[%s223 + $0x3d0] sm:$0xff]
        %v371 = vld [vmem:[%s223 + $0x3d8] sm:$0xff]
        %v372 = vld [vmem:[%s223 + $0x3e0] sm:$0xff]
        %v373 = vld [vmem:[%s223 + $0x3e8] sm:$0xff]
        %v374 = vld [vmem:[%s223 + $0x3f0] sm:$0xff]
        %v375 = vld [vmem:[%s223 + $0x3f8] sm:$0xff]
        %v376 = vld [vmem:[%s223 + $0x400] sm:$0xff]
        %v377 = vld [vmem:[%s223 + $0x408] sm:$0xff]
        %v378 = vld [vmem:[%s223 + $0x410] sm:$0xff]
        %v379 = vld [vmem:[%s223 + $0x418] sm:$0xff]
        %v380 = vld [vmem:[%s223 + $0x420] sm:$0xff]
        %v381 = vld [vmem:[%s223 + $0x428] sm:$0xff]
        %v382 = vld [vmem:[%s223 + $0x430] sm:$0xff]
        %v383 = vld [vmem:[%s223 + $0x438] sm:$0xff]
        %v384 = vld [vmem:[%s223 + $0x440] sm:$0xff]
        %v385 = vld [vmem:[%s223 + $0x448] sm:$0xff]
        %v386 = vld [vmem:[%s223 + $0x450] sm:$0xff]
        %v387 = vld [vmem:[%s223 + $0x458] sm:$0xff]
        %v388 = vld [vmem:[%s223 + $0x460] sm:$0xff]
        %v389 = vld [vmem:[%s223 + $0x468] sm:$0xff]
        %v390 = vld [vmem:[%s223 + $0x470] sm:$0xff]
        %v391 = vld [vmem:[%s223 + $0x478] sm:$0xff]
        %v392 = vld [vmem:[%s223 + $0x480] sm:$0xff]
        %v393 = vld [vmem:[%s223 + $0x488] sm:$0xff]
        %v394 = vld [vmem:[%s223 + $0x490] sm:$0xff]
        %v395 = vld [vmem:[%s223 + $0x498] sm:$0xff]
        %v396 = vld [vmem:[%s223 + $0x4a0] sm:$0xff]
        %v397 = vld [vmem:[%s223 + $0x4a8] sm:$0xff]
        %v398 = vld [vmem:[%s223 + $0x4b0] sm:$0xff]
        %v399 = vld [vmem:[%s223 + $0x4b8] sm:$0xff]
        %v400 = vld [vmem:[%s223 + $0x4c0] sm:$0xff]
        %v401 = vld [vmem:[%s223 + $0x4c8] sm:$0xff]
        %v402 = vld [vmem:[%s223 + $0x4d0] sm:$0xff]
        %v403 = vld [vmem:[%s223 + $0x4d8] sm:$0xff]
        %v404 = vld [vmem:[%s223 + $0x4e0] sm:$0xff]
        %v405 = vld [vmem:[%s223 + $0x4e8] sm:$0xff]
        %v406 = vld [vmem:[%s223 + $0x4f0] sm:$0xff]
        %v407 = vld [vmem:[%s223 + $0x4f8] sm:$0xff]
        %v408 = vld [vmem:[%s223 + $0x500] sm:$0xff]
        %v409 = vld [vmem:[%s223 + $0x508] sm:$0xff]
        %v410 = vld [vmem:[%s223 + $0x510] sm:$0xff]
        %v411 = vld [vmem:[%s223 + $0x518] sm:$0xff]
        %v412 = vld [vmem:[%s223 + $0x520] sm:$0xff]
        %v413 = vld [vmem:[%s223 + $0x528] sm:$0xff]
        %v414 = vld [vmem:[%s223 + $0x530] sm:$0xff]
        %v415 = vld [vmem:[%s223 + $0x538] sm:$0xff]
        %v416 = vld [vmem:[%s223 + $0x540] sm:$0xff]
        %v417 = vld [vmem:[%s223 + $0x548] sm:$0xff]
        %v418 = vld [vmem:[%s223 + $0x550] sm:$0xff]
        %v419 = vld [vmem:[%s223 + $0x558] sm:$0xff]
        %v420 = vld [vmem:[%s223 + $0x560] sm:$0xff]
        %v421 = vld [vmem:[%s223 + $0x568] sm:$0xff]
        %v422 = vld [vmem:[%s223 + $0x570] sm:$0xff]
        %v423 = vld [vmem:[%s223 + $0x578] sm:$0xff]
        %v424 = vld [vmem:[%s223 + $0x580] sm:$0xff]
        %v425 = vld [vmem:[%s223 + $0x588] sm:$0xff]
        %v426 = vld [vmem:[%s223 + $0x590] sm:$0xff]
        %v427 = vld [vmem:[%s223 + $0x598] sm:$0xff]
        %v428 = vld [vmem:[%s223 + $0x5a0] sm:$0xff]
        %v429 = vld [vmem:[%s223 + $0x5a8] sm:$0xff]
        %v430 = vld [vmem:[%s223 + $0x5b0] sm:$0xff]
        %v431 = vld [vmem:[%s223 + $0x5b8] sm:$0xff]
        %v432 = vld [vmem:[%s223 + $0x5c0] sm:$0xff]
        %v433 = vld [vmem:[%s223 + $0x5c8] sm:$0xff]
        %v434 = vld [vmem:[%s223 + $0x5d0] sm:$0xff]
        %v435 = vld [vmem:[%s223 + $0x5d8] sm:$0xff]
        %v436 = vld [vmem:[%s223 + $0x5e0] sm:$0xff]
        %v437 = vld [vmem:[%s223 + $0x5e8] sm:$0xff]
        %v438 = vld [vmem:[%s223 + $0x5f0] sm:$0xff]
        %v439 = vld [vmem:[%s223 + $0x5f8] sm:$0xff]
        %v440 = vld [vmem:[%s223 + $0x600] sm:$0xff]
        %v441 = vld [vmem:[%s223 + $0x608] sm:$0xff]
        %v442 = vld [vmem:[%s223 + $0x610] sm:$0xff]
        %v443 = vld [vmem:[%s223 + $0x618] sm:$0xff]
        %v444 = vld [vmem:[%s223 + $0x620] sm:$0xff]
        %v445 = vld [vmem:[%s223 + $0x628] sm:$0xff]
        %v446 = vld [vmem:[%s223 + $0x630] sm:$0xff]
        %v447 = vld [vmem:[%s223 + $0x638] sm:$0xff]
        %v448 = vld [vmem:[%s223 + $0x640] sm:$0xff]
        %v449 = vld [vmem:[%s223 + $0x648] sm:$0xff]
        %v450 = vld [vmem:[%s223 + $0x650] sm:$0xff]
        %v451 = vld [vmem:[%s223 + $0x658] sm:$0xff]
        %v452 = vld [vmem:[%s223 + $0x660] sm:$0xff]
        %v453 = vld [vmem:[%s223 + $0x668] sm:$0xff]
        %v454 = vld [vmem:[%s223 + $0x670] sm:$0xff]
        %v455 = vld [vmem:[%s223 + $0x678] sm:$0xff]
        %v456 = vld [vmem:[%s223 + $0x680] sm:$0xff]
        %v457 = vld [vmem:[%s223 + $0x688] sm:$0xff]
        %v458 = vld [vmem:[%s223 + $0x690] sm:$0xff]
        %v459 = vld [vmem:[%s223 + $0x698] sm:$0xff]
        %v460 = vld [vmem:[%s223 + $0x6a0] sm:$0xff]
        %v461 = vld [vmem:[%s223 + $0x6a8] sm:$0xff]
        %v462 = vld [vmem:[%s223 + $0x6b0] sm:$0xff]
        %v463 = vld [vmem:[%s223 + $0x6b8] sm:$0xff]
        %v464 = vld [vmem:[%s223 + $0x6c0] sm:$0xff]
        %v465 = vld [vmem:[%s223 + $0x6c8] sm:$0xff]
        %v466 = vld [vmem:[%s223 + $0x6d0] sm:$0xff]
        %v467 = vld [vmem:[%s223 + $0x6d8] sm:$0xff]
        %v468 = vld [vmem:[%s223 + $0x6e0] sm:$0xff]
        %v469 = vld [vmem:[%s223 + $0x6e8] sm:$0xff]
        %v470 = vld [vmem:[%s223 + $0x6f0] sm:$0xff]
        %v471 = vld [vmem:[%s223 + $0x6f8] sm:$0xff]
        %v472 = vld [vmem:[%s223 + $0x700] sm:$0xff]
        %v473 = vld [vmem:[%s223 + $0x708] sm:$0xff]
        %v474 = vld [vmem:[%s223 + $0x710] sm:$0xff]
        %v475 = vld [vmem:[%s223 + $0x718] sm:$0xff]
        %v476 = vld [vmem:[%s223 + $0x720] sm:$0xff]
        %v477 = vld [vmem:[%s223 + $0x728] sm:$0xff]
        %v478 = vld [vmem:[%s223 + $0x730] sm:$0xff]
        %v479 = vld [vmem:[%s223 + $0x738] sm:$0xff]
        %v480 = vld [vmem:[%s223 + $0x740] sm:$0xff]
        %v481 = vld [vmem:[%s223 + $0x748] sm:$0xff]
        %v482 = vld [vmem:[%s223 + $0x750] sm:$0xff]
        %v483 = vld [vmem:[%s223 + $0x758] sm:$0xff]
        %v484 = vld [vmem:[%s223 + $0x760] sm:$0xff]
        %v485 = vld [vmem:[%s223 + $0x768] sm:$0xff]
        %v486 = vld [vmem:[%s223 + $0x770] sm:$0xff]
        %v487 = vld [vmem:[%s223 + $0x778] sm:$0xff]
        %v488 = vld [vmem:[%s223 + $0x780] sm:$0xff]
        %v489 = vld [vmem:[%s223 + $0x788] sm:$0xff]
        %v490 = vld [vmem:[%s223 + $0x790] sm:$0xff]
        %v491 = vld [vmem:[%s223 + $0x798] sm:$0xff]
        %v492 = vld [vmem:[%s223 + $0x7a0] sm:$0xff]
        %v493 = vld [vmem:[%s223 + $0x7a8] sm:$0xff]
        %v494 = vld [vmem:[%s223 + $0x7b0] sm:$0xff]
        %v495 = vld [vmem:[%s223 + $0x7b8] sm:$0xff]
        %v496 = vld [vmem:[%s223 + $0x7c0] sm:$0xff]
        %v497 = vld [vmem:[%s223 + $0x7c8] sm:$0xff]
        %v498 = vld [vmem:[%s223 + $0x7d0] sm:$0xff]
        %v499 = vld [vmem:[%s223 + $0x7d8] sm:$0xff]
        %v500 = vld [vmem:[%s223 + $0x7e0] sm:$0xff]
        %v501 = vld [vmem:[%s223 + $0x7e8] sm:$0xff]
        %v502 = vld [vmem:[%s223 + $0x7f0] sm:$0xff]
        %v503 = vld [vmem:[%s223 + $0x7f8] sm:$0xff]
        %v505 = vunpack.c.l.b16 %v247
        %v506 = vunpack.c.h.b16 %v247
        %v507 = vpack.c.b16 %v505, %v505
        %v508 = vpack.c.b16 %v506, %v506
        %v767 = vunpack.c.l.b16 %v248
        %v768 = vunpack.c.h.b16 %v248
        %v769 = vunpack.c.l.b16 %v249
        %v770 = vunpack.c.h.b16 %v249
        %v771 = vunpack.c.l.b16 %v250
        %v772 = vunpack.c.h.b16 %v250
        %v773 = vunpack.c.l.b16 %v251
        %v774 = vunpack.c.h.b16 %v251
        %v775 = vunpack.c.l.b16 %v252
        %v776 = vunpack.c.h.b16 %v252
        %v777 = vunpack.c.l.b16 %v253
        %v778 = vunpack.c.h.b16 %v253
        %v779 = vunpack.c.l.b16 %v254
        %v780 = vunpack.c.h.b16 %v254
        %v781 = vunpack.c.l.b16 %v255
        %v782 = vunpack.c.h.b16 %v255
        %v783 = vunpack.c.l.b16 %v256
        %v784 = vunpack.c.h.b16 %v256
        %v785 = vunpack.c.l.b16 %v257
        %v786 = vunpack.c.h.b16 %v257
        %v787 = vunpack.c.l.b16 %v258
        %v788 = vunpack.c.h.b16 %v258
        %v789 = vunpack.c.l.b16 %v259
        %v790 = vunpack.c.h.b16 %v259
        %v791 = vunpack.c.l.b16 %v260
        %v792 = vunpack.c.h.b16 %v260
        %v793 = vunpack.c.l.b16 %v261
        %v794 = vunpack.c.h.b16 %v261
        %v795 = vunpack.c.l.b16 %v262
        %v796 = vunpack.c.h.b16 %v262
        %v797 = vunpack.c.l.b16 %v263
        %v798 = vunpack.c.h.b16 %v263
        %v799 = vunpack.c.l.b16 %v264
        %v800 = vunpack.c.h.b16 %v264
        %v801 = vunpack.c.l.b16 %v265
        %v802 = vunpack.c.h.b16 %v265
        %v803 = vunpack.c.l.b16 %v266
        %v804 = vunpack.c.h.b16 %v266
        %v805 = vunpack.c.l.b16 %v267
        %v806 = vunpack.c.h.b16 %v267
        %v807 = vunpack.c.l.b16 %v268
        %v808 = vunpack.c.h.b16 %v268
        %v809 = vunpack.c.l.b16 %v269
        %v810 = vunpack.c.h.b16 %v269
        %v811 = vunpack.c.l.b16 %v270
        %v812 = vunpack.c.h.b16 %v270
        %v813 = vunpack.c.l.b16 %v271
        %v814 = vunpack.c.h.b16 %v271
        %v815 = vunpack.c.l.b16 %v272
        %v816 = vunpack.c.h.b16 %v272
        %v817 = vunpack.c.l.b16 %v273
        %v818 = vunpack.c.h.b16 %v273
        %v819 = vunpack.c.l.b16 %v274
        %v820 = vunpack.c.h.b16 %v274
        %v821 = vunpack.c.l.b16 %v275
        %v822 = vunpack.c.h.b16 %v275
        %v823 = vunpack.c.l.b16 %v276
        %v824 = vunpack.c.h.b16 %v276
        %v825 = vunpack.c.l.b16 %v277
        %v826 = vunpack.c.h.b16 %v277
        %v827 = vunpack.c.l.b16 %v278
        %v828 = vunpack.c.h.b16 %v278
        %v829 = vunpack.c.l.b16 %v279
        %v830 = vunpack.c.h.b16 %v279
        %v831 = vunpack.c.l.b16 %v280
        %v832 = vunpack.c.h.b16 %v280
        %v833 = vunpack.c.l.b16 %v281
        %v834 = vunpack.c.h.b16 %v281
        %v835 = vunpack.c.l.b16 %v282
        %v836 = vunpack.c.h.b16 %v282
        %v837 = vunpack.c.l.b16 %v283
        %v838 = vunpack.c.h.b16 %v283
        %v839 = vunpack.c.l.b16 %v284
        %v840 = vunpack.c.h.b16 %v284
        %v841 = vunpack.c.l.b16 %v285
        %v842 = vunpack.c.h.b16 %v285
        %v843 = vunpack.c.l.b16 %v286
        %v844 = vunpack.c.h.b16 %v286
        %v845 = vunpack.c.l.b16 %v287
        %v846 = vunpack.c.h.b16 %v287
        %v847 = vunpack.c.l.b16 %v288
        %v848 = vunpack.c.h.b16 %v288
        %v849 = vunpack.c.l.b16 %v289
        %v850 = vunpack.c.h.b16 %v289
        %v851 = vunpack.c.l.b16 %v290
        %v852 = vunpack.c.h.b16 %v290
        %v853 = vunpack.c.l.b16 %v291
        %v854 = vunpack.c.h.b16 %v291
        %v855 = vunpack.c.l.b16 %v292
        %v856 = vunpack.c.h.b16 %v292
        %v857 = vunpack.c.l.b16 %v293
        %v858 = vunpack.c.h.b16 %v293
        %v859 = vunpack.c.l.b16 %v294
        %v860 = vunpack.c.h.b16 %v294
        %v861 = vunpack.c.l.b16 %v295
        %v862 = vunpack.c.h.b16 %v295
        %v863 = vunpack.c.l.b16 %v296
        %v864 = vunpack.c.h.b16 %v296
        %v865 = vunpack.c.l.b16 %v297
        %v866 = vunpack.c.h.b16 %v297
        %v867 = vunpack.c.l.b16 %v298
        %v868 = vunpack.c.h.b16 %v298
        %v869 = vunpack.c.l.b16 %v299
        %v870 = vunpack.c.h.b16 %v299
        %v871 = vunpack.c.l.b16 %v300
        %v872 = vunpack.c.h.b16 %v300
        %v873 = vunpack.c.l.b16 %v301
        %v874 = vunpack.c.h.b16 %v301
        %v875 = vunpack.c.l.b16 %v302
        %v876 = vunpack.c.h.b16 %v302
        %v877 = vunpack.c.l.b16 %v303
        %v878 = vunpack.c.h.b16 %v303
        %v879 = vunpack.c.l.b16 %v304
        %v880 = vunpack.c.h.b16 %v304
        %v881 = vunpack.c.l.b16 %v305
        %v882 = vunpack.c.h.b16 %v305
        %v883 = vunpack.c.l.b16 %v306
        %v884 = vunpack.c.h.b16 %v306
        %v885 = vunpack.c.l.b16 %v307
        %v886 = vunpack.c.h.b16 %v307
        %v887 = vunpack.c.l.b16 %v308
        %v888 = vunpack.c.h.b16 %v308
        %v889 = vunpack.c.l.b16 %v309
        %v890 = vunpack.c.h.b16 %v309
        %v891 = vunpack.c.l.b16 %v310
        %v892 = vunpack.c.h.b16 %v310
        %v893 = vunpack.c.l.b16 %v311
        %v894 = vunpack.c.h.b16 %v311
        %v895 = vunpack.c.l.b16 %v312
        %v896 = vunpack.c.h.b16 %v312
        %v897 = vunpack.c.l.b16 %v313
        %v898 = vunpack.c.h.b16 %v313
        %v899 = vunpack.c.l.b16 %v314
        %v900 = vunpack.c.h.b16 %v314
        %v901 = vunpack.c.l.b16 %v315
        %v902 = vunpack.c.h.b16 %v315
        %v903 = vunpack.c.l.b16 %v316
        %v904 = vunpack.c.h.b16 %v316
        %v905 = vunpack.c.l.b16 %v317
        %v906 = vunpack.c.h.b16 %v317
        %v907 = vunpack.c.l.b16 %v318
        %v908 = vunpack.c.h.b16 %v318
        %v909 = vunpack.c.l.b16 %v319
        %v910 = vunpack.c.h.b16 %v319
        %v911 = vunpack.c.l.b16 %v320
        %v912 = vunpack.c.h.b16 %v320
        %v913 = vunpack.c.l.b16 %v321
        %v914 = vunpack.c.h.b16 %v321
        %v915 = vunpack.c.l.b16 %v322
        %v916 = vunpack.c.h.b16 %v322
        %v917 = vunpack.c.l.b16 %v323
        %v918 = vunpack.c.h.b16 %v323
        %v919 = vunpack.c.l.b16 %v324
        %v920 = vunpack.c.h.b16 %v324
        %v921 = vunpack.c.l.b16 %v325
        %v922 = vunpack.c.h.b16 %v325
        %v923 = vunpack.c.l.b16 %v326
        %v924 = vunpack.c.h.b16 %v326
        %v925 = vunpack.c.l.b16 %v327
        %v926 = vunpack.c.h.b16 %v327
        %v927 = vunpack.c.l.b16 %v328
        %v928 = vunpack.c.h.b16 %v328
        %v929 = vunpack.c.l.b16 %v329
        %v930 = vunpack.c.h.b16 %v329
        %v931 = vunpack.c.l.b16 %v330
        %v932 = vunpack.c.h.b16 %v330
        %v933 = vunpack.c.l.b16 %v331
        %v934 = vunpack.c.h.b16 %v331
        %v935 = vunpack.c.l.b16 %v332
        %v936 = vunpack.c.h.b16 %v332
        %v937 = vunpack.c.l.b16 %v333
        %v938 = vunpack.c.h.b16 %v333
        %v939 = vunpack.c.l.b16 %v334
        %v940 = vunpack.c.h.b16 %v334
        %v941 = vunpack.c.l.b16 %v335
        %v942 = vunpack.c.h.b16 %v335
        %v943 = vunpack.c.l.b16 %v336
        %v944 = vunpack.c.h.b16 %v336
        %v945 = vunpack.c.l.b16 %v337
        %v946 = vunpack.c.h.b16 %v337
        %v947 = vunpack.c.l.b16 %v338
        %v948 = vunpack.c.h.b16 %v338
        %v949 = vunpack.c.l.b16 %v339
        %v950 = vunpack.c.h.b16 %v339
        %v951 = vunpack.c.l.b16 %v340
        %v952 = vunpack.c.h.b16 %v340
        %v953 = vunpack.c.l.b16 %v341
        %v954 = vunpack.c.h.b16 %v341
        %v955 = vunpack.c.l.b16 %v342
        %v956 = vunpack.c.h.b16 %v342
        %v957 = vunpack.c.l.b16 %v343
        %v958 = vunpack.c.h.b16 %v343
        %v959 = vunpack.c.l.b16 %v344
        %v960 = vunpack.c.h.b16 %v344
        %v961 = vunpack.c.l.b16 %v345
        %v962 = vunpack.c.h.b16 %v345
        %v963 = vunpack.c.l.b16 %v346
        %v964 = vunpack.c.h.b16 %v346
        %v965 = vunpack.c.l.b16 %v347
        %v966 = vunpack.c.h.b16 %v347
        %v967 = vunpack.c.l.b16 %v348
        %v968 = vunpack.c.h.b16 %v348
        %v969 = vunpack.c.l.b16 %v349
        %v970 = vunpack.c.h.b16 %v349
        %v971 = vunpack.c.l.b16 %v350
        %v972 = vunpack.c.h.b16 %v350
        %v973 = vunpack.c.l.b16 %v351
        %v974 = vunpack.c.h.b16 %v351
        %v975 = vunpack.c.l.b16 %v352
        %v976 = vunpack.c.h.b16 %v352
        %v977 = vunpack.c.l.b16 %v353
        %v978 = vunpack.c.h.b16 %v353
        %v979 = vunpack.c.l.b16 %v354
        %v980 = vunpack.c.h.b16 %v354
        %v981 = vunpack.c.l.b16 %v355
        %v982 = vunpack.c.h.b16 %v355
        %v983 = vunpack.c.l.b16 %v356
        %v984 = vunpack.c.h.b16 %v356
        %v985 = vunpack.c.l.b16 %v357
        %v986 = vunpack.c.h.b16 %v357
        %v987 = vunpack.c.l.b16 %v358
        %v988 = vunpack.c.h.b16 %v358
        %v989 = vunpack.c.l.b16 %v359
        %v990 = vunpack.c.h.b16 %v359
        %v991 = vunpack.c.l.b16 %v360
        %v992 = vunpack.c.h.b16 %v360
        %v993 = vunpack.c.l.b16 %v361
        %v994 = vunpack.c.h.b16 %v361
        %v995 = vunpack.c.l.b16 %v362
        %v996 = vunpack.c.h.b16 %v362
        %v997 = vunpack.c.l.b16 %v363
        %v998 = vunpack.c.h.b16 %v363
        %v999 = vunpack.c.l.b16 %v364
        %v1000 = vunpack.c.h.b16 %v364
        %v1001 = vunpack.c.l.b16 %v365
        %v1002 = vunpack.c.h.b16 %v365
        %v1003 = vunpack.c.l.b16 %v366
        %v1004 = vunpack.c.h.b16 %v366
        %v1005 = vunpack.c.l.b16 %v367
        %v1006 = vunpack.c.h.b16 %v367
        %v1007 = vunpack.c.l.b16 %v368
        %v1008 = vunpack.c.h.b16 %v368
        %v1009 = vunpack.c.l.b16 %v369
        %v1010 = vunpack.c.h.b16 %v369
        %v1011 = vunpack.c.l.b16 %v370
        %v1012 = vunpack.c.h.b16 %v370
        %v1013 = vunpack.c.l.b16 %v371
        %v1014 = vunpack.c.h.b16 %v371
        %v1015 = vunpack.c.l.b16 %v372
        %v1016 = vunpack.c.h.b16 %v372
        %v1017 = vunpack.c.l.b16 %v373
        %v1018 = vunpack.c.h.b16 %v373
        %v1019 = vunpack.c.l.b16 %v374
        %v1020 = vunpack.c.h.b16 %v374
        %v1021 = vunpack.c.l.b16 %v375
        %v1022 = vunpack.c.h.b16 %v375
        %v1023 = vunpack.c.l.b16 %v376
        %v1024 = vunpack.c.h.b16 %v376
        %v1025 = vunpack.c.l.b16 %v377
        %v1026 = vunpack.c.h.b16 %v377
        %v1027 = vunpack.c.l.b16 %v378
        %v1028 = vunpack.c.h.b16 %v378
        %v1029 = vunpack.c.l.b16 %v379
        %v1030 = vunpack.c.h.b16 %v379
        %v1031 = vunpack.c.l.b16 %v380
        %v1032 = vunpack.c.h.b16 %v380
        %v1033 = vunpack.c.l.b16 %v381
        %v1034 = vunpack.c.h.b16 %v381
        %v1035 = vunpack.c.l.b16 %v382
        %v1036 = vunpack.c.h.b16 %v382
        %v1037 = vunpack.c.l.b16 %v383
        %v1038 = vunpack.c.h.b16 %v383
        %v1039 = vunpack.c.l.b16 %v384
        %v1040 = vunpack.c.h.b16 %v384
        %v1041 = vunpack.c.l.b16 %v385
        %v1042 = vunpack.c.h.b16 %v385
        %v1043 = vunpack.c.l.b16 %v386
        %v1044 = vunpack.c.h.b16 %v386
        %v1045 = vunpack.c.l.b16 %v387
        %v1046 = vunpack.c.h.b16 %v387
        %v1047 = vunpack.c.l.b16 %v388
        %v1048 = vunpack.c.h.b16 %v388
        %v1049 = vunpack.c.l.b16 %v389
        %v1050 = vunpack.c.h.b16 %v389
        %v1051 = vunpack.c.l.b16 %v390
        %v1052 = vunpack.c.h.b16 %v390
        %v1053 = vunpack.c.l.b16 %v391
        %v1054 = vunpack.c.h.b16 %v391
        %v1055 = vunpack.c.l.b16 %v392
        %v1056 = vunpack.c.h.b16 %v392
        %v1057 = vunpack.c.l.b16 %v393
        %v1058 = vunpack.c.h.b16 %v393
        %v1059 = vunpack.c.l.b16 %v394
        %v1060 = vunpack.c.h.b16 %v394
        %v1061 = vunpack.c.l.b16 %v395
        %v1062 = vunpack.c.h.b16 %v395
        %v1063 = vunpack.c.l.b16 %v396
        %v1064 = vunpack.c.h.b16 %v396
        %v1065 = vunpack.c.l.b16 %v397
        %v1066 = vunpack.c.h.b16 %v397
        %v1067 = vunpack.c.l.b16 %v398
        %v1068 = vunpack.c.h.b16 %v398
        %v1069 = vunpack.c.l.b16 %v399
        %v1070 = vunpack.c.h.b16 %v399
        %v1071 = vunpack.c.l.b16 %v400
        %v1072 = vunpack.c.h.b16 %v400
        %v1073 = vunpack.c.l.b16 %v401
        %v1074 = vunpack.c.h.b16 %v401
        %v1075 = vunpack.c.l.b16 %v402
        %v1076 = vunpack.c.h.b16 %v402
        %v1077 = vunpack.c.l.b16 %v403
        %v1078 = vunpack.c.h.b16 %v403
        %v1079 = vunpack.c.l.b16 %v404
        %v1080 = vunpack.c.h.b16 %v404
        %v1081 = vunpack.c.l.b16 %v405
        %v1082 = vunpack.c.h.b16 %v405
        %v1083 = vunpack.c.l.b16 %v406
        %v1084 = vunpack.c.h.b16 %v406
        %v1085 = vunpack.c.l.b16 %v407
        %v1086 = vunpack.c.h.b16 %v407
        %v1087 = vunpack.c.l.b16 %v408
        %v1088 = vunpack.c.h.b16 %v408
        %v1089 = vunpack.c.l.b16 %v409
        %v1090 = vunpack.c.h.b16 %v409
        %v1091 = vunpack.c.l.b16 %v410
        %v1092 = vunpack.c.h.b16 %v410
        %v1093 = vunpack.c.l.b16 %v411
        %v1094 = vunpack.c.h.b16 %v411
        %v1095 = vunpack.c.l.b16 %v412
        %v1096 = vunpack.c.h.b16 %v412
        %v1097 = vunpack.c.l.b16 %v413
        %v1098 = vunpack.c.h.b16 %v413
        %v1099 = vunpack.c.l.b16 %v414
        %v1100 = vunpack.c.h.b16 %v414
        %v1101 = vunpack.c.l.b16 %v415
        %v1102 = vunpack.c.h.b16 %v415
        %v1103 = vunpack.c.l.b16 %v416
        %v1104 = vunpack.c.h.b16 %v416
        %v1105 = vunpack.c.l.b16 %v417
        %v1106 = vunpack.c.h.b16 %v417
        %v1107 = vunpack.c.l.b16 %v418
        %v1108 = vunpack.c.h.b16 %v418
        %v1109 = vunpack.c.l.b16 %v419
        %v1110 = vunpack.c.h.b16 %v419
        %v1111 = vunpack.c.l.b16 %v420
        %v1112 = vunpack.c.h.b16 %v420
        %v1113 = vunpack.c.l.b16 %v421
        %v1114 = vunpack.c.h.b16 %v421
        %v1115 = vunpack.c.l.b16 %v422
        %v1116 = vunpack.c.h.b16 %v422
        %v1117 = vunpack.c.l.b16 %v423
        %v1118 = vunpack.c.h.b16 %v423
        %v1119 = vunpack.c.l.b16 %v424
        %v1120 = vunpack.c.h.b16 %v424
        %v1121 = vunpack.c.l.b16 %v425
        %v1122 = vunpack.c.h.b16 %v425
        %v1123 = vunpack.c.l.b16 %v426
        %v1124 = vunpack.c.h.b16 %v426
        %v1125 = vunpack.c.l.b16 %v427
        %v1126 = vunpack.c.h.b16 %v427
        %v1127 = vunpack.c.l.b16 %v428
        %v1128 = vunpack.c.h.b16 %v428
        %v1129 = vunpack.c.l.b16 %v429
        %v1130 = vunpack.c.h.b16 %v429
        %v1131 = vunpack.c.l.b16 %v430
        %v1132 = vunpack.c.h.b16 %v430
        %v1133 = vunpack.c.l.b16 %v431
        %v1134 = vunpack.c.h.b16 %v431
        %v1135 = vunpack.c.l.b16 %v432
        %v1136 = vunpack.c.h.b16 %v432
        %v1137 = vunpack.c.l.b16 %v433
        %v1138 = vunpack.c.h.b16 %v433
        %v1139 = vunpack.c.l.b16 %v434
        %v1140 = vunpack.c.h.b16 %v434
        %v1141 = vunpack.c.l.b16 %v435
        %v1142 = vunpack.c.h.b16 %v435
        %v1143 = vunpack.c.l.b16 %v436
        %v1144 = vunpack.c.h.b16 %v436
        %v1145 = vunpack.c.l.b16 %v437
        %v1146 = vunpack.c.h.b16 %v437
        %v1147 = vunpack.c.l.b16 %v438
        %v1148 = vunpack.c.h.b16 %v438
        %v1149 = vunpack.c.l.b16 %v439
        %v1150 = vunpack.c.h.b16 %v439
        %v1151 = vunpack.c.l.b16 %v440
        %v1152 = vunpack.c.h.b16 %v440
        %v1153 = vunpack.c.l.b16 %v441
        %v1154 = vunpack.c.h.b16 %v441
        %v1155 = vunpack.c.l.b16 %v442
        %v1156 = vunpack.c.h.b16 %v442
        %v1157 = vunpack.c.l.b16 %v443
        %v1158 = vunpack.c.h.b16 %v443
        %v1159 = vunpack.c.l.b16 %v444
        %v1160 = vunpack.c.h.b16 %v444
        %v1161 = vunpack.c.l.b16 %v445
        %v1162 = vunpack.c.h.b16 %v445
        %v1163 = vunpack.c.l.b16 %v446
        %v1164 = vunpack.c.h.b16 %v446
        %v1165 = vunpack.c.l.b16 %v447
        %v1166 = vunpack.c.h.b16 %v447
        %v1167 = vunpack.c.l.b16 %v448
        %v1168 = vunpack.c.h.b16 %v448
        %v1169 = vunpack.c.l.b16 %v449
        %v1170 = vunpack.c.h.b16 %v449
        %v1171 = vunpack.c.l.b16 %v450
        %v1172 = vunpack.c.h.b16 %v450
        %v1173 = vunpack.c.l.b16 %v451
        %v1174 = vunpack.c.h.b16 %v451
        %v1175 = vunpack.c.l.b16 %v452
        %v1176 = vunpack.c.h.b16 %v452
        %v1177 = vunpack.c.l.b16 %v453
        %v1178 = vunpack.c.h.b16 %v453
        %v1179 = vunpack.c.l.b16 %v454
        %v1180 = vunpack.c.h.b16 %v454
        %v1181 = vunpack.c.l.b16 %v455
        %v1182 = vunpack.c.h.b16 %v455
        %v1183 = vunpack.c.l.b16 %v456
        %v1184 = vunpack.c.h.b16 %v456
        %v1185 = vunpack.c.l.b16 %v457
        %v1186 = vunpack.c.h.b16 %v457
        %v1187 = vunpack.c.l.b16 %v458
        %v1188 = vunpack.c.h.b16 %v458
        %v1189 = vunpack.c.l.b16 %v459
        %v1190 = vunpack.c.h.b16 %v459
        %v1191 = vunpack.c.l.b16 %v460
        %v1192 = vunpack.c.h.b16 %v460
        %v1193 = vunpack.c.l.b16 %v461
        %v1194 = vunpack.c.h.b16 %v461
        %v1195 = vunpack.c.l.b16 %v462
        %v1196 = vunpack.c.h.b16 %v462
        %v1197 = vunpack.c.l.b16 %v463
        %v1198 = vunpack.c.h.b16 %v463
        %v1199 = vunpack.c.l.b16 %v464
        %v1200 = vunpack.c.h.b16 %v464
        %v1201 = vunpack.c.l.b16 %v465
        %v1202 = vunpack.c.h.b16 %v465
        %v1203 = vunpack.c.l.b16 %v466
        %v1204 = vunpack.c.h.b16 %v466
        %v1205 = vunpack.c.l.b16 %v467
        %v1206 = vunpack.c.h.b16 %v467
        %v1207 = vunpack.c.l.b16 %v468
        %v1208 = vunpack.c.h.b16 %v468
        %v1209 = vunpack.c.l.b16 %v469
        %v1210 = vunpack.c.h.b16 %v469
        %v1211 = vunpack.c.l.b16 %v470
        %v1212 = vunpack.c.h.b16 %v470
        %v1213 = vunpack.c.l.b16 %v471
        %v1214 = vunpack.c.h.b16 %v471
        %v1215 = vunpack.c.l.b16 %v472
        %v1216 = vunpack.c.h.b16 %v472
        %v1217 = vunpack.c.l.b16 %v473
        %v1218 = vunpack.c.h.b16 %v473
        %v1219 = vunpack.c.l.b16 %v474
        %v1220 = vunpack.c.h.b16 %v474
        %v1221 = vunpack.c.l.b16 %v475
        %v1222 = vunpack.c.h.b16 %v475
        %v1223 = vunpack.c.l.b16 %v476
        %v1224 = vunpack.c.h.b16 %v476
        %v1225 = vunpack.c.l.b16 %v477
        %v1226 = vunpack.c.h.b16 %v477
        %v1227 = vunpack.c.l.b16 %v478
        %v1228 = vunpack.c.h.b16 %v478
        %v1229 = vunpack.c.l.b16 %v479
        %v1230 = vunpack.c.h.b16 %v479
        %v1231 = vunpack.c.l.b16 %v480
        %v1232 = vunpack.c.h.b16 %v480
        %v1233 = vunpack.c.l.b16 %v481
        %v1234 = vunpack.c.h.b16 %v481
        %v1235 = vunpack.c.l.b16 %v482
        %v1236 = vunpack.c.h.b16 %v482
        %v1237 = vunpack.c.l.b16 %v483
        %v1238 = vunpack.c.h.b16 %v483
        %v1239 = vunpack.c.l.b16 %v484
        %v1240 = vunpack.c.h.b16 %v484
        %v1241 = vunpack.c.l.b16 %v485
        %v1242 = vunpack.c.h.b16 %v485
        %v1243 = vunpack.c.l.b16 %v486
        %v1244 = vunpack.c.h.b16 %v486
        %v1245 = vunpack.c.l.b16 %v487
        %v1246 = vunpack.c.h.b16 %v487
        %v1247 = vunpack.c.l.b16 %v488
        %v1248 = vunpack.c.h.b16 %v488
        %v1249 = vunpack.c.l.b16 %v489
        %v1250 = vunpack.c.h.b16 %v489
        %v1251 = vunpack.c.l.b16 %v490
        %v1252 = vunpack.c.h.b16 %v490
        %v1253 = vunpack.c.l.b16 %v491
        %v1254 = vunpack.c.h.b16 %v491
        %v1255 = vunpack.c.l.b16 %v492
        %v1256 = vunpack.c.h.b16 %v492
        %v1257 = vunpack.c.l.b16 %v493
        %v1258 = vunpack.c.h.b16 %v493
        %v1259 = vunpack.c.l.b16 %v494
        %v1260 = vunpack.c.h.b16 %v494
        %v1261 = vunpack.c.l.b16 %v495
        %v1262 = vunpack.c.h.b16 %v495
        %v1263 = vunpack.c.l.b16 %v496
        %v1264 = vunpack.c.h.b16 %v496
        %v1265 = vunpack.c.l.b16 %v497
        %v1266 = vunpack.c.h.b16 %v497
        %v1267 = vunpack.c.l.b16 %v498
        %v1268 = vunpack.c.h.b16 %v498
        %v1269 = vunpack.c.l.b16 %v499
        %v1270 = vunpack.c.h.b16 %v499
        %v1271 = vunpack.c.l.b16 %v500
        %v1272 = vunpack.c.h.b16 %v500
        %v1273 = vunpack.c.l.b16 %v501
        %v1274 = vunpack.c.h.b16 %v501
        %v1275 = vunpack.c.l.b16 %v502
        %v1276 = vunpack.c.h.b16 %v502
        %v1277 = vunpack.c.l.b16 %v503
        %v1278 = vunpack.c.h.b16 %v503
        %v1279 = vpack.c.b16 %v769, %v767
        %v1280 = vpack.c.b16 %v770, %v768
        %v1281 = vpack.c.b16 %v773, %v771
        %v1282 = vpack.c.b16 %v774, %v772
        %v1283 = vpack.c.b16 %v777, %v775
        %v1284 = vpack.c.b16 %v778, %v776
        %v1285 = vpack.c.b16 %v781, %v779
        %v1286 = vpack.c.b16 %v782, %v780
        %v1287 = vpack.c.b16 %v785, %v783
        %v1288 = vpack.c.b16 %v786, %v784
        %v1289 = vpack.c.b16 %v789, %v787
        %v1290 = vpack.c.b16 %v790, %v788
        %v1291 = vpack.c.b16 %v793, %v791
        %v1292 = vpack.c.b16 %v794, %v792
        %v1293 = vpack.c.b16 %v797, %v795
        %v1294 = vpack.c.b16 %v798, %v796
        %v1295 = vpack.c.b16 %v801, %v799
        %v1296 = vpack.c.b16 %v802, %v800
        %v1297 = vpack.c.b16 %v805, %v803
        %v1298 = vpack.c.b16 %v806, %v804
        %v1299 = vpack.c.b16 %v809, %v807
        %v1300 = vpack.c.b16 %v810, %v808
        %v1301 = vpack.c.b16 %v813, %v811
        %v1302 = vpack.c.b16 %v814, %v812
        %v1303 = vpack.c.b16 %v817, %v815
        %v1304 = vpack.c.b16 %v818, %v816
        %v1305 = vpack.c.b16 %v821, %v819
        %v1306 = vpack.c.b16 %v822, %v820
        %v1307 = vpack.c.b16 %v825, %v823
        %v1308 = vpack.c.b16 %v826, %v824
        %v1309 = vpack.c.b16 %v829, %v827
        %v1310 = vpack.c.b16 %v830, %v828
        %v1311 = vpack.c.b16 %v833, %v831
        %v1312 = vpack.c.b16 %v834, %v832
        %v1313 = vpack.c.b16 %v837, %v835
        %v1314 = vpack.c.b16 %v838, %v836
        %v1315 = vpack.c.b16 %v841, %v839
        %v1316 = vpack.c.b16 %v842, %v840
        %v1317 = vpack.c.b16 %v845, %v843
        %v1318 = vpack.c.b16 %v846, %v844
        %v1319 = vpack.c.b16 %v849, %v847
        %v1320 = vpack.c.b16 %v850, %v848
        %v1321 = vpack.c.b16 %v853, %v851
        %v1322 = vpack.c.b16 %v854, %v852
        %v1323 = vpack.c.b16 %v857, %v855
        %v1324 = vpack.c.b16 %v858, %v856
        %v1325 = vpack.c.b16 %v861, %v859
        %v1326 = vpack.c.b16 %v862, %v860
        %v1327 = vpack.c.b16 %v865, %v863
        %v1328 = vpack.c.b16 %v866, %v864
        %v1329 = vpack.c.b16 %v869, %v867
        %v1330 = vpack.c.b16 %v870, %v868
        %v1331 = vpack.c.b16 %v873, %v871
        %v1332 = vpack.c.b16 %v874, %v872
        %v1333 = vpack.c.b16 %v877, %v875
        %v1334 = vpack.c.b16 %v878, %v876
        %v1335 = vpack.c.b16 %v881, %v879
        %v1336 = vpack.c.b16 %v882, %v880
        %v1337 = vpack.c.b16 %v885, %v883
        %v1338 = vpack.c.b16 %v886, %v884
        %v1339 = vpack.c.b16 %v889, %v887
        %v1340 = vpack.c.b16 %v890, %v888
        %v1341 = vpack.c.b16 %v893, %v891
        %v1342 = vpack.c.b16 %v894, %v892
        %v1343 = vpack.c.b16 %v897, %v895
        %v1344 = vpack.c.b16 %v898, %v896
        %v1345 = vpack.c.b16 %v901, %v899
        %v1346 = vpack.c.b16 %v902, %v900
        %v1347 = vpack.c.b16 %v905, %v903
        %v1348 = vpack.c.b16 %v906, %v904
        %v1349 = vpack.c.b16 %v909, %v907
        %v1350 = vpack.c.b16 %v910, %v908
        %v1351 = vpack.c.b16 %v913, %v911
        %v1352 = vpack.c.b16 %v914, %v912
        %v1353 = vpack.c.b16 %v917, %v915
        %v1354 = vpack.c.b16 %v918, %v916
        %v1355 = vpack.c.b16 %v921, %v919
        %v1356 = vpack.c.b16 %v922, %v920
        %v1357 = vpack.c.b16 %v925, %v923
        %v1358 = vpack.c.b16 %v926, %v924
        %v1359 = vpack.c.b16 %v929, %v927
        %v1360 = vpack.c.b16 %v930, %v928
        %v1361 = vpack.c.b16 %v933, %v931
        %v1362 = vpack.c.b16 %v934, %v932
        %v1363 = vpack.c.b16 %v937, %v935
        %v1364 = vpack.c.b16 %v938, %v936
        %v1365 = vpack.c.b16 %v941, %v939
        %v1366 = vpack.c.b16 %v942, %v940
        %v1367 = vpack.c.b16 %v945, %v943
        %v1368 = vpack.c.b16 %v946, %v944
        %v1369 = vpack.c.b16 %v949, %v947
        %v1370 = vpack.c.b16 %v950, %v948
        %v1371 = vpack.c.b16 %v953, %v951
        %v1372 = vpack.c.b16 %v954, %v952
        %v1373 = vpack.c.b16 %v957, %v955
        %v1374 = vpack.c.b16 %v958, %v956
        %v1375 = vpack.c.b16 %v961, %v959
        %v1376 = vpack.c.b16 %v962, %v960
        %v1377 = vpack.c.b16 %v965, %v963
        %v1378 = vpack.c.b16 %v966, %v964
        %v1379 = vpack.c.b16 %v969, %v967
        %v1380 = vpack.c.b16 %v970, %v968
        %v1381 = vpack.c.b16 %v973, %v971
        %v1382 = vpack.c.b16 %v974, %v972
        %v1383 = vpack.c.b16 %v977, %v975
        %v1384 = vpack.c.b16 %v978, %v976
        %v1385 = vpack.c.b16 %v981, %v979
        %v1386 = vpack.c.b16 %v982, %v980
        %v1387 = vpack.c.b16 %v985, %v983
        %v1388 = vpack.c.b16 %v986, %v984
        %v1389 = vpack.c.b16 %v989, %v987
        %v1390 = vpack.c.b16 %v990, %v988
        %v1391 = vpack.c.b16 %v993, %v991
        %v1392 = vpack.c.b16 %v994, %v992
        %v1393 = vpack.c.b16 %v997, %v995
        %v1394 = vpack.c.b16 %v998, %v996
        %v1395 = vpack.c.b16 %v1001, %v999
        %v1396 = vpack.c.b16 %v1002, %v1000
        %v1397 = vpack.c.b16 %v1005, %v1003
        %v1398 = vpack.c.b16 %v1006, %v1004
        %v1399 = vpack.c.b16 %v1009, %v1007
        %v1400 = vpack.c.b16 %v1010, %v1008
        %v1401 = vpack.c.b16 %v1013, %v1011
        %v1402 = vpack.c.b16 %v1014, %v1012
        %v1403 = vpack.c.b16 %v1017, %v1015
        %v1404 = vpack.c.b16 %v1018, %v1016
        %v1405 = vpack.c.b16 %v1021, %v1019
        %v1406 = vpack.c.b16 %v1022, %v1020
        %v1407 = vpack.c.b16 %v1025, %v1023
        %v1408 = vpack.c.b16 %v1026, %v1024
        %v1409 = vpack.c.b16 %v1029, %v1027
        %v1410 = vpack.c.b16 %v1030, %v1028
        %v1411 = vpack.c.b16 %v1033, %v1031
        %v1412 = vpack.c.b16 %v1034, %v1032
        %v1413 = vpack.c.b16 %v1037, %v1035
        %v1414 = vpack.c.b16 %v1038, %v1036
        %v1415 = vpack.c.b16 %v1041, %v1039
        %v1416 = vpack.c.b16 %v1042, %v1040
        %v1417 = vpack.c.b16 %v1045, %v1043
        %v1418 = vpack.c.b16 %v1046, %v1044
        %v1419 = vpack.c.b16 %v1049, %v1047
        %v1420 = vpack.c.b16 %v1050, %v1048
        %v1421 = vpack.c.b16 %v1053, %v1051
        %v1422 = vpack.c.b16 %v1054, %v1052
        %v1423 = vpack.c.b16 %v1057, %v1055
        %v1424 = vpack.c.b16 %v1058, %v1056
        %v1425 = vpack.c.b16 %v1061, %v1059
        %v1426 = vpack.c.b16 %v1062, %v1060
        %v1427 = vpack.c.b16 %v1065, %v1063
        %v1428 = vpack.c.b16 %v1066, %v1064
        %v1429 = vpack.c.b16 %v1069, %v1067
        %v1430 = vpack.c.b16 %v1070, %v1068
        %v1431 = vpack.c.b16 %v1073, %v1071
        %v1432 = vpack.c.b16 %v1074, %v1072
        %v1433 = vpack.c.b16 %v1077, %v1075
        %v1434 = vpack.c.b16 %v1078, %v1076
        %v1435 = vpack.c.b16 %v1081, %v1079
        %v1436 = vpack.c.b16 %v1082, %v1080
        %v1437 = vpack.c.b16 %v1085, %v1083
        %v1438 = vpack.c.b16 %v1086, %v1084
        %v1439 = vpack.c.b16 %v1089, %v1087
        %v1440 = vpack.c.b16 %v1090, %v1088
        %v1441 = vpack.c.b16 %v1093, %v1091
        %v1442 = vpack.c.b16 %v1094, %v1092
        %v1443 = vpack.c.b16 %v1097, %v1095
        %v1444 = vpack.c.b16 %v1098, %v1096
        %v1445 = vpack.c.b16 %v1101, %v1099
        %v1446 = vpack.c.b16 %v1102, %v1100
        %v1447 = vpack.c.b16 %v1105, %v1103
        %v1448 = vpack.c.b16 %v1106, %v1104
        %v1449 = vpack.c.b16 %v1109, %v1107
        %v1450 = vpack.c.b16 %v1110, %v1108
        %v1451 = vpack.c.b16 %v1113, %v1111
        %v1452 = vpack.c.b16 %v1114, %v1112
        %v1453 = vpack.c.b16 %v1117, %v1115
        %v1454 = vpack.c.b16 %v1118, %v1116
        %v1455 = vpack.c.b16 %v1121, %v1119
        %v1456 = vpack.c.b16 %v1122, %v1120
        %v1457 = vpack.c.b16 %v1125, %v1123
        %v1458 = vpack.c.b16 %v1126, %v1124
        %v1459 = vpack.c.b16 %v1129, %v1127
        %v1460 = vpack.c.b16 %v1130, %v1128
        %v1461 = vpack.c.b16 %v1133, %v1131
        %v1462 = vpack.c.b16 %v1134, %v1132
        %v1463 = vpack.c.b16 %v1137, %v1135
        %v1464 = vpack.c.b16 %v1138, %v1136
        %v1465 = vpack.c.b16 %v1141, %v1139
        %v1466 = vpack.c.b16 %v1142, %v1140
        %v1467 = vpack.c.b16 %v1145, %v1143
        %v1468 = vpack.c.b16 %v1146, %v1144
        %v1469 = vpack.c.b16 %v1149, %v1147
        %v1470 = vpack.c.b16 %v1150, %v1148
        %v1471 = vpack.c.b16 %v1153, %v1151
        %v1472 = vpack.c.b16 %v1154, %v1152
        %v1473 = vpack.c.b16 %v1157, %v1155
        %v1474 = vpack.c.b16 %v1158, %v1156
        %v1475 = vpack.c.b16 %v1161, %v1159
        %v1476 = vpack.c.b16 %v1162, %v1160
        %v1477 = vpack.c.b16 %v1165, %v1163
        %v1478 = vpack.c.b16 %v1166, %v1164
        %v1479 = vpack.c.b16 %v1169, %v1167
        %v1480 = vpack.c.b16 %v1170, %v1168
        %v1481 = vpack.c.b16 %v1173, %v1171
        %v1482 = vpack.c.b16 %v1174, %v1172
        %v1483 = vpack.c.b16 %v1177, %v1175
        %v1484 = vpack.c.b16 %v1178, %v1176
        %v1485 = vpack.c.b16 %v1181, %v1179
        %v1486 = vpack.c.b16 %v1182, %v1180
        %v1487 = vpack.c.b16 %v1185, %v1183
        %v1488 = vpack.c.b16 %v1186, %v1184
        %v1489 = vpack.c.b16 %v1189, %v1187
        %v1490 = vpack.c.b16 %v1190, %v1188
        %v1491 = vpack.c.b16 %v1193, %v1191
        %v1492 = vpack.c.b16 %v1194, %v1192
        %v1493 = vpack.c.b16 %v1197, %v1195
        %v1494 = vpack.c.b16 %v1198, %v1196
        %v1495 = vpack.c.b16 %v1201, %v1199
        %v1496 = vpack.c.b16 %v1202, %v1200
        %v1497 = vpack.c.b16 %v1205, %v1203
        %v1498 = vpack.c.b16 %v1206, %v1204
        %v1499 = vpack.c.b16 %v1209, %v1207
        %v1500 = vpack.c.b16 %v1210, %v1208
        %v1501 = vpack.c.b16 %v1213, %v1211
        %v1502 = vpack.c.b16 %v1214, %v1212
        %v1503 = vpack.c.b16 %v1217, %v1215
        %v1504 = vpack.c.b16 %v1218, %v1216
        %v1505 = vpack.c.b16 %v1221, %v1219
        %v1506 = vpack.c.b16 %v1222, %v1220
        %v1507 = vpack.c.b16 %v1225, %v1223
        %v1508 = vpack.c.b16 %v1226, %v1224
        %v1509 = vpack.c.b16 %v1229, %v1227
        %v1510 = vpack.c.b16 %v1230, %v1228
        %v1511 = vpack.c.b16 %v1233, %v1231
        %v1512 = vpack.c.b16 %v1234, %v1232
        %v1513 = vpack.c.b16 %v1237, %v1235
        %v1514 = vpack.c.b16 %v1238, %v1236
        %v1515 = vpack.c.b16 %v1241, %v1239
        %v1516 = vpack.c.b16 %v1242, %v1240
        %v1517 = vpack.c.b16 %v1245, %v1243
        %v1518 = vpack.c.b16 %v1246, %v1244
        %v1519 = vpack.c.b16 %v1249, %v1247
        %v1520 = vpack.c.b16 %v1250, %v1248
        %v1521 = vpack.c.b16 %v1253, %v1251
        %v1522 = vpack.c.b16 %v1254, %v1252
        %v1523 = vpack.c.b16 %v1257, %v1255
        %v1524 = vpack.c.b16 %v1258, %v1256
        %v1525 = vpack.c.b16 %v1261, %v1259
        %v1526 = vpack.c.b16 %v1262, %v1260
        %v1527 = vpack.c.b16 %v1265, %v1263
        %v1528 = vpack.c.b16 %v1266, %v1264
        %v1529 = vpack.c.b16 %v1269, %v1267
        %v1530 = vpack.c.b16 %v1270, %v1268
        %v1531 = vpack.c.b16 %v1273, %v1271
        %v1532 = vpack.c.b16 %v1274, %v1272
        %v1533 = vpack.c.b16 %v1277, %v1275
        %v1534 = vpack.c.b16 %v1278, %v1276
        %1791 = vmatprep.subr.bf16.mxu0 %v1280
        %1792 = vmatpush1.bf16.xpose.msra.mxu0 %v1279
        %1793 = vmatprep.subr.bf16.mxu0 %v1282
        %1794 = vmatpush1.bf16.xpose.msra.mxu0 %v1281
        %1795 = vmatprep.subr.bf16.mxu0 %v1284
        %1796 = vmatpush1.bf16.xpose.msra.mxu0 %v1283
        %1797 = vmatprep.subr.bf16.mxu0 %v1286
        %1798 = vmatpush1.bf16.xpose.msra.mxu0 %v1285
        %1799 = vmatprep.subr.bf16.mxu0 %v1288
        %1800 = vmatpush1.bf16.xpose.msra.mxu0 %v1287
        %1801 = vmatprep.subr.bf16.mxu0 %v1290
        %1802 = vmatpush1.bf16.xpose.msra.mxu0 %v1289
        %1803 = vmatprep.subr.bf16.mxu0 %v1292
        %1804 = vmatpush1.bf16.xpose.msra.mxu0 %v1291
        %1805 = vmatprep.subr.bf16.mxu0 %v1294
        %1806 = vmatpush1.bf16.xpose.msra.mxu0 %v1293
        %1807 = vmatprep.subr.bf16.mxu0 %v1296
        %1808 = vmatpush1.bf16.xpose.msra.mxu0 %v1295
        %1809 = vmatprep.subr.bf16.mxu0 %v1298
        %1810 = vmatpush1.bf16.xpose.msra.mxu0 %v1297
        %1811 = vmatprep.subr.bf16.mxu0 %v1300
        %1812 = vmatpush1.bf16.xpose.msra.mxu0 %v1299
        %1813 = vmatprep.subr.bf16.mxu0 %v1302
        %1814 = vmatpush1.bf16.xpose.msra.mxu0 %v1301
        %1815 = vmatprep.subr.bf16.mxu0 %v1304
        %1816 = vmatpush1.bf16.xpose.msra.mxu0 %v1303
        %1817 = vmatprep.subr.bf16.mxu0 %v1306
        %1818 = vmatpush1.bf16.xpose.msra.mxu0 %v1305
        %1819 = vmatprep.subr.bf16.mxu0 %v1308
        %1820 = vmatpush1.bf16.xpose.msra.mxu0 %v1307
        %1821 = vmatprep.subr.bf16.mxu0 %v1310
        %1822 = vmatpush1.bf16.xpose.msra.mxu0 %v1309
        %1823 = vmatprep.mubr.bf16.mxu0 %v508
        %1824 = vmatmul.mubr.bf16.gmra.mrb[0].mxu0 %v507
        %v1825 = vpop.f32.mrb[0].mxu0
        %v1826 = vadd.f32 0.0, %v1825
        %v1827 = vpop.f32.mrb[0].mxu0
        %v1828 = vadd.f32 0.0, %v1827
        %v1829 = vpop.f32.mrb[0].mxu0
        %v1830 = vpop.f32.mrb[0].mxu0
        %1831 = vdwg.mxu0
        %1832 = vmatprep.subr.bf16.mxu0 %v1312
        %1833 = vmatpush1.bf16.xpose.msra.mxu0 %v1311
        %1834 = vmatprep.subr.bf16.mxu0 %v1314
        %1835 = vmatpush1.bf16.xpose.msra.mxu0 %v1313
        %1836 = vmatprep.subr.bf16.mxu0 %v1316
        %1837 = vmatpush1.bf16.xpose.msra.mxu0 %v1315
        %1838 = vmatprep.subr.bf16.mxu0 %v1318
        %1839 = vmatpush1.bf16.xpose.msra.mxu0 %v1317
        %1840 = vmatprep.subr.bf16.mxu0 %v1320
        %1841 = vmatpush1.bf16.xpose.msra.mxu0 %v1319
        %1842 = vmatprep.subr.bf16.mxu0 %v1322
        %1843 = vmatpush1.bf16.xpose.msra.mxu0 %v1321
        %1844 = vmatprep.subr.bf16.mxu0 %v1324
        %1845 = vmatpush1.bf16.xpose.msra.mxu0 %v1323
        %1846 = vmatprep.subr.bf16.mxu0 %v1326
        %1847 = vmatpush1.bf16.xpose.msra.mxu0 %v1325
        %1848 = vmatprep.subr.bf16.mxu0 %v1328
        %1849 = vmatpush1.bf16.xpose.msra.mxu0 %v1327
        %1850 = vmatprep.subr.bf16.mxu0 %v1330
        %1851 = vmatpush1.bf16.xpose.msra.mxu0 %v1329
        %1852 = vmatprep.subr.bf16.mxu0 %v1332
        %1853 = vmatpush1.bf16.xpose.msra.mxu0 %v1331
        %1854 = vmatprep.subr.bf16.mxu0 %v1334
        %1855 = vmatpush1.bf16.xpose.msra.mxu0 %v1333
        %1856 = vmatprep.subr.bf16.mxu0 %v1336
        %1857 = vmatpush1.bf16.xpose.msra.mxu0 %v1335
        %1858 = vmatprep.subr.bf16.mxu0 %v1338
        %1859 = vmatpush1.bf16.xpose.msra.mxu0 %v1337
        %1860 = vmatprep.subr.bf16.mxu0 %v1340
        %1861 = vmatpush1.bf16.xpose.msra.mxu0 %v1339
        %1862 = vmatprep.subr.bf16.mxu0 %v1342
        %1863 = vmatpush1.bf16.xpose.msra.mxu0 %v1341
        %1864 = vmatprep.mubr.bf16.mxu0 %v508
        %1865 = vmatmul.mubr.bf16.gmra.mrb[0].mxu0 %v507
        %v1866 = vpop.f32.mrb[0].mxu0
        %v1867 = vadd.f32 0.0, %v1866
        %v1868 = vpop.f32.mrb[0].mxu0
        %v1869 = vadd.f32 0.0, %v1868
        %v1870 = vpop.f32.mrb[0].mxu0
        %v1871 = vpop.f32.mrb[0].mxu0
        %1872 = vdwg.mxu0
        %1873 = vmatprep.subr.bf16.mxu0 %v1344
        %1874 = vmatpush1.bf16.xpose.msra.mxu0 %v1343
        %1875 = vmatprep.subr.bf16.mxu0 %v1346
        %1876 = vmatpush1.bf16.xpose.msra.mxu0 %v1345
        %1877 = vmatprep.subr.bf16.mxu0 %v1348
        %1878 = vmatpush1.bf16.xpose.msra.mxu0 %v1347
        %1879 = vmatprep.subr.bf16.mxu0 %v1350
        %1880 = vmatpush1.bf16.xpose.msra.mxu0 %v1349
        %1881 = vmatprep.subr.bf16.mxu0 %v1352
        %1882 = vmatpush1.bf16.xpose.msra.mxu0 %v1351
        %1883 = vmatprep.subr.bf16.mxu0 %v1354
        %1884 = vmatpush1.bf16.xpose.msra.mxu0 %v1353
        %1885 = vmatprep.subr.bf16.mxu0 %v1356
        %1886 = vmatpush1.bf16.xpose.msra.mxu0 %v1355
        %1887 = vmatprep.subr.bf16.mxu0 %v1358
        %1888 = vmatpush1.bf16.xpose.msra.mxu0 %v1357
        %1889 = vmatprep.subr.bf16.mxu0 %v1360
        %1890 = vmatpush1.bf16.xpose.msra.mxu0 %v1359
        %1891 = vmatprep.subr.bf16.mxu0 %v1362
        %1892 = vmatpush1.bf16.xpose.msra.mxu0 %v1361
        %1893 = vmatprep.subr.bf16.mxu0 %v1364
        %1894 = vmatpush1.bf16.xpose.msra.mxu0 %v1363
        %1895 = vmatprep.subr.bf16.mxu0 %v1366
        %1896 = vmatpush1.bf16.xpose.msra.mxu0 %v1365
        %1897 = vmatprep.subr.bf16.mxu0 %v1368
        %1898 = vmatpush1.bf16.xpose.msra.mxu0 %v1367
        %1899 = vmatprep.subr.bf16.mxu0 %v1370
        %1900 = vmatpush1.bf16.xpose.msra.mxu0 %v1369
        %1901 = vmatprep.subr.bf16.mxu0 %v1372
        %1902 = vmatpush1.bf16.xpose.msra.mxu0 %v1371
        %1903 = vmatprep.subr.bf16.mxu0 %v1374
        %1904 = vmatpush1.bf16.xpose.msra.mxu0 %v1373
        %1905 = vmatprep.mubr.bf16.mxu0 %v508
        %1906 = vmatmul.mubr.bf16.gmra.mrb[0].mxu0 %v507
        %v1907 = vpop.f32.mrb[0].mxu0
        %v1908 = vadd.f32 0.0, %v1907
        %v1909 = vpop.f32.mrb[0].mxu0
        %v1910 = vadd.f32 0.0, %v1909
        %v1911 = vpop.f32.mrb[0].mxu0
        %v1912 = vpop.f32.mrb[0].mxu0
        %1913 = vdwg.mxu0
        %1914 = vmatprep.subr.bf16.mxu0 %v1376
        %1915 = vmatpush1.bf16.xpose.msra.mxu0 %v1375
        %1916 = vmatprep.subr.bf16.mxu0 %v1378
        %1917 = vmatpush1.bf16.xpose.msra.mxu0 %v1377
        %1918 = vmatprep.subr.bf16.mxu0 %v1380
        %1919 = vmatpush1.bf16.xpose.msra.mxu0 %v1379
        %1920 = vmatprep.subr.bf16.mxu0 %v1382
        %1921 = vmatpush1.bf16.xpose.msra.mxu0 %v1381
        %1922 = vmatprep.subr.bf16.mxu0 %v1384
        %1923 = vmatpush1.bf16.xpose.msra.mxu0 %v1383
        %1924 = vmatprep.subr.bf16.mxu0 %v1386
        %1925 = vmatpush1.bf16.xpose.msra.mxu0 %v1385
        %1926 = vmatprep.subr.bf16.mxu0 %v1388
        %1927 = vmatpush1.bf16.xpose.msra.mxu0 %v1387
        %1928 = vmatprep.subr.bf16.mxu0 %v1390
        %1929 = vmatpush1.bf16.xpose.msra.mxu0 %v1389
        %1930 = vmatprep.subr.bf16.mxu0 %v1392
        %1931 = vmatpush1.bf16.xpose.msra.mxu0 %v1391
        %1932 = vmatprep.subr.bf16.mxu0 %v1394
        %1933 = vmatpush1.bf16.xpose.msra.mxu0 %v1393
        %1934 = vmatprep.subr.bf16.mxu0 %v1396
        %1935 = vmatpush1.bf16.xpose.msra.mxu0 %v1395
        %1936 = vmatprep.subr.bf16.mxu0 %v1398
        %1937 = vmatpush1.bf16.xpose.msra.mxu0 %v1397
        %1938 = vmatprep.subr.bf16.mxu0 %v1400
        %1939 = vmatpush1.bf16.xpose.msra.mxu0 %v1399
        %1940 = vmatprep.subr.bf16.mxu0 %v1402
        %1941 = vmatpush1.bf16.xpose.msra.mxu0 %v1401
        %1942 = vmatprep.subr.bf16.mxu0 %v1404
        %1943 = vmatpush1.bf16.xpose.msra.mxu0 %v1403
        %1944 = vmatprep.subr.bf16.mxu0 %v1406
        %1945 = vmatpush1.bf16.xpose.msra.mxu0 %v1405
        %1946 = vmatprep.mubr.bf16.mxu0 %v508
        %1947 = vmatmul.mubr.bf16.gmra.mrb[0].mxu0 %v507
        %v1948 = vpop.f32.mrb[0].mxu0
        %v1949 = vadd.f32 0.0, %v1948
        %v1950 = vpop.f32.mrb[0].mxu0
        %v1951 = vadd.f32 0.0, %v1950
        %v1952 = vpop.f32.mrb[0].mxu0
        %v1953 = vpop.f32.mrb[0].mxu0
        %1954 = vdwg.mxu0
        %1955 = vmatprep.subr.bf16.mxu0 %v1408
        %1956 = vmatpush1.bf16.xpose.msra.mxu0 %v1407
        %1957 = vmatprep.subr.bf16.mxu0 %v1410
        %1958 = vmatpush1.bf16.xpose.msra.mxu0 %v1409
        %1959 = vmatprep.subr.bf16.mxu0 %v1412
        %1960 = vmatpush1.bf16.xpose.msra.mxu0 %v1411
        %1961 = vmatprep.subr.bf16.mxu0 %v1414
        %1962 = vmatpush1.bf16.xpose.msra.mxu0 %v1413
        %1963 = vmatprep.subr.bf16.mxu0 %v1416
        %1964 = vmatpush1.bf16.xpose.msra.mxu0 %v1415
        %1965 = vmatprep.subr.bf16.mxu0 %v1418
        %1966 = vmatpush1.bf16.xpose.msra.mxu0 %v1417
        %1967 = vmatprep.subr.bf16.mxu0 %v1420
        %1968 = vmatpush1.bf16.xpose.msra.mxu0 %v1419
        %1969 = vmatprep.subr.bf16.mxu0 %v1422
        %1970 = vmatpush1.bf16.xpose.msra.mxu0 %v1421
        %1971 = vmatprep.subr.bf16.mxu0 %v1424
        %1972 = vmatpush1.bf16.xpose.msra.mxu0 %v1423
        %1973 = vmatprep.subr.bf16.mxu0 %v1426
        %1974 = vmatpush1.bf16.xpose.msra.mxu0 %v1425
        %1975 = vmatprep.subr.bf16.mxu0 %v1428
        %1976 = vmatpush1.bf16.xpose.msra.mxu0 %v1427
        %1977 = vmatprep.subr.bf16.mxu0 %v1430
        %1978 = vmatpush1.bf16.xpose.msra.mxu0 %v1429
        %1979 = vmatprep.subr.bf16.mxu0 %v1432
        %1980 = vmatpush1.bf16.xpose.msra.mxu0 %v1431
        %1981 = vmatprep.subr.bf16.mxu0 %v1434
        %1982 = vmatpush1.bf16.xpose.msra.mxu0 %v1433
        %1983 = vmatprep.subr.bf16.mxu0 %v1436
        %1984 = vmatpush1.bf16.xpose.msra.mxu0 %v1435
        %1985 = vmatprep.subr.bf16.mxu0 %v1438
        %1986 = vmatpush1.bf16.xpose.msra.mxu0 %v1437
        %1987 = vmatprep.mubr.bf16.mxu0 %v508
        %1988 = vmatmul.mubr.bf16.gmra.mrb[0].mxu0 %v507
        %v1989 = vpop.f32.mrb[0].mxu0
        %v1990 = vadd.f32 0.0, %v1989
        %v1991 = vpop.f32.mrb[0].mxu0
        %v1992 = vadd.f32 0.0, %v1991
        %v1993 = vpop.f32.mrb[0].mxu0
        %v1994 = vpop.f32.mrb[0].mxu0
        %1995 = vdwg.mxu0
        %1996 = vmatprep.subr.bf16.mxu0 %v1440
        %1997 = vmatpush1.bf16.xpose.msra.mxu0 %v1439
        %1998 = vmatprep.subr.bf16.mxu0 %v1442
        %1999 = vmatpush1.bf16.xpose.msra.mxu0 %v1441
        %2000 = vmatprep.subr.bf16.mxu0 %v1444
        %2001 = vmatpush1.bf16.xpose.msra.mxu0 %v1443
        %2002 = vmatprep.subr.bf16.mxu0 %v1446
        %2003 = vmatpush1.bf16.xpose.msra.mxu0 %v1445
        %2004 = vmatprep.subr.bf16.mxu0 %v1448
        %2005 = vmatpush1.bf16.xpose.msra.mxu0 %v1447
        %2006 = vmatprep.subr.bf16.mxu0 %v1450
        %2007 = vmatpush1.bf16.xpose.msra.mxu0 %v1449
        %2008 = vmatprep.subr.bf16.mxu0 %v1452
        %2009 = vmatpush1.bf16.xpose.msra.mxu0 %v1451
        %2010 = vmatprep.subr.bf16.mxu0 %v1454
        %2011 = vmatpush1.bf16.xpose.msra.mxu0 %v1453
        %2012 = vmatprep.subr.bf16.mxu0 %v1456
        %2013 = vmatpush1.bf16.xpose.msra.mxu0 %v1455
        %2014 = vmatprep.subr.bf16.mxu0 %v1458
        %2015 = vmatpush1.bf16.xpose.msra.mxu0 %v1457
        %2016 = vmatprep.subr.bf16.mxu0 %v1460
        %2017 = vmatpush1.bf16.xpose.msra.mxu0 %v1459
        %2018 = vmatprep.subr.bf16.mxu0 %v1462
        %2019 = vmatpush1.bf16.xpose.msra.mxu0 %v1461
        %2020 = vmatprep.subr.bf16.mxu0 %v1464
        %2021 = vmatpush1.bf16.xpose.msra.mxu0 %v1463
        %2022 = vmatprep.subr.bf16.mxu0 %v1466
        %2023 = vmatpush1.bf16.xpose.msra.mxu0 %v1465
        %2024 = vmatprep.subr.bf16.mxu0 %v1468
        %2025 = vmatpush1.bf16.xpose.msra.mxu0 %v1467
        %2026 = vmatprep.subr.bf16.mxu0 %v1470
        %2027 = vmatpush1.bf16.xpose.msra.mxu0 %v1469
        %2028 = vmatprep.mubr.bf16.mxu0 %v508
        %2029 = vmatmul.mubr.bf16.gmra.mrb[0].mxu0 %v507
        %v2030 = vpop.f32.mrb[0].mxu0
        %v2031 = vadd.f32 0.0, %v2030
        %v2032 = vpop.f32.mrb[0].mxu0
        %v2033 = vadd.f32 0.0, %v2032
        %v2034 = vpop.f32.mrb[0].mxu0
        %v2035 = vpop.f32.mrb[0].mxu0
        %2036 = vdwg.mxu0
        %2037 = vmatprep.subr.bf16.mxu0 %v1472
        %2038 = vmatpush1.bf16.xpose.msra.mxu0 %v1471
        %2039 = vmatprep.subr.bf16.mxu0 %v1474
        %2040 = vmatpush1.bf16.xpose.msra.mxu0 %v1473
        %2041 = vmatprep.subr.bf16.mxu0 %v1476
        %2042 = vmatpush1.bf16.xpose.msra.mxu0 %v1475
        %2043 = vmatprep.subr.bf16.mxu0 %v1478
        %2044 = vmatpush1.bf16.xpose.msra.mxu0 %v1477
        %2045 = vmatprep.subr.bf16.mxu0 %v1480
        %2046 = vmatpush1.bf16.xpose.msra.mxu0 %v1479
        %2047 = vmatprep.subr.bf16.mxu0 %v1482
        %2048 = vmatpush1.bf16.xpose.msra.mxu0 %v1481
        %2049 = vmatprep.subr.bf16.mxu0 %v1484
        %2050 = vmatpush1.bf16.xpose.msra.mxu0 %v1483
        %2051 = vmatprep.subr.bf16.mxu0 %v1486
        %2052 = vmatpush1.bf16.xpose.msra.mxu0 %v1485
        %2053 = vmatprep.subr.bf16.mxu0 %v1488
        %2054 = vmatpush1.bf16.xpose.msra.mxu0 %v1487
        %2055 = vmatprep.subr.bf16.mxu0 %v1490
        %2056 = vmatpush1.bf16.xpose.msra.mxu0 %v1489
        %2057 = vmatprep.subr.bf16.mxu0 %v1492
        %2058 = vmatpush1.bf16.xpose.msra.mxu0 %v1491
        %2059 = vmatprep.subr.bf16.mxu0 %v1494
        %2060 = vmatpush1.bf16.xpose.msra.mxu0 %v1493
        %2061 = vmatprep.subr.bf16.mxu0 %v1496
        %2062 = vmatpush1.bf16.xpose.msra.mxu0 %v1495
        %2063 = vmatprep.subr.bf16.mxu0 %v1498
        %2064 = vmatpush1.bf16.xpose.msra.mxu0 %v1497
        %2065 = vmatprep.subr.bf16.mxu0 %v1500
        %2066 = vmatpush1.bf16.xpose.msra.mxu0 %v1499
        %2067 = vmatprep.subr.bf16.mxu0 %v1502
        %2068 = vmatpush1.bf16.xpose.msra.mxu0 %v1501
        %2069 = vmatprep.mubr.bf16.mxu0 %v508
        %2070 = vmatmul.mubr.bf16.gmra.mrb[0].mxu0 %v507
        %v2071 = vpop.f32.mrb[0].mxu0
        %v2072 = vadd.f32 0.0, %v2071
        %v2073 = vpop.f32.mrb[0].mxu0
        %v2074 = vadd.f32 0.0, %v2073
        %v2075 = vpop.f32.mrb[0].mxu0
        %v2076 = vpop.f32.mrb[0].mxu0
        %2077 = vdwg.mxu0
        %2078 = vmatprep.subr.bf16.mxu0 %v1504
        %2079 = vmatpush1.bf16.xpose.msra.mxu0 %v1503
        %2080 = vmatprep.subr.bf16.mxu0 %v1506
        %2081 = vmatpush1.bf16.xpose.msra.mxu0 %v1505
        %2082 = vmatprep.subr.bf16.mxu0 %v1508
        %2083 = vmatpush1.bf16.xpose.msra.mxu0 %v1507
        %2084 = vmatprep.subr.bf16.mxu0 %v1510
        %2085 = vmatpush1.bf16.xpose.msra.mxu0 %v1509
        %2086 = vmatprep.subr.bf16.mxu0 %v1512
        %2087 = vmatpush1.bf16.xpose.msra.mxu0 %v1511
        %2088 = vmatprep.subr.bf16.mxu0 %v1514
        %2089 = vmatpush1.bf16.xpose.msra.mxu0 %v1513
        %2090 = vmatprep.subr.bf16.mxu0 %v1516
        %2091 = vmatpush1.bf16.xpose.msra.mxu0 %v1515
        %2092 = vmatprep.subr.bf16.mxu0 %v1518
        %2093 = vmatpush1.bf16.xpose.msra.mxu0 %v1517
        %2094 = vmatprep.subr.bf16.mxu0 %v1520
        %2095 = vmatpush1.bf16.xpose.msra.mxu0 %v1519
        %2096 = vmatprep.subr.bf16.mxu0 %v1522
        %2097 = vmatpush1.bf16.xpose.msra.mxu0 %v1521
        %2098 = vmatprep.subr.bf16.mxu0 %v1524
        %2099 = vmatpush1.bf16.xpose.msra.mxu0 %v1523
        %2100 = vmatprep.subr.bf16.mxu0 %v1526
        %2101 = vmatpush1.bf16.xpose.msra.mxu0 %v1525
        %2102 = vmatprep.subr.bf16.mxu0 %v1528
        %2103 = vmatpush1.bf16.xpose.msra.mxu0 %v1527
        %2104 = vmatprep.subr.bf16.mxu0 %v1530
        %2105 = vmatpush1.bf16.xpose.msra.mxu0 %v1529
        %2106 = vmatprep.subr.bf16.mxu0 %v1532
        %2107 = vmatpush1.bf16.xpose.msra.mxu0 %v1531
        %2108 = vmatprep.subr.bf16.mxu0 %v1534
        %2109 = vmatpush1.bf16.xpose.msra.mxu0 %v1533
        %2110 = vmatprep.mubr.bf16.mxu0 %v508
        %2111 = vmatmul.mubr.bf16.gmra.mrb[0].mxu0 %v507
        %v2112 = vpop.f32.mrb[0].mxu0
        %v2113 = vadd.f32 0.0, %v2112
        %v2114 = vpop.f32.mrb[0].mxu0
        %v2115 = vadd.f32 0.0, %v2114
        %v2116 = vpop.f32.mrb[0].mxu0
        %v2117 = vpop.f32.mrb[0].mxu0
        %2118 = vdwg.mxu0
        %s2119 = smul.u32 %s20, 16
        %s2120 = smul.addr %s2119, 8
        %s2121 = scalar_lea.vmem [#allocation2], %s2120
        %2122 = vst [vmem:[%s2121] sm:$0xff] %v1826
        %2123 = vst [vmem:[%s2121 + $0x8] sm:$0xff] %v1828
        %2124 = vst [vmem:[%s2121 + $0x10] sm:$0xff] %v1867
        %2125 = vst [vmem:[%s2121 + $0x18] sm:$0xff] %v1869
        %2126 = vst [vmem:[%s2121 + $0x20] sm:$0xff] %v1908
        %2127 = vst [vmem:[%s2121 + $0x28] sm:$0xff] %v1910
        %2128 = vst [vmem:[%s2121 + $0x30] sm:$0xff] %v1949
        %2129 = vst [vmem:[%s2121 + $0x38] sm:$0xff] %v1951
        %2130 = vst [vmem:[%s2121 + $0x40] sm:$0xff] %v1990
        %2131 = vst [vmem:[%s2121 + $0x48] sm:$0xff] %v1992
        %2132 = vst [vmem:[%s2121 + $0x50] sm:$0xff] %v2031
        %2133 = vst [vmem:[%s2121 + $0x58] sm:$0xff] %v2033
        %2134 = vst [vmem:[%s2121 + $0x60] sm:$0xff] %v2072
        %2135 = vst [vmem:[%s2121 + $0x68] sm:$0xff] %v2074
        %2136 = vst [vmem:[%s2121 + $0x70] sm:$0xff] %v2113
        %2137 = vst [vmem:[%s2121 + $0x78] sm:$0xff] %v2115
        %v2138 = vld [vmem:[#allocation3] sm:$0xff]
        %v2139 = vadd.f32 %v1826, %v1828
        %v2140 = vadd.f32 %v2139, %v1867
        %v2141 = vadd.f32 %v2140, %v1869
        %v2142 = vadd.f32 %v2141, %v1908
        %v2143 = vadd.f32 %v2142, %v1910
        %v2144 = vadd.f32 %v2143, %v1949
        %v2145 = vadd.f32 %v2144, %v1951
        %v2146 = vadd.f32 %v2145, %v1990
        %v2147 = vadd.f32 %v2146, %v1992
        %v2148 = vadd.f32 %v2147, %v2031
        %v2149 = vadd.f32 %v2148, %v2033
        %v2150 = vadd.f32 %v2149, %v2072
        %v2151 = vadd.f32 %v2150, %v2074
        %v2152 = vadd.f32 %v2151, %v2113
        %v2153 = vadd.f32 %v2152, %v2115
        %2154 = vadd.xlane.f32.xlu0 %v2153
        %v2155 = vpop.xlane.xlu0 %2154
        %v2156 = vadd.f32 %v2138, %v2155
        %vm2157 = vcmask 7168
        %2158 = vst.msk [vmem:[#allocation3] sm:$0xff] %vm2157, %v2156
        %v2159 = vld [vmem:[#allocation4] sm:$0xff]
        %v2160 = vmul.f32 %v1826, %v1826
        %v2161 = vmul.f32 %v1828, %v1828
        %v2162 = vmul.f32 %v1867, %v1867
        %v2163 = vmul.f32 %v1869, %v1869
        %v2164 = vmul.f32 %v1908, %v1908
        %v2165 = vmul.f32 %v1910, %v1910
        %v2166 = vmul.f32 %v1949, %v1949
        %v2167 = vmul.f32 %v1951, %v1951
        %v2168 = vmul.f32 %v1990, %v1990
        %v2169 = vmul.f32 %v1992, %v1992
        %v2170 = vmul.f32 %v2031, %v2031
        %v2171 = vmul.f32 %v2033, %v2033
        %v2172 = vmul.f32 %v2072, %v2072
        %v2173 = vmul.f32 %v2074, %v2074
        %v2174 = vmul.f32 %v2113, %v2113
        %v2175 = vmul.f32 %v2115, %v2115
        %v2176 = vadd.f32 %v2160, %v2161
        %v2177 = vadd.f32 %v2176, %v2162
        %v2178 = vadd.f32 %v2177, %v2163
        %v2179 = vadd.f32 %v2178, %v2164
        %v2180 = vadd.f32 %v2179, %v2165
        %v2181 = vadd.f32 %v2180, %v2166
        %v2182 = vadd.f32 %v2181, %v2167
        %v2183 = vadd.f32 %v2182, %v2168
        %v2184 = vadd.f32 %v2183, %v2169
        %v2185 = vadd.f32 %v2184, %v2170
        %v2186 = vadd.f32 %v2185, %v2171
        %v2187 = vadd.f32 %v2186, %v2172
        %v2188 = vadd.f32 %v2187, %v2173
        %v2189 = vadd.f32 %v2188, %v2174
        %v2190 = vadd.f32 %v2189, %v2175
        %2191 = vadd.xlane.f32.xlu0 %v2190
        %v2192 = vpop.xlane.xlu0 %2191
        %v2193 = vadd.f32 %v2159, %v2192
        %2194 = vst.msk [vmem:[#allocation4] sm:$0xff] %vm2157, %v2193
      $region44: #{generator_forward.8} parent=35 // pred_fallthru
        _
      %p2195 = scmp.eq.s32.totalorder %s19, 1
      %p2196 = pnand %p2195, %p236
      %p2197 = pneg %p2196
      // Predicated region
      $region45: #{generator_forward.8} parent=35 // pred_check
        _
      $region46: #{generator_forward.8} parent=35 // pred_check_branch
        %2199 = sbr.rel (%p2196) target = $region48
      $region47: #{generator_forward.8} parent=35 // pred_region
        %v2200 = vld [vmem:[#allocation3] sm:$0xff]
        %v2201 = vmul.f32 %v2200, 0.00048828125
        %v2202 = vld [vmem:[#allocation4] sm:$0xff]
        %v2203 = vmul.f32 %v2202, 0.00048828125
        %v2204 = vmul.f32 %v2201, %v2201
        %v2205 = vsub.f32 %v2203, %v2204
        %v2206 = vmax.f32 %v2205, 0.0
        %v2207 = vld [vmem:[%s2] sm:$0xff]
        %v2208 = vadd.f32 %v2206, 1e-05
        %v2209 = vrsqrt.pop %v2208
        %v2210 = vmul.f32 %v2207, %v2209
        %vm2211 = vcmask 7168
        %2212 = vst.msk [vmem:[#allocation5] sm:$0xff] %vm2211, %v2210
        %v2213 = vld [vmem:[%s3] sm:$0xff]
        %v2214 = vmul.f32 %v2201, %v2210
        %v2215 = vsub.f32 %v2213, %v2214
        %2216 = vst.msk [vmem:[#allocation6] sm:$0xff] %vm2211, %v2215
      $region48: #{generator_forward.8} parent=35 // pred_fallthru
        _
      // Predicated region
      $region49: #{generator_forward.8} parent=35 // pred_check
        %p2217 = pneg %p2195
      $region50: #{generator_forward.8} parent=35 // pred_check_branch
        %2219 = sbr.rel (%p2217) target = $region52
      $region51: #{generator_forward.8} parent=35 // pred_region
        %s2220 = smul.u32 %s20, 16
        %s2221 = smul.addr %s2220, 8
        %s2222 = scalar_lea.vmem [#allocation2], %s2221
        %v2223 = vld [vmem:[%s2222] sm:$0xff]
        %v2224 = vld [vmem:[%s2222 + $0x8] sm:$0xff]
        %v2225 = vld [vmem:[%s2222 + $0x10] sm:$0xff]
        %v2226 = vld [vmem:[%s2222 + $0x18] sm:$0xff]
        %v2227 = vld [vmem:[%s2222 + $0x20] sm:$0xff]
        %v2228 = vld [vmem:[%s2222 + $0x28] sm:$0xff]
        %v2229 = vld [vmem:[%s2222 + $0x30] sm:$0xff]
        %v2230 = vld [vmem:[%s2222 + $0x38] sm:$0xff]
        %v2231 = vld [vmem:[%s2222 + $0x40] sm:$0xff]
        %v2232 = vld [vmem:[%s2222 + $0x48] sm:$0xff]
        %v2233 = vld [vmem:[%s2222 + $0x50] sm:$0xff]
        %v2234 = vld [vmem:[%s2222 + $0x58] sm:$0xff]
        %v2235 = vld [vmem:[%s2222 + $0x60] sm:$0xff]
        %v2236 = vld [vmem:[%s2222 + $0x68] sm:$0xff]
        %v2237 = vld [vmem:[%s2222 + $0x70] sm:$0xff]
        %v2238 = vld [vmem:[%s2222 + $0x78] sm:$0xff]
        %v2239 = vld [vmem:[#allocation5] sm:$0xff]
        %2241 = vset.pattern.permute.xlu0 0
        %2242 = vperm.xlu0 %2241, %v2239
        %v2243 = vpop.permute.xlu0 %2242
        %v2245 = vmul.f32 %v2223, %v2243
        %v2246 = vmul.f32 %v2224, %v2243
        %v2247 = vmul.f32 %v2225, %v2243
        %v2248 = vmul.f32 %v2226, %v2243
        %v2249 = vmul.f32 %v2227, %v2243
        %v2250 = vmul.f32 %v2228, %v2243
        %v2251 = vmul.f32 %v2229, %v2243
        %v2252 = vmul.f32 %v2230, %v2243
        %v2253 = vmul.f32 %v2231, %v2243
        %v2254 = vmul.f32 %v2232, %v2243
        %v2255 = vmul.f32 %v2233, %v2243
        %v2256 = vmul.f32 %v2234, %v2243
        %v2257 = vmul.f32 %v2235, %v2243
        %v2258 = vmul.f32 %v2236, %v2243
        %v2259 = vmul.f32 %v2237, %v2243
        %v2260 = vmul.f32 %v2238, %v2243
        %v2261 = vld [vmem:[#allocation6] sm:$0xff]
        %2263 = vset.pattern.permute.xlu0 0
        %2264 = vperm.xlu0 %2263, %v2261
        %v2265 = vpop.permute.xlu0 %2264
        %v2267 = vadd.f32 %v2245, %v2265
        %v2268 = vadd.f32 %v2246, %v2265
        %v2269 = vadd.f32 %v2247, %v2265
        %v2270 = vadd.f32 %v2248, %v2265
        %v2271 = vadd.f32 %v2249, %v2265
        %v2272 = vadd.f32 %v2250, %v2265
        %v2273 = vadd.f32 %v2251, %v2265
        %v2274 = vadd.f32 %v2252, %v2265
        %v2275 = vadd.f32 %v2253, %v2265
        %v2276 = vadd.f32 %v2254, %v2265
        %v2277 = vadd.f32 %v2255, %v2265
        %v2278 = vadd.f32 %v2256, %v2265
        %v2279 = vadd.f32 %v2257, %v2265
        %v2280 = vadd.f32 %v2258, %v2265
        %v2281 = vadd.f32 %v2259, %v2265
        %v2282 = vadd.f32 %v2260, %v2265
        %v2283 = vmax.f32 %v2267, 0.0
        %v2284 = vmax.f32 %v2268, 0.0
        %v2285 = vmax.f32 %v2269, 0.0
        %v2286 = vmax.f32 %v2270, 0.0
        %v2287 = vmax.f32 %v2271, 0.0
        %v2288 = vmax.f32 %v2272, 0.0
        %v2289 = vmax.f32 %v2273, 0.0
        %v2290 = vmax.f32 %v2274, 0.0
        %v2291 = vmax.f32 %v2275, 0.0
        %v2292 = vmax.f32 %v2276, 0.0
        %v2293 = vmax.f32 %v2277, 0.0
        %v2294 = vmax.f32 %v2278, 0.0
        %v2295 = vmax.f32 %v2279, 0.0
        %v2296 = vmax.f32 %v2280, 0.0
        %v2297 = vmax.f32 %v2281, 0.0
        %v2298 = vmax.f32 %v2282, 0.0
        %v2299 = vpack.c.bf16 %v2283, %v2283
        %v2300 = vpack.c.bf16 %v2284, %v2284
        %v2301 = vpack.c.bf16 %v2285, %v2285
        %v2302 = vpack.c.bf16 %v2286, %v2286
        %v2303 = vpack.c.bf16 %v2287, %v2287
        %v2304 = vpack.c.bf16 %v2288, %v2288
        %v2305 = vpack.c.bf16 %v2289, %v2289
        %v2306 = vpack.c.bf16 %v2290, %v2290
        %v2307 = vpack.c.bf16 %v2291, %v2291
        %v2308 = vpack.c.bf16 %v2292, %v2292
        %v2309 = vpack.c.bf16 %v2293, %v2293
        %v2310 = vpack.c.bf16 %v2294, %v2294
        %v2311 = vpack.c.bf16 %v2295, %v2295
        %v2312 = vpack.c.bf16 %v2296, %v2296
        %v2313 = vpack.c.bf16 %v2297, %v2297
        %v2314 = vpack.c.bf16 %v2298, %v2298
        %v2331 = vunpack.c.l.b16 %v2299
        %v2332 = vunpack.c.l.b16 %v2300
        %v2333 = vunpack.c.l.b16 %v2301
        %v2334 = vunpack.c.l.b16 %v2302
        %v2335 = vunpack.c.l.b16 %v2303
        %v2336 = vunpack.c.l.b16 %v2304
        %v2337 = vunpack.c.l.b16 %v2305
        %v2338 = vunpack.c.l.b16 %v2306
        %v2339 = vunpack.c.l.b16 %v2307
        %v2340 = vunpack.c.l.b16 %v2308
        %v2341 = vunpack.c.l.b16 %v2309
        %v2342 = vunpack.c.l.b16 %v2310
        %v2343 = vunpack.c.l.b16 %v2311
        %v2344 = vunpack.c.l.b16 %v2312
        %v2345 = vunpack.c.l.b16 %v2313
        %v2346 = vunpack.c.l.b16 %v2314
        %v2347 = vpack.c.b16 %v2332, %v2331
        %v2348 = vpack.c.b16 %v2334, %v2333
        %v2349 = vpack.c.b16 %v2336, %v2335
        %v2350 = vpack.c.b16 %v2338, %v2337
        %v2351 = vpack.c.b16 %v2340, %v2339
        %v2352 = vpack.c.b16 %v2342, %v2341
        %v2353 = vpack.c.b16 %v2344, %v2343
        %v2354 = vpack.c.b16 %v2346, %v2345
        %2363 = vst [vmem:[%s232] sm:$0xff] %v2347
        %2364 = vst [vmem:[%s232 + $0x8] sm:$0xff] %v2348
        %2365 = vst [vmem:[%s232 + $0x10] sm:$0xff] %v2349
        %2366 = vst [vmem:[%s232 + $0x18] sm:$0xff] %v2350
        %2367 = vst [vmem:[%s232 + $0x20] sm:$0xff] %v2351
        %2368 = vst [vmem:[%s232 + $0x28] sm:$0xff] %v2352
        %2369 = vst [vmem:[%s232 + $0x30] sm:$0xff] %v2353
        %2370 = vst [vmem:[%s232 + $0x38] sm:$0xff] %v2354
      $region52: #{generator_forward.8} parent=35 // pred_fallthru
        _
      %s2371 = smul.u32 %s20, %s19
      %s2372 = smul.u32 16, %s2371
      %p2373 = scmp.lt.s32.totalorder %s2372, 15
      %s2374 = scalar_select %p2373, %s2372, 15
      %s2375 = smul.addr %s2374, 4
      %s2376 = scalar_lea.vmem %s4, %s2375
      // Predicated region
      $region53: #{generator_forward.8} parent=35 // pred_check
        %p2377 = pneg %p140
      $region54: #{generator_forward.8} parent=35 // pred_check_branch
        %2379 = sbr.rel (%p2377) target = $region56
      $region55: #{generator_forward.8} parent=35 // pred_region
        %s2380 = smul.u32 %s20, %s19
        %s2381 = smul.u32 16, %s2380
      $region56: #{generator_forward.8} parent=35 // pred_fallthru
        _
    $region36: #{generator_forward.8} parent=5 // pred_fallthru
      _
    %p2382 = scmp.le.s32.totalorder 2, %s10
    // Predicated region
    $region57: #{generator_forward.8} parent=5 // pred_check
      %p2383 = pneg %p2382
    $region58: #{generator_forward.8} parent=5 // pred_check_branch
      %2385 = sbr.rel (%p2383) target = $region60
    $region59: #{generator_forward.8} parent=5 // pred_region
      %s2386 = ssub.s32 %s10, 2
      // Predicated region
      $region61: #{generator_forward.8} parent=59 // pred_check
        %p2387 = pneg %p146
      $region62: #{generator_forward.8} parent=59 // pred_check_branch
        %2389 = sbr.rel (%p2387) target = $region64
      $region63: #{generator_forward.8} parent=59 // pred_region
        %s2390 = smul.u32 %s22, %s21
        %s2391 = smul.u32 16, %s2390
        %p2392 = scmp.lt.s32.totalorder %s2391, 15
        %s2393 = scalar_select %p2392, %s2391, 15
        %s2394 = smul.addr %s2393, 4
        %s2395 = scalar_lea.vmem %s4, %s2394
      $region64: #{generator_forward.8} parent=59 // pred_fallthru
        _
    $region60: #{generator_forward.8} parent=5 // pred_fallthru
      _
  $region6: #{generator_forward.8} parent=0 // loop_footer
    %s14 = sadd.s32 1, %s10
  $region7: #{generator_forward.8} parent=0 // loop_footer_branch
    %9 = sbr.rel target = $region3
  $region8: #{generator_forward.8} parent=0 // loop_exit
    _

// kernel: generator_forward.9
$region0: #{generator_forward.9}
  #allocation0 [shape = 'u32[]', space=smem, size = 0x4, offset = 0x4, fixed_abs, tag = 'smem constant byte address 0x4 - core index']
  #allocation1 [shape = 'u32[144,128]{1,0:T(1,128)}', space=vmem, size = 0x12000, scoped, tag = 'internal scratch']
  %s0 = inlined_call_operand.vmem [shape: bf16[8192,128], index: 0, kind: input, shape index: {}]
  %s1 = inlined_call_operand.vmem [shape: bf16[8,128], index: 1, kind: input, shape index: {}]
  %s2 = inlined_call_operand.vmem [shape: f32[8,1], index: 2, kind: input, shape index: {}]
  %s3 = inlined_call_operand.vmem [shape: f32[8,8192], index: 3, kind: output, shape index: {}]
  %s4 = sld [smem:[#allocation0]]
  $region22: #{generator_forward.9} parent=0
    _
  %s6 = ssub.s32 1, %s4
  %s7 = scalar_select 0, %s6, %s4
  // Predicated region
  $region2: #{generator_forward.9} parent=0 // pred_check
    _
  $region3: #{generator_forward.9} parent=0 // pred_check_branch
    %9 = sbr.rel (0) target = $region5
  $region4: #{generator_forward.9} parent=0 // pred_region
    _
  $region5: #{generator_forward.9} parent=0 // pred_fallthru
    _
  // Predicated region
  $region6: #{generator_forward.9} parent=0 // pred_check
    _
  $region7: #{generator_forward.9} parent=0 // pred_check_branch
    %11 = sbr.rel (0) target = $region9
  $region8: #{generator_forward.9} parent=0 // pred_region
    _
  $region9: #{generator_forward.9} parent=0 // pred_fallthru
    _
  // Predicated region
  $region10: #{generator_forward.9} parent=0 // pred_check
    _
  $region11: #{generator_forward.9} parent=0 // pred_check_branch
    %13 = sbr.rel (0) target = $region13
  $region12: #{generator_forward.9} parent=0 // pred_region
    _
  $region13: #{generator_forward.9} parent=0 // pred_fallthru
    _
  %v15 = vld [vmem:[%s1] sm:$0xf]
  %v16 = vld [vmem:[%s0] sm:$0xf]
  %v17 = vld [vmem:[%s0 + $0x4] sm:$0xf]
  %v18 = vld [vmem:[%s0 + $0x8] sm:$0xf]
  %v19 = vld [vmem:[%s0 + $0xc] sm:$0xf]
  %v20 = vld [vmem:[%s0 + $0x10] sm:$0xf]
  %v21 = vld [vmem:[%s0 + $0x14] sm:$0xf]
  %v22 = vld [vmem:[%s0 + $0x18] sm:$0xf]
  %v23 = vld [vmem:[%s0 + $0x1c] sm:$0xf]
  %v24 = vld [vmem:[%s0 + $0x20] sm:$0xf]
  %v25 = vld [vmem:[%s0 + $0x24] sm:$0xf]
  %v26 = vld [vmem:[%s0 + $0x28] sm:$0xf]
  %v27 = vld [vmem:[%s0 + $0x2c] sm:$0xf]
  %v28 = vld [vmem:[%s0 + $0x30] sm:$0xf]
  %v29 = vld [vmem:[%s0 + $0x34] sm:$0xf]
  %v30 = vld [vmem:[%s0 + $0x38] sm:$0xf]
  %v31 = vld [vmem:[%s0 + $0x3c] sm:$0xf]
  %v32 = vld [vmem:[%s0 + $0x40] sm:$0xf]
  %v33 = vld [vmem:[%s0 + $0x44] sm:$0xf]
  %v34 = vld [vmem:[%s0 + $0x48] sm:$0xf]
  %v35 = vld [vmem:[%s0 + $0x4c] sm:$0xf]
  %v36 = vld [vmem:[%s0 + $0x50] sm:$0xf]
  %v37 = vld [vmem:[%s0 + $0x54] sm:$0xf]
  %v38 = vld [vmem:[%s0 + $0x58] sm:$0xf]
  %v39 = vld [vmem:[%s0 + $0x5c] sm:$0xf]
  %v40 = vld [vmem:[%s0 + $0x60] sm:$0xf]
  %v41 = vld [vmem:[%s0 + $0x64] sm:$0xf]
  %v42 = vld [vmem:[%s0 + $0x68] sm:$0xf]
  %v43 = vld [vmem:[%s0 + $0x6c] sm:$0xf]
  %v44 = vld [vmem:[%s0 + $0x70] sm:$0xf]
  %v45 = vld [vmem:[%s0 + $0x74] sm:$0xf]
  %v46 = vld [vmem:[%s0 + $0x78] sm:$0xf]
  %v47 = vld [vmem:[%s0 + $0x7c] sm:$0xf]
  %v48 = vld [vmem:[%s0 + $0x80] sm:$0xf]
  %v49 = vld [vmem:[%s0 + $0x84] sm:$0xf]
  %v50 = vld [vmem:[%s0 + $0x88] sm:$0xf]
  %v51 = vld [vmem:[%s0 + $0x8c] sm:$0xf]
  %v52 = vld [vmem:[%s0 + $0x90] sm:$0xf]
  %v53 = vld [vmem:[%s0 + $0x94] sm:$0xf]
  %v54 = vld [vmem:[%s0 + $0x98] sm:$0xf]
  %v55 = vld [vmem:[%s0 + $0x9c] sm:$0xf]
  %v56 = vld [vmem:[%s0 + $0xa0] sm:$0xf]
  %v57 = vld [vmem:[%s0 + $0xa4] sm:$0xf]
  %v58 = vld [vmem:[%s0 + $0xa8] sm:$0xf]
  %v59 = vld [vmem:[%s0 + $0xac] sm:$0xf]
  %v60 = vld [vmem:[%s0 + $0xb0] sm:$0xf]
  %v61 = vld [vmem:[%s0 + $0xb4] sm:$0xf]
  %v62 = vld [vmem:[%s0 + $0xb8] sm:$0xf]
  %v63 = vld [vmem:[%s0 + $0xbc] sm:$0xf]
  %v64 = vld [vmem:[%s0 + $0xc0] sm:$0xf]
  %v65 = vld [vmem:[%s0 + $0xc4] sm:$0xf]
  %v66 = vld [vmem:[%s0 + $0xc8] sm:$0xf]
  %v67 = vld [vmem:[%s0 + $0xcc] sm:$0xf]
  %v68 = vld [vmem:[%s0 + $0xd0] sm:$0xf]
  %v69 = vld [vmem:[%s0 + $0xd4] sm:$0xf]
  %v70 = vld [vmem:[%s0 + $0xd8] sm:$0xf]
  %v71 = vld [vmem:[%s0 + $0xdc] sm:$0xf]
  %v72 = vld [vmem:[%s0 + $0xe0] sm:$0xf]
  %v73 = vld [vmem:[%s0 + $0xe4] sm:$0xf]
  %v74 = vld [vmem:[%s0 + $0xe8] sm:$0xf]
  %v75 = vld [vmem:[%s0 + $0xec] sm:$0xf]
  %v76 = vld [vmem:[%s0 + $0xf0] sm:$0xf]
  %v77 = vld [vmem:[%s0 + $0xf4] sm:$0xf]
  %v78 = vld [vmem:[%s0 + $0xf8] sm:$0xf]
  %v79 = vld [vmem:[%s0 + $0xfc] sm:$0xf]
  %v80 = vld [vmem:[%s0 + $0x100] sm:$0xf]
  %v81 = vld [vmem:[%s0 + $0x104] sm:$0xf]
  %v82 = vld [vmem:[%s0 + $0x108] sm:$0xf]
  %v83 = vld [vmem:[%s0 + $0x10c] sm:$0xf]
  %v84 = vld [vmem:[%s0 + $0x110] sm:$0xf]
  %v85 = vld [vmem:[%s0 + $0x114] sm:$0xf]
  %v86 = vld [vmem:[%s0 + $0x118] sm:$0xf]
  %v87 = vld [vmem:[%s0 + $0x11c] sm:$0xf]
  %v88 = vld [vmem:[%s0 + $0x120] sm:$0xf]
  %v89 = vld [vmem:[%s0 + $0x124] sm:$0xf]
  %v90 = vld [vmem:[%s0 + $0x128] sm:$0xf]
  %v91 = vld [vmem:[%s0 + $0x12c] sm:$0xf]
  %v92 = vld [vmem:[%s0 + $0x130] sm:$0xf]
  %v93 = vld [vmem:[%s0 + $0x134] sm:$0xf]
  %v94 = vld [vmem:[%s0 + $0x138] sm:$0xf]
  %v95 = vld [vmem:[%s0 + $0x13c] sm:$0xf]
  %v96 = vld [vmem:[%s0 + $0x140] sm:$0xf]
  %v97 = vld [vmem:[%s0 + $0x144] sm:$0xf]
  %v98 = vld [vmem:[%s0 + $0x148] sm:$0xf]
  %v99 = vld [vmem:[%s0 + $0x14c] sm:$0xf]
  %v100 = vld [vmem:[%s0 + $0x150] sm:$0xf]
  %v101 = vld [vmem:[%s0 + $0x154] sm:$0xf]
  %v102 = vld [vmem:[%s0 + $0x158] sm:$0xf]
  %v103 = vld [vmem:[%s0 + $0x15c] sm:$0xf]
  %v104 = vld [vmem:[%s0 + $0x160] sm:$0xf]
  %v105 = vld [vmem:[%s0 + $0x164] sm:$0xf]
  %v106 = vld [vmem:[%s0 + $0x168] sm:$0xf]
  %v107 = vld [vmem:[%s0 + $0x16c] sm:$0xf]
  %v108 = vld [vmem:[%s0 + $0x170] sm:$0xf]
  %v109 = vld [vmem:[%s0 + $0x174] sm:$0xf]
  %v110 = vld [vmem:[%s0 + $0x178] sm:$0xf]
  %v111 = vld [vmem:[%s0 + $0x17c] sm:$0xf]
  %v112 = vld [vmem:[%s0 + $0x180] sm:$0xf]
  %v113 = vld [vmem:[%s0 + $0x184] sm:$0xf]
  %v114 = vld [vmem:[%s0 + $0x188] sm:$0xf]
  %v115 = vld [vmem:[%s0 + $0x18c] sm:$0xf]
  %v116 = vld [vmem:[%s0 + $0x190] sm:$0xf]
  %v117 = vld [vmem:[%s0 + $0x194] sm:$0xf]
  %v118 = vld [vmem:[%s0 + $0x198] sm:$0xf]
  %v119 = vld [vmem:[%s0 + $0x19c] sm:$0xf]
  %v120 = vld [vmem:[%s0 + $0x1a0] sm:$0xf]
  %v121 = vld [vmem:[%s0 + $0x1a4] sm:$0xf]
  %v122 = vld [vmem:[%s0 + $0x1a8] sm:$0xf]
  %v123 = vld [vmem:[%s0 + $0x1ac] sm:$0xf]
  %v124 = vld [vmem:[%s0 + $0x1b0] sm:$0xf]
  %v125 = vld [vmem:[%s0 + $0x1b4] sm:$0xf]
  %v126 = vld [vmem:[%s0 + $0x1b8] sm:$0xf]
  %v127 = vld [vmem:[%s0 + $0x1bc] sm:$0xf]
  %v128 = vld [vmem:[%s0 + $0x1c0] sm:$0xf]
  %v129 = vld [vmem:[%s0 + $0x1c4] sm:$0xf]
  %v130 = vld [vmem:[%s0 + $0x1c8] sm:$0xf]
  %v131 = vld [vmem:[%s0 + $0x1cc] sm:$0xf]
  %v132 = vld [vmem:[%s0 + $0x1d0] sm:$0xf]
  %v133 = vld [vmem:[%s0 + $0x1d4] sm:$0xf]
  %v134 = vld [vmem:[%s0 + $0x1d8] sm:$0xf]
  %v135 = vld [vmem:[%s0 + $0x1dc] sm:$0xf]
  %v136 = vld [vmem:[%s0 + $0x1e0] sm:$0xf]
  %v137 = vld [vmem:[%s0 + $0x1e4] sm:$0xf]
  %v138 = vld [vmem:[%s0 + $0x1e8] sm:$0xf]
  %v139 = vld [vmem:[%s0 + $0x1ec] sm:$0xf]
  %v140 = vld [vmem:[%s0 + $0x1f0] sm:$0xf]
  %v141 = vld [vmem:[%s0 + $0x1f4] sm:$0xf]
  %v142 = vld [vmem:[%s0 + $0x1f8] sm:$0xf]
  %v143 = vld [vmem:[%s0 + $0x1fc] sm:$0xf]
  %v144 = vld [vmem:[%s0 + $0x200] sm:$0xf]
  %v145 = vld [vmem:[%s0 + $0x204] sm:$0xf]
  %v146 = vld [vmem:[%s0 + $0x208] sm:$0xf]
  %v147 = vld [vmem:[%s0 + $0x20c] sm:$0xf]
  %v148 = vld [vmem:[%s0 + $0x210] sm:$0xf]
  %v149 = vld [vmem:[%s0 + $0x214] sm:$0xf]
  %v150 = vld [vmem:[%s0 + $0x218] sm:$0xf]
  %v151 = vld [vmem:[%s0 + $0x21c] sm:$0xf]
  %v152 = vld [vmem:[%s0 + $0x220] sm:$0xf]
  %v153 = vld [vmem:[%s0 + $0x224] sm:$0xf]
  %v154 = vld [vmem:[%s0 + $0x228] sm:$0xf]
  %v155 = vld [vmem:[%s0 + $0x22c] sm:$0xf]
  %v156 = vld [vmem:[%s0 + $0x230] sm:$0xf]
  %v157 = vld [vmem:[%s0 + $0x234] sm:$0xf]
  %v158 = vld [vmem:[%s0 + $0x238] sm:$0xf]
  %v159 = vld [vmem:[%s0 + $0x23c] sm:$0xf]
  %v160 = vld [vmem:[%s0 + $0x240] sm:$0xf]
  %v161 = vld [vmem:[%s0 + $0x244] sm:$0xf]
  %v162 = vld [vmem:[%s0 + $0x248] sm:$0xf]
  %v163 = vld [vmem:[%s0 + $0x24c] sm:$0xf]
  %v164 = vld [vmem:[%s0 + $0x250] sm:$0xf]
  %v165 = vld [vmem:[%s0 + $0x254] sm:$0xf]
  %v166 = vld [vmem:[%s0 + $0x258] sm:$0xf]
  %v167 = vld [vmem:[%s0 + $0x25c] sm:$0xf]
  %v168 = vld [vmem:[%s0 + $0x260] sm:$0xf]
  %v169 = vld [vmem:[%s0 + $0x264] sm:$0xf]
  %v170 = vld [vmem:[%s0 + $0x268] sm:$0xf]
  %v171 = vld [vmem:[%s0 + $0x26c] sm:$0xf]
  %v172 = vld [vmem:[%s0 + $0x270] sm:$0xf]
  %v173 = vld [vmem:[%s0 + $0x274] sm:$0xf]
  %v174 = vld [vmem:[%s0 + $0x278] sm:$0xf]
  %v175 = vld [vmem:[%s0 + $0x27c] sm:$0xf]
  %v176 = vld [vmem:[%s0 + $0x280] sm:$0xf]
  %v177 = vld [vmem:[%s0 + $0x284] sm:$0xf]
  %v178 = vld [vmem:[%s0 + $0x288] sm:$0xf]
  %v179 = vld [vmem:[%s0 + $0x28c] sm:$0xf]
  %v180 = vld [vmem:[%s0 + $0x290] sm:$0xf]
  %v181 = vld [vmem:[%s0 + $0x294] sm:$0xf]
  %v182 = vld [vmem:[%s0 + $0x298] sm:$0xf]
  %v183 = vld [vmem:[%s0 + $0x29c] sm:$0xf]
  %v184 = vld [vmem:[%s0 + $0x2a0] sm:$0xf]
  %v185 = vld [vmem:[%s0 + $0x2a4] sm:$0xf]
  %v186 = vld [vmem:[%s0 + $0x2a8] sm:$0xf]
  %v187 = vld [vmem:[%s0 + $0x2ac] sm:$0xf]
  %v188 = vld [vmem:[%s0 + $0x2b0] sm:$0xf]
  %v189 = vld [vmem:[%s0 + $0x2b4] sm:$0xf]
  %v190 = vld [vmem:[%s0 + $0x2b8] sm:$0xf]
  %v191 = vld [vmem:[%s0 + $0x2bc] sm:$0xf]
  %v192 = vld [vmem:[%s0 + $0x2c0] sm:$0xf]
  %v193 = vld [vmem:[%s0 + $0x2c4] sm:$0xf]
  %v194 = vld [vmem:[%s0 + $0x2c8] sm:$0xf]
  %v195 = vld [vmem:[%s0 + $0x2cc] sm:$0xf]
  %v196 = vld [vmem:[%s0 + $0x2d0] sm:$0xf]
  %v197 = vld [vmem:[%s0 + $0x2d4] sm:$0xf]
  %v198 = vld [vmem:[%s0 + $0x2d8] sm:$0xf]
  %v199 = vld [vmem:[%s0 + $0x2dc] sm:$0xf]
  %v200 = vld [vmem:[%s0 + $0x2e0] sm:$0xf]
  %v201 = vld [vmem:[%s0 + $0x2e4] sm:$0xf]
  %v202 = vld [vmem:[%s0 + $0x2e8] sm:$0xf]
  %v203 = vld [vmem:[%s0 + $0x2ec] sm:$0xf]
  %v204 = vld [vmem:[%s0 + $0x2f0] sm:$0xf]
  %v205 = vld [vmem:[%s0 + $0x2f4] sm:$0xf]
  %v206 = vld [vmem:[%s0 + $0x2f8] sm:$0xf]
  %v207 = vld [vmem:[%s0 + $0x2fc] sm:$0xf]
  %v208 = vld [vmem:[%s0 + $0x300] sm:$0xf]
  %v209 = vld [vmem:[%s0 + $0x304] sm:$0xf]
  %v210 = vld [vmem:[%s0 + $0x308] sm:$0xf]
  %v211 = vld [vmem:[%s0 + $0x30c] sm:$0xf]
  %v212 = vld [vmem:[%s0 + $0x310] sm:$0xf]
  %v213 = vld [vmem:[%s0 + $0x314] sm:$0xf]
  %v214 = vld [vmem:[%s0 + $0x318] sm:$0xf]
  %v215 = vld [vmem:[%s0 + $0x31c] sm:$0xf]
  %v216 = vld [vmem:[%s0 + $0x320] sm:$0xf]
  %v217 = vld [vmem:[%s0 + $0x324] sm:$0xf]
  %v218 = vld [vmem:[%s0 + $0x328] sm:$0xf]
  %v219 = vld [vmem:[%s0 + $0x32c] sm:$0xf]
  %v220 = vld [vmem:[%s0 + $0x330] sm:$0xf]
  %v221 = vld [vmem:[%s0 + $0x334] sm:$0xf]
  %v222 = vld [vmem:[%s0 + $0x338] sm:$0xf]
  %v223 = vld [vmem:[%s0 + $0x33c] sm:$0xf]
  %v224 = vld [vmem:[%s0 + $0x340] sm:$0xf]
  %v225 = vld [vmem:[%s0 + $0x344] sm:$0xf]
  %v226 = vld [vmem:[%s0 + $0x348] sm:$0xf]
  %v227 = vld [vmem:[%s0 + $0x34c] sm:$0xf]
  %v228 = vld [vmem:[%s0 + $0x350] sm:$0xf]
  %v229 = vld [vmem:[%s0 + $0x354] sm:$0xf]
  %v230 = vld [vmem:[%s0 + $0x358] sm:$0xf]
  %v231 = vld [vmem:[%s0 + $0x35c] sm:$0xf]
  %v232 = vld [vmem:[%s0 + $0x360] sm:$0xf]
  %v233 = vld [vmem:[%s0 + $0x364] sm:$0xf]
  %v234 = vld [vmem:[%s0 + $0x368] sm:$0xf]
  %v235 = vld [vmem:[%s0 + $0x36c] sm:$0xf]
  %v236 = vld [vmem:[%s0 + $0x370] sm:$0xf]
  %v237 = vld [vmem:[%s0 + $0x374] sm:$0xf]
  %v238 = vld [vmem:[%s0 + $0x378] sm:$0xf]
  %v239 = vld [vmem:[%s0 + $0x37c] sm:$0xf]
  %v240 = vld [vmem:[%s0 + $0x380] sm:$0xf]
  %v241 = vld [vmem:[%s0 + $0x384] sm:$0xf]
  %v242 = vld [vmem:[%s0 + $0x388] sm:$0xf]
  %v243 = vld [vmem:[%s0 + $0x38c] sm:$0xf]
  %v244 = vld [vmem:[%s0 + $0x390] sm:$0xf]
  %v245 = vld [vmem:[%s0 + $0x394] sm:$0xf]
  %v246 = vld [vmem:[%s0 + $0x398] sm:$0xf]
  %v247 = vld [vmem:[%s0 + $0x39c] sm:$0xf]
  %v248 = vld [vmem:[%s0 + $0x3a0] sm:$0xf]
  %v249 = vld [vmem:[%s0 + $0x3a4] sm:$0xf]
  %v250 = vld [vmem:[%s0 + $0x3a8] sm:$0xf]
  %v251 = vld [vmem:[%s0 + $0x3ac] sm:$0xf]
  %v252 = vld [vmem:[%s0 + $0x3b0] sm:$0xf]
  %v253 = vld [vmem:[%s0 + $0x3b4] sm:$0xf]
  %v254 = vld [vmem:[%s0 + $0x3b8] sm:$0xf]
  %v255 = vld [vmem:[%s0 + $0x3bc] sm:$0xf]
  %v256 = vld [vmem:[%s0 + $0x3c0] sm:$0xf]
  %v257 = vld [vmem:[%s0 + $0x3c4] sm:$0xf]
  %v258 = vld [vmem:[%s0 + $0x3c8] sm:$0xf]
  %v259 = vld [vmem:[%s0 + $0x3cc] sm:$0xf]
  %v260 = vld [vmem:[%s0 + $0x3d0] sm:$0xf]
  %v261 = vld [vmem:[%s0 + $0x3d4] sm:$0xf]
  %v262 = vld [vmem:[%s0 + $0x3d8] sm:$0xf]
  %v263 = vld [vmem:[%s0 + $0x3dc] sm:$0xf]
  %v264 = vld [vmem:[%s0 + $0x3e0] sm:$0xf]
  %v265 = vld [vmem:[%s0 + $0x3e4] sm:$0xf]
  %v266 = vld [vmem:[%s0 + $0x3e8] sm:$0xf]
  %v267 = vld [vmem:[%s0 + $0x3ec] sm:$0xf]
  %v268 = vld [vmem:[%s0 + $0x3f0] sm:$0xf]
  %v269 = vld [vmem:[%s0 + $0x3f4] sm:$0xf]
  %v270 = vld [vmem:[%s0 + $0x3f8] sm:$0xf]
  %v271 = vld [vmem:[%s0 + $0x3fc] sm:$0xf]
  %v272 = vld [vmem:[%s0 + $0x400] sm:$0xf]
  %v273 = vld [vmem:[%s0 + $0x404] sm:$0xf]
  %v274 = vld [vmem:[%s0 + $0x408] sm:$0xf]
  %v275 = vld [vmem:[%s0 + $0x40c] sm:$0xf]
  %v276 = vld [vmem:[%s0 + $0x410] sm:$0xf]
  %v277 = vld [vmem:[%s0 + $0x414] sm:$0xf]
  %v278 = vld [vmem:[%s0 + $0x418] sm:$0xf]
  %v279 = vld [vmem:[%s0 + $0x41c] sm:$0xf]
  %v280 = vld [vmem:[%s0 + $0x420] sm:$0xf]
  %v281 = vld [vmem:[%s0 + $0x424] sm:$0xf]
  %v282 = vld [vmem:[%s0 + $0x428] sm:$0xf]
  %v283 = vld [vmem:[%s0 + $0x42c] sm:$0xf]
  %v284 = vld [vmem:[%s0 + $0x430] sm:$0xf]
  %v285 = vld [vmem:[%s0 + $0x434] sm:$0xf]
  %v286 = vld [vmem:[%s0 + $0x438] sm:$0xf]
  %v287 = vld [vmem:[%s0 + $0x43c] sm:$0xf]
  %v288 = vld [vmem:[%s0 + $0x440] sm:$0xf]
  %v289 = vld [vmem:[%s0 + $0x444] sm:$0xf]
  %v290 = vld [vmem:[%s0 + $0x448] sm:$0xf]
  %v291 = vld [vmem:[%s0 + $0x44c] sm:$0xf]
  %v292 = vld [vmem:[%s0 + $0x450] sm:$0xf]
  %v293 = vld [vmem:[%s0 + $0x454] sm:$0xf]
  %v294 = vld [vmem:[%s0 + $0x458] sm:$0xf]
  %v295 = vld [vmem:[%s0 + $0x45c] sm:$0xf]
  %v296 = vld [vmem:[%s0 + $0x460] sm:$0xf]
  %v297 = vld [vmem:[%s0 + $0x464] sm:$0xf]
  %v298 = vld [vmem:[%s0 + $0x468] sm:$0xf]
  %v299 = vld [vmem:[%s0 + $0x46c] sm:$0xf]
  %v300 = vld [vmem:[%s0 + $0x470] sm:$0xf]
  %v301 = vld [vmem:[%s0 + $0x474] sm:$0xf]
  %v302 = vld [vmem:[%s0 + $0x478] sm:$0xf]
  %v303 = vld [vmem:[%s0 + $0x47c] sm:$0xf]
  %v304 = vld [vmem:[%s0 + $0x480] sm:$0xf]
  %v305 = vld [vmem:[%s0 + $0x484] sm:$0xf]
  %v306 = vld [vmem:[%s0 + $0x488] sm:$0xf]
  %v307 = vld [vmem:[%s0 + $0x48c] sm:$0xf]
  %v308 = vld [vmem:[%s0 + $0x490] sm:$0xf]
  %v309 = vld [vmem:[%s0 + $0x494] sm:$0xf]
  %v310 = vld [vmem:[%s0 + $0x498] sm:$0xf]
  %v311 = vld [vmem:[%s0 + $0x49c] sm:$0xf]
  %v312 = vld [vmem:[%s0 + $0x4a0] sm:$0xf]
  %v313 = vld [vmem:[%s0 + $0x4a4] sm:$0xf]
  %v314 = vld [vmem:[%s0 + $0x4a8] sm:$0xf]
  %v315 = vld [vmem:[%s0 + $0x4ac] sm:$0xf]
  %v316 = vld [vmem:[%s0 + $0x4b0] sm:$0xf]
  %v317 = vld [vmem:[%s0 + $0x4b4] sm:$0xf]
  %v318 = vld [vmem:[%s0 + $0x4b8] sm:$0xf]
  %v319 = vld [vmem:[%s0 + $0x4bc] sm:$0xf]
  %v320 = vld [vmem:[%s0 + $0x4c0] sm:$0xf]
  %v321 = vld [vmem:[%s0 + $0x4c4] sm:$0xf]
  %v322 = vld [vmem:[%s0 + $0x4c8] sm:$0xf]
  %v323 = vld [vmem:[%s0 + $0x4cc] sm:$0xf]
  %v324 = vld [vmem:[%s0 + $0x4d0] sm:$0xf]
  %v325 = vld [vmem:[%s0 + $0x4d4] sm:$0xf]
  %v326 = vld [vmem:[%s0 + $0x4d8] sm:$0xf]
  %v327 = vld [vmem:[%s0 + $0x4dc] sm:$0xf]
  %v328 = vld [vmem:[%s0 + $0x4e0] sm:$0xf]
  %v329 = vld [vmem:[%s0 + $0x4e4] sm:$0xf]
  %v330 = vld [vmem:[%s0 + $0x4e8] sm:$0xf]
  %v331 = vld [vmem:[%s0 + $0x4ec] sm:$0xf]
  %v332 = vld [vmem:[%s0 + $0x4f0] sm:$0xf]
  %v333 = vld [vmem:[%s0 + $0x4f4] sm:$0xf]
  %v334 = vld [vmem:[%s0 + $0x4f8] sm:$0xf]
  %v335 = vld [vmem:[%s0 + $0x4fc] sm:$0xf]
  %v336 = vld [vmem:[%s0 + $0x500] sm:$0xf]
  %v337 = vld [vmem:[%s0 + $0x504] sm:$0xf]
  %v338 = vld [vmem:[%s0 + $0x508] sm:$0xf]
  %v339 = vld [vmem:[%s0 + $0x50c] sm:$0xf]
  %v340 = vld [vmem:[%s0 + $0x510] sm:$0xf]
  %v341 = vld [vmem:[%s0 + $0x514] sm:$0xf]
  %v342 = vld [vmem:[%s0 + $0x518] sm:$0xf]
  %v343 = vld [vmem:[%s0 + $0x51c] sm:$0xf]
  %v344 = vld [vmem:[%s0 + $0x520] sm:$0xf]
  %v345 = vld [vmem:[%s0 + $0x524] sm:$0xf]
  %v346 = vld [vmem:[%s0 + $0x528] sm:$0xf]
  %v347 = vld [vmem:[%s0 + $0x52c] sm:$0xf]
  %v348 = vld [vmem:[%s0 + $0x530] sm:$0xf]
  %v349 = vld [vmem:[%s0 + $0x534] sm:$0xf]
  %v350 = vld [vmem:[%s0 + $0x538] sm:$0xf]
  %v351 = vld [vmem:[%s0 + $0x53c] sm:$0xf]
  %v352 = vld [vmem:[%s0 + $0x540] sm:$0xf]
  %v353 = vld [vmem:[%s0 + $0x544] sm:$0xf]
  %v354 = vld [vmem:[%s0 + $0x548] sm:$0xf]
  %v355 = vld [vmem:[%s0 + $0x54c] sm:$0xf]
  %v356 = vld [vmem:[%s0 + $0x550] sm:$0xf]
  %v357 = vld [vmem:[%s0 + $0x554] sm:$0xf]
  %v358 = vld [vmem:[%s0 + $0x558] sm:$0xf]
  %v359 = vld [vmem:[%s0 + $0x55c] sm:$0xf]
  %v360 = vld [vmem:[%s0 + $0x560] sm:$0xf]
  %v361 = vld [vmem:[%s0 + $0x564] sm:$0xf]
  %v362 = vld [vmem:[%s0 + $0x568] sm:$0xf]
  %v363 = vld [vmem:[%s0 + $0x56c] sm:$0xf]
  %v364 = vld [vmem:[%s0 + $0x570] sm:$0xf]
  %v365 = vld [vmem:[%s0 + $0x574] sm:$0xf]
  %v366 = vld [vmem:[%s0 + $0x578] sm:$0xf]
  %v367 = vld [vmem:[%s0 + $0x57c] sm:$0xf]
  %v368 = vld [vmem:[%s0 + $0x580] sm:$0xf]
  %v369 = vld [vmem:[%s0 + $0x584] sm:$0xf]
  %v370 = vld [vmem:[%s0 + $0x588] sm:$0xf]
  %v371 = vld [vmem:[%s0 + $0x58c] sm:$0xf]
  %v372 = vld [vmem:[%s0 + $0x590] sm:$0xf]
  %v373 = vld [vmem:[%s0 + $0x594] sm:$0xf]
  %v374 = vld [vmem:[%s0 + $0x598] sm:$0xf]
  %v375 = vld [vmem:[%s0 + $0x59c] sm:$0xf]
  %v376 = vld [vmem:[%s0 + $0x5a0] sm:$0xf]
  %v377 = vld [vmem:[%s0 + $0x5a4] sm:$0xf]
  %v378 = vld [vmem:[%s0 + $0x5a8] sm:$0xf]
  %v379 = vld [vmem:[%s0 + $0x5ac] sm:$0xf]
  %v380 = vld [vmem:[%s0 + $0x5b0] sm:$0xf]
  %v381 = vld [vmem:[%s0 + $0x5b4] sm:$0xf]
  %v382 = vld [vmem:[%s0 + $0x5b8] sm:$0xf]
  %v383 = vld [vmem:[%s0 + $0x5bc] sm:$0xf]
  %v384 = vld [vmem:[%s0 + $0x5c0] sm:$0xf]
  %v385 = vld [vmem:[%s0 + $0x5c4] sm:$0xf]
  %v386 = vld [vmem:[%s0 + $0x5c8] sm:$0xf]
  %v387 = vld [vmem:[%s0 + $0x5cc] sm:$0xf]
  %v388 = vld [vmem:[%s0 + $0x5d0] sm:$0xf]
  %v389 = vld [vmem:[%s0 + $0x5d4] sm:$0xf]
  %v390 = vld [vmem:[%s0 + $0x5d8] sm:$0xf]
  %v391 = vld [vmem:[%s0 + $0x5dc] sm:$0xf]
  %v392 = vld [vmem:[%s0 + $0x5e0] sm:$0xf]
  %v393 = vld [vmem:[%s0 + $0x5e4] sm:$0xf]
  %v394 = vld [vmem:[%s0 + $0x5e8] sm:$0xf]
  %v395 = vld [vmem:[%s0 + $0x5ec] sm:$0xf]
  %v396 = vld [vmem:[%s0 + $0x5f0] sm:$0xf]
  %v397 = vld [vmem:[%s0 + $0x5f4] sm:$0xf]
  %v398 = vld [vmem:[%s0 + $0x5f8] sm:$0xf]
  %v399 = vld [vmem:[%s0 + $0x5fc] sm:$0xf]
  %v400 = vld [vmem:[%s0 + $0x600] sm:$0xf]
  %v401 = vld [vmem:[%s0 + $0x604] sm:$0xf]
  %v402 = vld [vmem:[%s0 + $0x608] sm:$0xf]
  %v403 = vld [vmem:[%s0 + $0x60c] sm:$0xf]
  %v404 = vld [vmem:[%s0 + $0x610] sm:$0xf]
  %v405 = vld [vmem:[%s0 + $0x614] sm:$0xf]
  %v406 = vld [vmem:[%s0 + $0x618] sm:$0xf]
  %v407 = vld [vmem:[%s0 + $0x61c] sm:$0xf]
  %v408 = vld [vmem:[%s0 + $0x620] sm:$0xf]
  %v409 = vld [vmem:[%s0 + $0x624] sm:$0xf]
  %v410 = vld [vmem:[%s0 + $0x628] sm:$0xf]
  %v411 = vld [vmem:[%s0 + $0x62c] sm:$0xf]
  %v412 = vld [vmem:[%s0 + $0x630] sm:$0xf]
  %v413 = vld [vmem:[%s0 + $0x634] sm:$0xf]
  %v414 = vld [vmem:[%s0 + $0x638] sm:$0xf]
  %v415 = vld [vmem:[%s0 + $0x63c] sm:$0xf]
  %v416 = vld [vmem:[%s0 + $0x640] sm:$0xf]
  %v417 = vld [vmem:[%s0 + $0x644] sm:$0xf]
  %v418 = vld [vmem:[%s0 + $0x648] sm:$0xf]
  %v419 = vld [vmem:[%s0 + $0x64c] sm:$0xf]
  %v420 = vld [vmem:[%s0 + $0x650] sm:$0xf]
  %v421 = vld [vmem:[%s0 + $0x654] sm:$0xf]
  %v422 = vld [vmem:[%s0 + $0x658] sm:$0xf]
  %v423 = vld [vmem:[%s0 + $0x65c] sm:$0xf]
  %v424 = vld [vmem:[%s0 + $0x660] sm:$0xf]
  %v425 = vld [vmem:[%s0 + $0x664] sm:$0xf]
  %v426 = vld [vmem:[%s0 + $0x668] sm:$0xf]
  %v427 = vld [vmem:[%s0 + $0x66c] sm:$0xf]
  %v428 = vld [vmem:[%s0 + $0x670] sm:$0xf]
  %v429 = vld [vmem:[%s0 + $0x674] sm:$0xf]
  %v430 = vld [vmem:[%s0 + $0x678] sm:$0xf]
  %v431 = vld [vmem:[%s0 + $0x67c] sm:$0xf]
  %v432 = vld [vmem:[%s0 + $0x680] sm:$0xf]
  %v433 = vld [vmem:[%s0 + $0x684] sm:$0xf]
  %v434 = vld [vmem:[%s0 + $0x688] sm:$0xf]
  %v435 = vld [vmem:[%s0 + $0x68c] sm:$0xf]
  %v436 = vld [vmem:[%s0 + $0x690] sm:$0xf]
  %v437 = vld [vmem:[%s0 + $0x694] sm:$0xf]
  %v438 = vld [vmem:[%s0 + $0x698] sm:$0xf]
  %v439 = vld [vmem:[%s0 + $0x69c] sm:$0xf]
  %v440 = vld [vmem:[%s0 + $0x6a0] sm:$0xf]
  %v441 = vld [vmem:[%s0 + $0x6a4] sm:$0xf]
  %v442 = vld [vmem:[%s0 + $0x6a8] sm:$0xf]
  %v443 = vld [vmem:[%s0 + $0x6ac] sm:$0xf]
  %v444 = vld [vmem:[%s0 + $0x6b0] sm:$0xf]
  %v445 = vld [vmem:[%s0 + $0x6b4] sm:$0xf]
  %v446 = vld [vmem:[%s0 + $0x6b8] sm:$0xf]
  %v447 = vld [vmem:[%s0 + $0x6bc] sm:$0xf]
  %v448 = vld [vmem:[%s0 + $0x6c0] sm:$0xf]
  %v449 = vld [vmem:[%s0 + $0x6c4] sm:$0xf]
  %v450 = vld [vmem:[%s0 + $0x6c8] sm:$0xf]
  %v451 = vld [vmem:[%s0 + $0x6cc] sm:$0xf]
  %v452 = vld [vmem:[%s0 + $0x6d0] sm:$0xf]
  %v453 = vld [vmem:[%s0 + $0x6d4] sm:$0xf]
  %v454 = vld [vmem:[%s0 + $0x6d8] sm:$0xf]
  %v455 = vld [vmem:[%s0 + $0x6dc] sm:$0xf]
  %v456 = vld [vmem:[%s0 + $0x6e0] sm:$0xf]
  %v457 = vld [vmem:[%s0 + $0x6e4] sm:$0xf]
  %v458 = vld [vmem:[%s0 + $0x6e8] sm:$0xf]
  %v459 = vld [vmem:[%s0 + $0x6ec] sm:$0xf]
  %v460 = vld [vmem:[%s0 + $0x6f0] sm:$0xf]
  %v461 = vld [vmem:[%s0 + $0x6f4] sm:$0xf]
  %v462 = vld [vmem:[%s0 + $0x6f8] sm:$0xf]
  %v463 = vld [vmem:[%s0 + $0x6fc] sm:$0xf]
  %v464 = vld [vmem:[%s0 + $0x700] sm:$0xf]
  %v465 = vld [vmem:[%s0 + $0x704] sm:$0xf]
  %v466 = vld [vmem:[%s0 + $0x708] sm:$0xf]
  %v467 = vld [vmem:[%s0 + $0x70c] sm:$0xf]
  %v468 = vld [vmem:[%s0 + $0x710] sm:$0xf]
  %v469 = vld [vmem:[%s0 + $0x714] sm:$0xf]
  %v470 = vld [vmem:[%s0 + $0x718] sm:$0xf]
  %v471 = vld [vmem:[%s0 + $0x71c] sm:$0xf]
  %v472 = vld [vmem:[%s0 + $0x720] sm:$0xf]
  %v473 = vld [vmem:[%s0 + $0x724] sm:$0xf]
  %v474 = vld [vmem:[%s0 + $0x728] sm:$0xf]
  %v475 = vld [vmem:[%s0 + $0x72c] sm:$0xf]
  %v476 = vld [vmem:[%s0 + $0x730] sm:$0xf]
  %v477 = vld [vmem:[%s0 + $0x734] sm:$0xf]
  %v478 = vld [vmem:[%s0 + $0x738] sm:$0xf]
  %v479 = vld [vmem:[%s0 + $0x73c] sm:$0xf]
  %v480 = vld [vmem:[%s0 + $0x740] sm:$0xf]
  %v481 = vld [vmem:[%s0 + $0x744] sm:$0xf]
  %v482 = vld [vmem:[%s0 + $0x748] sm:$0xf]
  %v483 = vld [vmem:[%s0 + $0x74c] sm:$0xf]
  %v484 = vld [vmem:[%s0 + $0x750] sm:$0xf]
  %v485 = vld [vmem:[%s0 + $0x754] sm:$0xf]
  %v486 = vld [vmem:[%s0 + $0x758] sm:$0xf]
  %v487 = vld [vmem:[%s0 + $0x75c] sm:$0xf]
  %v488 = vld [vmem:[%s0 + $0x760] sm:$0xf]
  %v489 = vld [vmem:[%s0 + $0x764] sm:$0xf]
  %v490 = vld [vmem:[%s0 + $0x768] sm:$0xf]
  %v491 = vld [vmem:[%s0 + $0x76c] sm:$0xf]
  %v492 = vld [vmem:[%s0 + $0x770] sm:$0xf]
  %v493 = vld [vmem:[%s0 + $0x774] sm:$0xf]
  %v494 = vld [vmem:[%s0 + $0x778] sm:$0xf]
  %v495 = vld [vmem:[%s0 + $0x77c] sm:$0xf]
  %v496 = vld [vmem:[%s0 + $0x780] sm:$0xf]
  %v497 = vld [vmem:[%s0 + $0x784] sm:$0xf]
  %v498 = vld [vmem:[%s0 + $0x788] sm:$0xf]
  %v499 = vld [vmem:[%s0 + $0x78c] sm:$0xf]
  %v500 = vld [vmem:[%s0 + $0x790] sm:$0xf]
  %v501 = vld [vmem:[%s0 + $0x794] sm:$0xf]
  %v502 = vld [vmem:[%s0 + $0x798] sm:$0xf]
  %v503 = vld [vmem:[%s0 + $0x79c] sm:$0xf]
  %v504 = vld [vmem:[%s0 + $0x7a0] sm:$0xf]
  %v505 = vld [vmem:[%s0 + $0x7a4] sm:$0xf]
  %v506 = vld [vmem:[%s0 + $0x7a8] sm:$0xf]
  %v507 = vld [vmem:[%s0 + $0x7ac] sm:$0xf]
  %v508 = vld [vmem:[%s0 + $0x7b0] sm:$0xf]
  %v509 = vld [vmem:[%s0 + $0x7b4] sm:$0xf]
  %v510 = vld [vmem:[%s0 + $0x7b8] sm:$0xf]
  %v511 = vld [vmem:[%s0 + $0x7bc] sm:$0xf]
  %v512 = vld [vmem:[%s0 + $0x7c0] sm:$0xf]
  %v513 = vld [vmem:[%s0 + $0x7c4] sm:$0xf]
  %v514 = vld [vmem:[%s0 + $0x7c8] sm:$0xf]
  %v515 = vld [vmem:[%s0 + $0x7cc] sm:$0xf]
  %v516 = vld [vmem:[%s0 + $0x7d0] sm:$0xf]
  %v517 = vld [vmem:[%s0 + $0x7d4] sm:$0xf]
  %v518 = vld [vmem:[%s0 + $0x7d8] sm:$0xf]
  %v519 = vld [vmem:[%s0 + $0x7dc] sm:$0xf]
  %v520 = vld [vmem:[%s0 + $0x7e0] sm:$0xf]
  %v521 = vld [vmem:[%s0 + $0x7e4] sm:$0xf]
  %v522 = vld [vmem:[%s0 + $0x7e8] sm:$0xf]
  %v523 = vld [vmem:[%s0 + $0x7ec] sm:$0xf]
  %v524 = vld [vmem:[%s0 + $0x7f0] sm:$0xf]
  %v525 = vld [vmem:[%s0 + $0x7f4] sm:$0xf]
  %v526 = vld [vmem:[%s0 + $0x7f8] sm:$0xf]
  %v527 = vld [vmem:[%s0 + $0x7fc] sm:$0xf]
  %v528 = vld [vmem:[%s0 + $0x800] sm:$0xf]
  %v529 = vld [vmem:[%s0 + $0x804] sm:$0xf]
  %v530 = vld [vmem:[%s0 + $0x808] sm:$0xf]
  %v531 = vld [vmem:[%s0 + $0x80c] sm:$0xf]
  %v532 = vld [vmem:[%s0 + $0x810] sm:$0xf]
  %v533 = vld [vmem:[%s0 + $0x814] sm:$0xf]
  %v534 = vld [vmem:[%s0 + $0x818] sm:$0xf]
  %v535 = vld [vmem:[%s0 + $0x81c] sm:$0xf]
  %v536 = vld [vmem:[%s0 + $0x820] sm:$0xf]
  %v537 = vld [vmem:[%s0 + $0x824] sm:$0xf]
  %v538 = vld [vmem:[%s0 + $0x828] sm:$0xf]
  %v539 = vld [vmem:[%s0 + $0x82c] sm:$0xf]
  %v540 = vld [vmem:[%s0 + $0x830] sm:$0xf]
  %v541 = vld [vmem:[%s0 + $0x834] sm:$0xf]
  %v542 = vld [vmem:[%s0 + $0x838] sm:$0xf]
  %v543 = vld [vmem:[%s0 + $0x83c] sm:$0xf]
  %v544 = vld [vmem:[%s0 + $0x840] sm:$0xf]
  %v545 = vld [vmem:[%s0 + $0x844] sm:$0xf]
  %v546 = vld [vmem:[%s0 + $0x848] sm:$0xf]
  %v547 = vld [vmem:[%s0 + $0x84c] sm:$0xf]
  %v548 = vld [vmem:[%s0 + $0x850] sm:$0xf]
  %v549 = vld [vmem:[%s0 + $0x854] sm:$0xf]
  %v550 = vld [vmem:[%s0 + $0x858] sm:$0xf]
  %v551 = vld [vmem:[%s0 + $0x85c] sm:$0xf]
  %v552 = vld [vmem:[%s0 + $0x860] sm:$0xf]
  %v553 = vld [vmem:[%s0 + $0x864] sm:$0xf]
  %v554 = vld [vmem:[%s0 + $0x868] sm:$0xf]
  %v555 = vld [vmem:[%s0 + $0x86c] sm:$0xf]
  %v556 = vld [vmem:[%s0 + $0x870] sm:$0xf]
  %v557 = vld [vmem:[%s0 + $0x874] sm:$0xf]
  %v558 = vld [vmem:[%s0 + $0x878] sm:$0xf]
  %v559 = vld [vmem:[%s0 + $0x87c] sm:$0xf]
  %v560 = vld [vmem:[%s0 + $0x880] sm:$0xf]
  %v561 = vld [vmem:[%s0 + $0x884] sm:$0xf]
  %v562 = vld [vmem:[%s0 + $0x888] sm:$0xf]
  %v563 = vld [vmem:[%s0 + $0x88c] sm:$0xf]
  %v564 = vld [vmem:[%s0 + $0x890] sm:$0xf]
  %v565 = vld [vmem:[%s0 + $0x894] sm:$0xf]
  %v566 = vld [vmem:[%s0 + $0x898] sm:$0xf]
  %v567 = vld [vmem:[%s0 + $0x89c] sm:$0xf]
  %v568 = vld [vmem:[%s0 + $0x8a0] sm:$0xf]
  %v569 = vld [vmem:[%s0 + $0x8a4] sm:$0xf]
  %v570 = vld [vmem:[%s0 + $0x8a8] sm:$0xf]
  %v571 = vld [vmem:[%s0 + $0x8ac] sm:$0xf]
  %v572 = vld [vmem:[%s0 + $0x8b0] sm:$0xf]
  %v573 = vld [vmem:[%s0 + $0x8b4] sm:$0xf]
  %v574 = vld [vmem:[%s0 + $0x8b8] sm:$0xf]
  %v575 = vld [vmem:[%s0 + $0x8bc] sm:$0xf]
  %v576 = vld [vmem:[%s0 + $0x8c0] sm:$0xf]
  %v577 = vld [vmem:[%s0 + $0x8c4] sm:$0xf]
  %v578 = vld [vmem:[%s0 + $0x8c8] sm:$0xf]
  %v579 = vld [vmem:[%s0 + $0x8cc] sm:$0xf]
  %v580 = vld [vmem:[%s0 + $0x8d0] sm:$0xf]
  %v581 = vld [vmem:[%s0 + $0x8d4] sm:$0xf]
  %v582 = vld [vmem:[%s0 + $0x8d8] sm:$0xf]
  %v583 = vld [vmem:[%s0 + $0x8dc] sm:$0xf]
  %v584 = vld [vmem:[%s0 + $0x8e0] sm:$0xf]
  %v585 = vld [vmem:[%s0 + $0x8e4] sm:$0xf]
  %v586 = vld [vmem:[%s0 + $0x8e8] sm:$0xf]
  %v587 = vld [vmem:[%s0 + $0x8ec] sm:$0xf]
  %v588 = vld [vmem:[%s0 + $0x8f0] sm:$0xf]
  %v589 = vld [vmem:[%s0 + $0x8f4] sm:$0xf]
  %v590 = vld [vmem:[%s0 + $0x8f8] sm:$0xf]
  %v591 = vld [vmem:[%s0 + $0x8fc] sm:$0xf]
  %v592 = vld [vmem:[%s0 + $0x900] sm:$0xf]
  %v593 = vld [vmem:[%s0 + $0x904] sm:$0xf]
  %v594 = vld [vmem:[%s0 + $0x908] sm:$0xf]
  %v595 = vld [vmem:[%s0 + $0x90c] sm:$0xf]
  %v596 = vld [vmem:[%s0 + $0x910] sm:$0xf]
  %v597 = vld [vmem:[%s0 + $0x914] sm:$0xf]
  %v598 = vld [vmem:[%s0 + $0x918] sm:$0xf]
  %v599 = vld [vmem:[%s0 + $0x91c] sm:$0xf]
  %v600 = vld [vmem:[%s0 + $0x920] sm:$0xf]
  %v601 = vld [vmem:[%s0 + $0x924] sm:$0xf]
  %v602 = vld [vmem:[%s0 + $0x928] sm:$0xf]
  %v603 = vld [vmem:[%s0 + $0x92c] sm:$0xf]
  %v604 = vld [vmem:[%s0 + $0x930] sm:$0xf]
  %v605 = vld [vmem:[%s0 + $0x934] sm:$0xf]
  %v606 = vld [vmem:[%s0 + $0x938] sm:$0xf]
  %v607 = vld [vmem:[%s0 + $0x93c] sm:$0xf]
  %v608 = vld [vmem:[%s0 + $0x940] sm:$0xf]
  %v609 = vld [vmem:[%s0 + $0x944] sm:$0xf]
  %v610 = vld [vmem:[%s0 + $0x948] sm:$0xf]
  %v611 = vld [vmem:[%s0 + $0x94c] sm:$0xf]
  %v612 = vld [vmem:[%s0 + $0x950] sm:$0xf]
  %v613 = vld [vmem:[%s0 + $0x954] sm:$0xf]
  %v614 = vld [vmem:[%s0 + $0x958] sm:$0xf]
  %v615 = vld [vmem:[%s0 + $0x95c] sm:$0xf]
  %v616 = vld [vmem:[%s0 + $0x960] sm:$0xf]
  %v617 = vld [vmem:[%s0 + $0x964] sm:$0xf]
  %v618 = vld [vmem:[%s0 + $0x968] sm:$0xf]
  %v619 = vld [vmem:[%s0 + $0x96c] sm:$0xf]
  %v620 = vld [vmem:[%s0 + $0x970] sm:$0xf]
  %v621 = vld [vmem:[%s0 + $0x974] sm:$0xf]
  %v622 = vld [vmem:[%s0 + $0x978] sm:$0xf]
  %v623 = vld [vmem:[%s0 + $0x97c] sm:$0xf]
  %v624 = vld [vmem:[%s0 + $0x980] sm:$0xf]
  %v625 = vld [vmem:[%s0 + $0x984] sm:$0xf]
  %v626 = vld [vmem:[%s0 + $0x988] sm:$0xf]
  %v627 = vld [vmem:[%s0 + $0x98c] sm:$0xf]
  %v628 = vld [vmem:[%s0 + $0x990] sm:$0xf]
  %v629 = vld [vmem:[%s0 + $0x994] sm:$0xf]
  %v630 = vld [vmem:[%s0 + $0x998] sm:$0xf]
  %v631 = vld [vmem:[%s0 + $0x99c] sm:$0xf]
  %v632 = vld [vmem:[%s0 + $0x9a0] sm:$0xf]
  %v633 = vld [vmem:[%s0 + $0x9a4] sm:$0xf]
  %v634 = vld [vmem:[%s0 + $0x9a8] sm:$0xf]
  %v635 = vld [vmem:[%s0 + $0x9ac] sm:$0xf]
  %v636 = vld [vmem:[%s0 + $0x9b0] sm:$0xf]
  %v637 = vld [vmem:[%s0 + $0x9b4] sm:$0xf]
  %v638 = vld [vmem:[%s0 + $0x9b8] sm:$0xf]
  %v639 = vld [vmem:[%s0 + $0x9bc] sm:$0xf]
  %v640 = vld [vmem:[%s0 + $0x9c0] sm:$0xf]
  %v641 = vld [vmem:[%s0 + $0x9c4] sm:$0xf]
  %v642 = vld [vmem:[%s0 + $0x9c8] sm:$0xf]
  %v643 = vld [vmem:[%s0 + $0x9cc] sm:$0xf]
  %v644 = vld [vmem:[%s0 + $0x9d0] sm:$0xf]
  %v645 = vld [vmem:[%s0 + $0x9d4] sm:$0xf]
  %v646 = vld [vmem:[%s0 + $0x9d8] sm:$0xf]
  %v647 = vld [vmem:[%s0 + $0x9dc] sm:$0xf]
  %v648 = vld [vmem:[%s0 + $0x9e0] sm:$0xf]
  %v649 = vld [vmem:[%s0 + $0x9e4] sm:$0xf]
  %v650 = vld [vmem:[%s0 + $0x9e8] sm:$0xf]
  %v651 = vld [vmem:[%s0 + $0x9ec] sm:$0xf]
  %v652 = vld [vmem:[%s0 + $0x9f0] sm:$0xf]
  %v653 = vld [vmem:[%s0 + $0x9f4] sm:$0xf]
  %v654 = vld [vmem:[%s0 + $0x9f8] sm:$0xf]
  %v655 = vld [vmem:[%s0 + $0x9fc] sm:$0xf]
  %v656 = vld [vmem:[%s0 + $0xa00] sm:$0xf]
  %v657 = vld [vmem:[%s0 + $0xa04] sm:$0xf]
  %v658 = vld [vmem:[%s0 + $0xa08] sm:$0xf]
  %v659 = vld [vmem:[%s0 + $0xa0c] sm:$0xf]
  %v660 = vld [vmem:[%s0 + $0xa10] sm:$0xf]
  %v661 = vld [vmem:[%s0 + $0xa14] sm:$0xf]
  %v662 = vld [vmem:[%s0 + $0xa18] sm:$0xf]
  %v663 = vld [vmem:[%s0 + $0xa1c] sm:$0xf]
  %v664 = vld [vmem:[%s0 + $0xa20] sm:$0xf]
  %v665 = vld [vmem:[%s0 + $0xa24] sm:$0xf]
  %v666 = vld [vmem:[%s0 + $0xa28] sm:$0xf]
  %v667 = vld [vmem:[%s0 + $0xa2c] sm:$0xf]
  %v668 = vld [vmem:[%s0 + $0xa30] sm:$0xf]
  %v669 = vld [vmem:[%s0 + $0xa34] sm:$0xf]
  %v670 = vld [vmem:[%s0 + $0xa38] sm:$0xf]
  %v671 = vld [vmem:[%s0 + $0xa3c] sm:$0xf]
  %v672 = vld [vmem:[%s0 + $0xa40] sm:$0xf]
  %v673 = vld [vmem:[%s0 + $0xa44] sm:$0xf]
  %v674 = vld [vmem:[%s0 + $0xa48] sm:$0xf]
  %v675 = vld [vmem:[%s0 + $0xa4c] sm:$0xf]
  %v676 = vld [vmem:[%s0 + $0xa50] sm:$0xf]
  %v677 = vld [vmem:[%s0 + $0xa54] sm:$0xf]
  %v678 = vld [vmem:[%s0 + $0xa58] sm:$0xf]
  %v679 = vld [vmem:[%s0 + $0xa5c] sm:$0xf]
  %v680 = vld [vmem:[%s0 + $0xa60] sm:$0xf]
  %v681 = vld [vmem:[%s0 + $0xa64] sm:$0xf]
  %v682 = vld [vmem:[%s0 + $0xa68] sm:$0xf]
  %v683 = vld [vmem:[%s0 + $0xa6c] sm:$0xf]
  %v684 = vld [vmem:[%s0 + $0xa70] sm:$0xf]
  %v685 = vld [vmem:[%s0 + $0xa74] sm:$0xf]
  %v686 = vld [vmem:[%s0 + $0xa78] sm:$0xf]
  %v687 = vld [vmem:[%s0 + $0xa7c] sm:$0xf]
  %v688 = vld [vmem:[%s0 + $0xa80] sm:$0xf]
  %v689 = vld [vmem:[%s0 + $0xa84] sm:$0xf]
  %v690 = vld [vmem:[%s0 + $0xa88] sm:$0xf]
  %v691 = vld [vmem:[%s0 + $0xa8c] sm:$0xf]
  %v692 = vld [vmem:[%s0 + $0xa90] sm:$0xf]
  %v693 = vld [vmem:[%s0 + $0xa94] sm:$0xf]
  %v694 = vld [vmem:[%s0 + $0xa98] sm:$0xf]
  %v695 = vld [vmem:[%s0 + $0xa9c] sm:$0xf]
  %v696 = vld [vmem:[%s0 + $0xaa0] sm:$0xf]
  %v697 = vld [vmem:[%s0 + $0xaa4] sm:$0xf]
  %v698 = vld [vmem:[%s0 + $0xaa8] sm:$0xf]
  %v699 = vld [vmem:[%s0 + $0xaac] sm:$0xf]
  %v700 = vld [vmem:[%s0 + $0xab0] sm:$0xf]
  %v701 = vld [vmem:[%s0 + $0xab4] sm:$0xf]
  %v702 = vld [vmem:[%s0 + $0xab8] sm:$0xf]
  %v703 = vld [vmem:[%s0 + $0xabc] sm:$0xf]
  %v704 = vld [vmem:[%s0 + $0xac0] sm:$0xf]
  %v705 = vld [vmem:[%s0 + $0xac4] sm:$0xf]
  %v706 = vld [vmem:[%s0 + $0xac8] sm:$0xf]
  %v707 = vld [vmem:[%s0 + $0xacc] sm:$0xf]
  %v708 = vld [vmem:[%s0 + $0xad0] sm:$0xf]
  %v709 = vld [vmem:[%s0 + $0xad4] sm:$0xf]
  %v710 = vld [vmem:[%s0 + $0xad8] sm:$0xf]
  %v711 = vld [vmem:[%s0 + $0xadc] sm:$0xf]
  %v712 = vld [vmem:[%s0 + $0xae0] sm:$0xf]
  %v713 = vld [vmem:[%s0 + $0xae4] sm:$0xf]
  %v714 = vld [vmem:[%s0 + $0xae8] sm:$0xf]
  %v715 = vld [vmem:[%s0 + $0xaec] sm:$0xf]
  %v716 = vld [vmem:[%s0 + $0xaf0] sm:$0xf]
  %v717 = vld [vmem:[%s0 + $0xaf4] sm:$0xf]
  %v718 = vld [vmem:[%s0 + $0xaf8] sm:$0xf]
  %v719 = vld [vmem:[%s0 + $0xafc] sm:$0xf]
  %v720 = vld [vmem:[%s0 + $0xb00] sm:$0xf]
  %v721 = vld [vmem:[%s0 + $0xb04] sm:$0xf]
  %v722 = vld [vmem:[%s0 + $0xb08] sm:$0xf]
  %v723 = vld [vmem:[%s0 + $0xb0c] sm:$0xf]
  %v724 = vld [vmem:[%s0 + $0xb10] sm:$0xf]
  %v725 = vld [vmem:[%s0 + $0xb14] sm:$0xf]
  %v726 = vld [vmem:[%s0 + $0xb18] sm:$0xf]
  %v727 = vld [vmem:[%s0 + $0xb1c] sm:$0xf]
  %v728 = vld [vmem:[%s0 + $0xb20] sm:$0xf]
  %v729 = vld [vmem:[%s0 + $0xb24] sm:$0xf]
  %v730 = vld [vmem:[%s0 + $0xb28] sm:$0xf]
  %v731 = vld [vmem:[%s0 + $0xb2c] sm:$0xf]
  %v732 = vld [vmem:[%s0 + $0xb30] sm:$0xf]
  %v733 = vld [vmem:[%s0 + $0xb34] sm:$0xf]
  %v734 = vld [vmem:[%s0 + $0xb38] sm:$0xf]
  %v735 = vld [vmem:[%s0 + $0xb3c] sm:$0xf]
  %v736 = vld [vmem:[%s0 + $0xb40] sm:$0xf]
  %v737 = vld [vmem:[%s0 + $0xb44] sm:$0xf]
  %v738 = vld [vmem:[%s0 + $0xb48] sm:$0xf]
  %v739 = vld [vmem:[%s0 + $0xb4c] sm:$0xf]
  %v740 = vld [vmem:[%s0 + $0xb50] sm:$0xf]
  %v741 = vld [vmem:[%s0 + $0xb54] sm:$0xf]
  %v742 = vld [vmem:[%s0 + $0xb58] sm:$0xf]
  %v743 = vld [vmem:[%s0 + $0xb5c] sm:$0xf]
  %v744 = vld [vmem:[%s0 + $0xb60] sm:$0xf]
  %v745 = vld [vmem:[%s0 + $0xb64] sm:$0xf]
  %v746 = vld [vmem:[%s0 + $0xb68] sm:$0xf]
  %v747 = vld [vmem:[%s0 + $0xb6c] sm:$0xf]
  %v748 = vld [vmem:[%s0 + $0xb70] sm:$0xf]
  %v749 = vld [vmem:[%s0 + $0xb74] sm:$0xf]
  %v750 = vld [vmem:[%s0 + $0xb78] sm:$0xf]
  %v751 = vld [vmem:[%s0 + $0xb7c] sm:$0xf]
  %v752 = vld [vmem:[%s0 + $0xb80] sm:$0xf]
  %v753 = vld [vmem:[%s0 + $0xb84] sm:$0xf]
  %v754 = vld [vmem:[%s0 + $0xb88] sm:$0xf]
  %v755 = vld [vmem:[%s0 + $0xb8c] sm:$0xf]
  %v756 = vld [vmem:[%s0 + $0xb90] sm:$0xf]
  %v757 = vld [vmem:[%s0 + $0xb94] sm:$0xf]
  %v758 = vld [vmem:[%s0 + $0xb98] sm:$0xf]
  %v759 = vld [vmem:[%s0 + $0xb9c] sm:$0xf]
  %v760 = vld [vmem:[%s0 + $0xba0] sm:$0xf]
  %v761 = vld [vmem:[%s0 + $0xba4] sm:$0xf]
  %v762 = vld [vmem:[%s0 + $0xba8] sm:$0xf]
  %v763 = vld [vmem:[%s0 + $0xbac] sm:$0xf]
  %v764 = vld [vmem:[%s0 + $0xbb0] sm:$0xf]
  %v765 = vld [vmem:[%s0 + $0xbb4] sm:$0xf]
  %v766 = vld [vmem:[%s0 + $0xbb8] sm:$0xf]
  %v767 = vld [vmem:[%s0 + $0xbbc] sm:$0xf]
  %v768 = vld [vmem:[%s0 + $0xbc0] sm:$0xf]
  %v769 = vld [vmem:[%s0 + $0xbc4] sm:$0xf]
  %v770 = vld [vmem:[%s0 + $0xbc8] sm:$0xf]
  %v771 = vld [vmem:[%s0 + $0xbcc] sm:$0xf]
  %v772 = vld [vmem:[%s0 + $0xbd0] sm:$0xf]
  %v773 = vld [vmem:[%s0 + $0xbd4] sm:$0xf]
  %v774 = vld [vmem:[%s0 + $0xbd8] sm:$0xf]
  %v775 = vld [vmem:[%s0 + $0xbdc] sm:$0xf]
  %v776 = vld [vmem:[%s0 + $0xbe0] sm:$0xf]
  %v777 = vld [vmem:[%s0 + $0xbe4] sm:$0xf]
  %v778 = vld [vmem:[%s0 + $0xbe8] sm:$0xf]
  %v779 = vld [vmem:[%s0 + $0xbec] sm:$0xf]
  %v780 = vld [vmem:[%s0 + $0xbf0] sm:$0xf]
  %v781 = vld [vmem:[%s0 + $0xbf4] sm:$0xf]
  %v782 = vld [vmem:[%s0 + $0xbf8] sm:$0xf]
  %v783 = vld [vmem:[%s0 + $0xbfc] sm:$0xf]
  %v784 = vld [vmem:[%s0 + $0xc00] sm:$0xf]
  %v785 = vld [vmem:[%s0 + $0xc04] sm:$0xf]
  %v786 = vld [vmem:[%s0 + $0xc08] sm:$0xf]
  %v787 = vld [vmem:[%s0 + $0xc0c] sm:$0xf]
  %v788 = vld [vmem:[%s0 + $0xc10] sm:$0xf]
  %v789 = vld [vmem:[%s0 + $0xc14] sm:$0xf]
  %v790 = vld [vmem:[%s0 + $0xc18] sm:$0xf]
  %v791 = vld [vmem:[%s0 + $0xc1c] sm:$0xf]
  %v792 = vld [vmem:[%s0 + $0xc20] sm:$0xf]
  %v793 = vld [vmem:[%s0 + $0xc24] sm:$0xf]
  %v794 = vld [vmem:[%s0 + $0xc28] sm:$0xf]
  %v795 = vld [vmem:[%s0 + $0xc2c] sm:$0xf]
  %v796 = vld [vmem:[%s0 + $0xc30] sm:$0xf]
  %v797 = vld [vmem:[%s0 + $0xc34] sm:$0xf]
  %v798 = vld [vmem:[%s0 + $0xc38] sm:$0xf]
  %v799 = vld [vmem:[%s0 + $0xc3c] sm:$0xf]
  %v800 = vld [vmem:[%s0 + $0xc40] sm:$0xf]
  %v801 = vld [vmem:[%s0 + $0xc44] sm:$0xf]
  %v802 = vld [vmem:[%s0 + $0xc48] sm:$0xf]
  %v803 = vld [vmem:[%s0 + $0xc4c] sm:$0xf]
  %v804 = vld [vmem:[%s0 + $0xc50] sm:$0xf]
  %v805 = vld [vmem:[%s0 + $0xc54] sm:$0xf]
  %v806 = vld [vmem:[%s0 + $0xc58] sm:$0xf]
  %v807 = vld [vmem:[%s0 + $0xc5c] sm:$0xf]
  %v808 = vld [vmem:[%s0 + $0xc60] sm:$0xf]
  %v809 = vld [vmem:[%s0 + $0xc64] sm:$0xf]
  %v810 = vld [vmem:[%s0 + $0xc68] sm:$0xf]
  %v811 = vld [vmem:[%s0 + $0xc6c] sm:$0xf]
  %v812 = vld [vmem:[%s0 + $0xc70] sm:$0xf]
  %v813 = vld [vmem:[%s0 + $0xc74] sm:$0xf]
  %v814 = vld [vmem:[%s0 + $0xc78] sm:$0xf]
  %v815 = vld [vmem:[%s0 + $0xc7c] sm:$0xf]
  %v816 = vld [vmem:[%s0 + $0xc80] sm:$0xf]
  %v817 = vld [vmem:[%s0 + $0xc84] sm:$0xf]
  %v818 = vld [vmem:[%s0 + $0xc88] sm:$0xf]
  %v819 = vld [vmem:[%s0 + $0xc8c] sm:$0xf]
  %v820 = vld [vmem:[%s0 + $0xc90] sm:$0xf]
  %v821 = vld [vmem:[%s0 + $0xc94] sm:$0xf]
  %v822 = vld [vmem:[%s0 + $0xc98] sm:$0xf]
  %v823 = vld [vmem:[%s0 + $0xc9c] sm:$0xf]
  %v824 = vld [vmem:[%s0 + $0xca0] sm:$0xf]
  %v825 = vld [vmem:[%s0 + $0xca4] sm:$0xf]
  %v826 = vld [vmem:[%s0 + $0xca8] sm:$0xf]
  %v827 = vld [vmem:[%s0 + $0xcac] sm:$0xf]
  %v828 = vld [vmem:[%s0 + $0xcb0] sm:$0xf]
  %v829 = vld [vmem:[%s0 + $0xcb4] sm:$0xf]
  %v830 = vld [vmem:[%s0 + $0xcb8] sm:$0xf]
  %v831 = vld [vmem:[%s0 + $0xcbc] sm:$0xf]
  %v832 = vld [vmem:[%s0 + $0xcc0] sm:$0xf]
  %v833 = vld [vmem:[%s0 + $0xcc4] sm:$0xf]
  %v834 = vld [vmem:[%s0 + $0xcc8] sm:$0xf]
  %v835 = vld [vmem:[%s0 + $0xccc] sm:$0xf]
  %v836 = vld [vmem:[%s0 + $0xcd0] sm:$0xf]
  %v837 = vld [vmem:[%s0 + $0xcd4] sm:$0xf]
  %v838 = vld [vmem:[%s0 + $0xcd8] sm:$0xf]
  %v839 = vld [vmem:[%s0 + $0xcdc] sm:$0xf]
  %v840 = vld [vmem:[%s0 + $0xce0] sm:$0xf]
  %v841 = vld [vmem:[%s0 + $0xce4] sm:$0xf]
  %v842 = vld [vmem:[%s0 + $0xce8] sm:$0xf]
  %v843 = vld [vmem:[%s0 + $0xcec] sm:$0xf]
  %v844 = vld [vmem:[%s0 + $0xcf0] sm:$0xf]
  %v845 = vld [vmem:[%s0 + $0xcf4] sm:$0xf]
  %v846 = vld [vmem:[%s0 + $0xcf8] sm:$0xf]
  %v847 = vld [vmem:[%s0 + $0xcfc] sm:$0xf]
  %v848 = vld [vmem:[%s0 + $0xd00] sm:$0xf]
  %v849 = vld [vmem:[%s0 + $0xd04] sm:$0xf]
  %v850 = vld [vmem:[%s0 + $0xd08] sm:$0xf]
  %v851 = vld [vmem:[%s0 + $0xd0c] sm:$0xf]
  %v852 = vld [vmem:[%s0 + $0xd10] sm:$0xf]
  %v853 = vld [vmem:[%s0 + $0xd14] sm:$0xf]
  %v854 = vld [vmem:[%s0 + $0xd18] sm:$0xf]
  %v855 = vld [vmem:[%s0 + $0xd1c] sm:$0xf]
  %v856 = vld [vmem:[%s0 + $0xd20] sm:$0xf]
  %v857 = vld [vmem:[%s0 + $0xd24] sm:$0xf]
  %v858 = vld [vmem:[%s0 + $0xd28] sm:$0xf]
  %v859 = vld [vmem:[%s0 + $0xd2c] sm:$0xf]
  %v860 = vld [vmem:[%s0 + $0xd30] sm:$0xf]
  %v861 = vld [vmem:[%s0 + $0xd34] sm:$0xf]
  %v862 = vld [vmem:[%s0 + $0xd38] sm:$0xf]
  %v863 = vld [vmem:[%s0 + $0xd3c] sm:$0xf]
  %v864 = vld [vmem:[%s0 + $0xd40] sm:$0xf]
  %v865 = vld [vmem:[%s0 + $0xd44] sm:$0xf]
  %v866 = vld [vmem:[%s0 + $0xd48] sm:$0xf]
  %v867 = vld [vmem:[%s0 + $0xd4c] sm:$0xf]
  %v868 = vld [vmem:[%s0 + $0xd50] sm:$0xf]
  %v869 = vld [vmem:[%s0 + $0xd54] sm:$0xf]
  %v870 = vld [vmem:[%s0 + $0xd58] sm:$0xf]
  %v871 = vld [vmem:[%s0 + $0xd5c] sm:$0xf]
  %v872 = vld [vmem:[%s0 + $0xd60] sm:$0xf]
  %v873 = vld [vmem:[%s0 + $0xd64] sm:$0xf]
  %v874 = vld [vmem:[%s0 + $0xd68] sm:$0xf]
  %v875 = vld [vmem:[%s0 + $0xd6c] sm:$0xf]
  %v876 = vld [vmem:[%s0 + $0xd70] sm:$0xf]
  %v877 = vld [vmem:[%s0 + $0xd74] sm:$0xf]
  %v878 = vld [vmem:[%s0 + $0xd78] sm:$0xf]
  %v879 = vld [vmem:[%s0 + $0xd7c] sm:$0xf]
  %v880 = vld [vmem:[%s0 + $0xd80] sm:$0xf]
  %v881 = vld [vmem:[%s0 + $0xd84] sm:$0xf]
  %v882 = vld [vmem:[%s0 + $0xd88] sm:$0xf]
  %v883 = vld [vmem:[%s0 + $0xd8c] sm:$0xf]
  %v884 = vld [vmem:[%s0 + $0xd90] sm:$0xf]
  %v885 = vld [vmem:[%s0 + $0xd94] sm:$0xf]
  %v886 = vld [vmem:[%s0 + $0xd98] sm:$0xf]
  %v887 = vld [vmem:[%s0 + $0xd9c] sm:$0xf]
  %v888 = vld [vmem:[%s0 + $0xda0] sm:$0xf]
  %v889 = vld [vmem:[%s0 + $0xda4] sm:$0xf]
  %v890 = vld [vmem:[%s0 + $0xda8] sm:$0xf]
  %v891 = vld [vmem:[%s0 + $0xdac] sm:$0xf]
  %v892 = vld [vmem:[%s0 + $0xdb0] sm:$0xf]
  %v893 = vld [vmem:[%s0 + $0xdb4] sm:$0xf]
  %v894 = vld [vmem:[%s0 + $0xdb8] sm:$0xf]
  %v895 = vld [vmem:[%s0 + $0xdbc] sm:$0xf]
  %v896 = vld [vmem:[%s0 + $0xdc0] sm:$0xf]
  %v897 = vld [vmem:[%s0 + $0xdc4] sm:$0xf]
  %v898 = vld [vmem:[%s0 + $0xdc8] sm:$0xf]
  %v899 = vld [vmem:[%s0 + $0xdcc] sm:$0xf]
  %v900 = vld [vmem:[%s0 + $0xdd0] sm:$0xf]
  %v901 = vld [vmem:[%s0 + $0xdd4] sm:$0xf]
  %v902 = vld [vmem:[%s0 + $0xdd8] sm:$0xf]
  %v903 = vld [vmem:[%s0 + $0xddc] sm:$0xf]
  %v904 = vld [vmem:[%s0 + $0xde0] sm:$0xf]
  %v905 = vld [vmem:[%s0 + $0xde4] sm:$0xf]
  %v906 = vld [vmem:[%s0 + $0xde8] sm:$0xf]
  %v907 = vld [vmem:[%s0 + $0xdec] sm:$0xf]
  %v908 = vld [vmem:[%s0 + $0xdf0] sm:$0xf]
  %v909 = vld [vmem:[%s0 + $0xdf4] sm:$0xf]
  %v910 = vld [vmem:[%s0 + $0xdf8] sm:$0xf]
  %v911 = vld [vmem:[%s0 + $0xdfc] sm:$0xf]
  %v912 = vld [vmem:[%s0 + $0xe00] sm:$0xf]
  %v913 = vld [vmem:[%s0 + $0xe04] sm:$0xf]
  %v914 = vld [vmem:[%s0 + $0xe08] sm:$0xf]
  %v915 = vld [vmem:[%s0 + $0xe0c] sm:$0xf]
  %v916 = vld [vmem:[%s0 + $0xe10] sm:$0xf]
  %v917 = vld [vmem:[%s0 + $0xe14] sm:$0xf]
  %v918 = vld [vmem:[%s0 + $0xe18] sm:$0xf]
  %v919 = vld [vmem:[%s0 + $0xe1c] sm:$0xf]
  %v920 = vld [vmem:[%s0 + $0xe20] sm:$0xf]
  %v921 = vld [vmem:[%s0 + $0xe24] sm:$0xf]
  %v922 = vld [vmem:[%s0 + $0xe28] sm:$0xf]
  %v923 = vld [vmem:[%s0 + $0xe2c] sm:$0xf]
  %v924 = vld [vmem:[%s0 + $0xe30] sm:$0xf]
  %v925 = vld [vmem:[%s0 + $0xe34] sm:$0xf]
  %v926 = vld [vmem:[%s0 + $0xe38] sm:$0xf]
  %v927 = vld [vmem:[%s0 + $0xe3c] sm:$0xf]
  %v928 = vld [vmem:[%s0 + $0xe40] sm:$0xf]
  %v929 = vld [vmem:[%s0 + $0xe44] sm:$0xf]
  %v930 = vld [vmem:[%s0 + $0xe48] sm:$0xf]
  %v931 = vld [vmem:[%s0 + $0xe4c] sm:$0xf]
  %v932 = vld [vmem:[%s0 + $0xe50] sm:$0xf]
  %v933 = vld [vmem:[%s0 + $0xe54] sm:$0xf]
  %v934 = vld [vmem:[%s0 + $0xe58] sm:$0xf]
  %v935 = vld [vmem:[%s0 + $0xe5c] sm:$0xf]
  %v936 = vld [vmem:[%s0 + $0xe60] sm:$0xf]
  %v937 = vld [vmem:[%s0 + $0xe64] sm:$0xf]
  %v938 = vld [vmem:[%s0 + $0xe68] sm:$0xf]
  %v939 = vld [vmem:[%s0 + $0xe6c] sm:$0xf]
  %v940 = vld [vmem:[%s0 + $0xe70] sm:$0xf]
  %v941 = vld [vmem:[%s0 + $0xe74] sm:$0xf]
  %v942 = vld [vmem:[%s0 + $0xe78] sm:$0xf]
  %v943 = vld [vmem:[%s0 + $0xe7c] sm:$0xf]
  %v944 = vld [vmem:[%s0 + $0xe80] sm:$0xf]
  %v945 = vld [vmem:[%s0 + $0xe84] sm:$0xf]
  %v946 = vld [vmem:[%s0 + $0xe88] sm:$0xf]
  %v947 = vld [vmem:[%s0 + $0xe8c] sm:$0xf]
  %v948 = vld [vmem:[%s0 + $0xe90] sm:$0xf]
  %v949 = vld [vmem:[%s0 + $0xe94] sm:$0xf]
  %v950 = vld [vmem:[%s0 + $0xe98] sm:$0xf]
  %v951 = vld [vmem:[%s0 + $0xe9c] sm:$0xf]
  %v952 = vld [vmem:[%s0 + $0xea0] sm:$0xf]
  %v953 = vld [vmem:[%s0 + $0xea4] sm:$0xf]
  %v954 = vld [vmem:[%s0 + $0xea8] sm:$0xf]
  %v955 = vld [vmem:[%s0 + $0xeac] sm:$0xf]
  %v956 = vld [vmem:[%s0 + $0xeb0] sm:$0xf]
  %v957 = vld [vmem:[%s0 + $0xeb4] sm:$0xf]
  %v958 = vld [vmem:[%s0 + $0xeb8] sm:$0xf]
  %v959 = vld [vmem:[%s0 + $0xebc] sm:$0xf]
  %v960 = vld [vmem:[%s0 + $0xec0] sm:$0xf]
  %v961 = vld [vmem:[%s0 + $0xec4] sm:$0xf]
  %v962 = vld [vmem:[%s0 + $0xec8] sm:$0xf]
  %v963 = vld [vmem:[%s0 + $0xecc] sm:$0xf]
  %v964 = vld [vmem:[%s0 + $0xed0] sm:$0xf]
  %v965 = vld [vmem:[%s0 + $0xed4] sm:$0xf]
  %v966 = vld [vmem:[%s0 + $0xed8] sm:$0xf]
  %v967 = vld [vmem:[%s0 + $0xedc] sm:$0xf]
  %v968 = vld [vmem:[%s0 + $0xee0] sm:$0xf]
  %v969 = vld [vmem:[%s0 + $0xee4] sm:$0xf]
  %v970 = vld [vmem:[%s0 + $0xee8] sm:$0xf]
  %v971 = vld [vmem:[%s0 + $0xeec] sm:$0xf]
  %v972 = vld [vmem:[%s0 + $0xef0] sm:$0xf]
  %v973 = vld [vmem:[%s0 + $0xef4] sm:$0xf]
  %v974 = vld [vmem:[%s0 + $0xef8] sm:$0xf]
  %v975 = vld [vmem:[%s0 + $0xefc] sm:$0xf]
  %v976 = vld [vmem:[%s0 + $0xf00] sm:$0xf]
  %v977 = vld [vmem:[%s0 + $0xf04] sm:$0xf]
  %v978 = vld [vmem:[%s0 + $0xf08] sm:$0xf]
  %v979 = vld [vmem:[%s0 + $0xf0c] sm:$0xf]
  %v980 = vld [vmem:[%s0 + $0xf10] sm:$0xf]
  %v981 = vld [vmem:[%s0 + $0xf14] sm:$0xf]
  %v982 = vld [vmem:[%s0 + $0xf18] sm:$0xf]
  %v983 = vld [vmem:[%s0 + $0xf1c] sm:$0xf]
  %v984 = vld [vmem:[%s0 + $0xf20] sm:$0xf]
  %v985 = vld [vmem:[%s0 + $0xf24] sm:$0xf]
  %v986 = vld [vmem:[%s0 + $0xf28] sm:$0xf]
  %v987 = vld [vmem:[%s0 + $0xf2c] sm:$0xf]
  %v988 = vld [vmem:[%s0 + $0xf30] sm:$0xf]
  %v989 = vld [vmem:[%s0 + $0xf34] sm:$0xf]
  %v990 = vld [vmem:[%s0 + $0xf38] sm:$0xf]
  %v991 = vld [vmem:[%s0 + $0xf3c] sm:$0xf]
  %v992 = vld [vmem:[%s0 + $0xf40] sm:$0xf]
  %v993 = vld [vmem:[%s0 + $0xf44] sm:$0xf]
  %v994 = vld [vmem:[%s0 + $0xf48] sm:$0xf]
  %v995 = vld [vmem:[%s0 + $0xf4c] sm:$0xf]
  %v996 = vld [vmem:[%s0 + $0xf50] sm:$0xf]
  %v997 = vld [vmem:[%s0 + $0xf54] sm:$0xf]
  %v998 = vld [vmem:[%s0 + $0xf58] sm:$0xf]
  %v999 = vld [vmem:[%s0 + $0xf5c] sm:$0xf]
  %v1000 = vld [vmem:[%s0 + $0xf60] sm:$0xf]
  %v1001 = vld [vmem:[%s0 + $0xf64] sm:$0xf]
  %v1002 = vld [vmem:[%s0 + $0xf68] sm:$0xf]
  %v1003 = vld [vmem:[%s0 + $0xf6c] sm:$0xf]
  %v1004 = vld [vmem:[%s0 + $0xf70] sm:$0xf]
  %v1005 = vld [vmem:[%s0 + $0xf74] sm:$0xf]
  %v1006 = vld [vmem:[%s0 + $0xf78] sm:$0xf]
  %v1007 = vld [vmem:[%s0 + $0xf7c] sm:$0xf]
  %v1008 = vld [vmem:[%s0 + $0xf80] sm:$0xf]
  %v1009 = vld [vmem:[%s0 + $0xf84] sm:$0xf]
  %v1010 = vld [vmem:[%s0 + $0xf88] sm:$0xf]
  %v1011 = vld [vmem:[%s0 + $0xf8c] sm:$0xf]
  %v1012 = vld [vmem:[%s0 + $0xf90] sm:$0xf]
  %v1013 = vld [vmem:[%s0 + $0xf94] sm:$0xf]
  %v1014 = vld [vmem:[%s0 + $0xf98] sm:$0xf]
  %v1015 = vld [vmem:[%s0 + $0xf9c] sm:$0xf]
  %v1016 = vld [vmem:[%s0 + $0xfa0] sm:$0xf]
  %v1017 = vld [vmem:[%s0 + $0xfa4] sm:$0xf]
  %v1018 = vld [vmem:[%s0 + $0xfa8] sm:$0xf]
  %v1019 = vld [vmem:[%s0 + $0xfac] sm:$0xf]
  %v1020 = vld [vmem:[%s0 + $0xfb0] sm:$0xf]
  %v1021 = vld [vmem:[%s0 + $0xfb4] sm:$0xf]
  %v1022 = vld [vmem:[%s0 + $0xfb8] sm:$0xf]
  %v1023 = vld [vmem:[%s0 + $0xfbc] sm:$0xf]
  %v1024 = vld [vmem:[%s0 + $0xfc0] sm:$0xf]
  %v1025 = vld [vmem:[%s0 + $0xfc4] sm:$0xf]
  %v1026 = vld [vmem:[%s0 + $0xfc8] sm:$0xf]
  %v1027 = vld [vmem:[%s0 + $0xfcc] sm:$0xf]
  %v1028 = vld [vmem:[%s0 + $0xfd0] sm:$0xf]
  %v1029 = vld [vmem:[%s0 + $0xfd4] sm:$0xf]
  %v1030 = vld [vmem:[%s0 + $0xfd8] sm:$0xf]
  %v1031 = vld [vmem:[%s0 + $0xfdc] sm:$0xf]
  %v1032 = vld [vmem:[%s0 + $0xfe0] sm:$0xf]
  %v1033 = vld [vmem:[%s0 + $0xfe4] sm:$0xf]
  %v1034 = vld [vmem:[%s0 + $0xfe8] sm:$0xf]
  %v1035 = vld [vmem:[%s0 + $0xfec] sm:$0xf]
  %v1036 = vld [vmem:[%s0 + $0xff0] sm:$0xf]
  %v1037 = vld [vmem:[%s0 + $0xff4] sm:$0xf]
  %v1038 = vld [vmem:[%s0 + $0xff8] sm:$0xf]
  %v1039 = vld [vmem:[%s0 + $0xffc] sm:$0xf]
  %v1040 = vld [vmem:[%s2] sm:$0xff]
  %1042 = vset.pattern.permute.xlu0 0
  %1043 = vperm.xlu0 %1042, %v1040
  %v1044 = vpop.permute.xlu0 %1043
  %v2070 = vunpack.c.l.b16 %v16
  %v2071 = vunpack.c.l.b16 %v17
  %v2072 = vunpack.c.l.b16 %v18
  %v2073 = vunpack.c.l.b16 %v19
  %v2074 = vunpack.c.l.b16 %v20
  %v2075 = vunpack.c.l.b16 %v21
  %v2076 = vunpack.c.l.b16 %v22
  %v2077 = vunpack.c.l.b16 %v23
  %v2078 = vunpack.c.l.b16 %v24
  %v2079 = vunpack.c.l.b16 %v25
  %v2080 = vunpack.c.l.b16 %v26
  %v2081 = vunpack.c.l.b16 %v27
  %v2082 = vunpack.c.l.b16 %v28
  %v2083 = vunpack.c.l.b16 %v29
  %v2084 = vunpack.c.l.b16 %v30
  %v2085 = vunpack.c.l.b16 %v31
  %v2086 = vunpack.c.l.b16 %v32
  %v2087 = vunpack.c.l.b16 %v33
  %v2088 = vunpack.c.l.b16 %v34
  %v2089 = vunpack.c.l.b16 %v35
  %v2090 = vunpack.c.l.b16 %v36
  %v2091 = vunpack.c.l.b16 %v37
  %v2092 = vunpack.c.l.b16 %v38
  %v2093 = vunpack.c.l.b16 %v39
  %v2094 = vunpack.c.l.b16 %v40
  %v2095 = vunpack.c.l.b16 %v41
  %v2096 = vunpack.c.l.b16 %v42
  %v2097 = vunpack.c.l.b16 %v43
  %v2098 = vunpack.c.l.b16 %v44
  %v2099 = vunpack.c.l.b16 %v45
  %v2100 = vunpack.c.l.b16 %v46
  %v2101 = vunpack.c.l.b16 %v47
  %v2102 = vunpack.c.l.b16 %v48
  %v2103 = vunpack.c.l.b16 %v49
  %v2104 = vunpack.c.l.b16 %v50
  %v2105 = vunpack.c.l.b16 %v51
  %v2106 = vunpack.c.l.b16 %v52
  %v2107 = vunpack.c.l.b16 %v53
  %v2108 = vunpack.c.l.b16 %v54
  %v2109 = vunpack.c.l.b16 %v55
  %v2110 = vunpack.c.l.b16 %v56
  %v2111 = vunpack.c.l.b16 %v57
  %v2112 = vunpack.c.l.b16 %v58
  %v2113 = vunpack.c.l.b16 %v59
  %v2114 = vunpack.c.l.b16 %v60
  %v2115 = vunpack.c.l.b16 %v61
  %v2116 = vunpack.c.l.b16 %v62
  %v2117 = vunpack.c.l.b16 %v63
  %v2118 = vunpack.c.l.b16 %v64
  %v2119 = vunpack.c.l.b16 %v65
  %v2120 = vunpack.c.l.b16 %v66
  %v2121 = vunpack.c.l.b16 %v67
  %v2122 = vunpack.c.l.b16 %v68
  %v2123 = vunpack.c.l.b16 %v69
  %v2124 = vunpack.c.l.b16 %v70
  %v2125 = vunpack.c.l.b16 %v71
  %v2126 = vunpack.c.l.b16 %v72
  %v2127 = vunpack.c.l.b16 %v73
  %v2128 = vunpack.c.l.b16 %v74
  %v2129 = vunpack.c.l.b16 %v75
  %v2130 = vunpack.c.l.b16 %v76
  %v2131 = vunpack.c.l.b16 %v77
  %v2132 = vunpack.c.l.b16 %v78
  %v2133 = vunpack.c.l.b16 %v79
  %v2134 = vunpack.c.l.b16 %v80
  %v2135 = vunpack.c.l.b16 %v81
  %v2136 = vunpack.c.l.b16 %v82
  %v2137 = vunpack.c.l.b16 %v83
  %v2138 = vunpack.c.l.b16 %v84
  %v2139 = vunpack.c.l.b16 %v85
  %v2140 = vunpack.c.l.b16 %v86
  %v2141 = vunpack.c.l.b16 %v87
  %v2142 = vunpack.c.l.b16 %v88
  %v2143 = vunpack.c.l.b16 %v89
  %v2144 = vunpack.c.l.b16 %v90
  %v2145 = vunpack.c.l.b16 %v91
  %v2146 = vunpack.c.l.b16 %v92
  %v2147 = vunpack.c.l.b16 %v93
  %v2148 = vunpack.c.l.b16 %v94
  %v2149 = vunpack.c.l.b16 %v95
  %v2150 = vunpack.c.l.b16 %v96
  %v2151 = vunpack.c.l.b16 %v97
  %v2152 = vunpack.c.l.b16 %v98
  %v2153 = vunpack.c.l.b16 %v99
  %v2154 = vunpack.c.l.b16 %v100
  %v2155 = vunpack.c.l.b16 %v101
  %v2156 = vunpack.c.l.b16 %v102
  %v2157 = vunpack.c.l.b16 %v103
  %v2158 = vunpack.c.l.b16 %v104
  %v2159 = vunpack.c.l.b16 %v105
  %v2160 = vunpack.c.l.b16 %v106
  %v2161 = vunpack.c.l.b16 %v107
  %v2162 = vunpack.c.l.b16 %v108
  %v2163 = vunpack.c.l.b16 %v109
  %v2164 = vunpack.c.l.b16 %v110
  %v2165 = vunpack.c.l.b16 %v111
  %v2166 = vunpack.c.l.b16 %v112
  %v2167 = vunpack.c.l.b16 %v113
  %v2168 = vunpack.c.l.b16 %v114
  %v2169 = vunpack.c.l.b16 %v115
  %v2170 = vunpack.c.l.b16 %v116
  %v2171 = vunpack.c.l.b16 %v117
  %v2172 = vunpack.c.l.b16 %v118
  %v2173 = vunpack.c.l.b16 %v119
  %v2174 = vunpack.c.l.b16 %v120
  %v2175 = vunpack.c.l.b16 %v121
  %v2176 = vunpack.c.l.b16 %v122
  %v2177 = vunpack.c.l.b16 %v123
  %v2178 = vunpack.c.l.b16 %v124
  %v2179 = vunpack.c.l.b16 %v125
  %v2180 = vunpack.c.l.b16 %v126
  %v2181 = vunpack.c.l.b16 %v127
  %v2182 = vunpack.c.l.b16 %v128
  %v2183 = vunpack.c.l.b16 %v129
  %v2184 = vunpack.c.l.b16 %v130
  %v2185 = vunpack.c.l.b16 %v131
  %v2186 = vunpack.c.l.b16 %v132
  %v2187 = vunpack.c.l.b16 %v133
  %v2188 = vunpack.c.l.b16 %v134
  %v2189 = vunpack.c.l.b16 %v135
  %v2190 = vunpack.c.l.b16 %v136
  %v2191 = vunpack.c.l.b16 %v137
  %v2192 = vunpack.c.l.b16 %v138
  %v2193 = vunpack.c.l.b16 %v139
  %v2194 = vunpack.c.l.b16 %v140
  %v2195 = vunpack.c.l.b16 %v141
  %v2196 = vunpack.c.l.b16 %v142
  %v2197 = vunpack.c.l.b16 %v143
  %v2198 = vunpack.c.l.b16 %v144
  %v2199 = vunpack.c.l.b16 %v145
  %v2200 = vunpack.c.l.b16 %v146
  %v2201 = vunpack.c.l.b16 %v147
  %v2202 = vunpack.c.l.b16 %v148
  %v2203 = vunpack.c.l.b16 %v149
  %v2204 = vunpack.c.l.b16 %v150
  %v2205 = vunpack.c.l.b16 %v151
  %v2206 = vunpack.c.l.b16 %v152
  %v2207 = vunpack.c.l.b16 %v153
  %v2208 = vunpack.c.l.b16 %v154
  %v2209 = vunpack.c.l.b16 %v155
  %v2210 = vunpack.c.l.b16 %v156
  %v2211 = vunpack.c.l.b16 %v157
  %v2212 = vunpack.c.l.b16 %v158
  %v2213 = vunpack.c.l.b16 %v159
  %v2214 = vunpack.c.l.b16 %v160
  %v2215 = vunpack.c.l.b16 %v161
  %v2216 = vunpack.c.l.b16 %v162
  %v2217 = vunpack.c.l.b16 %v163
  %v2218 = vunpack.c.l.b16 %v164
  %v2219 = vunpack.c.l.b16 %v165
  %v2220 = vunpack.c.l.b16 %v166
  %v2221 = vunpack.c.l.b16 %v167
  %v2222 = vunpack.c.l.b16 %v168
  %v2223 = vunpack.c.l.b16 %v169
  %v2224 = vunpack.c.l.b16 %v170
  %v2225 = vunpack.c.l.b16 %v171
  %v2226 = vunpack.c.l.b16 %v172
  %v2227 = vunpack.c.l.b16 %v173
  %v2228 = vunpack.c.l.b16 %v174
  %v2229 = vunpack.c.l.b16 %v175
  %v2230 = vunpack.c.l.b16 %v176
  %v2231 = vunpack.c.l.b16 %v177
  %v2232 = vunpack.c.l.b16 %v178
  %v2233 = vunpack.c.l.b16 %v179
  %v2234 = vunpack.c.l.b16 %v180
  %v2235 = vunpack.c.l.b16 %v181
  %v2236 = vunpack.c.l.b16 %v182
  %v2237 = vunpack.c.l.b16 %v183
  %v2238 = vunpack.c.l.b16 %v184
  %v2239 = vunpack.c.l.b16 %v185
  %v2240 = vunpack.c.l.b16 %v186
  %v2241 = vunpack.c.l.b16 %v187
  %v2242 = vunpack.c.l.b16 %v188
  %v2243 = vunpack.c.l.b16 %v189
  %v2244 = vunpack.c.l.b16 %v190
  %v2245 = vunpack.c.l.b16 %v191
  %v2246 = vunpack.c.l.b16 %v192
  %v2247 = vunpack.c.l.b16 %v193
  %v2248 = vunpack.c.l.b16 %v194
  %v2249 = vunpack.c.l.b16 %v195
  %v2250 = vunpack.c.l.b16 %v196
  %v2251 = vunpack.c.l.b16 %v197
  %v2252 = vunpack.c.l.b16 %v198
  %v2253 = vunpack.c.l.b16 %v199
  %v2254 = vunpack.c.l.b16 %v200
  %v2255 = vunpack.c.l.b16 %v201
  %v2256 = vunpack.c.l.b16 %v202
  %v2257 = vunpack.c.l.b16 %v203
  %v2258 = vunpack.c.l.b16 %v204
  %v2259 = vunpack.c.l.b16 %v205
  %v2260 = vunpack.c.l.b16 %v206
  %v2261 = vunpack.c.l.b16 %v207
  %v2262 = vunpack.c.l.b16 %v208
  %v2263 = vunpack.c.l.b16 %v209
  %v2264 = vunpack.c.l.b16 %v210
  %v2265 = vunpack.c.l.b16 %v211
  %v2266 = vunpack.c.l.b16 %v212
  %v2267 = vunpack.c.l.b16 %v213
  %v2268 = vunpack.c.l.b16 %v214
  %v2269 = vunpack.c.l.b16 %v215
  %v2270 = vunpack.c.l.b16 %v216
  %v2271 = vunpack.c.l.b16 %v217
  %v2272 = vunpack.c.l.b16 %v218
  %v2273 = vunpack.c.l.b16 %v219
  %v2274 = vunpack.c.l.b16 %v220
  %v2275 = vunpack.c.l.b16 %v221
  %v2276 = vunpack.c.l.b16 %v222
  %v2277 = vunpack.c.l.b16 %v223
  %v2278 = vunpack.c.l.b16 %v224
  %v2279 = vunpack.c.l.b16 %v225
  %v2280 = vunpack.c.l.b16 %v226
  %v2281 = vunpack.c.l.b16 %v227
  %v2282 = vunpack.c.l.b16 %v228
  %v2283 = vunpack.c.l.b16 %v229
  %v2284 = vunpack.c.l.b16 %v230
  %v2285 = vunpack.c.l.b16 %v231
  %v2286 = vunpack.c.l.b16 %v232
  %v2287 = vunpack.c.l.b16 %v233
  %v2288 = vunpack.c.l.b16 %v234
  %v2289 = vunpack.c.l.b16 %v235
  %v2290 = vunpack.c.l.b16 %v236
  %v2291 = vunpack.c.l.b16 %v237
  %v2292 = vunpack.c.l.b16 %v238
  %v2293 = vunpack.c.l.b16 %v239
  %v2294 = vunpack.c.l.b16 %v240
  %v2295 = vunpack.c.l.b16 %v241
  %v2296 = vunpack.c.l.b16 %v242
  %v2297 = vunpack.c.l.b16 %v243
  %v2298 = vunpack.c.l.b16 %v244
  %v2299 = vunpack.c.l.b16 %v245
  %v2300 = vunpack.c.l.b16 %v246
  %v2301 = vunpack.c.l.b16 %v247
  %v2302 = vunpack.c.l.b16 %v248
  %v2303 = vunpack.c.l.b16 %v249
  %v2304 = vunpack.c.l.b16 %v250
  %v2305 = vunpack.c.l.b16 %v251
  %v2306 = vunpack.c.l.b16 %v252
  %v2307 = vunpack.c.l.b16 %v253
  %v2308 = vunpack.c.l.b16 %v254
  %v2309 = vunpack.c.l.b16 %v255
  %v2310 = vunpack.c.l.b16 %v256
  %v2311 = vunpack.c.l.b16 %v257
  %v2312 = vunpack.c.l.b16 %v258
  %v2313 = vunpack.c.l.b16 %v259
  %v2314 = vunpack.c.l.b16 %v260
  %v2315 = vunpack.c.l.b16 %v261
  %v2316 = vunpack.c.l.b16 %v262
  %v2317 = vunpack.c.l.b16 %v263
  %v2318 = vunpack.c.l.b16 %v264
  %v2319 = vunpack.c.l.b16 %v265
  %v2320 = vunpack.c.l.b16 %v266
  %v2321 = vunpack.c.l.b16 %v267
  %v2322 = vunpack.c.l.b16 %v268
  %v2323 = vunpack.c.l.b16 %v269
  %v2324 = vunpack.c.l.b16 %v270
  %v2325 = vunpack.c.l.b16 %v271
  %v2326 = vunpack.c.l.b16 %v272
  %v2327 = vunpack.c.l.b16 %v273
  %v2328 = vunpack.c.l.b16 %v274
  %v2329 = vunpack.c.l.b16 %v275
  %v2330 = vunpack.c.l.b16 %v276
  %v2331 = vunpack.c.l.b16 %v277
  %v2332 = vunpack.c.l.b16 %v278
  %v2333 = vunpack.c.l.b16 %v279
  %v2334 = vunpack.c.l.b16 %v280
  %v2335 = vunpack.c.l.b16 %v281
  %v2336 = vunpack.c.l.b16 %v282
  %v2337 = vunpack.c.l.b16 %v283
  %v2338 = vunpack.c.l.b16 %v284
  %v2339 = vunpack.c.l.b16 %v285
  %v2340 = vunpack.c.l.b16 %v286
  %v2341 = vunpack.c.l.b16 %v287
  %v2342 = vunpack.c.l.b16 %v288
  %v2343 = vunpack.c.l.b16 %v289
  %v2344 = vunpack.c.l.b16 %v290
  %v2345 = vunpack.c.l.b16 %v291
  %v2346 = vunpack.c.l.b16 %v292
  %v2347 = vunpack.c.l.b16 %v293
  %v2348 = vunpack.c.l.b16 %v294
  %v2349 = vunpack.c.l.b16 %v295
  %v2350 = vunpack.c.l.b16 %v296
  %v2351 = vunpack.c.l.b16 %v297
  %v2352 = vunpack.c.l.b16 %v298
  %v2353 = vunpack.c.l.b16 %v299
  %v2354 = vunpack.c.l.b16 %v300
  %v2355 = vunpack.c.l.b16 %v301
  %v2356 = vunpack.c.l.b16 %v302
  %v2357 = vunpack.c.l.b16 %v303
  %v2358 = vunpack.c.l.b16 %v304
  %v2359 = vunpack.c.l.b16 %v305
  %v2360 = vunpack.c.l.b16 %v306
  %v2361 = vunpack.c.l.b16 %v307
  %v2362 = vunpack.c.l.b16 %v308
  %v2363 = vunpack.c.l.b16 %v309
  %v2364 = vunpack.c.l.b16 %v310
  %v2365 = vunpack.c.l.b16 %v311
  %v2366 = vunpack.c.l.b16 %v312
  %v2367 = vunpack.c.l.b16 %v313
  %v2368 = vunpack.c.l.b16 %v314
  %v2369 = vunpack.c.l.b16 %v315
  %v2370 = vunpack.c.l.b16 %v316
  %v2371 = vunpack.c.l.b16 %v317
  %v2372 = vunpack.c.l.b16 %v318
  %v2373 = vunpack.c.l.b16 %v319
  %v2374 = vunpack.c.l.b16 %v320
  %v2375 = vunpack.c.l.b16 %v321
  %v2376 = vunpack.c.l.b16 %v322
  %v2377 = vunpack.c.l.b16 %v323
  %v2378 = vunpack.c.l.b16 %v324
  %v2379 = vunpack.c.l.b16 %v325
  %v2380 = vunpack.c.l.b16 %v326
  %v2381 = vunpack.c.l.b16 %v327
  %v2382 = vunpack.c.l.b16 %v328
  %v2383 = vunpack.c.l.b16 %v329
  %v2384 = vunpack.c.l.b16 %v330
  %v2385 = vunpack.c.l.b16 %v331
  %v2386 = vunpack.c.l.b16 %v332
  %v2387 = vunpack.c.l.b16 %v333
  %v2388 = vunpack.c.l.b16 %v334
  %v2389 = vunpack.c.l.b16 %v335
  %v2390 = vunpack.c.l.b16 %v336
  %v2391 = vunpack.c.l.b16 %v337
  %v2392 = vunpack.c.l.b16 %v338
  %v2393 = vunpack.c.l.b16 %v339
  %v2394 = vunpack.c.l.b16 %v340
  %v2395 = vunpack.c.l.b16 %v341
  %v2396 = vunpack.c.l.b16 %v342
  %v2397 = vunpack.c.l.b16 %v343
  %v2398 = vunpack.c.l.b16 %v344
  %v2399 = vunpack.c.l.b16 %v345
  %v2400 = vunpack.c.l.b16 %v346
  %v2401 = vunpack.c.l.b16 %v347
  %v2402 = vunpack.c.l.b16 %v348
  %v2403 = vunpack.c.l.b16 %v349
  %v2404 = vunpack.c.l.b16 %v350
  %v2405 = vunpack.c.l.b16 %v351
  %v2406 = vunpack.c.l.b16 %v352
  %v2407 = vunpack.c.l.b16 %v353
  %v2408 = vunpack.c.l.b16 %v354
  %v2409 = vunpack.c.l.b16 %v355
  %v2410 = vunpack.c.l.b16 %v356
  %v2411 = vunpack.c.l.b16 %v357
  %v2412 = vunpack.c.l.b16 %v358
  %v2413 = vunpack.c.l.b16 %v359
  %v2414 = vunpack.c.l.b16 %v360
  %v2415 = vunpack.c.l.b16 %v361
  %v2416 = vunpack.c.l.b16 %v362
  %v2417 = vunpack.c.l.b16 %v363
  %v2418 = vunpack.c.l.b16 %v364
  %v2419 = vunpack.c.l.b16 %v365
  %v2420 = vunpack.c.l.b16 %v366
  %v2421 = vunpack.c.l.b16 %v367
  %v2422 = vunpack.c.l.b16 %v368
  %v2423 = vunpack.c.l.b16 %v369
  %v2424 = vunpack.c.l.b16 %v370
  %v2425 = vunpack.c.l.b16 %v371
  %v2426 = vunpack.c.l.b16 %v372
  %v2427 = vunpack.c.l.b16 %v373
  %v2428 = vunpack.c.l.b16 %v374
  %v2429 = vunpack.c.l.b16 %v375
  %v2430 = vunpack.c.l.b16 %v376
  %v2431 = vunpack.c.l.b16 %v377
  %v2432 = vunpack.c.l.b16 %v378
  %v2433 = vunpack.c.l.b16 %v379
  %v2434 = vunpack.c.l.b16 %v380
  %v2435 = vunpack.c.l.b16 %v381
  %v2436 = vunpack.c.l.b16 %v382
  %v2437 = vunpack.c.l.b16 %v383
  %v2438 = vunpack.c.l.b16 %v384
  %v2439 = vunpack.c.l.b16 %v385
  %v2440 = vunpack.c.l.b16 %v386
  %v2441 = vunpack.c.l.b16 %v387
  %v2442 = vunpack.c.l.b16 %v388
  %v2443 = vunpack.c.l.b16 %v389
  %v2444 = vunpack.c.l.b16 %v390
  %v2445 = vunpack.c.l.b16 %v391
  %v2446 = vunpack.c.l.b16 %v392
  %v2447 = vunpack.c.l.b16 %v393
  %v2448 = vunpack.c.l.b16 %v394
  %v2449 = vunpack.c.l.b16 %v395
  %v2450 = vunpack.c.l.b16 %v396
  %v2451 = vunpack.c.l.b16 %v397
  %v2452 = vunpack.c.l.b16 %v398
  %v2453 = vunpack.c.l.b16 %v399
  %v2454 = vunpack.c.l.b16 %v400
  %v2455 = vunpack.c.l.b16 %v401
  %v2456 = vunpack.c.l.b16 %v402
  %v2457 = vunpack.c.l.b16 %v403
  %v2458 = vunpack.c.l.b16 %v404
  %v2459 = vunpack.c.l.b16 %v405
  %v2460 = vunpack.c.l.b16 %v406
  %v2461 = vunpack.c.l.b16 %v407
  %v2462 = vunpack.c.l.b16 %v408
  %v2463 = vunpack.c.l.b16 %v409
  %v2464 = vunpack.c.l.b16 %v410
  %v2465 = vunpack.c.l.b16 %v411
  %v2466 = vunpack.c.l.b16 %v412
  %v2467 = vunpack.c.l.b16 %v413
  %v2468 = vunpack.c.l.b16 %v414
  %v2469 = vunpack.c.l.b16 %v415
  %v2470 = vunpack.c.l.b16 %v416
  %v2471 = vunpack.c.l.b16 %v417
  %v2472 = vunpack.c.l.b16 %v418
  %v2473 = vunpack.c.l.b16 %v419
  %v2474 = vunpack.c.l.b16 %v420
  %v2475 = vunpack.c.l.b16 %v421
  %v2476 = vunpack.c.l.b16 %v422
  %v2477 = vunpack.c.l.b16 %v423
  %v2478 = vunpack.c.l.b16 %v424
  %v2479 = vunpack.c.l.b16 %v425
  %v2480 = vunpack.c.l.b16 %v426
  %v2481 = vunpack.c.l.b16 %v427
  %v2482 = vunpack.c.l.b16 %v428
  %v2483 = vunpack.c.l.b16 %v429
  %v2484 = vunpack.c.l.b16 %v430
  %v2485 = vunpack.c.l.b16 %v431
  %v2486 = vunpack.c.l.b16 %v432
  %v2487 = vunpack.c.l.b16 %v433
  %v2488 = vunpack.c.l.b16 %v434
  %v2489 = vunpack.c.l.b16 %v435
  %v2490 = vunpack.c.l.b16 %v436
  %v2491 = vunpack.c.l.b16 %v437
  %v2492 = vunpack.c.l.b16 %v438
  %v2493 = vunpack.c.l.b16 %v439
  %v2494 = vunpack.c.l.b16 %v440
  %v2495 = vunpack.c.l.b16 %v441
  %v2496 = vunpack.c.l.b16 %v442
  %v2497 = vunpack.c.l.b16 %v443
  %v2498 = vunpack.c.l.b16 %v444
  %v2499 = vunpack.c.l.b16 %v445
  %v2500 = vunpack.c.l.b16 %v446
  %v2501 = vunpack.c.l.b16 %v447
  %v2502 = vunpack.c.l.b16 %v448
  %v2503 = vunpack.c.l.b16 %v449
  %v2504 = vunpack.c.l.b16 %v450
  %v2505 = vunpack.c.l.b16 %v451
  %v2506 = vunpack.c.l.b16 %v452
  %v2507 = vunpack.c.l.b16 %v453
  %v2508 = vunpack.c.l.b16 %v454
  %v2509 = vunpack.c.l.b16 %v455
  %v2510 = vunpack.c.l.b16 %v456
  %v2511 = vunpack.c.l.b16 %v457
  %v2512 = vunpack.c.l.b16 %v458
  %v2513 = vunpack.c.l.b16 %v459
  %v2514 = vunpack.c.l.b16 %v460
  %v2515 = vunpack.c.l.b16 %v461
  %v2516 = vunpack.c.l.b16 %v462
  %v2517 = vunpack.c.l.b16 %v463
  %v2518 = vunpack.c.l.b16 %v464
  %v2519 = vunpack.c.l.b16 %v465
  %v2520 = vunpack.c.l.b16 %v466
  %v2521 = vunpack.c.l.b16 %v467
  %v2522 = vunpack.c.l.b16 %v468
  %v2523 = vunpack.c.l.b16 %v469
  %v2524 = vunpack.c.l.b16 %v470
  %v2525 = vunpack.c.l.b16 %v471
  %v2526 = vunpack.c.l.b16 %v472
  %v2527 = vunpack.c.l.b16 %v473
  %v2528 = vunpack.c.l.b16 %v474
  %v2529 = vunpack.c.l.b16 %v475
  %v2530 = vunpack.c.l.b16 %v476
  %v2531 = vunpack.c.l.b16 %v477
  %v2532 = vunpack.c.l.b16 %v478
  %v2533 = vunpack.c.l.b16 %v479
  %v2534 = vunpack.c.l.b16 %v480
  %v2535 = vunpack.c.l.b16 %v481
  %v2536 = vunpack.c.l.b16 %v482
  %v2537 = vunpack.c.l.b16 %v483
  %v2538 = vunpack.c.l.b16 %v484
  %v2539 = vunpack.c.l.b16 %v485
  %v2540 = vunpack.c.l.b16 %v486
  %v2541 = vunpack.c.l.b16 %v487
  %v2542 = vunpack.c.l.b16 %v488
  %v2543 = vunpack.c.l.b16 %v489
  %v2544 = vunpack.c.l.b16 %v490
  %v2545 = vunpack.c.l.b16 %v491
  %v2546 = vunpack.c.l.b16 %v492
  %v2547 = vunpack.c.l.b16 %v493
  %v2548 = vunpack.c.l.b16 %v494
  %v2549 = vunpack.c.l.b16 %v495
  %v2550 = vunpack.c.l.b16 %v496
  %v2551 = vunpack.c.l.b16 %v497
  %v2552 = vunpack.c.l.b16 %v498
  %v2553 = vunpack.c.l.b16 %v499
  %v2554 = vunpack.c.l.b16 %v500
  %v2555 = vunpack.c.l.b16 %v501
  %v2556 = vunpack.c.l.b16 %v502
  %v2557 = vunpack.c.l.b16 %v503
  %v2558 = vunpack.c.l.b16 %v504
  %v2559 = vunpack.c.l.b16 %v505
  %v2560 = vunpack.c.l.b16 %v506
  %v2561 = vunpack.c.l.b16 %v507
  %v2562 = vunpack.c.l.b16 %v508
  %v2563 = vunpack.c.l.b16 %v509
  %v2564 = vunpack.c.l.b16 %v510
  %v2565 = vunpack.c.l.b16 %v511
  %v2566 = vunpack.c.l.b16 %v512
  %v2567 = vunpack.c.l.b16 %v513
  %v2568 = vunpack.c.l.b16 %v514
  %v2569 = vunpack.c.l.b16 %v515
  %v2570 = vunpack.c.l.b16 %v516
  %v2571 = vunpack.c.l.b16 %v517
  %v2572 = vunpack.c.l.b16 %v518
  %v2573 = vunpack.c.l.b16 %v519
  %v2574 = vunpack.c.l.b16 %v520
  %v2575 = vunpack.c.l.b16 %v521
  %v2576 = vunpack.c.l.b16 %v522
  %v2577 = vunpack.c.l.b16 %v523
  %v2578 = vunpack.c.l.b16 %v524
  %v2579 = vunpack.c.l.b16 %v525
  %v2580 = vunpack.c.l.b16 %v526
  %v2581 = vunpack.c.l.b16 %v527
  %v2582 = vunpack.c.l.b16 %v528
  %v2583 = vunpack.c.l.b16 %v529
  %v2584 = vunpack.c.l.b16 %v530
  %v2585 = vunpack.c.l.b16 %v531
  %v2586 = vunpack.c.l.b16 %v532
  %v2587 = vunpack.c.l.b16 %v533
  %v2588 = vunpack.c.l.b16 %v534
  %v2589 = vunpack.c.l.b16 %v535
  %v2590 = vunpack.c.l.b16 %v536
  %v2591 = vunpack.c.l.b16 %v537
  %v2592 = vunpack.c.l.b16 %v538
  %v2593 = vunpack.c.l.b16 %v539
  %v2594 = vunpack.c.l.b16 %v540
  %v2595 = vunpack.c.l.b16 %v541
  %v2596 = vunpack.c.l.b16 %v542
  %v2597 = vunpack.c.l.b16 %v543
  %v2598 = vunpack.c.l.b16 %v544
  %v2599 = vunpack.c.l.b16 %v545
  %v2600 = vunpack.c.l.b16 %v546
  %v2601 = vunpack.c.l.b16 %v547
  %v2602 = vunpack.c.l.b16 %v548
  %v2603 = vunpack.c.l.b16 %v549
  %v2604 = vunpack.c.l.b16 %v550
  %v2605 = vunpack.c.l.b16 %v551
  %v2606 = vunpack.c.l.b16 %v552
  %v2607 = vunpack.c.l.b16 %v553
  %v2608 = vunpack.c.l.b16 %v554
  %v2609 = vunpack.c.l.b16 %v555
  %v2610 = vunpack.c.l.b16 %v556
  %v2611 = vunpack.c.l.b16 %v557
  %v2612 = vunpack.c.l.b16 %v558
  %v2613 = vunpack.c.l.b16 %v559
  %v2614 = vunpack.c.l.b16 %v560
  %v2615 = vunpack.c.l.b16 %v561
  %v2616 = vunpack.c.l.b16 %v562
  %v2617 = vunpack.c.l.b16 %v563
  %v2618 = vunpack.c.l.b16 %v564
  %v2619 = vunpack.c.l.b16 %v565
  %v2620 = vunpack.c.l.b16 %v566
  %v2621 = vunpack.c.l.b16 %v567
  %v2622 = vunpack.c.l.b16 %v568
  %v2623 = vunpack.c.l.b16 %v569
  %v2624 = vunpack.c.l.b16 %v570
  %v2625 = vunpack.c.l.b16 %v571
  %v2626 = vunpack.c.l.b16 %v572
  %v2627 = vunpack.c.l.b16 %v573
  %v2628 = vunpack.c.l.b16 %v574
  %v2629 = vunpack.c.l.b16 %v575
  %v2630 = vunpack.c.l.b16 %v576
  %v2631 = vunpack.c.l.b16 %v577
  %v2632 = vunpack.c.l.b16 %v578
  %v2633 = vunpack.c.l.b16 %v579
  %v2634 = vunpack.c.l.b16 %v580
  %v2635 = vunpack.c.l.b16 %v581
  %v2636 = vunpack.c.l.b16 %v582
  %v2637 = vunpack.c.l.b16 %v583
  %v2638 = vunpack.c.l.b16 %v584
  %v2639 = vunpack.c.l.b16 %v585
  %v2640 = vunpack.c.l.b16 %v586
  %v2641 = vunpack.c.l.b16 %v587
  %v2642 = vunpack.c.l.b16 %v588
  %v2643 = vunpack.c.l.b16 %v589
  %v2644 = vunpack.c.l.b16 %v590
  %v2645 = vunpack.c.l.b16 %v591
  %v2646 = vunpack.c.l.b16 %v592
  %v2647 = vunpack.c.l.b16 %v593
  %v2648 = vunpack.c.l.b16 %v594
  %v2649 = vunpack.c.l.b16 %v595
  %v2650 = vunpack.c.l.b16 %v596
  %v2651 = vunpack.c.l.b16 %v597
  %v2652 = vunpack.c.l.b16 %v598
  %v2653 = vunpack.c.l.b16 %v599
  %v2654 = vunpack.c.l.b16 %v600
  %v2655 = vunpack.c.l.b16 %v601
  %v2656 = vunpack.c.l.b16 %v602
  %v2657 = vunpack.c.l.b16 %v603
  %v2658 = vunpack.c.l.b16 %v604
  %v2659 = vunpack.c.l.b16 %v605
  %v2660 = vunpack.c.l.b16 %v606
  %v2661 = vunpack.c.l.b16 %v607
  %v2662 = vunpack.c.l.b16 %v608
  %v2663 = vunpack.c.l.b16 %v609
  %v2664 = vunpack.c.l.b16 %v610
  %v2665 = vunpack.c.l.b16 %v611
  %v2666 = vunpack.c.l.b16 %v612
  %v2667 = vunpack.c.l.b16 %v613
  %v2668 = vunpack.c.l.b16 %v614
  %v2669 = vunpack.c.l.b16 %v615
  %v2670 = vunpack.c.l.b16 %v616
  %v2671 = vunpack.c.l.b16 %v617
  %v2672 = vunpack.c.l.b16 %v618
  %v2673 = vunpack.c.l.b16 %v619
  %v2674 = vunpack.c.l.b16 %v620
  %v2675 = vunpack.c.l.b16 %v621
  %v2676 = vunpack.c.l.b16 %v622
  %v2677 = vunpack.c.l.b16 %v623
  %v2678 = vunpack.c.l.b16 %v624
  %v2679 = vunpack.c.l.b16 %v625
  %v2680 = vunpack.c.l.b16 %v626
  %v2681 = vunpack.c.l.b16 %v627
  %v2682 = vunpack.c.l.b16 %v628
  %v2683 = vunpack.c.l.b16 %v629
  %v2684 = vunpack.c.l.b16 %v630
  %v2685 = vunpack.c.l.b16 %v631
  %v2686 = vunpack.c.l.b16 %v632
  %v2687 = vunpack.c.l.b16 %v633
  %v2688 = vunpack.c.l.b16 %v634
  %v2689 = vunpack.c.l.b16 %v635
  %v2690 = vunpack.c.l.b16 %v636
  %v2691 = vunpack.c.l.b16 %v637
  %v2692 = vunpack.c.l.b16 %v638
  %v2693 = vunpack.c.l.b16 %v639
  %v2694 = vunpack.c.l.b16 %v640
  %v2695 = vunpack.c.l.b16 %v641
  %v2696 = vunpack.c.l.b16 %v642
  %v2697 = vunpack.c.l.b16 %v643
  %v2698 = vunpack.c.l.b16 %v644
  %v2699 = vunpack.c.l.b16 %v645
  %v2700 = vunpack.c.l.b16 %v646
  %v2701 = vunpack.c.l.b16 %v647
  %v2702 = vunpack.c.l.b16 %v648
  %v2703 = vunpack.c.l.b16 %v649
  %v2704 = vunpack.c.l.b16 %v650
  %v2705 = vunpack.c.l.b16 %v651
  %v2706 = vunpack.c.l.b16 %v652
  %v2707 = vunpack.c.l.b16 %v653
  %v2708 = vunpack.c.l.b16 %v654
  %v2709 = vunpack.c.l.b16 %v655
  %v2710 = vunpack.c.l.b16 %v656
  %v2711 = vunpack.c.l.b16 %v657
  %v2712 = vunpack.c.l.b16 %v658
  %v2713 = vunpack.c.l.b16 %v659
  %v2714 = vunpack.c.l.b16 %v660
  %v2715 = vunpack.c.l.b16 %v661
  %v2716 = vunpack.c.l.b16 %v662
  %v2717 = vunpack.c.l.b16 %v663
  %v2718 = vunpack.c.l.b16 %v664
  %v2719 = vunpack.c.l.b16 %v665
  %v2720 = vunpack.c.l.b16 %v666
  %v2721 = vunpack.c.l.b16 %v667
  %v2722 = vunpack.c.l.b16 %v668
  %v2723 = vunpack.c.l.b16 %v669
  %v2724 = vunpack.c.l.b16 %v670
  %v2725 = vunpack.c.l.b16 %v671
  %v2726 = vunpack.c.l.b16 %v672
  %v2727 = vunpack.c.l.b16 %v673
  %v2728 = vunpack.c.l.b16 %v674
  %v2729 = vunpack.c.l.b16 %v675
  %v2730 = vunpack.c.l.b16 %v676
  %v2731 = vunpack.c.l.b16 %v677
  %v2732 = vunpack.c.l.b16 %v678
  %v2733 = vunpack.c.l.b16 %v679
  %v2734 = vunpack.c.l.b16 %v680
  %v2735 = vunpack.c.l.b16 %v681
  %v2736 = vunpack.c.l.b16 %v682
  %v2737 = vunpack.c.l.b16 %v683
  %v2738 = vunpack.c.l.b16 %v684
  %v2739 = vunpack.c.l.b16 %v685
  %v2740 = vunpack.c.l.b16 %v686
  %v2741 = vunpack.c.l.b16 %v687
  %v2742 = vunpack.c.l.b16 %v688
  %v2743 = vunpack.c.l.b16 %v689
  %v2744 = vunpack.c.l.b16 %v690
  %v2745 = vunpack.c.l.b16 %v691
  %v2746 = vunpack.c.l.b16 %v692
  %v2747 = vunpack.c.l.b16 %v693
  %v2748 = vunpack.c.l.b16 %v694
  %v2749 = vunpack.c.l.b16 %v695
  %v2750 = vunpack.c.l.b16 %v696
  %v2751 = vunpack.c.l.b16 %v697
  %v2752 = vunpack.c.l.b16 %v698
  %v2753 = vunpack.c.l.b16 %v699
  %v2754 = vunpack.c.l.b16 %v700
  %v2755 = vunpack.c.l.b16 %v701
  %v2756 = vunpack.c.l.b16 %v702
  %v2757 = vunpack.c.l.b16 %v703
  %v2758 = vunpack.c.l.b16 %v704
  %v2759 = vunpack.c.l.b16 %v705
  %v2760 = vunpack.c.l.b16 %v706
  %v2761 = vunpack.c.l.b16 %v707
  %v2762 = vunpack.c.l.b16 %v708
  %v2763 = vunpack.c.l.b16 %v709
  %v2764 = vunpack.c.l.b16 %v710
  %v2765 = vunpack.c.l.b16 %v711
  %v2766 = vunpack.c.l.b16 %v712
  %v2767 = vunpack.c.l.b16 %v713
  %v2768 = vunpack.c.l.b16 %v714
  %v2769 = vunpack.c.l.b16 %v715
  %v2770 = vunpack.c.l.b16 %v716
  %v2771 = vunpack.c.l.b16 %v717
  %v2772 = vunpack.c.l.b16 %v718
  %v2773 = vunpack.c.l.b16 %v719
  %v2774 = vunpack.c.l.b16 %v720
  %v2775 = vunpack.c.l.b16 %v721
  %v2776 = vunpack.c.l.b16 %v722
  %v2777 = vunpack.c.l.b16 %v723
  %v2778 = vunpack.c.l.b16 %v724
  %v2779 = vunpack.c.l.b16 %v725
  %v2780 = vunpack.c.l.b16 %v726
  %v2781 = vunpack.c.l.b16 %v727
  %v2782 = vunpack.c.l.b16 %v728
  %v2783 = vunpack.c.l.b16 %v729
  %v2784 = vunpack.c.l.b16 %v730
  %v2785 = vunpack.c.l.b16 %v731
  %v2786 = vunpack.c.l.b16 %v732
  %v2787 = vunpack.c.l.b16 %v733
  %v2788 = vunpack.c.l.b16 %v734
  %v2789 = vunpack.c.l.b16 %v735
  %v2790 = vunpack.c.l.b16 %v736
  %v2791 = vunpack.c.l.b16 %v737
  %v2792 = vunpack.c.l.b16 %v738
  %v2793 = vunpack.c.l.b16 %v739
  %v2794 = vunpack.c.l.b16 %v740
  %v2795 = vunpack.c.l.b16 %v741
  %v2796 = vunpack.c.l.b16 %v742
  %v2797 = vunpack.c.l.b16 %v743
  %v2798 = vunpack.c.l.b16 %v744
  %v2799 = vunpack.c.l.b16 %v745
  %v2800 = vunpack.c.l.b16 %v746
  %v2801 = vunpack.c.l.b16 %v747
  %v2802 = vunpack.c.l.b16 %v748
  %v2803 = vunpack.c.l.b16 %v749
  %v2804 = vunpack.c.l.b16 %v750
  %v2805 = vunpack.c.l.b16 %v751
  %v2806 = vunpack.c.l.b16 %v752
  %v2807 = vunpack.c.l.b16 %v753
  %v2808 = vunpack.c.l.b16 %v754
  %v2809 = vunpack.c.l.b16 %v755
  %v2810 = vunpack.c.l.b16 %v756
  %v2811 = vunpack.c.l.b16 %v757
  %v2812 = vunpack.c.l.b16 %v758
  %v2813 = vunpack.c.l.b16 %v759
  %v2814 = vunpack.c.l.b16 %v760
  %v2815 = vunpack.c.l.b16 %v761
  %v2816 = vunpack.c.l.b16 %v762
  %v2817 = vunpack.c.l.b16 %v763
  %v2818 = vunpack.c.l.b16 %v764
  %v2819 = vunpack.c.l.b16 %v765
  %v2820 = vunpack.c.l.b16 %v766
  %v2821 = vunpack.c.l.b16 %v767
  %v2822 = vunpack.c.l.b16 %v768
  %v2823 = vunpack.c.l.b16 %v769
  %v2824 = vunpack.c.l.b16 %v770
  %v2825 = vunpack.c.l.b16 %v771
  %v2826 = vunpack.c.l.b16 %v772
  %v2827 = vunpack.c.l.b16 %v773
  %v2828 = vunpack.c.l.b16 %v774
  %v2829 = vunpack.c.l.b16 %v775
  %v2830 = vunpack.c.l.b16 %v776
  %v2831 = vunpack.c.l.b16 %v777
  %v2832 = vunpack.c.l.b16 %v778
  %v2833 = vunpack.c.l.b16 %v779
  %v2834 = vunpack.c.l.b16 %v780
  %v2835 = vunpack.c.l.b16 %v781
  %v2836 = vunpack.c.l.b16 %v782
  %v2837 = vunpack.c.l.b16 %v783
  %v2838 = vunpack.c.l.b16 %v784
  %v2839 = vunpack.c.l.b16 %v785
  %v2840 = vunpack.c.l.b16 %v786
  %v2841 = vunpack.c.l.b16 %v787
  %v2842 = vunpack.c.l.b16 %v788
  %v2843 = vunpack.c.l.b16 %v789
  %v2844 = vunpack.c.l.b16 %v790
  %v2845 = vunpack.c.l.b16 %v791
  %v2846 = vunpack.c.l.b16 %v792
  %v2847 = vunpack.c.l.b16 %v793
  %v2848 = vunpack.c.l.b16 %v794
  %v2849 = vunpack.c.l.b16 %v795
  %v2850 = vunpack.c.l.b16 %v796
  %v2851 = vunpack.c.l.b16 %v797
  %v2852 = vunpack.c.l.b16 %v798
  %v2853 = vunpack.c.l.b16 %v799
  %v2854 = vunpack.c.l.b16 %v800
  %v2855 = vunpack.c.l.b16 %v801
  %v2856 = vunpack.c.l.b16 %v802
  %v2857 = vunpack.c.l.b16 %v803
  %v2858 = vunpack.c.l.b16 %v804
  %v2859 = vunpack.c.l.b16 %v805
  %v2860 = vunpack.c.l.b16 %v806
  %v2861 = vunpack.c.l.b16 %v807
  %v2862 = vunpack.c.l.b16 %v808
  %v2863 = vunpack.c.l.b16 %v809
  %v2864 = vunpack.c.l.b16 %v810
  %v2865 = vunpack.c.l.b16 %v811
  %v2866 = vunpack.c.l.b16 %v812
  %v2867 = vunpack.c.l.b16 %v813
  %v2868 = vunpack.c.l.b16 %v814
  %v2869 = vunpack.c.l.b16 %v815
  %v2870 = vunpack.c.l.b16 %v816
  %v2871 = vunpack.c.l.b16 %v817
  %v2872 = vunpack.c.l.b16 %v818
  %v2873 = vunpack.c.l.b16 %v819
  %v2874 = vunpack.c.l.b16 %v820
  %v2875 = vunpack.c.l.b16 %v821
  %v2876 = vunpack.c.l.b16 %v822
  %v2877 = vunpack.c.l.b16 %v823
  %v2878 = vunpack.c.l.b16 %v824
  %v2879 = vunpack.c.l.b16 %v825
  %v2880 = vunpack.c.l.b16 %v826
  %v2881 = vunpack.c.l.b16 %v827
  %v2882 = vunpack.c.l.b16 %v828
  %v2883 = vunpack.c.l.b16 %v829
  %v2884 = vunpack.c.l.b16 %v830
  %v2885 = vunpack.c.l.b16 %v831
  %v2886 = vunpack.c.l.b16 %v832
  %v2887 = vunpack.c.l.b16 %v833
  %v2888 = vunpack.c.l.b16 %v834
  %v2889 = vunpack.c.l.b16 %v835
  %v2890 = vunpack.c.l.b16 %v836
  %v2891 = vunpack.c.l.b16 %v837
  %v2892 = vunpack.c.l.b16 %v838
  %v2893 = vunpack.c.l.b16 %v839
  %v2894 = vunpack.c.l.b16 %v840
  %v2895 = vunpack.c.l.b16 %v841
  %v2896 = vunpack.c.l.b16 %v842
  %v2897 = vunpack.c.l.b16 %v843
  %v2898 = vunpack.c.l.b16 %v844
  %v2899 = vunpack.c.l.b16 %v845
  %v2900 = vunpack.c.l.b16 %v846
  %v2901 = vunpack.c.l.b16 %v847
  %v2902 = vunpack.c.l.b16 %v848
  %v2903 = vunpack.c.l.b16 %v849
  %v2904 = vunpack.c.l.b16 %v850
  %v2905 = vunpack.c.l.b16 %v851
  %v2906 = vunpack.c.l.b16 %v852
  %v2907 = vunpack.c.l.b16 %v853
  %v2908 = vunpack.c.l.b16 %v854
  %v2909 = vunpack.c.l.b16 %v855
  %v2910 = vunpack.c.l.b16 %v856
  %v2911 = vunpack.c.l.b16 %v857
  %v2912 = vunpack.c.l.b16 %v858
  %v2913 = vunpack.c.l.b16 %v859
  %v2914 = vunpack.c.l.b16 %v860
  %v2915 = vunpack.c.l.b16 %v861
  %v2916 = vunpack.c.l.b16 %v862
  %v2917 = vunpack.c.l.b16 %v863
  %v2918 = vunpack.c.l.b16 %v864
  %v2919 = vunpack.c.l.b16 %v865
  %v2920 = vunpack.c.l.b16 %v866
  %v2921 = vunpack.c.l.b16 %v867
  %v2922 = vunpack.c.l.b16 %v868
  %v2923 = vunpack.c.l.b16 %v869
  %v2924 = vunpack.c.l.b16 %v870
  %v2925 = vunpack.c.l.b16 %v871
  %v2926 = vunpack.c.l.b16 %v872
  %v2927 = vunpack.c.l.b16 %v873
  %v2928 = vunpack.c.l.b16 %v874
  %v2929 = vunpack.c.l.b16 %v875
  %v2930 = vunpack.c.l.b16 %v876
  %v2931 = vunpack.c.l.b16 %v877
  %v2932 = vunpack.c.l.b16 %v878
  %v2933 = vunpack.c.l.b16 %v879
  %v2934 = vunpack.c.l.b16 %v880
  %v2935 = vunpack.c.l.b16 %v881
  %v2936 = vunpack.c.l.b16 %v882
  %v2937 = vunpack.c.l.b16 %v883
  %v2938 = vunpack.c.l.b16 %v884
  %v2939 = vunpack.c.l.b16 %v885
  %v2940 = vunpack.c.l.b16 %v886
  %v2941 = vunpack.c.l.b16 %v887
  %v2942 = vunpack.c.l.b16 %v888
  %v2943 = vunpack.c.l.b16 %v889
  %v2944 = vunpack.c.l.b16 %v890
  %v2945 = vunpack.c.l.b16 %v891
  %v2946 = vunpack.c.l.b16 %v892
  %v2947 = vunpack.c.l.b16 %v893
  %v2948 = vunpack.c.l.b16 %v894
  %v2949 = vunpack.c.l.b16 %v895
  %v2950 = vunpack.c.l.b16 %v896
  %v2951 = vunpack.c.l.b16 %v897
  %v2952 = vunpack.c.l.b16 %v898
  %v2953 = vunpack.c.l.b16 %v899
  %v2954 = vunpack.c.l.b16 %v900
  %v2955 = vunpack.c.l.b16 %v901
  %v2956 = vunpack.c.l.b16 %v902
  %v2957 = vunpack.c.l.b16 %v903
  %v2958 = vunpack.c.l.b16 %v904
  %v2959 = vunpack.c.l.b16 %v905
  %v2960 = vunpack.c.l.b16 %v906
  %v2961 = vunpack.c.l.b16 %v907
  %v2962 = vunpack.c.l.b16 %v908
  %v2963 = vunpack.c.l.b16 %v909
  %v2964 = vunpack.c.l.b16 %v910
  %v2965 = vunpack.c.l.b16 %v911
  %v2966 = vunpack.c.l.b16 %v912
  %v2967 = vunpack.c.l.b16 %v913
  %v2968 = vunpack.c.l.b16 %v914
  %v2969 = vunpack.c.l.b16 %v915
  %v2970 = vunpack.c.l.b16 %v916
  %v2971 = vunpack.c.l.b16 %v917
  %v2972 = vunpack.c.l.b16 %v918
  %v2973 = vunpack.c.l.b16 %v919
  %v2974 = vunpack.c.l.b16 %v920
  %v2975 = vunpack.c.l.b16 %v921
  %v2976 = vunpack.c.l.b16 %v922
  %v2977 = vunpack.c.l.b16 %v923
  %v2978 = vunpack.c.l.b16 %v924
  %v2979 = vunpack.c.l.b16 %v925
  %v2980 = vunpack.c.l.b16 %v926
  %v2981 = vunpack.c.l.b16 %v927
  %v2982 = vunpack.c.l.b16 %v928
  %v2983 = vunpack.c.l.b16 %v929
  %v2984 = vunpack.c.l.b16 %v930
  %v2985 = vunpack.c.l.b16 %v931
  %v2986 = vunpack.c.l.b16 %v932
  %v2987 = vunpack.c.l.b16 %v933
  %v2988 = vunpack.c.l.b16 %v934
  %v2989 = vunpack.c.l.b16 %v935
  %v2990 = vunpack.c.l.b16 %v936
  %v2991 = vunpack.c.l.b16 %v937
  %v2992 = vunpack.c.l.b16 %v938
  %v2993 = vunpack.c.l.b16 %v939
  %v2994 = vunpack.c.l.b16 %v940
  %v2995 = vunpack.c.l.b16 %v941
  %v2996 = vunpack.c.l.b16 %v942
  %v2997 = vunpack.c.l.b16 %v943
  %v2998 = vunpack.c.l.b16 %v944
  %v2999 = vunpack.c.l.b16 %v945
  %v3000 = vunpack.c.l.b16 %v946
  %v3001 = vunpack.c.l.b16 %v947
  %v3002 = vunpack.c.l.b16 %v948
  %v3003 = vunpack.c.l.b16 %v949
  %v3004 = vunpack.c.l.b16 %v950
  %v3005 = vunpack.c.l.b16 %v951
  %v3006 = vunpack.c.l.b16 %v952
  %v3007 = vunpack.c.l.b16 %v953
  %v3008 = vunpack.c.l.b16 %v954
  %v3009 = vunpack.c.l.b16 %v955
  %v3010 = vunpack.c.l.b16 %v956
  %v3011 = vunpack.c.l.b16 %v957
  %v3012 = vunpack.c.l.b16 %v958
  %v3013 = vunpack.c.l.b16 %v959
  %v3014 = vunpack.c.l.b16 %v960
  %v3015 = vunpack.c.l.b16 %v961
  %v3016 = vunpack.c.l.b16 %v962
  %v3017 = vunpack.c.l.b16 %v963
  %v3018 = vunpack.c.l.b16 %v964
  %v3019 = vunpack.c.l.b16 %v965
  %v3020 = vunpack.c.l.b16 %v966
  %v3021 = vunpack.c.l.b16 %v967
  %v3022 = vunpack.c.l.b16 %v968
  %v3023 = vunpack.c.l.b16 %v969
  %v3024 = vunpack.c.l.b16 %v970
  %v3025 = vunpack.c.l.b16 %v971
  %v3026 = vunpack.c.l.b16 %v972
  %v3027 = vunpack.c.l.b16 %v973
  %v3028 = vunpack.c.l.b16 %v974
  %v3029 = vunpack.c.l.b16 %v975
  %v3030 = vunpack.c.l.b16 %v976
  %v3031 = vunpack.c.l.b16 %v977
  %v3032 = vunpack.c.l.b16 %v978
  %v3033 = vunpack.c.l.b16 %v979
  %v3034 = vunpack.c.l.b16 %v980
  %v3035 = vunpack.c.l.b16 %v981
  %v3036 = vunpack.c.l.b16 %v982
  %v3037 = vunpack.c.l.b16 %v983
  %v3038 = vunpack.c.l.b16 %v984
  %v3039 = vunpack.c.l.b16 %v985
  %v3040 = vunpack.c.l.b16 %v986
  %v3041 = vunpack.c.l.b16 %v987
  %v3042 = vunpack.c.l.b16 %v988
  %v3043 = vunpack.c.l.b16 %v989
  %v3044 = vunpack.c.l.b16 %v990
  %v3045 = vunpack.c.l.b16 %v991
  %v3046 = vunpack.c.l.b16 %v992
  %v3047 = vunpack.c.l.b16 %v993
  %v3048 = vunpack.c.l.b16 %v994
  %v3049 = vunpack.c.l.b16 %v995
  %v3050 = vunpack.c.l.b16 %v996
  %v3051 = vunpack.c.l.b16 %v997
  %v3052 = vunpack.c.l.b16 %v998
  %v3053 = vunpack.c.l.b16 %v999
  %v3054 = vunpack.c.l.b16 %v1000
  %v3055 = vunpack.c.l.b16 %v1001
  %v3056 = vunpack.c.l.b16 %v1002
  %v3057 = vunpack.c.l.b16 %v1003
  %v3058 = vunpack.c.l.b16 %v1004
  %v3059 = vunpack.c.l.b16 %v1005
  %v3060 = vunpack.c.l.b16 %v1006
  %v3061 = vunpack.c.l.b16 %v1007
  %v3062 = vunpack.c.l.b16 %v1008
  %v3063 = vunpack.c.l.b16 %v1009
  %v3064 = vunpack.c.l.b16 %v1010
  %v3065 = vunpack.c.l.b16 %v1011
  %v3066 = vunpack.c.l.b16 %v1012
  %v3067 = vunpack.c.l.b16 %v1013
  %v3068 = vunpack.c.l.b16 %v1014
  %v3069 = vunpack.c.l.b16 %v1015
  %v3070 = vunpack.c.l.b16 %v1016
  %v3071 = vunpack.c.l.b16 %v1017
  %v3072 = vunpack.c.l.b16 %v1018
  %v3073 = vunpack.c.l.b16 %v1019
  %v3074 = vunpack.c.l.b16 %v1020
  %v3075 = vunpack.c.l.b16 %v1021
  %v3076 = vunpack.c.l.b16 %v1022
  %v3077 = vunpack.c.l.b16 %v1023
  %v3078 = vunpack.c.l.b16 %v1024
  %v3079 = vunpack.c.l.b16 %v1025
  %v3080 = vunpack.c.l.b16 %v1026
  %v3081 = vunpack.c.l.b16 %v1027
  %v3082 = vunpack.c.l.b16 %v1028
  %v3083 = vunpack.c.l.b16 %v1029
  %v3084 = vunpack.c.l.b16 %v1030
  %v3085 = vunpack.c.l.b16 %v1031
  %v3086 = vunpack.c.l.b16 %v1032
  %v3087 = vunpack.c.l.b16 %v1033
  %v3088 = vunpack.c.l.b16 %v1034
  %v3089 = vunpack.c.l.b16 %v1035
  %v3090 = vunpack.c.l.b16 %v1036
  %v3091 = vunpack.c.l.b16 %v1037
  %v3092 = vunpack.c.l.b16 %v1038
  %v3093 = vunpack.c.l.b16 %v1039
  %v3094 = vpack.c.b16 %v2071, %v2070
  %v3095 = vpack.c.b16 %v2073, %v2072
  %v3096 = vpack.c.b16 %v2075, %v2074
  %v3097 = vpack.c.b16 %v2077, %v2076
  %v3098 = vpack.c.b16 %v2079, %v2078
  %v3099 = vpack.c.b16 %v2081, %v2080
  %v3100 = vpack.c.b16 %v2083, %v2082
  %v3101 = vpack.c.b16 %v2085, %v2084
  %v3102 = vpack.c.b16 %v2087, %v2086
  %v3103 = vpack.c.b16 %v2089, %v2088
  %v3104 = vpack.c.b16 %v2091, %v2090
  %v3105 = vpack.c.b16 %v2093, %v2092
  %v3106 = vpack.c.b16 %v2095, %v2094
  %v3107 = vpack.c.b16 %v2097, %v2096
  %v3108 = vpack.c.b16 %v2099, %v2098
  %v3109 = vpack.c.b16 %v2101, %v2100
  %v3110 = vpack.c.b16 %v2103, %v2102
  %v3111 = vpack.c.b16 %v2105, %v2104
  %v3112 = vpack.c.b16 %v2107, %v2106
  %v3113 = vpack.c.b16 %v2109, %v2108
  %v3114 = vpack.c.b16 %v2111, %v2110
  %v3115 = vpack.c.b16 %v2113, %v2112
  %v3116 = vpack.c.b16 %v2115, %v2114
  %v3117 = vpack.c.b16 %v2117, %v2116
  %v3118 = vpack.c.b16 %v2119, %v2118
  %v3119 = vpack.c.b16 %v2121, %v2120
  %v3120 = vpack.c.b16 %v2123, %v2122
  %v3121 = vpack.c.b16 %v2125, %v2124
  %v3122 = vpack.c.b16 %v2127, %v2126
  %v3123 = vpack.c.b16 %v2129, %v2128
  %v3124 = vpack.c.b16 %v2131, %v2130
  %v3125 = vpack.c.b16 %v2133, %v2132
  %v3126 = vpack.c.b16 %v2135, %v2134
  %v3127 = vpack.c.b16 %v2137, %v2136
  %v3128 = vpack.c.b16 %v2139, %v2138
  %v3129 = vpack.c.b16 %v2141, %v2140
  %v3130 = vpack.c.b16 %v2143, %v2142
  %v3131 = vpack.c.b16 %v2145, %v2144
  %v3132 = vpack.c.b16 %v2147, %v2146
  %v3133 = vpack.c.b16 %v2149, %v2148
  %v3134 = vpack.c.b16 %v2151, %v2150
  %v3135 = vpack.c.b16 %v2153, %v2152
  %v3136 = vpack.c.b16 %v2155, %v2154
  %v3137 = vpack.c.b16 %v2157, %v2156
  %v3138 = vpack.c.b16 %v2159, %v2158
  %v3139 = vpack.c.b16 %v2161, %v2160
  %v3140 = vpack.c.b16 %v2163, %v2162
  %v3141 = vpack.c.b16 %v2165, %v2164
  %v3142 = vpack.c.b16 %v2167, %v2166
  %v3143 = vpack.c.b16 %v2169, %v2168
  %v3144 = vpack.c.b16 %v2171, %v2170
  %v3145 = vpack.c.b16 %v2173, %v2172
  %v3146 = vpack.c.b16 %v2175, %v2174
  %v3147 = vpack.c.b16 %v2177, %v2176
  %v3148 = vpack.c.b16 %v2179, %v2178
  %v3149 = vpack.c.b16 %v2181, %v2180
  %v3150 = vpack.c.b16 %v2183, %v2182
  %v3151 = vpack.c.b16 %v2185, %v2184
  %v3152 = vpack.c.b16 %v2187, %v2186
  %v3153 = vpack.c.b16 %v2189, %v2188
  %v3154 = vpack.c.b16 %v2191, %v2190
  %v3155 = vpack.c.b16 %v2193, %v2192
  %v3156 = vpack.c.b16 %v2195, %v2194
  %v3157 = vpack.c.b16 %v2197, %v2196
  %v3158 = vpack.c.b16 %v2199, %v2198
  %v3159 = vpack.c.b16 %v2201, %v2200
  %v3160 = vpack.c.b16 %v2203, %v2202
  %v3161 = vpack.c.b16 %v2205, %v2204
  %v3162 = vpack.c.b16 %v2207, %v2206
  %v3163 = vpack.c.b16 %v2209, %v2208
  %v3164 = vpack.c.b16 %v2211, %v2210
  %v3165 = vpack.c.b16 %v2213, %v2212
  %v3166 = vpack.c.b16 %v2215, %v2214
  %v3167 = vpack.c.b16 %v2217, %v2216
  %v3168 = vpack.c.b16 %v2219, %v2218
  %v3169 = vpack.c.b16 %v2221, %v2220
  %v3170 = vpack.c.b16 %v2223, %v2222
  %v3171 = vpack.c.b16 %v2225, %v2224
  %v3172 = vpack.c.b16 %v2227, %v2226
  %v3173 = vpack.c.b16 %v2229, %v2228
  %v3174 = vpack.c.b16 %v2231, %v2230
  %v3175 = vpack.c.b16 %v2233, %v2232
  %v3176 = vpack.c.b16 %v2235, %v2234
  %v3177 = vpack.c.b16 %v2237, %v2236
  %v3178 = vpack.c.b16 %v2239, %v2238
  %v3179 = vpack.c.b16 %v2241, %v2240
  %v3180 = vpack.c.b16 %v2243, %v2242
  %v3181 = vpack.c.b16 %v2245, %v2244
  %v3182 = vpack.c.b16 %v2247, %v2246
  %v3183 = vpack.c.b16 %v2249, %v2248
  %v3184 = vpack.c.b16 %v2251, %v2250
  %v3185 = vpack.c.b16 %v2253, %v2252
  %v3186 = vpack.c.b16 %v2255, %v2254
  %v3187 = vpack.c.b16 %v2257, %v2256
  %v3188 = vpack.c.b16 %v2259, %v2258
  %v3189 = vpack.c.b16 %v2261, %v2260
  %v3190 = vpack.c.b16 %v2263, %v2262
  %v3191 = vpack.c.b16 %v2265, %v2264
  %v3192 = vpack.c.b16 %v2267, %v2266
  %v3193 = vpack.c.b16 %v2269, %v2268
  %v3194 = vpack.c.b16 %v2271, %v2270
  %v3195 = vpack.c.b16 %v2273, %v2272
  %v3196 = vpack.c.b16 %v2275, %v2274
  %v3197 = vpack.c.b16 %v2277, %v2276
  %v3198 = vpack.c.b16 %v2279, %v2278
  %v3199 = vpack.c.b16 %v2281, %v2280
  %v3200 = vpack.c.b16 %v2283, %v2282
  %v3201 = vpack.c.b16 %v2285, %v2284
  %v3202 = vpack.c.b16 %v2287, %v2286
  %v3203 = vpack.c.b16 %v2289, %v2288
  %v3204 = vpack.c.b16 %v2291, %v2290
  %v3205 = vpack.c.b16 %v2293, %v2292
  %v3206 = vpack.c.b16 %v2295, %v2294
  %v3207 = vpack.c.b16 %v2297, %v2296
  %v3208 = vpack.c.b16 %v2299, %v2298
  %v3209 = vpack.c.b16 %v2301, %v2300
  %v3210 = vpack.c.b16 %v2303, %v2302
  %v3211 = vpack.c.b16 %v2305, %v2304
  %v3212 = vpack.c.b16 %v2307, %v2306
  %v3213 = vpack.c.b16 %v2309, %v2308
  %v3214 = vpack.c.b16 %v2311, %v2310
  %v3215 = vpack.c.b16 %v2313, %v2312
  %v3216 = vpack.c.b16 %v2315, %v2314
  %v3217 = vpack.c.b16 %v2317, %v2316
  %v3218 = vpack.c.b16 %v2319, %v2318
  %v3219 = vpack.c.b16 %v2321, %v2320
  %v3220 = vpack.c.b16 %v2323, %v2322
  %v3221 = vpack.c.b16 %v2325, %v2324
  %v3222 = vpack.c.b16 %v2327, %v2326
  %v3223 = vpack.c.b16 %v2329, %v2328
  %v3224 = vpack.c.b16 %v2331, %v2330
  %v3225 = vpack.c.b16 %v2333, %v2332
  %v3226 = vpack.c.b16 %v2335, %v2334
  %v3227 = vpack.c.b16 %v2337, %v2336
  %v3228 = vpack.c.b16 %v2339, %v2338
  %v3229 = vpack.c.b16 %v2341, %v2340
  %v3230 = vpack.c.b16 %v2343, %v2342
  %v3231 = vpack.c.b16 %v2345, %v2344
  %v3232 = vpack.c.b16 %v2347, %v2346
  %v3233 = vpack.c.b16 %v2349, %v2348
  %v3234 = vpack.c.b16 %v2351, %v2350
  %v3235 = vpack.c.b16 %v2353, %v2352
  %v3236 = vpack.c.b16 %v2355, %v2354
  %v3237 = vpack.c.b16 %v2357, %v2356
  %v3238 = vpack.c.b16 %v2359, %v2358
  %v3239 = vpack.c.b16 %v2361, %v2360
  %v3240 = vpack.c.b16 %v2363, %v2362
  %v3241 = vpack.c.b16 %v2365, %v2364
  %v3242 = vpack.c.b16 %v2367, %v2366
  %v3243 = vpack.c.b16 %v2369, %v2368
  %v3244 = vpack.c.b16 %v2371, %v2370
  %v3245 = vpack.c.b16 %v2373, %v2372
  %v3246 = vpack.c.b16 %v2375, %v2374
  %v3247 = vpack.c.b16 %v2377, %v2376
  %v3248 = vpack.c.b16 %v2379, %v2378
  %v3249 = vpack.c.b16 %v2381, %v2380
  %v3250 = vpack.c.b16 %v2383, %v2382
  %v3251 = vpack.c.b16 %v2385, %v2384
  %v3252 = vpack.c.b16 %v2387, %v2386
  %v3253 = vpack.c.b16 %v2389, %v2388
  %v3254 = vpack.c.b16 %v2391, %v2390
  %v3255 = vpack.c.b16 %v2393, %v2392
  %v3256 = vpack.c.b16 %v2395, %v2394
  %v3257 = vpack.c.b16 %v2397, %v2396
  %v3258 = vpack.c.b16 %v2399, %v2398
  %v3259 = vpack.c.b16 %v2401, %v2400
  %v3260 = vpack.c.b16 %v2403, %v2402
  %v3261 = vpack.c.b16 %v2405, %v2404
  %v3262 = vpack.c.b16 %v2407, %v2406
  %v3263 = vpack.c.b16 %v2409, %v2408
  %v3264 = vpack.c.b16 %v2411, %v2410
  %v3265 = vpack.c.b16 %v2413, %v2412
  %v3266 = vpack.c.b16 %v2415, %v2414
  %v3267 = vpack.c.b16 %v2417, %v2416
  %v3268 = vpack.c.b16 %v2419, %v2418
  %v3269 = vpack.c.b16 %v2421, %v2420
  %v3270 = vpack.c.b16 %v2423, %v2422
  %v3271 = vpack.c.b16 %v2425, %v2424
  %v3272 = vpack.c.b16 %v2427, %v2426
  %v3273 = vpack.c.b16 %v2429, %v2428
  %v3274 = vpack.c.b16 %v2431, %v2430
  %v3275 = vpack.c.b16 %v2433, %v2432
  %v3276 = vpack.c.b16 %v2435, %v2434
  %v3277 = vpack.c.b16 %v2437, %v2436
  %v3278 = vpack.c.b16 %v2439, %v2438
  %v3279 = vpack.c.b16 %v2441, %v2440
  %v3280 = vpack.c.b16 %v2443, %v2442
  %v3281 = vpack.c.b16 %v2445, %v2444
  %v3282 = vpack.c.b16 %v2447, %v2446
  %v3283 = vpack.c.b16 %v2449, %v2448
  %v3284 = vpack.c.b16 %v2451, %v2450
  %v3285 = vpack.c.b16 %v2453, %v2452
  %v3286 = vpack.c.b16 %v2455, %v2454
  %v3287 = vpack.c.b16 %v2457, %v2456
  %v3288 = vpack.c.b16 %v2459, %v2458
  %v3289 = vpack.c.b16 %v2461, %v2460
  %v3290 = vpack.c.b16 %v2463, %v2462
  %v3291 = vpack.c.b16 %v2465, %v2464
  %v3292 = vpack.c.b16 %v2467, %v2466
  %v3293 = vpack.c.b16 %v2469, %v2468
  %v3294 = vpack.c.b16 %v2471, %v2470
  %v3295 = vpack.c.b16 %v2473, %v2472
  %v3296 = vpack.c.b16 %v2475, %v2474
  %v3297 = vpack.c.b16 %v2477, %v2476
  %v3298 = vpack.c.b16 %v2479, %v2478
  %v3299 = vpack.c.b16 %v2481, %v2480
  %v3300 = vpack.c.b16 %v2483, %v2482
  %v3301 = vpack.c.b16 %v2485, %v2484
  %v3302 = vpack.c.b16 %v2487, %v2486
  %v3303 = vpack.c.b16 %v2489, %v2488
  %v3304 = vpack.c.b16 %v2491, %v2490
  %v3305 = vpack.c.b16 %v2493, %v2492
  %v3306 = vpack.c.b16 %v2495, %v2494
  %v3307 = vpack.c.b16 %v2497, %v2496
  %v3308 = vpack.c.b16 %v2499, %v2498
  %v3309 = vpack.c.b16 %v2501, %v2500
  %v3310 = vpack.c.b16 %v2503, %v2502
  %v3311 = vpack.c.b16 %v2505, %v2504
  %v3312 = vpack.c.b16 %v2507, %v2506
  %v3313 = vpack.c.b16 %v2509, %v2508
  %v3314 = vpack.c.b16 %v2511, %v2510
  %v3315 = vpack.c.b16 %v2513, %v2512
  %v3316 = vpack.c.b16 %v2515, %v2514
  %v3317 = vpack.c.b16 %v2517, %v2516
  %v3318 = vpack.c.b16 %v2519, %v2518
  %v3319 = vpack.c.b16 %v2521, %v2520
  %v3320 = vpack.c.b16 %v2523, %v2522
  %v3321 = vpack.c.b16 %v2525, %v2524
  %v3322 = vpack.c.b16 %v2527, %v2526
  %v3323 = vpack.c.b16 %v2529, %v2528
  %v3324 = vpack.c.b16 %v2531, %v2530
  %v3325 = vpack.c.b16 %v2533, %v2532
  %v3326 = vpack.c.b16 %v2535, %v2534
  %v3327 = vpack.c.b16 %v2537, %v2536
  %v3328 = vpack.c.b16 %v2539, %v2538
  %v3329 = vpack.c.b16 %v2541, %v2540
  %v3330 = vpack.c.b16 %v2543, %v2542
  %v3331 = vpack.c.b16 %v2545, %v2544
  %v3332 = vpack.c.b16 %v2547, %v2546
  %v3333 = vpack.c.b16 %v2549, %v2548
  %v3334 = vpack.c.b16 %v2551, %v2550
  %v3335 = vpack.c.b16 %v2553, %v2552
  %v3336 = vpack.c.b16 %v2555, %v2554
  %v3337 = vpack.c.b16 %v2557, %v2556
  %v3338 = vpack.c.b16 %v2559, %v2558
  %v3339 = vpack.c.b16 %v2561, %v2560
  %v3340 = vpack.c.b16 %v2563, %v2562
  %v3341 = vpack.c.b16 %v2565, %v2564
  %v3342 = vpack.c.b16 %v2567, %v2566
  %v3343 = vpack.c.b16 %v2569, %v2568
  %v3344 = vpack.c.b16 %v2571, %v2570
  %v3345 = vpack.c.b16 %v2573, %v2572
  %v3346 = vpack.c.b16 %v2575, %v2574
  %v3347 = vpack.c.b16 %v2577, %v2576
  %v3348 = vpack.c.b16 %v2579, %v2578
  %v3349 = vpack.c.b16 %v2581, %v2580
  %v3350 = vpack.c.b16 %v2583, %v2582
  %v3351 = vpack.c.b16 %v2585, %v2584
  %v3352 = vpack.c.b16 %v2587, %v2586
  %v3353 = vpack.c.b16 %v2589, %v2588
  %v3354 = vpack.c.b16 %v2591, %v2590
  %v3355 = vpack.c.b16 %v2593, %v2592
  %v3356 = vpack.c.b16 %v2595, %v2594
  %v3357 = vpack.c.b16 %v2597, %v2596
  %v3358 = vpack.c.b16 %v2599, %v2598
  %v3359 = vpack.c.b16 %v2601, %v2600
  %v3360 = vpack.c.b16 %v2603, %v2602
  %v3361 = vpack.c.b16 %v2605, %v2604
  %v3362 = vpack.c.b16 %v2607, %v2606
  %v3363 = vpack.c.b16 %v2609, %v2608
  %v3364 = vpack.c.b16 %v2611, %v2610
  %v3365 = vpack.c.b16 %v2613, %v2612
  %v3366 = vpack.c.b16 %v2615, %v2614
  %v3367 = vpack.c.b16 %v2617, %v2616
  %v3368 = vpack.c.b16 %v2619, %v2618
  %v3369 = vpack.c.b16 %v2621, %v2620
  %v3370 = vpack.c.b16 %v2623, %v2622
  %v3371 = vpack.c.b16 %v2625, %v2624
  %v3372 = vpack.c.b16 %v2627, %v2626
  %v3373 = vpack.c.b16 %v2629, %v2628
  %v3374 = vpack.c.b16 %v2631, %v2630
  %v3375 = vpack.c.b16 %v2633, %v2632
  %v3376 = vpack.c.b16 %v2635, %v2634
  %v3377 = vpack.c.b16 %v2637, %v2636
  %v3378 = vpack.c.b16 %v2639, %v2638
  %v3379 = vpack.c.b16 %v2641, %v2640
  %v3380 = vpack.c.b16 %v2643, %v2642
  %v3381 = vpack.c.b16 %v2645, %v2644
  %v3382 = vpack.c.b16 %v2647, %v2646
  %v3383 = vpack.c.b16 %v2649, %v2648
  %v3384 = vpack.c.b16 %v2651, %v2650
  %v3385 = vpack.c.b16 %v2653, %v2652
  %v3386 = vpack.c.b16 %v2655, %v2654
  %v3387 = vpack.c.b16 %v2657, %v2656
  %v3388 = vpack.c.b16 %v2659, %v2658
  %v3389 = vpack.c.b16 %v2661, %v2660
  %v3390 = vpack.c.b16 %v2663, %v2662
  %v3391 = vpack.c.b16 %v2665, %v2664
  %v3392 = vpack.c.b16 %v2667, %v2666
  %v3393 = vpack.c.b16 %v2669, %v2668
  %v3394 = vpack.c.b16 %v2671, %v2670
  %v3395 = vpack.c.b16 %v2673, %v2672
  %v3396 = vpack.c.b16 %v2675, %v2674
  %v3397 = vpack.c.b16 %v2677, %v2676
  %v3398 = vpack.c.b16 %v2679, %v2678
  %v3399 = vpack.c.b16 %v2681, %v2680
  %v3400 = vpack.c.b16 %v2683, %v2682
  %v3401 = vpack.c.b16 %v2685, %v2684
  %v3402 = vpack.c.b16 %v2687, %v2686
  %v3403 = vpack.c.b16 %v2689, %v2688
  %v3404 = vpack.c.b16 %v2691, %v2690
  %v3405 = vpack.c.b16 %v2693, %v2692
  %v3406 = vpack.c.b16 %v2695, %v2694
  %v3407 = vpack.c.b16 %v2697, %v2696
  %v3408 = vpack.c.b16 %v2699, %v2698
  %v3409 = vpack.c.b16 %v2701, %v2700
  %v3410 = vpack.c.b16 %v2703, %v2702
  %v3411 = vpack.c.b16 %v2705, %v2704
  %v3412 = vpack.c.b16 %v2707, %v2706
  %v3413 = vpack.c.b16 %v2709, %v2708
  %v3414 = vpack.c.b16 %v2711, %v2710
  %v3415 = vpack.c.b16 %v2713, %v2712
  %v3416 = vpack.c.b16 %v2715, %v2714
  %v3417 = vpack.c.b16 %v2717, %v2716
  %v3418 = vpack.c.b16 %v2719, %v2718
  %v3419 = vpack.c.b16 %v2721, %v2720
  %v3420 = vpack.c.b16 %v2723, %v2722
  %v3421 = vpack.c.b16 %v2725, %v2724
  %v3422 = vpack.c.b16 %v2727, %v2726
  %v3423 = vpack.c.b16 %v2729, %v2728
  %v3424 = vpack.c.b16 %v2731, %v2730
  %v3425 = vpack.c.b16 %v2733, %v2732
  %v3426 = vpack.c.b16 %v2735, %v2734
  %v3427 = vpack.c.b16 %v2737, %v2736
  %v3428 = vpack.c.b16 %v2739, %v2738
  %v3429 = vpack.c.b16 %v2741, %v2740
  %v3430 = vpack.c.b16 %v2743, %v2742
  %v3431 = vpack.c.b16 %v2745, %v2744
  %v3432 = vpack.c.b16 %v2747, %v2746
  %v3433 = vpack.c.b16 %v2749, %v2748
  %v3434 = vpack.c.b16 %v2751, %v2750
  %v3435 = vpack.c.b16 %v2753, %v2752
  %v3436 = vpack.c.b16 %v2755, %v2754
  %v3437 = vpack.c.b16 %v2757, %v2756
  %v3438 = vpack.c.b16 %v2759, %v2758
  %v3439 = vpack.c.b16 %v2761, %v2760
  %v3440 = vpack.c.b16 %v2763, %v2762
  %v3441 = vpack.c.b16 %v2765, %v2764
  %v3442 = vpack.c.b16 %v2767, %v2766
  %v3443 = vpack.c.b16 %v2769, %v2768
  %v3444 = vpack.c.b16 %v2771, %v2770
  %v3445 = vpack.c.b16 %v2773, %v2772
  %v3446 = vpack.c.b16 %v2775, %v2774
  %v3447 = vpack.c.b16 %v2777, %v2776
  %v3448 = vpack.c.b16 %v2779, %v2778
  %v3449 = vpack.c.b16 %v2781, %v2780
  %v3450 = vpack.c.b16 %v2783, %v2782
  %v3451 = vpack.c.b16 %v2785, %v2784
  %v3452 = vpack.c.b16 %v2787, %v2786
  %v3453 = vpack.c.b16 %v2789, %v2788
  %v3454 = vpack.c.b16 %v2791, %v2790
  %v3455 = vpack.c.b16 %v2793, %v2792
  %v3456 = vpack.c.b16 %v2795, %v2794
  %v3457 = vpack.c.b16 %v2797, %v2796
  %v3458 = vpack.c.b16 %v2799, %v2798
  %v3459 = vpack.c.b16 %v2801, %v2800
  %v3460 = vpack.c.b16 %v2803, %v2802
  %v3461 = vpack.c.b16 %v2805, %v2804
  %v3462 = vpack.c.b16 %v2807, %v2806
  %v3463 = vpack.c.b16 %v2809, %v2808
  %v3464 = vpack.c.b16 %v2811, %v2810
  %v3465 = vpack.c.b16 %v2813, %v2812
  %v3466 = vpack.c.b16 %v2815, %v2814
  %v3467 = vpack.c.b16 %v2817, %v2816
  %v3468 = vpack.c.b16 %v2819, %v2818
  %v3469 = vpack.c.b16 %v2821, %v2820
  %v3470 = vpack.c.b16 %v2823, %v2822
  %v3471 = vpack.c.b16 %v2825, %v2824
  %v3472 = vpack.c.b16 %v2827, %v2826
  %v3473 = vpack.c.b16 %v2829, %v2828
  %v3474 = vpack.c.b16 %v2831, %v2830
  %v3475 = vpack.c.b16 %v2833, %v2832
  %v3476 = vpack.c.b16 %v2835, %v2834
  %v3477 = vpack.c.b16 %v2837, %v2836
  %v3478 = vpack.c.b16 %v2839, %v2838
  %v3479 = vpack.c.b16 %v2841, %v2840
  %v3480 = vpack.c.b16 %v2843, %v2842
  %v3481 = vpack.c.b16 %v2845, %v2844
  %v3482 = vpack.c.b16 %v2847, %v2846
  %v3483 = vpack.c.b16 %v2849, %v2848
  %v3484 = vpack.c.b16 %v2851, %v2850
  %v3485 = vpack.c.b16 %v2853, %v2852
  %v3486 = vpack.c.b16 %v2855, %v2854
  %v3487 = vpack.c.b16 %v2857, %v2856
  %v3488 = vpack.c.b16 %v2859, %v2858
  %v3489 = vpack.c.b16 %v2861, %v2860
  %v3490 = vpack.c.b16 %v2863, %v2862
  %v3491 = vpack.c.b16 %v2865, %v2864
  %v3492 = vpack.c.b16 %v2867, %v2866
  %v3493 = vpack.c.b16 %v2869, %v2868
  %v3494 = vpack.c.b16 %v2871, %v2870
  %v3495 = vpack.c.b16 %v2873, %v2872
  %v3496 = vpack.c.b16 %v2875, %v2874
  %v3497 = vpack.c.b16 %v2877, %v2876
  %v3498 = vpack.c.b16 %v2879, %v2878
  %v3499 = vpack.c.b16 %v2881, %v2880
  %v3500 = vpack.c.b16 %v2883, %v2882
  %v3501 = vpack.c.b16 %v2885, %v2884
  %v3502 = vpack.c.b16 %v2887, %v2886
  %v3503 = vpack.c.b16 %v2889, %v2888
  %v3504 = vpack.c.b16 %v2891, %v2890
  %v3505 = vpack.c.b16 %v2893, %v2892
  %v3506 = vpack.c.b16 %v2895, %v2894
  %v3507 = vpack.c.b16 %v2897, %v2896
  %v3508 = vpack.c.b16 %v2899, %v2898
  %v3509 = vpack.c.b16 %v2901, %v2900
  %v3510 = vpack.c.b16 %v2903, %v2902
  %v3511 = vpack.c.b16 %v2905, %v2904
  %v3512 = vpack.c.b16 %v2907, %v2906
  %v3513 = vpack.c.b16 %v2909, %v2908
  %v3514 = vpack.c.b16 %v2911, %v2910
  %v3515 = vpack.c.b16 %v2913, %v2912
  %v3516 = vpack.c.b16 %v2915, %v2914
  %v3517 = vpack.c.b16 %v2917, %v2916
  %v3518 = vpack.c.b16 %v2919, %v2918
  %v3519 = vpack.c.b16 %v2921, %v2920
  %v3520 = vpack.c.b16 %v2923, %v2922
  %v3521 = vpack.c.b16 %v2925, %v2924
  %v3522 = vpack.c.b16 %v2927, %v2926
  %v3523 = vpack.c.b16 %v2929, %v2928
  %v3524 = vpack.c.b16 %v2931, %v2930
  %v3525 = vpack.c.b16 %v2933, %v2932
  %v3526 = vpack.c.b16 %v2935, %v2934
  %v3527 = vpack.c.b16 %v2937, %v2936
  %v3528 = vpack.c.b16 %v2939, %v2938
  %v3529 = vpack.c.b16 %v2941, %v2940
  %v3530 = vpack.c.b16 %v2943, %v2942
  %v3531 = vpack.c.b16 %v2945, %v2944
  %v3532 = vpack.c.b16 %v2947, %v2946
  %v3533 = vpack.c.b16 %v2949, %v2948
  %v3534 = vpack.c.b16 %v2951, %v2950
  %v3535 = vpack.c.b16 %v2953, %v2952
  %v3536 = vpack.c.b16 %v2955, %v2954
  %v3537 = vpack.c.b16 %v2957, %v2956
  %v3538 = vpack.c.b16 %v2959, %v2958
  %v3539 = vpack.c.b16 %v2961, %v2960
  %v3540 = vpack.c.b16 %v2963, %v2962
  %v3541 = vpack.c.b16 %v2965, %v2964
  %v3542 = vpack.c.b16 %v2967, %v2966
  %v3543 = vpack.c.b16 %v2969, %v2968
  %v3544 = vpack.c.b16 %v2971, %v2970
  %v3545 = vpack.c.b16 %v2973, %v2972
  %v3546 = vpack.c.b16 %v2975, %v2974
  %v3547 = vpack.c.b16 %v2977, %v2976
  %v3548 = vpack.c.b16 %v2979, %v2978
  %v3549 = vpack.c.b16 %v2981, %v2980
  %v3550 = vpack.c.b16 %v2983, %v2982
  %v3551 = vpack.c.b16 %v2985, %v2984
  %v3552 = vpack.c.b16 %v2987, %v2986
  %v3553 = vpack.c.b16 %v2989, %v2988
  %v3554 = vpack.c.b16 %v2991, %v2990
  %v3555 = vpack.c.b16 %v2993, %v2992
  %v3556 = vpack.c.b16 %v2995, %v2994
  %v3557 = vpack.c.b16 %v2997, %v2996
  %v3558 = vpack.c.b16 %v2999, %v2998
  %v3559 = vpack.c.b16 %v3001, %v3000
  %v3560 = vpack.c.b16 %v3003, %v3002
  %v3561 = vpack.c.b16 %v3005, %v3004
  %v3562 = vpack.c.b16 %v3007, %v3006
  %v3563 = vpack.c.b16 %v3009, %v3008
  %v3564 = vpack.c.b16 %v3011, %v3010
  %v3565 = vpack.c.b16 %v3013, %v3012
  %v3566 = vpack.c.b16 %v3015, %v3014
  %v3567 = vpack.c.b16 %v3017, %v3016
  %v3568 = vpack.c.b16 %v3019, %v3018
  %v3569 = vpack.c.b16 %v3021, %v3020
  %v3570 = vpack.c.b16 %v3023, %v3022
  %v3571 = vpack.c.b16 %v3025, %v3024
  %v3572 = vpack.c.b16 %v3027, %v3026
  %v3573 = vpack.c.b16 %v3029, %v3028
  %v3574 = vpack.c.b16 %v3031, %v3030
  %v3575 = vpack.c.b16 %v3033, %v3032
  %v3576 = vpack.c.b16 %v3035, %v3034
  %v3577 = vpack.c.b16 %v3037, %v3036
  %v3578 = vpack.c.b16 %v3039, %v3038
  %v3579 = vpack.c.b16 %v3041, %v3040
  %v3580 = vpack.c.b16 %v3043, %v3042
  %v3581 = vpack.c.b16 %v3045, %v3044
  %v3582 = vpack.c.b16 %v3047, %v3046
  %v3583 = vpack.c.b16 %v3049, %v3048
  %v3584 = vpack.c.b16 %v3051, %v3050
  %v3585 = vpack.c.b16 %v3053, %v3052
  %v3586 = vpack.c.b16 %v3055, %v3054
  %v3587 = vpack.c.b16 %v3057, %v3056
  %v3588 = vpack.c.b16 %v3059, %v3058
  %v3589 = vpack.c.b16 %v3061, %v3060
  %v3590 = vpack.c.b16 %v3063, %v3062
  %v3591 = vpack.c.b16 %v3065, %v3064
  %v3592 = vpack.c.b16 %v3067, %v3066
  %v3593 = vpack.c.b16 %v3069, %v3068
  %v3594 = vpack.c.b16 %v3071, %v3070
  %v3595 = vpack.c.b16 %v3073, %v3072
  %v3596 = vpack.c.b16 %v3075, %v3074
  %v3597 = vpack.c.b16 %v3077, %v3076
  %v3598 = vpack.c.b16 %v3079, %v3078
  %v3599 = vpack.c.b16 %v3081, %v3080
  %v3600 = vpack.c.b16 %v3083, %v3082
  %v3601 = vpack.c.b16 %v3085, %v3084
  %v3602 = vpack.c.b16 %v3087, %v3086
  %v3603 = vpack.c.b16 %v3089, %v3088
  %v3604 = vpack.c.b16 %v3091, %v3090
  %v3605 = vpack.c.b16 %v3093, %v3092
  %4118 = vmatprep.subr.bf16.mxu0 0
  %4119 = vmatpush1.bf16.xpose.msra.mxu0 %v3094
  %4120 = vmatprep.subr.bf16.mxu0 0
  %4121 = vmatpush1.bf16.xpose.msra.mxu0 %v3095
  %4122 = vmatprep.subr.bf16.mxu0 0
  %4123 = vmatpush1.bf16.xpose.msra.mxu0 %v3096
  %4124 = vmatprep.subr.bf16.mxu0 0
  %4125 = vmatpush1.bf16.xpose.msra.mxu0 %v3097
  %4126 = vmatprep.subr.bf16.mxu0 0
  %4127 = vmatpush1.bf16.xpose.msra.mxu0 %v3098
  %4128 = vmatprep.subr.bf16.mxu0 0
  %4129 = vmatpush1.bf16.xpose.msra.mxu0 %v3099
  %4130 = vmatprep.subr.bf16.mxu0 0
  %4131 = vmatpush1.bf16.xpose.msra.mxu0 %v3100
  %4132 = vmatprep.subr.bf16.mxu0 0
  %4133 = vmatpush1.bf16.xpose.msra.mxu0 %v3101
  %4134 = vmatprep.subr.bf16.mxu0 0
  %4135 = vmatpush1.bf16.xpose.msra.mxu0 %v3102
  %4136 = vmatprep.subr.bf16.mxu0 0
  %4137 = vmatpush1.bf16.xpose.msra.mxu0 %v3103
  %4138 = vmatprep.subr.bf16.mxu0 0
  %4139 = vmatpush1.bf16.xpose.msra.mxu0 %v3104
  %4140 = vmatprep.subr.bf16.mxu0 0
  %4141 = vmatpush1.bf16.xpose.msra.mxu0 %v3105
  %4142 = vmatprep.subr.bf16.mxu0 0
  %4143 = vmatpush1.bf16.xpose.msra.mxu0 %v3106
  %4144 = vmatprep.subr.bf16.mxu0 0
  %4145 = vmatpush1.bf16.xpose.msra.mxu0 %v3107
  %4146 = vmatprep.subr.bf16.mxu0 0
  %4147 = vmatpush1.bf16.xpose.msra.mxu0 %v3108
  %4148 = vmatprep.subr.bf16.mxu0 0
  %4149 = vmatpush1.bf16.xpose.msra.mxu0 %v3109
  %4150 = vmatprep.mubr.bf16.mxu0 0
  %4151 = vmatmul.mubr.bf16.gmra.mrb[0].mxu0 %v15
  %v4152 = vpop.f32.mrb[0].mxu0
  %v4153 = vadd.f32 %v1044, %v4152
  %v4154 = vpop.f32.mrb[0].mxu0
  %v4155 = vadd.f32 %v1044, %v4154
  %v4156 = vpop.f32.mrb[0].mxu0
  %v4157 = vpop.f32.mrb[0].mxu0
  %4158 = vdwg.mxu0
  %4159 = vmatprep.subr.bf16.mxu0 0
  %4160 = vmatpush1.bf16.xpose.msra.mxu0 %v3110
  %4161 = vmatprep.subr.bf16.mxu0 0
  %4162 = vmatpush1.bf16.xpose.msra.mxu0 %v3111
  %4163 = vmatprep.subr.bf16.mxu0 0
  %4164 = vmatpush1.bf16.xpose.msra.mxu0 %v3112
  %4165 = vmatprep.subr.bf16.mxu0 0
  %4166 = vmatpush1.bf16.xpose.msra.mxu0 %v3113
  %4167 = vmatprep.subr.bf16.mxu0 0
  %4168 = vmatpush1.bf16.xpose.msra.mxu0 %v3114
  %4169 = vmatprep.subr.bf16.mxu0 0
  %4170 = vmatpush1.bf16.xpose.msra.mxu0 %v3115
  %4171 = vmatprep.subr.bf16.mxu0 0
  %4172 = vmatpush1.bf16.xpose.msra.mxu0 %v3116
  %4173 = vmatprep.subr.bf16.mxu0 0
  %4174 = vmatpush1.bf16.xpose.msra.mxu0 %v3117
  %4175 = vmatprep.subr.bf16.mxu0 0
  %4176 = vmatpush1.bf16.xpose.msra.mxu0 %v3118
  %4177 = vmatprep.subr.bf16.mxu0 0
  %4178 = vmatpush1.bf16.xpose.msra.mxu0 %v3119
  %4179 = vmatprep.subr.bf16.mxu0 0
  %4180 = vmatpush1.bf16.xpose.msra.mxu0 %v3120
  %4181 = vmatprep.subr.bf16.mxu0 0
  %4182 = vmatpush1.bf16.xpose.msra.mxu0 %v3121
  %4183 = vmatprep.subr.bf16.mxu0 0
  %4184 = vmatpush1.bf16.xpose.msra.mxu0 %v3122
  %4185 = vmatprep.subr.bf16.mxu0 0
  %4186 = vmatpush1.bf16.xpose.msra.mxu0 %v3123
  %4187 = vmatprep.subr.bf16.mxu0 0
  %4188 = vmatpush1.bf16.xpose.msra.mxu0 %v3124
  %4189 = vmatprep.subr.bf16.mxu0 0
  %4190 = vmatpush1.bf16.xpose.msra.mxu0 %v3125
  %4191 = vmatprep.mubr.bf16.mxu0 0
  %4192 = vmatmul.mubr.bf16.gmra.mrb[0].mxu0 %v15
  %v4193 = vpop.f32.mrb[0].mxu0
  %v4194 = vadd.f32 %v1044, %v4193
  %v4195 = vpop.f32.mrb[0].mxu0
  %v4196 = vadd.f32 %v1044, %v4195
  %v4197 = vpop.f32.mrb[0].mxu0
  %v4198 = vpop.f32.mrb[0].mxu0
  %4199 = vdwg.mxu0
  %4200 = vmatprep.subr.bf16.mxu0 0
  %4201 = vmatpush1.bf16.xpose.msra.mxu0 %v3126
  %4202 = vmatprep.subr.bf16.mxu0 0
  %4203 = vmatpush1.bf16.xpose.msra.mxu0 %v3127
  %4204 = vmatprep.subr.bf16.mxu0 0
  %4205 = vmatpush1.bf16.xpose.msra.mxu0 %v3128
  %4206 = vmatprep.subr.bf16.mxu0 0
  %4207 = vmatpush1.bf16.xpose.msra.mxu0 %v3129
  %4208 = vmatprep.subr.bf16.mxu0 0
  %4209 = vmatpush1.bf16.xpose.msra.mxu0 %v3130
  %4210 = vmatprep.subr.bf16.mxu0 0
  %4211 = vmatpush1.bf16.xpose.msra.mxu0 %v3131
  %4212 = vmatprep.subr.bf16.mxu0 0
  %4213 = vmatpush1.bf16.xpose.msra.mxu0 %v3132
  %4214 = vmatprep.subr.bf16.mxu0 0
  %4215 = vmatpush1.bf16.xpose.msra.mxu0 %v3133
  %4216 = vmatprep.subr.bf16.mxu0 0
  %4217 = vmatpush1.bf16.xpose.msra.mxu0 %v3134
  %4218 = vmatprep.subr.bf16.mxu0 0
  %4219 = vmatpush1.bf16.xpose.msra.mxu0 %v3135
  %4220 = vmatprep.subr.bf16.mxu0 0
  %4221 = vmatpush1.bf16.xpose.msra.mxu0 %v3136
  %4222 = vmatprep.subr.bf16.mxu0 0
  %4223 = vmatpush1.bf16.xpose.msra.mxu0 %v3137
  %4224 = vmatprep.subr.bf16.mxu0 0
  %4225 = vmatpush1.bf16.xpose.msra.mxu0 %v3138
  %4226 = vmatprep.subr.bf16.mxu0 0
  %4227 = vmatpush1.bf16.xpose.msra.mxu0 %v3139
  %4228 = vmatprep.subr.bf16.mxu0 0
  %4229 = vmatpush1.bf16.xpose.msra.mxu0 %v3140
  %4230 = vmatprep.subr.bf16.mxu0 0
  %4231 = vmatpush1.bf16.xpose.msra.mxu0 %v3141
  %4232 = vmatprep.mubr.bf16.mxu0 0
  %4233 = vmatmul.mubr.bf16.gmra.mrb[0].mxu0 %v15
  %v4234 = vpop.f32.mrb[0].mxu0
  %v4235 = vadd.f32 %v1044, %v4234
  %v4236 = vpop.f32.mrb[0].mxu0
  %v4237 = vadd.f32 %v1044, %v4236
  %v4238 = vpop.f32.mrb[0].mxu0
  %v4239 = vpop.f32.mrb[0].mxu0
  %4240 = vdwg.mxu0
  %4241 = vmatprep.subr.bf16.mxu0 0
  %4242 = vmatpush1.bf16.xpose.msra.mxu0 %v3142
  %4243 = vmatprep.subr.bf16.mxu0 0
  %4244 = vmatpush1.bf16.xpose.msra.mxu0 %v3143
  %4245 = vmatprep.subr.bf16.mxu0 0
  %4246 = vmatpush1.bf16.xpose.msra.mxu0 %v3144
  %4247 = vmatprep.subr.bf16.mxu0 0
  %4248 = vmatpush1.bf16.xpose.msra.mxu0 %v3145
  %4249 = vmatprep.subr.bf16.mxu0 0
  %4250 = vmatpush1.bf16.xpose.msra.mxu0 %v3146
  %4251 = vmatprep.subr.bf16.mxu0 0
  %4252 = vmatpush1.bf16.xpose.msra.mxu0 %v3147
  %4253 = vmatprep.subr.bf16.mxu0 0
  %4254 = vmatpush1.bf16.xpose.msra.mxu0 %v3148
  %4255 = vmatprep.subr.bf16.mxu0 0
  %4256 = vmatpush1.bf16.xpose.msra.mxu0 %v3149
  %4257 = vmatprep.subr.bf16.mxu0 0
  %4258 = vmatpush1.bf16.xpose.msra.mxu0 %v3150
  %4259 = vmatprep.subr.bf16.mxu0 0
  %4260 = vmatpush1.bf16.xpose.msra.mxu0 %v3151
  %4261 = vmatprep.subr.bf16.mxu0 0
  %4262 = vmatpush1.bf16.xpose.msra.mxu0 %v3152
  %4263 = vmatprep.subr.bf16.mxu0 0
  %4264 = vmatpush1.bf16.xpose.msra.mxu0 %v3153
  %4265 = vmatprep.subr.bf16.mxu0 0
  %4266 = vmatpush1.bf16.xpose.msra.mxu0 %v3154
  %4267 = vmatprep.subr.bf16.mxu0 0
  %4268 = vmatpush1.bf16.xpose.msra.mxu0 %v3155
  %4269 = vmatprep.subr.bf16.mxu0 0
  %4270 = vmatpush1.bf16.xpose.msra.mxu0 %v3156
  %4271 = vmatprep.subr.bf16.mxu0 0
  %4272 = vmatpush1.bf16.xpose.msra.mxu0 %v3157
  %4273 = vmatprep.mubr.bf16.mxu0 0
  %4274 = vmatmul.mubr.bf16.gmra.mrb[0].mxu0 %v15
  %v4275 = vpop.f32.mrb[0].mxu0
  %v4276 = vadd.f32 %v1044, %v4275
  %v4277 = vpop.f32.mrb[0].mxu0
  %v4278 = vadd.f32 %v1044, %v4277
  %v4279 = vpop.f32.mrb[0].mxu0
  %v4280 = vpop.f32.mrb[0].mxu0
  %4281 = vdwg.mxu0
  %4282 = vmatprep.subr.bf16.mxu0 0
  %4283 = vmatpush1.bf16.xpose.msra.mxu0 %v3158
  %4284 = vmatprep.subr.bf16.mxu0 0
  %4285 = vmatpush1.bf16.xpose.msra.mxu0 %v3159
  %4286 = vmatprep.subr.bf16.mxu0 0
  %4287 = vmatpush1.bf16.xpose.msra.mxu0 %v3160
  %4288 = vmatprep.subr.bf16.mxu0 0
  %4289 = vmatpush1.bf16.xpose.msra.mxu0 %v3161
  %4290 = vmatprep.subr.bf16.mxu0 0
  %4291 = vmatpush1.bf16.xpose.msra.mxu0 %v3162
  %4292 = vmatprep.subr.bf16.mxu0 0
  %4293 = vmatpush1.bf16.xpose.msra.mxu0 %v3163
  %4294 = vmatprep.subr.bf16.mxu0 0
  %4295 = vmatpush1.bf16.xpose.msra.mxu0 %v3164
  %4296 = vmatprep.subr.bf16.mxu0 0
  %4297 = vmatpush1.bf16.xpose.msra.mxu0 %v3165
  %4298 = vmatprep.subr.bf16.mxu0 0
  %4299 = vmatpush1.bf16.xpose.msra.mxu0 %v3166
  %4300 = vmatprep.subr.bf16.mxu0 0
  %4301 = vmatpush1.bf16.xpose.msra.mxu0 %v3167
  %4302 = vmatprep.subr.bf16.mxu0 0
  %4303 = vmatpush1.bf16.xpose.msra.mxu0 %v3168
  %4304 = vmatprep.subr.bf16.mxu0 0
  %4305 = vmatpush1.bf16.xpose.msra.mxu0 %v3169
  %4306 = vmatprep.subr.bf16.mxu0 0
  %4307 = vmatpush1.bf16.xpose.msra.mxu0 %v3170
  %4308 = vmatprep.subr.bf16.mxu0 0
  %4309 = vmatpush1.bf16.xpose.msra.mxu0 %v3171
  %4310 = vmatprep.subr.bf16.mxu0 0
  %4311 = vmatpush1.bf16.xpose.msra.mxu0 %v3172
  %4312 = vmatprep.subr.bf16.mxu0 0
  %4313 = vmatpush1.bf16.xpose.msra.mxu0 %v3173
  %4314 = vmatprep.mubr.bf16.mxu0 0
  %4315 = vmatmul.mubr.bf16.gmra.mrb[0].mxu0 %v15
  %v4316 = vpop.f32.mrb[0].mxu0
  %v4317 = vadd.f32 %v1044, %v4316
  %v4318 = vpop.f32.mrb[0].mxu0
  %v4319 = vadd.f32 %v1044, %v4318
  %v4320 = vpop.f32.mrb[0].mxu0
  %v4321 = vpop.f32.mrb[0].mxu0
  %4322 = vdwg.mxu0
  %4323 = vmatprep.subr.bf16.mxu0 0
  %4324 = vmatpush1.bf16.xpose.msra.mxu0 %v3174
  %4325 = vmatprep.subr.bf16.mxu0 0
  %4326 = vmatpush1.bf16.xpose.msra.mxu0 %v3175
  %4327 = vmatprep.subr.bf16.mxu0 0
  %4328 = vmatpush1.bf16.xpose.msra.mxu0 %v3176
  %4329 = vmatprep.subr.bf16.mxu0 0
  %4330 = vmatpush1.bf16.xpose.msra.mxu0 %v3177
  %4331 = vmatprep.subr.bf16.mxu0 0
  %4332 = vmatpush1.bf16.xpose.msra.mxu0 %v3178
  %4333 = vmatprep.subr.bf16.mxu0 0
  %4334 = vmatpush1.bf16.xpose.msra.mxu0 %v3179
  %4335 = vmatprep.subr.bf16.mxu0 0
  %4336 = vmatpush1.bf16.xpose.msra.mxu0 %v3180
  %4337 = vmatprep.subr.bf16.mxu0 0
  %4338 = vmatpush1.bf16.xpose.msra.mxu0 %v3181
  %4339 = vmatprep.subr.bf16.mxu0 0
  %4340 = vmatpush1.bf16.xpose.msra.mxu0 %v3182
  %4341 = vmatprep.subr.bf16.mxu0 0
  %4342 = vmatpush1.bf16.xpose.msra.mxu0 %v3183
  %4343 = vmatprep.subr.bf16.mxu0 0
  %4344 = vmatpush1.bf16.xpose.msra.mxu0 %v3184
  %4345 = vmatprep.subr.bf16.mxu0 0
  %4346 = vmatpush1.bf16.xpose.msra.mxu0 %v3185
  %4347 = vmatprep.subr.bf16.mxu0 0
  %4348 = vmatpush1.bf16.xpose.msra.mxu0 %v3186
  %4349 = vmatprep.subr.bf16.mxu0 0
  %4350 = vmatpush1.bf16.xpose.msra.mxu0 %v3187
  %4351 = vmatprep.subr.bf16.mxu0 0
  %4352 = vmatpush1.bf16.xpose.msra.mxu0 %v3188
  %4353 = vmatprep.subr.bf16.mxu0 0
  %4354 = vmatpush1.bf16.xpose.msra.mxu0 %v3189
  %4355 = vmatprep.mubr.bf16.mxu0 0
  %4356 = vmatmul.mubr.bf16.gmra.mrb[0].mxu0 %v15
  %v4357 = vpop.f32.mrb[0].mxu0
  %v4358 = vadd.f32 %v1044, %v4357
  %v4359 = vpop.f32.mrb[0].mxu0
  %v4360 = vadd.f32 %v1044, %v4359
  %v4361 = vpop.f32.mrb[0].mxu0
  %v4362 = vpop.f32.mrb[0].mxu0
  %4363 = vdwg.mxu0
  %4364 = vmatprep.subr.bf16.mxu0 0
  %4365 = vmatpush1.bf16.xpose.msra.mxu0 %v3190
  %4366 = vmatprep.subr.bf16.mxu0 0
  %4367 = vmatpush1.bf16.xpose.msra.mxu0 %v3191
  %4368 = vmatprep.subr.bf16.mxu0 0
  %4369 = vmatpush1.bf16.xpose.msra.mxu0 %v3192
  %4370 = vmatprep.subr.bf16.mxu0 0
  %4371 = vmatpush1.bf16.xpose.msra.mxu0 %v3193
  %4372 = vmatprep.subr.bf16.mxu0 0
  %4373 = vmatpush1.bf16.xpose.msra.mxu0 %v3194
  %4374 = vmatprep.subr.bf16.mxu0 0
  %4375 = vmatpush1.bf16.xpose.msra.mxu0 %v3195
  %4376 = vmatprep.subr.bf16.mxu0 0
  %4377 = vmatpush1.bf16.xpose.msra.mxu0 %v3196
  %4378 = vmatprep.subr.bf16.mxu0 0
  %4379 = vmatpush1.bf16.xpose.msra.mxu0 %v3197
  %4380 = vmatprep.subr.bf16.mxu0 0
  %4381 = vmatpush1.bf16.xpose.msra.mxu0 %v3198
  %4382 = vmatprep.subr.bf16.mxu0 0
  %4383 = vmatpush1.bf16.xpose.msra.mxu0 %v3199
  %4384 = vmatprep.subr.bf16.mxu0 0
  %4385 = vmatpush1.bf16.xpose.msra.mxu0 %v3200
  %4386 = vmatprep.subr.bf16.mxu0 0
  %4387 = vmatpush1.bf16.xpose.msra.mxu0 %v3201
  %4388 = vmatprep.subr.bf16.mxu0 0
  %4389 = vmatpush1.bf16.xpose.msra.mxu0 %v3202
  %4390 = vmatprep.subr.bf16.mxu0 0
  %4391 = vmatpush1.bf16.xpose.msra.mxu0 %v3203
  %4392 = vmatprep.subr.bf16.mxu0 0
  %4393 = vmatpush1.bf16.xpose.msra.mxu0 %v3204
  %4394 = vmatprep.subr.bf16.mxu0 0
  %4395 = vmatpush1.bf16.xpose.msra.mxu0 %v3205
  %4396 = vmatprep.mubr.bf16.mxu0 0
  %4397 = vmatmul.mubr.bf16.gmra.mrb[0].mxu0 %v15
  %v4398 = vpop.f32.mrb[0].mxu0
  %v4399 = vadd.f32 %v1044, %v4398
  %v4400 = vpop.f32.mrb[0].mxu0
  %v4401 = vadd.f32 %v1044, %v4400
  %v4402 = vpop.f32.mrb[0].mxu0
  %v4403 = vpop.f32.mrb[0].mxu0
  %4404 = vdwg.mxu0
  %4405 = vmatprep.subr.bf16.mxu0 0
  %4406 = vmatpush1.bf16.xpose.msra.mxu0 %v3206
  %4407 = vmatprep.subr.bf16.mxu0 0
  %4408 = vmatpush1.bf16.xpose.msra.mxu0 %v3207
  %4409 = vmatprep.subr.bf16.mxu0 0
  %4410 = vmatpush1.bf16.xpose.msra.mxu0 %v3208
  %4411 = vmatprep.subr.bf16.mxu0 0
  %4412 = vmatpush1.bf16.xpose.msra.mxu0 %v3209
  %4413 = vmatprep.subr.bf16.mxu0 0
  %4414 = vmatpush1.bf16.xpose.msra.mxu0 %v3210
  %4415 = vmatprep.subr.bf16.mxu0 0
  %4416 = vmatpush1.bf16.xpose.msra.mxu0 %v3211
  %4417 = vmatprep.subr.bf16.mxu0 0
  %4418 = vmatpush1.bf16.xpose.msra.mxu0 %v3212
  %4419 = vmatprep.subr.bf16.mxu0 0
  %4420 = vmatpush1.bf16.xpose.msra.mxu0 %v3213
  %4421 = vmatprep.subr.bf16.mxu0 0
  %4422 = vmatpush1.bf16.xpose.msra.mxu0 %v3214
  %4423 = vmatprep.subr.bf16.mxu0 0
  %4424 = vmatpush1.bf16.xpose.msra.mxu0 %v3215
  %4425 = vmatprep.subr.bf16.mxu0 0
  %4426 = vmatpush1.bf16.xpose.msra.mxu0 %v3216
  %4427 = vmatprep.subr.bf16.mxu0 0
  %4428 = vmatpush1.bf16.xpose.msra.mxu0 %v3217
  %4429 = vmatprep.subr.bf16.mxu0 0
  %4430 = vmatpush1.bf16.xpose.msra.mxu0 %v3218
  %4431 = vmatprep.subr.bf16.mxu0 0
  %4432 = vmatpush1.bf16.xpose.msra.mxu0 %v3219
  %4433 = vmatprep.subr.bf16.mxu0 0
  %4434 = vmatpush1.bf16.xpose.msra.mxu0 %v3220
  %4435 = vmatprep.subr.bf16.mxu0 0
  %4436 = vmatpush1.bf16.xpose.msra.mxu0 %v3221
  %4437 = vmatprep.mubr.bf16.mxu0 0
  %4438 = vmatmul.mubr.bf16.gmra.mrb[0].mxu0 %v15
  %v4439 = vpop.f32.mrb[0].mxu0
  %v4440 = vadd.f32 %v1044, %v4439
  %v4441 = vpop.f32.mrb[0].mxu0
  %v4442 = vadd.f32 %v1044, %v4441
  %v4443 = vpop.f32.mrb[0].mxu0
  %v4444 = vpop.f32.mrb[0].mxu0
  %4445 = vdwg.mxu0
  %4446 = vmatprep.subr.bf16.mxu0 0
  %4447 = vmatpush1.bf16.xpose.msra.mxu0 %v3222
  %4448 = vmatprep.subr.bf16.mxu0 0
  %4449 = vmatpush1.bf16.xpose.msra.mxu0 %v3223
  %4450 = vmatprep.subr.bf16.mxu0 0
  %4451 = vmatpush1.bf16.xpose.msra.mxu0 %v3224
  %4452 = vmatprep.subr.bf16.mxu0 0
  %4453 = vmatpush1.bf16.xpose.msra.mxu0 %v3225
  %4454 = vmatprep.subr.bf16.mxu0 0
  %4455 = vmatpush1.bf16.xpose.msra.mxu0 %v3226
  %4456 = vmatprep.subr.bf16.mxu0 0
  %4457 = vmatpush1.bf16.xpose.msra.mxu0 %v3227
  %4458 = vmatprep.subr.bf16.mxu0 0
  %4459 = vmatpush1.bf16.xpose.msra.mxu0 %v3228
  %4460 = vmatprep.subr.bf16.mxu0 0
  %4461 = vmatpush1.bf16.xpose.msra.mxu0 %v3229
  %4462 = vmatprep.subr.bf16.mxu0 0
  %4463 = vmatpush1.bf16.xpose.msra.mxu0 %v3230
  %4464 = vmatprep.subr.bf16.mxu0 0
  %4465 = vmatpush1.bf16.xpose.msra.mxu0 %v3231
  %4466 = vmatprep.subr.bf16.mxu0 0
  %4467 = vmatpush1.bf16.xpose.msra.mxu0 %v3232
  %4468 = vmatprep.subr.bf16.mxu0 0
  %4469 = vmatpush1.bf16.xpose.msra.mxu0 %v3233
  %4470 = vmatprep.subr.bf16.mxu0 0
  %4471 = vmatpush1.bf16.xpose.msra.mxu0 %v3234
  %4472 = vmatprep.subr.bf16.mxu0 0
  %4473 = vmatpush1.bf16.xpose.msra.mxu0 %v3235
  %4474 = vmatprep.subr.bf16.mxu0 0
  %4475 = vmatpush1.bf16.xpose.msra.mxu0 %v3236
  %4476 = vmatprep.subr.bf16.mxu0 0
  %4477 = vmatpush1.bf16.xpose.msra.mxu0 %v3237
  %4478 = vmatprep.mubr.bf16.mxu0 0
  %4479 = vmatmul.mubr.bf16.gmra.mrb[0].mxu0 %v15
  %v4480 = vpop.f32.mrb[0].mxu0
  %v4481 = vadd.f32 %v1044, %v4480
  %v4482 = vpop.f32.mrb[0].mxu0
  %v4483 = vadd.f32 %v1044, %v4482
  %v4484 = vpop.f32.mrb[0].mxu0
  %v4485 = vpop.f32.mrb[0].mxu0
  %4486 = vdwg.mxu0
  %4487 = vmatprep.subr.bf16.mxu0 0
  %4488 = vmatpush1.bf16.xpose.msra.mxu0 %v3238
  %4489 = vmatprep.subr.bf16.mxu0 0
  %4490 = vmatpush1.bf16.xpose.msra.mxu0 %v3239
  %4491 = vmatprep.subr.bf16.mxu0 0
  %4492 = vmatpush1.bf16.xpose.msra.mxu0 %v3240
  %4493 = vmatprep.subr.bf16.mxu0 0
  %4494 = vmatpush1.bf16.xpose.msra.mxu0 %v3241
  %4495 = vmatprep.subr.bf16.mxu0 0
  %4496 = vmatpush1.bf16.xpose.msra.mxu0 %v3242
  %4497 = vmatprep.subr.bf16.mxu0 0
  %4498 = vmatpush1.bf16.xpose.msra.mxu0 %v3243
  %4499 = vmatprep.subr.bf16.mxu0 0
  %4500 = vmatpush1.bf16.xpose.msra.mxu0 %v3244
  %4501 = vmatprep.subr.bf16.mxu0 0
  %4502 = vmatpush1.bf16.xpose.msra.mxu0 %v3245
  %4503 = vmatprep.subr.bf16.mxu0 0
  %4504 = vmatpush1.bf16.xpose.msra.mxu0 %v3246
  %4505 = vmatprep.subr.bf16.mxu0 0
  %4506 = vmatpush1.bf16.xpose.msra.mxu0 %v3247
  %4507 = vmatprep.subr.bf16.mxu0 0
  %4508 = vmatpush1.bf16.xpose.msra.mxu0 %v3248
  %4509 = vmatprep.subr.bf16.mxu0 0
  %4510 = vmatpush1.bf16.xpose.msra.mxu0 %v3249
  %4511 = vmatprep.subr.bf16.mxu0 0
  %4512 = vmatpush1.bf16.xpose.msra.mxu0 %v3250
  %4513 = vmatprep.subr.bf16.mxu0 0
  %4514 = vmatpush1.bf16.xpose.msra.mxu0 %v3251
  %4515 = vmatprep.subr.bf16.mxu0 0
  %4516 = vmatpush1.bf16.xpose.msra.mxu0 %v3252
  %4517 = vmatprep.subr.bf16.mxu0 0
  %4518 = vmatpush1.bf16.xpose.msra.mxu0 %v3253
  %4519 = vmatprep.mubr.bf16.mxu0 0
  %4520 = vmatmul.mubr.bf16.gmra.mrb[0].mxu0 %v15
  %v4521 = vpop.f32.mrb[0].mxu0
  %v4522 = vadd.f32 %v1044, %v4521
  %v4523 = vpop.f32.mrb[0].mxu0
  %v4524 = vadd.f32 %v1044, %v4523
  %v4525 = vpop.f32.mrb[0].mxu0
  %v4526 = vpop.f32.mrb[0].mxu0
  %4527 = vdwg.mxu0
  %4528 = vmatprep.subr.bf16.mxu0 0
  %4529 = vmatpush1.bf16.xpose.msra.mxu0 %v3254
  %4530 = vmatprep.subr.bf16.mxu0 0
  %4531 = vmatpush1.bf16.xpose.msra.mxu0 %v3255
  %4532 = vmatprep.subr.bf16.mxu0 0
  %4533 = vmatpush1.bf16.xpose.msra.mxu0 %v3256
  %4534 = vmatprep.subr.bf16.mxu0 0
  %4535 = vmatpush1.bf16.xpose.msra.mxu0 %v3257
  %4536 = vmatprep.subr.bf16.mxu0 0
  %4537 = vmatpush1.bf16.xpose.msra.mxu0 %v3258
  %4538 = vmatprep.subr.bf16.mxu0 0
  %4539 = vmatpush1.bf16.xpose.msra.mxu0 %v3259
  %4540 = vmatprep.subr.bf16.mxu0 0
  %4541 = vmatpush1.bf16.xpose.msra.mxu0 %v3260
  %4542 = vmatprep.subr.bf16.mxu0 0
  %4543 = vmatpush1.bf16.xpose.msra.mxu0 %v3261
  %4544 = vmatprep.subr.bf16.mxu0 0
  %4545 = vmatpush1.bf16.xpose.msra.mxu0 %v3262
  %4546 = vmatprep.subr.bf16.mxu0 0
  %4547 = vmatpush1.bf16.xpose.msra.mxu0 %v3263
  %4548 = vmatprep.subr.bf16.mxu0 0
  %4549 = vmatpush1.bf16.xpose.msra.mxu0 %v3264
  %4550 = vmatprep.subr.bf16.mxu0 0
  %4551 = vmatpush1.bf16.xpose.msra.mxu0 %v3265
  %4552 = vmatprep.subr.bf16.mxu0 0
  %4553 = vmatpush1.bf16.xpose.msra.mxu0 %v3266
  %4554 = vmatprep.subr.bf16.mxu0 0
  %4555 = vmatpush1.bf16.xpose.msra.mxu0 %v3267
  %4556 = vmatprep.subr.bf16.mxu0 0
  %4557 = vmatpush1.bf16.xpose.msra.mxu0 %v3268
  %4558 = vmatprep.subr.bf16.mxu0 0
  %4559 = vmatpush1.bf16.xpose.msra.mxu0 %v3269
  %4560 = vmatprep.mubr.bf16.mxu0 0
  %4561 = vmatmul.mubr.bf16.gmra.mrb[0].mxu0 %v15
  %v4562 = vpop.f32.mrb[0].mxu0
  %v4563 = vadd.f32 %v1044, %v4562
  %v4564 = vpop.f32.mrb[0].mxu0
  %v4565 = vadd.f32 %v1044, %v4564
  %v4566 = vpop.f32.mrb[0].mxu0
  %v4567 = vpop.f32.mrb[0].mxu0
  %4568 = vdwg.mxu0
  %4569 = vmatprep.subr.bf16.mxu0 0
  %4570 = vmatpush1.bf16.xpose.msra.mxu0 %v3270
  %4571 = vmatprep.subr.bf16.mxu0 0
  %4572 = vmatpush1.bf16.xpose.msra.mxu0 %v3271
  %4573 = vmatprep.subr.bf16.mxu0 0
  %4574 = vmatpush1.bf16.xpose.msra.mxu0 %v3272
  %4575 = vmatprep.subr.bf16.mxu0 0
  %4576 = vmatpush1.bf16.xpose.msra.mxu0 %v3273
  %4577 = vmatprep.subr.bf16.mxu0 0
  %4578 = vmatpush1.bf16.xpose.msra.mxu0 %v3274
  %4579 = vmatprep.subr.bf16.mxu0 0
  %4580 = vmatpush1.bf16.xpose.msra.mxu0 %v3275
  %4581 = vmatprep.subr.bf16.mxu0 0
  %4582 = vmatpush1.bf16.xpose.msra.mxu0 %v3276
  %4583 = vmatprep.subr.bf16.mxu0 0
  %4584 = vmatpush1.bf16.xpose.msra.mxu0 %v3277
  %4585 = vmatprep.subr.bf16.mxu0 0
  %4586 = vmatpush1.bf16.xpose.msra.mxu0 %v3278
  %4587 = vmatprep.subr.bf16.mxu0 0
  %4588 = vmatpush1.bf16.xpose.msra.mxu0 %v3279
  %4589 = vmatprep.subr.bf16.mxu0 0
  %4590 = vmatpush1.bf16.xpose.msra.mxu0 %v3280
  %4591 = vmatprep.subr.bf16.mxu0 0
  %4592 = vmatpush1.bf16.xpose.msra.mxu0 %v3281
  %4593 = vmatprep.subr.bf16.mxu0 0
  %4594 = vmatpush1.bf16.xpose.msra.mxu0 %v3282
  %4595 = vmatprep.subr.bf16.mxu0 0
  %4596 = vmatpush1.bf16.xpose.msra.mxu0 %v3283
  %4597 = vmatprep.subr.bf16.mxu0 0
  %4598 = vmatpush1.bf16.xpose.msra.mxu0 %v3284
  %4599 = vmatprep.subr.bf16.mxu0 0
  %4600 = vmatpush1.bf16.xpose.msra.mxu0 %v3285
  %4601 = vmatprep.mubr.bf16.mxu0 0
  %4602 = vmatmul.mubr.bf16.gmra.mrb[0].mxu0 %v15
  %v4603 = vpop.f32.mrb[0].mxu0
  %v4604 = vadd.f32 %v1044, %v4603
  %v4605 = vpop.f32.mrb[0].mxu0
  %v4606 = vadd.f32 %v1044, %v4605
  %v4607 = vpop.f32.mrb[0].mxu0
  %v4608 = vpop.f32.mrb[0].mxu0
  %4609 = vdwg.mxu0
  %4610 = vmatprep.subr.bf16.mxu0 0
  %4611 = vmatpush1.bf16.xpose.msra.mxu0 %v3286
  %4612 = vmatprep.subr.bf16.mxu0 0
  %4613 = vmatpush1.bf16.xpose.msra.mxu0 %v3287
  %4614 = vmatprep.subr.bf16.mxu0 0
  %4615 = vmatpush1.bf16.xpose.msra.mxu0 %v3288
  %4616 = vmatprep.subr.bf16.mxu0 0
  %4617 = vmatpush1.bf16.xpose.msra.mxu0 %v3289
  %4618 = vmatprep.subr.bf16.mxu0 0
  %4619 = vmatpush1.bf16.xpose.msra.mxu0 %v3290
  %4620 = vmatprep.subr.bf16.mxu0 0
  %4621 = vmatpush1.bf16.xpose.msra.mxu0 %v3291
  %4622 = vmatprep.subr.bf16.mxu0 0
  %4623 = vmatpush1.bf16.xpose.msra.mxu0 %v3292
  %4624 = vmatprep.subr.bf16.mxu0 0
  %4625 = vmatpush1.bf16.xpose.msra.mxu0 %v3293
  %4626 = vmatprep.subr.bf16.mxu0 0
  %4627 = vmatpush1.bf16.xpose.msra.mxu0 %v3294
  %4628 = vmatprep.subr.bf16.mxu0 0
  %4629 = vmatpush1.bf16.xpose.msra.mxu0 %v3295
  %4630 = vmatprep.subr.bf16.mxu0 0
  %4631 = vmatpush1.bf16.xpose.msra.mxu0 %v3296
  %4632 = vmatprep.subr.bf16.mxu0 0
  %4633 = vmatpush1.bf16.xpose.msra.mxu0 %v3297
  %4634 = vmatprep.subr.bf16.mxu0 0
  %4635 = vmatpush1.bf16.xpose.msra.mxu0 %v3298
  %4636 = vmatprep.subr.bf16.mxu0 0
  %4637 = vmatpush1.bf16.xpose.msra.mxu0 %v3299
  %4638 = vmatprep.subr.bf16.mxu0 0
  %4639 = vmatpush1.bf16.xpose.msra.mxu0 %v3300
  %4640 = vmatprep.subr.bf16.mxu0 0
  %4641 = vmatpush1.bf16.xpose.msra.mxu0 %v3301
  %4642 = vmatprep.mubr.bf16.mxu0 0
  %4643 = vmatmul.mubr.bf16.gmra.mrb[0].mxu0 %v15
  %v4644 = vpop.f32.mrb[0].mxu0
  %v4645 = vadd.f32 %v1044, %v4644
  %v4646 = vpop.f32.mrb[0].mxu0
  %v4647 = vadd.f32 %v1044, %v4646
  %v4648 = vpop.f32.mrb[0].mxu0
  %v4649 = vpop.f32.mrb[0].mxu0
  %4650 = vdwg.mxu0
  %4651 = vmatprep.subr.bf16.mxu0 0
  %4652 = vmatpush1.bf16.xpose.msra.mxu0 %v3302
  %4653 = vmatprep.subr.bf16.mxu0 0
  %4654 = vmatpush1.bf16.xpose.msra.mxu0 %v3303
  %4655 = vmatprep.subr.bf16.mxu0 0
  %4656 = vmatpush1.bf16.xpose.msra.mxu0 %v3304
  %4657 = vmatprep.subr.bf16.mxu0 0
  %4658 = vmatpush1.bf16.xpose.msra.mxu0 %v3305
  %4659 = vmatprep.subr.bf16.mxu0 0
  %4660 = vmatpush1.bf16.xpose.msra.mxu0 %v3306
  %4661 = vmatprep.subr.bf16.mxu0 0
  %4662 = vmatpush1.bf16.xpose.msra.mxu0 %v3307
  %4663 = vmatprep.subr.bf16.mxu0 0
  %4664 = vmatpush1.bf16.xpose.msra.mxu0 %v3308
  %4665 = vmatprep.subr.bf16.mxu0 0
  %4666 = vmatpush1.bf16.xpose.msra.mxu0 %v3309
  %4667 = vmatprep.subr.bf16.mxu0 0
  %4668 = vmatpush1.bf16.xpose.msra.mxu0 %v3310
  %4669 = vmatprep.subr.bf16.mxu0 0
  %4670 = vmatpush1.bf16.xpose.msra.mxu0 %v3311
  %4671 = vmatprep.subr.bf16.mxu0 0
  %4672 = vmatpush1.bf16.xpose.msra.mxu0 %v3312
  %4673 = vmatprep.subr.bf16.mxu0 0
  %4674 = vmatpush1.bf16.xpose.msra.mxu0 %v3313
  %4675 = vmatprep.subr.bf16.mxu0 0
  %4676 = vmatpush1.bf16.xpose.msra.mxu0 %v3314
  %4677 = vmatprep.subr.bf16.mxu0 0
  %4678 = vmatpush1.bf16.xpose.msra.mxu0 %v3315
  %4679 = vmatprep.subr.bf16.mxu0 0
  %4680 = vmatpush1.bf16.xpose.msra.mxu0 %v3316
  %4681 = vmatprep.subr.bf16.mxu0 0
  %4682 = vmatpush1.bf16.xpose.msra.mxu0 %v3317
  %4683 = vmatprep.mubr.bf16.mxu0 0
  %4684 = vmatmul.mubr.bf16.gmra.mrb[0].mxu0 %v15
  %v4685 = vpop.f32.mrb[0].mxu0
  %v4686 = vadd.f32 %v1044, %v4685
  %v4687 = vpop.f32.mrb[0].mxu0
  %v4688 = vadd.f32 %v1044, %v4687
  %v4689 = vpop.f32.mrb[0].mxu0
  %v4690 = vpop.f32.mrb[0].mxu0
  %4691 = vdwg.mxu0
  %4692 = vmatprep.subr.bf16.mxu0 0
  %4693 = vmatpush1.bf16.xpose.msra.mxu0 %v3318
  %4694 = vmatprep.subr.bf16.mxu0 0
  %4695 = vmatpush1.bf16.xpose.msra.mxu0 %v3319
  %4696 = vmatprep.subr.bf16.mxu0 0
  %4697 = vmatpush1.bf16.xpose.msra.mxu0 %v3320
  %4698 = vmatprep.subr.bf16.mxu0 0
  %4699 = vmatpush1.bf16.xpose.msra.mxu0 %v3321
  %4700 = vmatprep.subr.bf16.mxu0 0
  %4701 = vmatpush1.bf16.xpose.msra.mxu0 %v3322
  %4702 = vmatprep.subr.bf16.mxu0 0
  %4703 = vmatpush1.bf16.xpose.msra.mxu0 %v3323
  %4704 = vmatprep.subr.bf16.mxu0 0
  %4705 = vmatpush1.bf16.xpose.msra.mxu0 %v3324
  %4706 = vmatprep.subr.bf16.mxu0 0
  %4707 = vmatpush1.bf16.xpose.msra.mxu0 %v3325
  %4708 = vmatprep.subr.bf16.mxu0 0
  %4709 = vmatpush1.bf16.xpose.msra.mxu0 %v3326
  %4710 = vmatprep.subr.bf16.mxu0 0
  %4711 = vmatpush1.bf16.xpose.msra.mxu0 %v3327
  %4712 = vmatprep.subr.bf16.mxu0 0
  %4713 = vmatpush1.bf16.xpose.msra.mxu0 %v3328
  %4714 = vmatprep.subr.bf16.mxu0 0
  %4715 = vmatpush1.bf16.xpose.msra.mxu0 %v3329
  %4716 = vmatprep.subr.bf16.mxu0 0
  %4717 = vmatpush1.bf16.xpose.msra.mxu0 %v3330
  %4718 = vmatprep.subr.bf16.mxu0 0
  %4719 = vmatpush1.bf16.xpose.msra.mxu0 %v3331
  %4720 = vmatprep.subr.bf16.mxu0 0
  %4721 = vmatpush1.bf16.xpose.msra.mxu0 %v3332
  %4722 = vmatprep.subr.bf16.mxu0 0
  %4723 = vmatpush1.bf16.xpose.msra.mxu0 %v3333
  %4724 = vmatprep.mubr.bf16.mxu0 0
  %4725 = vmatmul.mubr.bf16.gmra.mrb[0].mxu0 %v15
  %v4726 = vpop.f32.mrb[0].mxu0
  %v4727 = vadd.f32 %v1044, %v4726
  %v4728 = vpop.f32.mrb[0].mxu0
  %v4729 = vadd.f32 %v1044, %v4728
  %v4730 = vpop.f32.mrb[0].mxu0
  %v4731 = vpop.f32.mrb[0].mxu0
  %4732 = vdwg.mxu0
  %4733 = vmatprep.subr.bf16.mxu0 0
  %4734 = vmatpush1.bf16.xpose.msra.mxu0 %v3334
  %4735 = vmatprep.subr.bf16.mxu0 0
  %4736 = vmatpush1.bf16.xpose.msra.mxu0 %v3335
  %4737 = vmatprep.subr.bf16.mxu0 0
  %4738 = vmatpush1.bf16.xpose.msra.mxu0 %v3336
  %4739 = vmatprep.subr.bf16.mxu0 0
  %4740 = vmatpush1.bf16.xpose.msra.mxu0 %v3337
  %4741 = vmatprep.subr.bf16.mxu0 0
  %4742 = vmatpush1.bf16.xpose.msra.mxu0 %v3338
  %4743 = vmatprep.subr.bf16.mxu0 0
  %4744 = vmatpush1.bf16.xpose.msra.mxu0 %v3339
  %4745 = vmatprep.subr.bf16.mxu0 0
  %4746 = vmatpush1.bf16.xpose.msra.mxu0 %v3340
  %4747 = vmatprep.subr.bf16.mxu0 0
  %4748 = vmatpush1.bf16.xpose.msra.mxu0 %v3341
  %4749 = vmatprep.subr.bf16.mxu0 0
  %4750 = vmatpush1.bf16.xpose.msra.mxu0 %v3342
  %4751 = vmatprep.subr.bf16.mxu0 0
  %4752 = vmatpush1.bf16.xpose.msra.mxu0 %v3343
  %4753 = vmatprep.subr.bf16.mxu0 0
  %4754 = vmatpush1.bf16.xpose.msra.mxu0 %v3344
  %4755 = vmatprep.subr.bf16.mxu0 0
  %4756 = vmatpush1.bf16.xpose.msra.mxu0 %v3345
  %4757 = vmatprep.subr.bf16.mxu0 0
  %4758 = vmatpush1.bf16.xpose.msra.mxu0 %v3346
  %4759 = vmatprep.subr.bf16.mxu0 0
  %4760 = vmatpush1.bf16.xpose.msra.mxu0 %v3347
  %4761 = vmatprep.subr.bf16.mxu0 0
  %4762 = vmatpush1.bf16.xpose.msra.mxu0 %v3348
  %4763 = vmatprep.subr.bf16.mxu0 0
  %4764 = vmatpush1.bf16.xpose.msra.mxu0 %v3349
  %4765 = vmatprep.mubr.bf16.mxu0 0
  %4766 = vmatmul.mubr.bf16.gmra.mrb[0].mxu0 %v15
  %v4767 = vpop.f32.mrb[0].mxu0
  %v4768 = vadd.f32 %v1044, %v4767
  %v4769 = vpop.f32.mrb[0].mxu0
  %v4770 = vadd.f32 %v1044, %v4769
  %v4771 = vpop.f32.mrb[0].mxu0
  %v4772 = vpop.f32.mrb[0].mxu0
  %4773 = vdwg.mxu0
  %4774 = vmatprep.subr.bf16.mxu0 0
  %4775 = vmatpush1.bf16.xpose.msra.mxu0 %v3350
  %4776 = vmatprep.subr.bf16.mxu0 0
  %4777 = vmatpush1.bf16.xpose.msra.mxu0 %v3351
  %4778 = vmatprep.subr.bf16.mxu0 0
  %4779 = vmatpush1.bf16.xpose.msra.mxu0 %v3352
  %4780 = vmatprep.subr.bf16.mxu0 0
  %4781 = vmatpush1.bf16.xpose.msra.mxu0 %v3353
  %4782 = vmatprep.subr.bf16.mxu0 0
  %4783 = vmatpush1.bf16.xpose.msra.mxu0 %v3354
  %4784 = vmatprep.subr.bf16.mxu0 0
  %4785 = vmatpush1.bf16.xpose.msra.mxu0 %v3355
  %4786 = vmatprep.subr.bf16.mxu0 0
  %4787 = vmatpush1.bf16.xpose.msra.mxu0 %v3356
  %4788 = vmatprep.subr.bf16.mxu0 0
  %4789 = vmatpush1.bf16.xpose.msra.mxu0 %v3357
  %4790 = vmatprep.subr.bf16.mxu0 0
  %4791 = vmatpush1.bf16.xpose.msra.mxu0 %v3358
  %4792 = vmatprep.subr.bf16.mxu0 0
  %4793 = vmatpush1.bf16.xpose.msra.mxu0 %v3359
  %4794 = vmatprep.subr.bf16.mxu0 0
  %4795 = vmatpush1.bf16.xpose.msra.mxu0 %v3360
  %4796 = vmatprep.subr.bf16.mxu0 0
  %4797 = vmatpush1.bf16.xpose.msra.mxu0 %v3361
  %4798 = vmatprep.subr.bf16.mxu0 0
  %4799 = vmatpush1.bf16.xpose.msra.mxu0 %v3362
  %4800 = vmatprep.subr.bf16.mxu0 0
  %4801 = vmatpush1.bf16.xpose.msra.mxu0 %v3363
  %4802 = vmatprep.subr.bf16.mxu0 0
  %4803 = vmatpush1.bf16.xpose.msra.mxu0 %v3364
  %4804 = vmatprep.subr.bf16.mxu0 0
  %4805 = vmatpush1.bf16.xpose.msra.mxu0 %v3365
  %4806 = vmatprep.mubr.bf16.mxu0 0
  %4807 = vmatmul.mubr.bf16.gmra.mrb[0].mxu0 %v15
  %v4808 = vpop.f32.mrb[0].mxu0
  %v4809 = vadd.f32 %v1044, %v4808
  %v4810 = vpop.f32.mrb[0].mxu0
  %v4811 = vadd.f32 %v1044, %v4810
  %v4812 = vpop.f32.mrb[0].mxu0
  %v4813 = vpop.f32.mrb[0].mxu0
  %4814 = vdwg.mxu0
  %4815 = vmatprep.subr.bf16.mxu0 0
  %4816 = vmatpush1.bf16.xpose.msra.mxu0 %v3366
  %4817 = vmatprep.subr.bf16.mxu0 0
  %4818 = vmatpush1.bf16.xpose.msra.mxu0 %v3367
  %4819 = vmatprep.subr.bf16.mxu0 0
  %4820 = vmatpush1.bf16.xpose.msra.mxu0 %v3368
  %4821 = vmatprep.subr.bf16.mxu0 0
  %4822 = vmatpush1.bf16.xpose.msra.mxu0 %v3369
  %4823 = vmatprep.subr.bf16.mxu0 0
  %4824 = vmatpush1.bf16.xpose.msra.mxu0 %v3370
  %4825 = vmatprep.subr.bf16.mxu0 0
  %4826 = vmatpush1.bf16.xpose.msra.mxu0 %v3371
  %4827 = vmatprep.subr.bf16.mxu0 0
  %4828 = vmatpush1.bf16.xpose.msra.mxu0 %v3372
  %4829 = vmatprep.subr.bf16.mxu0 0
  %4830 = vmatpush1.bf16.xpose.msra.mxu0 %v3373
  %4831 = vmatprep.subr.bf16.mxu0 0
  %4832 = vmatpush1.bf16.xpose.msra.mxu0 %v3374
  %4833 = vmatprep.subr.bf16.mxu0 0
  %4834 = vmatpush1.bf16.xpose.msra.mxu0 %v3375
  %4835 = vmatprep.subr.bf16.mxu0 0
  %4836 = vmatpush1.bf16.xpose.msra.mxu0 %v3376
  %4837 = vmatprep.subr.bf16.mxu0 0
  %4838 = vmatpush1.bf16.xpose.msra.mxu0 %v3377
  %4839 = vmatprep.subr.bf16.mxu0 0
  %4840 = vmatpush1.bf16.xpose.msra.mxu0 %v3378
  %4841 = vmatprep.subr.bf16.mxu0 0
  %4842 = vmatpush1.bf16.xpose.msra.mxu0 %v3379
  %4843 = vmatprep.subr.bf16.mxu0 0
  %4844 = vmatpush1.bf16.xpose.msra.mxu0 %v3380
  %4845 = vmatprep.subr.bf16.mxu0 0
  %4846 = vmatpush1.bf16.xpose.msra.mxu0 %v3381
  %4847 = vmatprep.mubr.bf16.mxu0 0
  %4848 = vmatmul.mubr.bf16.gmra.mrb[0].mxu0 %v15
  %v4849 = vpop.f32.mrb[0].mxu0
  %v4850 = vadd.f32 %v1044, %v4849
  %v4851 = vpop.f32.mrb[0].mxu0
  %v4852 = vadd.f32 %v1044, %v4851
  %v4853 = vpop.f32.mrb[0].mxu0
  %v4854 = vpop.f32.mrb[0].mxu0
  %4855 = vdwg.mxu0
  %4856 = vmatprep.subr.bf16.mxu0 0
  %4857 = vmatpush1.bf16.xpose.msra.mxu0 %v3382
  %4858 = vmatprep.subr.bf16.mxu0 0
  %4859 = vmatpush1.bf16.xpose.msra.mxu0 %v3383
  %4860 = vmatprep.subr.bf16.mxu0 0
  %4861 = vmatpush1.bf16.xpose.msra.mxu0 %v3384
  %4862 = vmatprep.subr.bf16.mxu0 0
  %4863 = vmatpush1.bf16.xpose.msra.mxu0 %v3385
  %4864 = vmatprep.subr.bf16.mxu0 0
  %4865 = vmatpush1.bf16.xpose.msra.mxu0 %v3386
  %4866 = vmatprep.subr.bf16.mxu0 0
  %4867 = vmatpush1.bf16.xpose.msra.mxu0 %v3387
  %4868 = vmatprep.subr.bf16.mxu0 0
  %4869 = vmatpush1.bf16.xpose.msra.mxu0 %v3388
  %4870 = vmatprep.subr.bf16.mxu0 0
  %4871 = vmatpush1.bf16.xpose.msra.mxu0 %v3389
  %4872 = vmatprep.subr.bf16.mxu0 0
  %4873 = vmatpush1.bf16.xpose.msra.mxu0 %v3390
  %4874 = vmatprep.subr.bf16.mxu0 0
  %4875 = vmatpush1.bf16.xpose.msra.mxu0 %v3391
  %4876 = vmatprep.subr.bf16.mxu0 0
  %4877 = vmatpush1.bf16.xpose.msra.mxu0 %v3392
  %4878 = vmatprep.subr.bf16.mxu0 0
  %4879 = vmatpush1.bf16.xpose.msra.mxu0 %v3393
  %4880 = vmatprep.subr.bf16.mxu0 0
  %4881 = vmatpush1.bf16.xpose.msra.mxu0 %v3394
  %4882 = vmatprep.subr.bf16.mxu0 0
  %4883 = vmatpush1.bf16.xpose.msra.mxu0 %v3395
  %4884 = vmatprep.subr.bf16.mxu0 0
  %4885 = vmatpush1.bf16.xpose.msra.mxu0 %v3396
  %4886 = vmatprep.subr.bf16.mxu0 0
  %4887 = vmatpush1.bf16.xpose.msra.mxu0 %v3397
  %4888 = vmatprep.mubr.bf16.mxu0 0
  %4889 = vmatmul.mubr.bf16.gmra.mrb[0].mxu0 %v15
  %v4890 = vpop.f32.mrb[0].mxu0
  %v4891 = vadd.f32 %v1044, %v4890
  %v4892 = vpop.f32.mrb[0].mxu0
  %v4893 = vadd.f32 %v1044, %v4892
  %v4894 = vpop.f32.mrb[0].mxu0
  %v4895 = vpop.f32.mrb[0].mxu0
  %4896 = vdwg.mxu0
  %4897 = vmatprep.subr.bf16.mxu0 0
  %4898 = vmatpush1.bf16.xpose.msra.mxu0 %v3398
  %4899 = vmatprep.subr.bf16.mxu0 0
  %4900 = vmatpush1.bf16.xpose.msra.mxu0 %v3399
  %4901 = vmatprep.subr.bf16.mxu0 0
  %4902 = vmatpush1.bf16.xpose.msra.mxu0 %v3400
  %4903 = vmatprep.subr.bf16.mxu0 0
  %4904 = vmatpush1.bf16.xpose.msra.mxu0 %v3401
  %4905 = vmatprep.subr.bf16.mxu0 0
  %4906 = vmatpush1.bf16.xpose.msra.mxu0 %v3402
  %4907 = vmatprep.subr.bf16.mxu0 0
  %4908 = vmatpush1.bf16.xpose.msra.mxu0 %v3403
  %4909 = vmatprep.subr.bf16.mxu0 0
  %4910 = vmatpush1.bf16.xpose.msra.mxu0 %v3404
  %4911 = vmatprep.subr.bf16.mxu0 0
  %4912 = vmatpush1.bf16.xpose.msra.mxu0 %v3405
  %4913 = vmatprep.subr.bf16.mxu0 0
  %4914 = vmatpush1.bf16.xpose.msra.mxu0 %v3406
  %4915 = vmatprep.subr.bf16.mxu0 0
  %4916 = vmatpush1.bf16.xpose.msra.mxu0 %v3407
  %4917 = vmatprep.subr.bf16.mxu0 0
  %4918 = vmatpush1.bf16.xpose.msra.mxu0 %v3408
  %4919 = vmatprep.subr.bf16.mxu0 0
  %4920 = vmatpush1.bf16.xpose.msra.mxu0 %v3409
  %4921 = vmatprep.subr.bf16.mxu0 0
  %4922 = vmatpush1.bf16.xpose.msra.mxu0 %v3410
  %4923 = vmatprep.subr.bf16.mxu0 0
  %4924 = vmatpush1.bf16.xpose.msra.mxu0 %v3411
  %4925 = vmatprep.subr.bf16.mxu0 0
  %4926 = vmatpush1.bf16.xpose.msra.mxu0 %v3412
  %4927 = vmatprep.subr.bf16.mxu0 0
  %4928 = vmatpush1.bf16.xpose.msra.mxu0 %v3413
  %4929 = vmatprep.mubr.bf16.mxu0 0
  %4930 = vmatmul.mubr.bf16.gmra.mrb[0].mxu0 %v15
  %v4931 = vpop.f32.mrb[0].mxu0
  %v4932 = vadd.f32 %v1044, %v4931
  %v4933 = vpop.f32.mrb[0].mxu0
  %v4934 = vadd.f32 %v1044, %v4933
  %v4935 = vpop.f32.mrb[0].mxu0
  %v4936 = vpop.f32.mrb[0].mxu0
  %4937 = vdwg.mxu0
  %4938 = vmatprep.subr.bf16.mxu0 0
  %4939 = vmatpush1.bf16.xpose.msra.mxu0 %v3414
  %4940 = vmatprep.subr.bf16.mxu0 0
  %4941 = vmatpush1.bf16.xpose.msra.mxu0 %v3415
  %4942 = vmatprep.subr.bf16.mxu0 0
  %4943 = vmatpush1.bf16.xpose.msra.mxu0 %v3416
  %4944 = vmatprep.subr.bf16.mxu0 0
  %4945 = vmatpush1.bf16.xpose.msra.mxu0 %v3417
  %4946 = vmatprep.subr.bf16.mxu0 0
  %4947 = vmatpush1.bf16.xpose.msra.mxu0 %v3418
  %4948 = vmatprep.subr.bf16.mxu0 0
  %4949 = vmatpush1.bf16.xpose.msra.mxu0 %v3419
  %4950 = vmatprep.subr.bf16.mxu0 0
  %4951 = vmatpush1.bf16.xpose.msra.mxu0 %v3420
  %4952 = vmatprep.subr.bf16.mxu0 0
  %4953 = vmatpush1.bf16.xpose.msra.mxu0 %v3421
  %4954 = vmatprep.subr.bf16.mxu0 0
  %4955 = vmatpush1.bf16.xpose.msra.mxu0 %v3422
  %4956 = vmatprep.subr.bf16.mxu0 0
  %4957 = vmatpush1.bf16.xpose.msra.mxu0 %v3423
  %4958 = vmatprep.subr.bf16.mxu0 0
  %4959 = vmatpush1.bf16.xpose.msra.mxu0 %v3424
  %4960 = vmatprep.subr.bf16.mxu0 0
  %4961 = vmatpush1.bf16.xpose.msra.mxu0 %v3425
  %4962 = vmatprep.subr.bf16.mxu0 0
  %4963 = vmatpush1.bf16.xpose.msra.mxu0 %v3426
  %4964 = vmatprep.subr.bf16.mxu0 0
  %4965 = vmatpush1.bf16.xpose.msra.mxu0 %v3427
  %4966 = vmatprep.subr.bf16.mxu0 0
  %4967 = vmatpush1.bf16.xpose.msra.mxu0 %v3428
  %4968 = vmatprep.subr.bf16.mxu0 0
  %4969 = vmatpush1.bf16.xpose.msra.mxu0 %v3429
  %4970 = vmatprep.mubr.bf16.mxu0 0
  %4971 = vmatmul.mubr.bf16.gmra.mrb[0].mxu0 %v15
  %v4972 = vpop.f32.mrb[0].mxu0
  %v4973 = vadd.f32 %v1044, %v4972
  %v4974 = vpop.f32.mrb[0].mxu0
  %v4975 = vadd.f32 %v1044, %v4974
  %v4976 = vpop.f32.mrb[0].mxu0
  %v4977 = vpop.f32.mrb[0].mxu0
  %4978 = vdwg.mxu0
  %4979 = vmatprep.subr.bf16.mxu0 0
  %4980 = vmatpush1.bf16.xpose.msra.mxu0 %v3430
  %4981 = vmatprep.subr.bf16.mxu0 0
  %4982 = vmatpush1.bf16.xpose.msra.mxu0 %v3431
  %4983 = vmatprep.subr.bf16.mxu0 0
  %4984 = vmatpush1.bf16.xpose.msra.mxu0 %v3432
  %4985 = vmatprep.subr.bf16.mxu0 0
  %4986 = vmatpush1.bf16.xpose.msra.mxu0 %v3433
  %4987 = vmatprep.subr.bf16.mxu0 0
  %4988 = vmatpush1.bf16.xpose.msra.mxu0 %v3434
  %4989 = vmatprep.subr.bf16.mxu0 0
  %4990 = vmatpush1.bf16.xpose.msra.mxu0 %v3435
  %4991 = vmatprep.subr.bf16.mxu0 0
  %4992 = vmatpush1.bf16.xpose.msra.mxu0 %v3436
  %4993 = vmatprep.subr.bf16.mxu0 0
  %4994 = vmatpush1.bf16.xpose.msra.mxu0 %v3437
  %4995 = vmatprep.subr.bf16.mxu0 0
  %4996 = vmatpush1.bf16.xpose.msra.mxu0 %v3438
  %4997 = vmatprep.subr.bf16.mxu0 0
  %4998 = vmatpush1.bf16.xpose.msra.mxu0 %v3439
  %4999 = vmatprep.subr.bf16.mxu0 0
  %5000 = vmatpush1.bf16.xpose.msra.mxu0 %v3440
  %5001 = vmatprep.subr.bf16.mxu0 0
  %5002 = vmatpush1.bf16.xpose.msra.mxu0 %v3441
  %5003 = vmatprep.subr.bf16.mxu0 0
  %5004 = vmatpush1.bf16.xpose.msra.mxu0 %v3442
  %5005 = vmatprep.subr.bf16.mxu0 0
  %5006 = vmatpush1.bf16.xpose.msra.mxu0 %v3443
  %5007 = vmatprep.subr.bf16.mxu0 0
  %5008 = vmatpush1.bf16.xpose.msra.mxu0 %v3444
  %5009 = vmatprep.subr.bf16.mxu0 0
  %5010 = vmatpush1.bf16.xpose.msra.mxu0 %v3445
  %5011 = vmatprep.mubr.bf16.mxu0 0
  %5012 = vmatmul.mubr.bf16.gmra.mrb[0].mxu0 %v15
  %v5013 = vpop.f32.mrb[0].mxu0
  %v5014 = vadd.f32 %v1044, %v5013
  %v5015 = vpop.f32.mrb[0].mxu0
  %v5016 = vadd.f32 %v1044, %v5015
  %v5017 = vpop.f32.mrb[0].mxu0
  %v5018 = vpop.f32.mrb[0].mxu0
  %5019 = vdwg.mxu0
  %5020 = vmatprep.subr.bf16.mxu0 0
  %5021 = vmatpush1.bf16.xpose.msra.mxu0 %v3446
  %5022 = vmatprep.subr.bf16.mxu0 0
  %5023 = vmatpush1.bf16.xpose.msra.mxu0 %v3447
  %5024 = vmatprep.subr.bf16.mxu0 0
  %5025 = vmatpush1.bf16.xpose.msra.mxu0 %v3448
  %5026 = vmatprep.subr.bf16.mxu0 0
  %5027 = vmatpush1.bf16.xpose.msra.mxu0 %v3449
  %5028 = vmatprep.subr.bf16.mxu0 0
  %5029 = vmatpush1.bf16.xpose.msra.mxu0 %v3450
  %5030 = vmatprep.subr.bf16.mxu0 0
  %5031 = vmatpush1.bf16.xpose.msra.mxu0 %v3451
  %5032 = vmatprep.subr.bf16.mxu0 0
  %5033 = vmatpush1.bf16.xpose.msra.mxu0 %v3452
  %5034 = vmatprep.subr.bf16.mxu0 0
  %5035 = vmatpush1.bf16.xpose.msra.mxu0 %v3453
  %5036 = vmatprep.subr.bf16.mxu0 0
  %5037 = vmatpush1.bf16.xpose.msra.mxu0 %v3454
  %5038 = vmatprep.subr.bf16.mxu0 0
  %5039 = vmatpush1.bf16.xpose.msra.mxu0 %v3455
  %5040 = vmatprep.subr.bf16.mxu0 0
  %5041 = vmatpush1.bf16.xpose.msra.mxu0 %v3456
  %5042 = vmatprep.subr.bf16.mxu0 0
  %5043 = vmatpush1.bf16.xpose.msra.mxu0 %v3457
  %5044 = vmatprep.subr.bf16.mxu0 0
  %5045 = vmatpush1.bf16.xpose.msra.mxu0 %v3458
  %5046 = vmatprep.subr.bf16.mxu0 0
  %5047 = vmatpush1.bf16.xpose.msra.mxu0 %v3459
  %5048 = vmatprep.subr.bf16.mxu0 0
  %5049 = vmatpush1.bf16.xpose.msra.mxu0 %v3460
  %5050 = vmatprep.subr.bf16.mxu0 0
  %5051 = vmatpush1.bf16.xpose.msra.mxu0 %v3461
  %5052 = vmatprep.mubr.bf16.mxu0 0
  %5053 = vmatmul.mubr.bf16.gmra.mrb[0].mxu0 %v15
  %v5054 = vpop.f32.mrb[0].mxu0
  %v5055 = vadd.f32 %v1044, %v5054
  %v5056 = vpop.f32.mrb[0].mxu0
  %v5057 = vadd.f32 %v1044, %v5056
  %v5058 = vpop.f32.mrb[0].mxu0
  %v5059 = vpop.f32.mrb[0].mxu0
  %5060 = vdwg.mxu0
  %5061 = vmatprep.subr.bf16.mxu0 0
  %5062 = vmatpush1.bf16.xpose.msra.mxu0 %v3462
  %5063 = vmatprep.subr.bf16.mxu0 0
  %5064 = vmatpush1.bf16.xpose.msra.mxu0 %v3463
  %5065 = vmatprep.subr.bf16.mxu0 0
  %5066 = vmatpush1.bf16.xpose.msra.mxu0 %v3464
  %5067 = vmatprep.subr.bf16.mxu0 0
  %5068 = vmatpush1.bf16.xpose.msra.mxu0 %v3465
  %5069 = vmatprep.subr.bf16.mxu0 0
  %5070 = vmatpush1.bf16.xpose.msra.mxu0 %v3466
  %5071 = vmatprep.subr.bf16.mxu0 0
  %5072 = vmatpush1.bf16.xpose.msra.mxu0 %v3467
  %5073 = vmatprep.subr.bf16.mxu0 0
  %5074 = vmatpush1.bf16.xpose.msra.mxu0 %v3468
  %5075 = vmatprep.subr.bf16.mxu0 0
  %5076 = vmatpush1.bf16.xpose.msra.mxu0 %v3469
  %5077 = vmatprep.subr.bf16.mxu0 0
  %5078 = vmatpush1.bf16.xpose.msra.mxu0 %v3470
  %5079 = vmatprep.subr.bf16.mxu0 0
  %5080 = vmatpush1.bf16.xpose.msra.mxu0 %v3471
  %5081 = vmatprep.subr.bf16.mxu0 0
  %5082 = vmatpush1.bf16.xpose.msra.mxu0 %v3472
  %5083 = vmatprep.subr.bf16.mxu0 0
  %5084 = vmatpush1.bf16.xpose.msra.mxu0 %v3473
  %5085 = vmatprep.subr.bf16.mxu0 0
  %5086 = vmatpush1.bf16.xpose.msra.mxu0 %v3474
  %5087 = vmatprep.subr.bf16.mxu0 0
  %5088 = vmatpush1.bf16.xpose.msra.mxu0 %v3475
  %5089 = vmatprep.subr.bf16.mxu0 0
  %5090 = vmatpush1.bf16.xpose.msra.mxu0 %v3476
  %5091 = vmatprep.subr.bf16.mxu0 0
  %5092 = vmatpush1.bf16.xpose.msra.mxu0 %v3477
  %5093 = vmatprep.mubr.bf16.mxu0 0
  %5094 = vmatmul.mubr.bf16.gmra.mrb[0].mxu0 %v15
  %v5095 = vpop.f32.mrb[0].mxu0
  %v5096 = vadd.f32 %v1044, %v5095
  %v5097 = vpop.f32.mrb[0].mxu0
  %v5098 = vadd.f32 %v1044, %v5097
  %v5099 = vpop.f32.mrb[0].mxu0
  %v5100 = vpop.f32.mrb[0].mxu0
  %5101 = vdwg.mxu0
  %5102 = vmatprep.subr.bf16.mxu0 0
  %5103 = vmatpush1.bf16.xpose.msra.mxu0 %v3478
  %5104 = vmatprep.subr.bf16.mxu0 0
  %5105 = vmatpush1.bf16.xpose.msra.mxu0 %v3479
  %5106 = vmatprep.subr.bf16.mxu0 0
  %5107 = vmatpush1.bf16.xpose.msra.mxu0 %v3480
  %5108 = vmatprep.subr.bf16.mxu0 0
  %5109 = vmatpush1.bf16.xpose.msra.mxu0 %v3481
  %5110 = vmatprep.subr.bf16.mxu0 0
  %5111 = vmatpush1.bf16.xpose.msra.mxu0 %v3482
  %5112 = vmatprep.subr.bf16.mxu0 0
  %5113 = vmatpush1.bf16.xpose.msra.mxu0 %v3483
  %5114 = vmatprep.subr.bf16.mxu0 0
  %5115 = vmatpush1.bf16.xpose.msra.mxu0 %v3484
  %5116 = vmatprep.subr.bf16.mxu0 0
  %5117 = vmatpush1.bf16.xpose.msra.mxu0 %v3485
  %5118 = vmatprep.subr.bf16.mxu0 0
  %5119 = vmatpush1.bf16.xpose.msra.mxu0 %v3486
  %5120 = vmatprep.subr.bf16.mxu0 0
  %5121 = vmatpush1.bf16.xpose.msra.mxu0 %v3487
  %5122 = vmatprep.subr.bf16.mxu0 0
  %5123 = vmatpush1.bf16.xpose.msra.mxu0 %v3488
  %5124 = vmatprep.subr.bf16.mxu0 0
  %5125 = vmatpush1.bf16.xpose.msra.mxu0 %v3489
  %5126 = vmatprep.subr.bf16.mxu0 0
  %5127 = vmatpush1.bf16.xpose.msra.mxu0 %v3490
  %5128 = vmatprep.subr.bf16.mxu0 0
  %5129 = vmatpush1.bf16.xpose.msra.mxu0 %v3491
  %5130 = vmatprep.subr.bf16.mxu0 0
  %5131 = vmatpush1.bf16.xpose.msra.mxu0 %v3492
  %5132 = vmatprep.subr.bf16.mxu0 0
  %5133 = vmatpush1.bf16.xpose.msra.mxu0 %v3493
  %5134 = vmatprep.mubr.bf16.mxu0 0
  %5135 = vmatmul.mubr.bf16.gmra.mrb[0].mxu0 %v15
  %v5136 = vpop.f32.mrb[0].mxu0
  %v5137 = vadd.f32 %v1044, %v5136
  %v5138 = vpop.f32.mrb[0].mxu0
  %v5139 = vadd.f32 %v1044, %v5138
  %v5140 = vpop.f32.mrb[0].mxu0
  %v5141 = vpop.f32.mrb[0].mxu0
  %5142 = vdwg.mxu0
  %5143 = vmatprep.subr.bf16.mxu0 0
  %5144 = vmatpush1.bf16.xpose.msra.mxu0 %v3494
  %5145 = vmatprep.subr.bf16.mxu0 0
  %5146 = vmatpush1.bf16.xpose.msra.mxu0 %v3495
  %5147 = vmatprep.subr.bf16.mxu0 0
  %5148 = vmatpush1.bf16.xpose.msra.mxu0 %v3496
  %5149 = vmatprep.subr.bf16.mxu0 0
  %5150 = vmatpush1.bf16.xpose.msra.mxu0 %v3497
  %5151 = vmatprep.subr.bf16.mxu0 0
  %5152 = vmatpush1.bf16.xpose.msra.mxu0 %v3498
  %5153 = vmatprep.subr.bf16.mxu0 0
  %5154 = vmatpush1.bf16.xpose.msra.mxu0 %v3499
  %5155 = vmatprep.subr.bf16.mxu0 0
  %5156 = vmatpush1.bf16.xpose.msra.mxu0 %v3500
  %5157 = vmatprep.subr.bf16.mxu0 0
  %5158 = vmatpush1.bf16.xpose.msra.mxu0 %v3501
  %5159 = vmatprep.subr.bf16.mxu0 0
  %5160 = vmatpush1.bf16.xpose.msra.mxu0 %v3502
  %5161 = vmatprep.subr.bf16.mxu0 0
  %5162 = vmatpush1.bf16.xpose.msra.mxu0 %v3503
  %5163 = vmatprep.subr.bf16.mxu0 0
  %5164 = vmatpush1.bf16.xpose.msra.mxu0 %v3504
  %5165 = vmatprep.subr.bf16.mxu0 0
  %5166 = vmatpush1.bf16.xpose.msra.mxu0 %v3505
  %5167 = vmatprep.subr.bf16.mxu0 0
  %5168 = vmatpush1.bf16.xpose.msra.mxu0 %v3506
  %5169 = vmatprep.subr.bf16.mxu0 0
  %5170 = vmatpush1.bf16.xpose.msra.mxu0 %v3507
  %5171 = vmatprep.subr.bf16.mxu0 0
  %5172 = vmatpush1.bf16.xpose.msra.mxu0 %v3508
  %5173 = vmatprep.subr.bf16.mxu0 0
  %5174 = vmatpush1.bf16.xpose.msra.mxu0 %v3509
  %5175 = vmatprep.mubr.bf16.mxu0 0
  %5176 = vmatmul.mubr.bf16.gmra.mrb[0].mxu0 %v15
  %v5177 = vpop.f32.mrb[0].mxu0
  %v5178 = vadd.f32 %v1044, %v5177
  %v5179 = vpop.f32.mrb[0].mxu0
  %v5180 = vadd.f32 %v1044, %v5179
  %v5181 = vpop.f32.mrb[0].mxu0
  %v5182 = vpop.f32.mrb[0].mxu0
  %5183 = vdwg.mxu0
  %5184 = vmatprep.subr.bf16.mxu0 0
  %5185 = vmatpush1.bf16.xpose.msra.mxu0 %v3510
  %5186 = vmatprep.subr.bf16.mxu0 0
  %5187 = vmatpush1.bf16.xpose.msra.mxu0 %v3511
  %5188 = vmatprep.subr.bf16.mxu0 0
  %5189 = vmatpush1.bf16.xpose.msra.mxu0 %v3512
  %5190 = vmatprep.subr.bf16.mxu0 0
  %5191 = vmatpush1.bf16.xpose.msra.mxu0 %v3513
  %5192 = vmatprep.subr.bf16.mxu0 0
  %5193 = vmatpush1.bf16.xpose.msra.mxu0 %v3514
  %5194 = vmatprep.subr.bf16.mxu0 0
  %5195 = vmatpush1.bf16.xpose.msra.mxu0 %v3515
  %5196 = vmatprep.subr.bf16.mxu0 0
  %5197 = vmatpush1.bf16.xpose.msra.mxu0 %v3516
  %5198 = vmatprep.subr.bf16.mxu0 0
  %5199 = vmatpush1.bf16.xpose.msra.mxu0 %v3517
  %5200 = vmatprep.subr.bf16.mxu0 0
  %5201 = vmatpush1.bf16.xpose.msra.mxu0 %v3518
  %5202 = vmatprep.subr.bf16.mxu0 0
  %5203 = vmatpush1.bf16.xpose.msra.mxu0 %v3519
  %5204 = vmatprep.subr.bf16.mxu0 0
  %5205 = vmatpush1.bf16.xpose.msra.mxu0 %v3520
  %5206 = vmatprep.subr.bf16.mxu0 0
  %5207 = vmatpush1.bf16.xpose.msra.mxu0 %v3521
  %5208 = vmatprep.subr.bf16.mxu0 0
  %5209 = vmatpush1.bf16.xpose.msra.mxu0 %v3522
  %5210 = vmatprep.subr.bf16.mxu0 0
  %5211 = vmatpush1.bf16.xpose.msra.mxu0 %v3523
  %5212 = vmatprep.subr.bf16.mxu0 0
  %5213 = vmatpush1.bf16.xpose.msra.mxu0 %v3524
  %5214 = vmatprep.subr.bf16.mxu0 0
  %5215 = vmatpush1.bf16.xpose.msra.mxu0 %v3525
  %5216 = vmatprep.mubr.bf16.mxu0 0
  %5217 = vmatmul.mubr.bf16.gmra.mrb[0].mxu0 %v15
  %v5218 = vpop.f32.mrb[0].mxu0
  %v5219 = vadd.f32 %v1044, %v5218
  %v5220 = vpop.f32.mrb[0].mxu0
  %v5221 = vadd.f32 %v1044, %v5220
  %v5222 = vpop.f32.mrb[0].mxu0
  %v5223 = vpop.f32.mrb[0].mxu0
  %5224 = vdwg.mxu0
  %5225 = vmatprep.subr.bf16.mxu0 0
  %5226 = vmatpush1.bf16.xpose.msra.mxu0 %v3526
  %5227 = vmatprep.subr.bf16.mxu0 0
  %5228 = vmatpush1.bf16.xpose.msra.mxu0 %v3527
  %5229 = vmatprep.subr.bf16.mxu0 0
  %5230 = vmatpush1.bf16.xpose.msra.mxu0 %v3528
  %5231 = vmatprep.subr.bf16.mxu0 0
  %5232 = vmatpush1.bf16.xpose.msra.mxu0 %v3529
  %5233 = vmatprep.subr.bf16.mxu0 0
  %5234 = vmatpush1.bf16.xpose.msra.mxu0 %v3530
  %5235 = vmatprep.subr.bf16.mxu0 0
  %5236 = vmatpush1.bf16.xpose.msra.mxu0 %v3531
  %5237 = vmatprep.subr.bf16.mxu0 0
  %5238 = vmatpush1.bf16.xpose.msra.mxu0 %v3532
  %5239 = vmatprep.subr.bf16.mxu0 0
  %5240 = vmatpush1.bf16.xpose.msra.mxu0 %v3533
  %5241 = vmatprep.subr.bf16.mxu0 0
  %5242 = vmatpush1.bf16.xpose.msra.mxu0 %v3534
  %5243 = vmatprep.subr.bf16.mxu0 0
  %5244 = vmatpush1.bf16.xpose.msra.mxu0 %v3535
  %5245 = vmatprep.subr.bf16.mxu0 0
  %5246 = vmatpush1.bf16.xpose.msra.mxu0 %v3536
  %5247 = vmatprep.subr.bf16.mxu0 0
  %5248 = vmatpush1.bf16.xpose.msra.mxu0 %v3537
  %5249 = vmatprep.subr.bf16.mxu0 0
  %5250 = vmatpush1.bf16.xpose.msra.mxu0 %v3538
  %5251 = vmatprep.subr.bf16.mxu0 0
  %5252 = vmatpush1.bf16.xpose.msra.mxu0 %v3539
  %5253 = vmatprep.subr.bf16.mxu0 0
  %5254 = vmatpush1.bf16.xpose.msra.mxu0 %v3540
  %5255 = vmatprep.subr.bf16.mxu0 0
  %5256 = vmatpush1.bf16.xpose.msra.mxu0 %v3541
  %5257 = vmatprep.mubr.bf16.mxu0 0
  %5258 = vmatmul.mubr.bf16.gmra.mrb[0].mxu0 %v15
  %v5259 = vpop.f32.mrb[0].mxu0
  %v5260 = vadd.f32 %v1044, %v5259
  %v5261 = vpop.f32.mrb[0].mxu0
  %v5262 = vadd.f32 %v1044, %v5261
  %v5263 = vpop.f32.mrb[0].mxu0
  %v5264 = vpop.f32.mrb[0].mxu0
  %5265 = vdwg.mxu0
  %5266 = vmatprep.subr.bf16.mxu0 0
  %5267 = vmatpush1.bf16.xpose.msra.mxu0 %v3542
  %5268 = vmatprep.subr.bf16.mxu0 0
  %5269 = vmatpush1.bf16.xpose.msra.mxu0 %v3543
  %5270 = vmatprep.subr.bf16.mxu0 0
  %5271 = vmatpush1.bf16.xpose.msra.mxu0 %v3544
  %5272 = vmatprep.subr.bf16.mxu0 0
  %5273 = vmatpush1.bf16.xpose.msra.mxu0 %v3545
  %5274 = vmatprep.subr.bf16.mxu0 0
  %5275 = vmatpush1.bf16.xpose.msra.mxu0 %v3546
  %5276 = vmatprep.subr.bf16.mxu0 0
  %5277 = vmatpush1.bf16.xpose.msra.mxu0 %v3547
  %5278 = vmatprep.subr.bf16.mxu0 0
  %5279 = vmatpush1.bf16.xpose.msra.mxu0 %v3548
  %5280 = vmatprep.subr.bf16.mxu0 0
  %5281 = vmatpush1.bf16.xpose.msra.mxu0 %v3549
  %5282 = vmatprep.subr.bf16.mxu0 0
  %5283 = vmatpush1.bf16.xpose.msra.mxu0 %v3550
  %5284 = vmatprep.subr.bf16.mxu0 0
  %5285 = vmatpush1.bf16.xpose.msra.mxu0 %v3551
  %5286 = vmatprep.subr.bf16.mxu0 0
  %5287 = vmatpush1.bf16.xpose.msra.mxu0 %v3552
  %5288 = vmatprep.subr.bf16.mxu0 0
  %5289 = vmatpush1.bf16.xpose.msra.mxu0 %v3553
  %5290 = vmatprep.subr.bf16.mxu0 0
  %5291 = vmatpush1.bf16.xpose.msra.mxu0 %v3554
  %5292 = vmatprep.subr.bf16.mxu0 0
  %5293 = vmatpush1.bf16.xpose.msra.mxu0 %v3555
  %5294 = vmatprep.subr.bf16.mxu0 0
  %5295 = vmatpush1.bf16.xpose.msra.mxu0 %v3556
  %5296 = vmatprep.subr.bf16.mxu0 0
  %5297 = vmatpush1.bf16.xpose.msra.mxu0 %v3557
  %5298 = vmatprep.mubr.bf16.mxu0 0
  %5299 = vmatmul.mubr.bf16.gmra.mrb[0].mxu0 %v15
  %v5300 = vpop.f32.mrb[0].mxu0
  %v5301 = vadd.f32 %v1044, %v5300
  %v5302 = vpop.f32.mrb[0].mxu0
  %v5303 = vadd.f32 %v1044, %v5302
  %v5304 = vpop.f32.mrb[0].mxu0
  %v5305 = vpop.f32.mrb[0].mxu0
  %5306 = vdwg.mxu0
  %5307 = vmatprep.subr.bf16.mxu0 0
  %5308 = vmatpush1.bf16.xpose.msra.mxu0 %v3558
  %5309 = vmatprep.subr.bf16.mxu0 0
  %5310 = vmatpush1.bf16.xpose.msra.mxu0 %v3559
  %5311 = vmatprep.subr.bf16.mxu0 0
  %5312 = vmatpush1.bf16.xpose.msra.mxu0 %v3560
  %5313 = vmatprep.subr.bf16.mxu0 0
  %5314 = vmatpush1.bf16.xpose.msra.mxu0 %v3561
  %5315 = vmatprep.subr.bf16.mxu0 0
  %5316 = vmatpush1.bf16.xpose.msra.mxu0 %v3562
  %5317 = vmatprep.subr.bf16.mxu0 0
  %5318 = vmatpush1.bf16.xpose.msra.mxu0 %v3563
  %5319 = vmatprep.subr.bf16.mxu0 0
  %5320 = vmatpush1.bf16.xpose.msra.mxu0 %v3564
  %5321 = vmatprep.subr.bf16.mxu0 0
  %5322 = vmatpush1.bf16.xpose.msra.mxu0 %v3565
  %5323 = vmatprep.subr.bf16.mxu0 0
  %5324 = vmatpush1.bf16.xpose.msra.mxu0 %v3566
  %5325 = vmatprep.subr.bf16.mxu0 0
  %5326 = vmatpush1.bf16.xpose.msra.mxu0 %v3567
  %5327 = vmatprep.subr.bf16.mxu0 0
  %5328 = vmatpush1.bf16.xpose.msra.mxu0 %v3568
  %5329 = vmatprep.subr.bf16.mxu0 0
  %5330 = vmatpush1.bf16.xpose.msra.mxu0 %v3569
  %5331 = vmatprep.subr.bf16.mxu0 0
  %5332 = vmatpush1.bf16.xpose.msra.mxu0 %v3570
  %5333 = vmatprep.subr.bf16.mxu0 0
  %5334 = vmatpush1.bf16.xpose.msra.mxu0 %v3571
  %5335 = vmatprep.subr.bf16.mxu0 0
  %5336 = vmatpush1.bf16.xpose.msra.mxu0 %v3572
  %5337 = vmatprep.subr.bf16.mxu0 0
  %5338 = vmatpush1.bf16.xpose.msra.mxu0 %v3573
  %5339 = vmatprep.mubr.bf16.mxu0 0
  %5340 = vmatmul.mubr.bf16.gmra.mrb[0].mxu0 %v15
  %v5341 = vpop.f32.mrb[0].mxu0
  %v5342 = vadd.f32 %v1044, %v5341
  %v5343 = vpop.f32.mrb[0].mxu0
  %v5344 = vadd.f32 %v1044, %v5343
  %v5345 = vpop.f32.mrb[0].mxu0
  %v5346 = vpop.f32.mrb[0].mxu0
  %5347 = vdwg.mxu0
  %5348 = vmatprep.subr.bf16.mxu0 0
  %5349 = vmatpush1.bf16.xpose.msra.mxu0 %v3574
  %5350 = vmatprep.subr.bf16.mxu0 0
  %5351 = vmatpush1.bf16.xpose.msra.mxu0 %v3575
  %5352 = vmatprep.subr.bf16.mxu0 0
  %5353 = vmatpush1.bf16.xpose.msra.mxu0 %v3576
  %5354 = vmatprep.subr.bf16.mxu0 0
  %5355 = vmatpush1.bf16.xpose.msra.mxu0 %v3577
  %5356 = vmatprep.subr.bf16.mxu0 0
  %5357 = vmatpush1.bf16.xpose.msra.mxu0 %v3578
  %5358 = vmatprep.subr.bf16.mxu0 0
  %5359 = vmatpush1.bf16.xpose.msra.mxu0 %v3579
  %5360 = vmatprep.subr.bf16.mxu0 0
  %5361 = vmatpush1.bf16.xpose.msra.mxu0 %v3580
  %5362 = vmatprep.subr.bf16.mxu0 0
  %5363 = vmatpush1.bf16.xpose.msra.mxu0 %v3581
  %5364 = vmatprep.subr.bf16.mxu0 0
  %5365 = vmatpush1.bf16.xpose.msra.mxu0 %v3582
  %5366 = vmatprep.subr.bf16.mxu0 0
  %5367 = vmatpush1.bf16.xpose.msra.mxu0 %v3583
  %5368 = vmatprep.subr.bf16.mxu0 0
  %5369 = vmatpush1.bf16.xpose.msra.mxu0 %v3584
  %5370 = vmatprep.subr.bf16.mxu0 0
  %5371 = vmatpush1.bf16.xpose.msra.mxu0 %v3585
  %5372 = vmatprep.subr.bf16.mxu0 0
  %5373 = vmatpush1.bf16.xpose.msra.mxu0 %v3586
  %5374 = vmatprep.subr.bf16.mxu0 0
  %5375 = vmatpush1.bf16.xpose.msra.mxu0 %v3587
  %5376 = vmatprep.subr.bf16.mxu0 0
  %5377 = vmatpush1.bf16.xpose.msra.mxu0 %v3588
  %5378 = vmatprep.subr.bf16.mxu0 0
  %5379 = vmatpush1.bf16.xpose.msra.mxu0 %v3589
  %5380 = vmatprep.mubr.bf16.mxu0 0
  %5381 = vmatmul.mubr.bf16.gmra.mrb[0].mxu0 %v15
  %v5382 = vpop.f32.mrb[0].mxu0
  %v5383 = vadd.f32 %v1044, %v5382
  %v5384 = vpop.f32.mrb[0].mxu0
  %v5385 = vadd.f32 %v1044, %v5384
  %v5386 = vpop.f32.mrb[0].mxu0
  %v5387 = vpop.f32.mrb[0].mxu0
  %5388 = vdwg.mxu0
  %5389 = vmatprep.subr.bf16.mxu0 0
  %5390 = vmatpush1.bf16.xpose.msra.mxu0 %v3590
  %5391 = vmatprep.subr.bf16.mxu0 0
  %5392 = vmatpush1.bf16.xpose.msra.mxu0 %v3591
  %5393 = vmatprep.subr.bf16.mxu0 0
  %5394 = vmatpush1.bf16.xpose.msra.mxu0 %v3592
  %5395 = vmatprep.subr.bf16.mxu0 0
  %5396 = vmatpush1.bf16.xpose.msra.mxu0 %v3593
  %5397 = vmatprep.subr.bf16.mxu0 0
  %5398 = vmatpush1.bf16.xpose.msra.mxu0 %v3594
  %5399 = vmatprep.subr.bf16.mxu0 0
  %5400 = vmatpush1.bf16.xpose.msra.mxu0 %v3595
  %5401 = vmatprep.subr.bf16.mxu0 0
  %5402 = vmatpush1.bf16.xpose.msra.mxu0 %v3596
  %5403 = vmatprep.subr.bf16.mxu0 0
  %5404 = vmatpush1.bf16.xpose.msra.mxu0 %v3597
  %5405 = vmatprep.subr.bf16.mxu0 0
  %5406 = vmatpush1.bf16.xpose.msra.mxu0 %v3598
  %5407 = vmatprep.subr.bf16.mxu0 0
  %5408 = vmatpush1.bf16.xpose.msra.mxu0 %v3599
  %5409 = vmatprep.subr.bf16.mxu0 0
  %5410 = vmatpush1.bf16.xpose.msra.mxu0 %v3600
  %5411 = vmatprep.subr.bf16.mxu0 0
  %5412 = vmatpush1.bf16.xpose.msra.mxu0 %v3601
  %5413 = vmatprep.subr.bf16.mxu0 0
  %5414 = vmatpush1.bf16.xpose.msra.mxu0 %v3602
  %5415 = vmatprep.subr.bf16.mxu0 0
  %5416 = vmatpush1.bf16.xpose.msra.mxu0 %v3603
  %5417 = vmatprep.subr.bf16.mxu0 0
  %5418 = vmatpush1.bf16.xpose.msra.mxu0 %v3604
  %5419 = vmatprep.subr.bf16.mxu0 0
  %5420 = vmatpush1.bf16.xpose.msra.mxu0 %v3605
  %5421 = vmatprep.mubr.bf16.mxu0 0
  %5422 = vmatmul.mubr.bf16.gmra.mrb[0].mxu0 %v15
  %v5423 = vpop.f32.mrb[0].mxu0
  %v5424 = vadd.f32 %v1044, %v5423
  %v5425 = vpop.f32.mrb[0].mxu0
  %v5426 = vadd.f32 %v1044, %v5425
  %v5427 = vpop.f32.mrb[0].mxu0
  %v5428 = vpop.f32.mrb[0].mxu0
  %5429 = vdwg.mxu0
  %v5430 = vtanh.pop %v4153
  %v5431 = vtanh.pop %v4155
  %v5432 = vtanh.pop %v4194
  %v5433 = vtanh.pop %v4196
  %v5434 = vtanh.pop %v4235
  %v5435 = vtanh.pop %v4237
  %v5436 = vtanh.pop %v4276
  %v5437 = vtanh.pop %v4278
  %v5438 = vtanh.pop %v4317
  %v5439 = vtanh.pop %v4319
  %v5440 = vtanh.pop %v4358
  %v5441 = vtanh.pop %v4360
  %v5442 = vtanh.pop %v4399
  %v5443 = vtanh.pop %v4401
  %v5444 = vtanh.pop %v4440
  %v5445 = vtanh.pop %v4442
  %v5446 = vtanh.pop %v4481
  %v5447 = vtanh.pop %v4483
  %v5448 = vtanh.pop %v4522
  %v5449 = vtanh.pop %v4524
  %v5450 = vtanh.pop %v4563
  %v5451 = vtanh.pop %v4565
  %v5452 = vtanh.pop %v4604
  %v5453 = vtanh.pop %v4606
  %v5454 = vtanh.pop %v4645
  %v5455 = vtanh.pop %v4647
  %v5456 = vtanh.pop %v4686
  %v5457 = vtanh.pop %v4688
  %v5458 = vtanh.pop %v4727
  %v5459 = vtanh.pop %v4729
  %v5460 = vtanh.pop %v4768
  %v5461 = vtanh.pop %v4770
  %v5462 = vtanh.pop %v4809
  %v5463 = vtanh.pop %v4811
  %v5464 = vtanh.pop %v4850
  %v5465 = vtanh.pop %v4852
  %v5466 = vtanh.pop %v4891
  %v5467 = vtanh.pop %v4893
  %v5468 = vtanh.pop %v4932
  %v5469 = vtanh.pop %v4934
  %v5470 = vtanh.pop %v4973
  %v5471 = vtanh.pop %v4975
  %v5472 = vtanh.pop %v5014
  %v5473 = vtanh.pop %v5016
  %v5474 = vtanh.pop %v5055
  %v5475 = vtanh.pop %v5057
  %v5476 = vtanh.pop %v5096
  %v5477 = vtanh.pop %v5098
  %v5478 = vtanh.pop %v5137
  %v5479 = vtanh.pop %v5139
  %v5480 = vtanh.pop %v5178
  %v5481 = vtanh.pop %v5180
  %v5482 = vtanh.pop %v5219
  %v5483 = vtanh.pop %v5221
  %v5484 = vtanh.pop %v5260
  %v5485 = vtanh.pop %v5262
  %v5486 = vtanh.pop %v5301
  %v5487 = vtanh.pop %v5303
  %v5488 = vtanh.pop %v5342
  %v5489 = vtanh.pop %v5344
  %v5490 = vtanh.pop %v5383
  %v5491 = vtanh.pop %v5385
  %v5492 = vtanh.pop %v5424
  %v5493 = vtanh.pop %v5426
  %5494 = vst [vmem:[%s3] sm:$0xff] %v5430
  %5495 = vst [vmem:[%s3 + $0x8] sm:$0xff] %v5431
  %5496 = vst [vmem:[%s3 + $0x10] sm:$0xff] %v5432
  %5497 = vst [vmem:[%s3 + $0x18] sm:$0xff] %v5433
  %5498 = vst [vmem:[%s3 + $0x20] sm:$0xff] %v5434
  %5499 = vst [vmem:[%s3 + $0x28] sm:$0xff] %v5435
  %5500 = vst [vmem:[%s3 + $0x30] sm:$0xff] %v5436
  %5501 = vst [vmem:[%s3 + $0x38] sm:$0xff] %v5437
  %5502 = vst [vmem:[%s3 + $0x40] sm:$0xff] %v5438
  %5503 = vst [vmem:[%s3 + $0x48] sm:$0xff] %v5439
  %5504 = vst [vmem:[%s3 + $0x50] sm:$0xff] %v5440
  %5505 = vst [vmem:[%s3 + $0x58] sm:$0xff] %v5441
  %5506 = vst [vmem:[%s3 + $0x60] sm:$0xff] %v5442
  %5507 = vst [vmem:[%s3 + $0x68] sm:$0xff] %v5443
  %5508 = vst [vmem:[%s3 + $0x70] sm:$0xff] %v5444
  %5509 = vst [vmem:[%s3 + $0x78] sm:$0xff] %v5445
  %5510 = vst [vmem:[%s3 + $0x80] sm:$0xff] %v5446
  %5511 = vst [vmem:[%s3 + $0x88] sm:$0xff] %v5447
  %5512 = vst [vmem:[%s3 + $0x90] sm:$0xff] %v5448
  %5513 = vst [vmem:[%s3 + $0x98] sm:$0xff] %v5449
  %5514 = vst [vmem:[%s3 + $0xa0] sm:$0xff] %v5450
  %5515 = vst [vmem:[%s3 + $0xa8] sm:$0xff] %v5451
  %5516 = vst [vmem:[%s3 + $0xb0] sm:$0xff] %v5452
  %5517 = vst [vmem:[%s3 + $0xb8] sm:$0xff] %v5453
  %5518 = vst [vmem:[%s3 + $0xc0] sm:$0xff] %v5454
  %5519 = vst [vmem:[%s3 + $0xc8] sm:$0xff] %v5455
  %5520 = vst [vmem:[%s3 + $0xd0] sm:$0xff] %v5456
  %5521 = vst [vmem:[%s3 + $0xd8] sm:$0xff] %v5457
  %5522 = vst [vmem:[%s3 + $0xe0] sm:$0xff] %v5458
  %5523 = vst [vmem:[%s3 + $0xe8] sm:$0xff] %v5459
  %5524 = vst [vmem:[%s3 + $0xf0] sm:$0xff] %v5460
  %5525 = vst [vmem:[%s3 + $0xf8] sm:$0xff] %v5461
  %5526 = vst [vmem:[%s3 + $0x100] sm:$0xff] %v5462
  %5527 = vst [vmem:[%s3 + $0x108] sm:$0xff] %v5463
  %5528 = vst [vmem:[%s3 + $0x110] sm:$0xff] %v5464
  %5529 = vst [vmem:[%s3 + $0x118] sm:$0xff] %v5465
  %5530 = vst [vmem:[%s3 + $0x120] sm:$0xff] %v5466
  %5531 = vst [vmem:[%s3 + $0x128] sm:$0xff] %v5467
  %5532 = vst [vmem:[%s3 + $0x130] sm:$0xff] %v5468
  %5533 = vst [vmem:[%s3 + $0x138] sm:$0xff] %v5469
  %5534 = vst [vmem:[%s3 + $0x140] sm:$0xff] %v5470
  %5535 = vst [vmem:[%s3 + $0x148] sm:$0xff] %v5471
  %5536 = vst [vmem:[%s3 + $0x150] sm:$0xff] %v5472
  %5537 = vst [vmem:[%s3 + $0x158] sm:$0xff] %v5473
  %5538 = vst [vmem:[%s3 + $0x160] sm:$0xff] %v5474
  %5539 = vst [vmem:[%s3 + $0x168] sm:$0xff] %v5475
  %5540 = vst [vmem:[%s3 + $0x170] sm:$0xff] %v5476
  %5541 = vst [vmem:[%s3 + $0x178] sm:$0xff] %v5477
  %5542 = vst [vmem:[%s3 + $0x180] sm:$0xff] %v5478
  %5543 = vst [vmem:[%s3 + $0x188] sm:$0xff] %v5479
  %5544 = vst [vmem:[%s3 + $0x190] sm:$0xff] %v5480
  %5545 = vst [vmem:[%s3 + $0x198] sm:$0xff] %v5481
  %5546 = vst [vmem:[%s3 + $0x1a0] sm:$0xff] %v5482
  %5547 = vst [vmem:[%s3 + $0x1a8] sm:$0xff] %v5483
  %5548 = vst [vmem:[%s3 + $0x1b0] sm:$0xff] %v5484
  %5549 = vst [vmem:[%s3 + $0x1b8] sm:$0xff] %v5485
  %5550 = vst [vmem:[%s3 + $0x1c0] sm:$0xff] %v5486
  %5551 = vst [vmem:[%s3 + $0x1c8] sm:$0xff] %v5487
  %5552 = vst [vmem:[%s3 + $0x1d0] sm:$0xff] %v5488
  %5553 = vst [vmem:[%s3 + $0x1d8] sm:$0xff] %v5489
  %5554 = vst [vmem:[%s3 + $0x1e0] sm:$0xff] %v5490
  %5555 = vst [vmem:[%s3 + $0x1e8] sm:$0xff] %v5491
  %5556 = vst [vmem:[%s3 + $0x1f0] sm:$0xff] %v5492
  %5557 = vst [vmem:[%s3 + $0x1f8] sm:$0xff] %v5493
  // Predicated region
  $region14: #{generator_forward.9} parent=0 // pred_check
    _
  $region15: #{generator_forward.9} parent=0 // pred_check_branch
    %5559 = sbr.rel (0) target = $region17
  $region16: #{generator_forward.9} parent=0 // pred_region
    _
  $region17: #{generator_forward.9} parent=0 // pred_fallthru
    _
  // Predicated region
  $region18: #{generator_forward.9} parent=0 // pred_check
    _
  $region19: #{generator_forward.9} parent=0 // pred_check_branch
    %5561 = sbr.rel (0) target = $region21
  $region20: #{generator_forward.9} parent=0 // pred_region
    _
  $region21: #{generator_forward.9} parent=0 // pred_fallthru
    _

</llo_original>
